<compile_context>
chip_gen: v7x
topology: tpu7x:2x2x1
jax: 0.10.0
libtpu: 0.0.40
codegen_flags: <defaults>
</compile_context>

<pallas_src>
import jax
import jax.numpy as jnp
from jax.experimental import pallas as pl
from jax.experimental.pallas import tpu as pltpu


# --------------------------------------------------------------------------
# Fused Pallas kernel for the whole residual stack (grid over batch tiles)
# --------------------------------------------------------------------------
def _make_stack_kernel(dilations, c_res, c_skip, t_in, t_pad, skip_size):
    """Builds the fused kernel. One grid step == one batch tile of Bt rows."""

    def kernel(x_ref, w0_ref, w1_ref, wr_ref, br_ref, ws_ref, bs_ref, skip_ref):
        # x_ref    : VMEM (c_res, Bt, t_pad)   batch on sublanes, time on lanes
        # w0/w1/wr : SMEM (n_blocks, c_res*c_res)   flattened [o, i] row-major
        # br       : SMEM (n_blocks, c_res)
        # ws       : SMEM (n_blocks, c_skip*c_res)  flattened [o, i] row-major
        # bs       : SMEM (n_blocks, c_skip)
        # skip_ref : VMEM (n_blocks, Bt, c_skip*skip_size)  lane-dense output

        def shift_left(r, d):
            # Fixed-shape roll by -d along lanes: out[:, p] == r[:, p + d] for
            # p < t_pad - d.  The wrapped tail lands only in the garbage
            # suffix, which no valid output position ever reads.
            return jnp.concatenate([r[:, d:], r[:, :d]], axis=1)

        # Per-channel (Bt, t_pad) slabs; VMEM/vreg-resident across all blocks.
        rows = [x_ref[i] for i in range(c_res)]
        valid = t_in                                   # valid prefix length

        for n, d in enumerate(dilations):              # static, unrolled
            hi = [shift_left(r, d) for r in rows]      # taps at t + d

            # Dilated conv (kernel_size=2, no bias) + gated activation.
            gated = []
            for o in range(c_res):
                acc = (rows[0] * w0_ref[n, o * c_res] +
                       hi[0] * w1_ref[n, o * c_res])
                for i in range(1, c_res):
                    acc = acc + rows[i] * w0_ref[n, o * c_res + i]
                    acc = acc + hi[i] * w1_ref[n, o * c_res + i]
                # tanh(a)*sigmoid(a) == (1 - u) / (1 + u*u), u = exp(-a).
                # TODO(synk): approx=True reciprocal is a further EUP win but
                # exceeds the 1e-4 test tolerance margin; kept exact.
                u = jnp.exp(-jnp.maximum(acc, -30.0))
                gated.append((1.0 - u) *
                             pl.reciprocal(1.0 + u * u, approx=False))

            # 1x1 residual conv + bias + residual add against x[:, :, t+d].
            new_rows = []
            for o in range(c_res):
                acc = gated[0] * wr_ref[n, o * c_res]
                for i in range(1, c_res):
                    acc = acc + gated[i] * wr_ref[n, o * c_res + i]
                new_rows.append(acc + br_ref[n, o] + hi[o])

            # 1x1 skip conv, evaluated ONLY on the kept (last skip_size valid)
            # timesteps; static offset into the fixed-length arrays.
            valid -= d
            off = valid - skip_size
            g_tail = [g[:, off:off + skip_size] for g in gated]
            pieces = []
            for o in range(c_skip):
                acc = g_tail[0] * ws_ref[n, o * c_res]
                for i in range(1, c_res):
                    acc = acc + g_tail[i] * ws_ref[n, o * c_res + i]
                pieces.append(acc + bs_ref[n, o])
            # One lane-dense (Bt, c_skip*skip_size) store per block.
            skip_ref[n] = jnp.concatenate(pieces, axis=1)

            rows = new_rows

    return kernel


def residual_stack_pallas(x_nct, dilations, params, skip_size):
    """Fused ResidualStack forward.

    x_nct: (B, C_res, T) float32 (PyTorch NCT convention).
    Returns: (num_blocks, B, C_skip, skip_size) -- matches torch.stack output.
    """
    b, c_res, t_in = x_nct.shape
    n_blocks = len(dilations)
    c_skip = params[0][4].shape[0]
    assert t_in - sum(dilations) >= skip_size, \
        "skip_size must be <= output length of the last block"

    # Pad time up to a lane multiple (>=128) so slabs are lane-dense; the
    # padded tail is never read by a valid output position.
    t_pad = max(128, ((t_in + 127) // 128) * 128)
    if t_pad != t_in:
        x_nct = jnp.pad(x_nct, ((0, 0), (0, 0), (0, t_pad - t_in)))

    # Channel-outer layout (C, B, T): batch lands on sublanes, time on lanes.
    x_cbt = jnp.transpose(x_nct, (1, 0, 2))

    # Batch tile: 8 fills the sublanes (and keeps >=2 parallel grid steps when
    # B >= 16, feeding both v7x TensorCores); otherwise take the whole batch
    # (block dims must be multiples of 8 or the full extent).
    bt = 8 if (b % 8 == 0) else b

    # Stack per-block weights; flatten matrices for scalar SMEM access.
    w0 = jnp.stack([p[0] for p in params]).reshape(n_blocks, c_res * c_res)
    w1 = jnp.stack([p[1] for p in params]).reshape(n_blocks, c_res * c_res)
    wr = jnp.stack([p[2] for p in params]).reshape(n_blocks, c_res * c_res)
    br = jnp.stack([p[3] for p in params])                        # (n, c_res)
    ws = jnp.stack([p[4] for p in params]).reshape(n_blocks, c_skip * c_res)
    bs = jnp.stack([p[5] for p in params])                        # (n, c_skip)

    kernel = _make_stack_kernel(tuple(dilations), c_res, c_skip,
                                t_in, t_pad, skip_size)
    smem = pl.BlockSpec(memory_space=pltpu.MemorySpace.SMEM)

    out = pl.pallas_call(
        kernel,
        out_shape=jax.ShapeDtypeStruct((n_blocks, b, c_skip * skip_size),
                                       jnp.float32),
        grid_spec=pl.GridSpec(
            grid=(b // bt,),
            in_specs=[
                pl.BlockSpec((c_res, bt, t_pad), lambda i: (0, i, 0)),   # x
                smem, smem, smem, smem, smem, smem,                      # weights
            ],
            out_specs=pl.BlockSpec((n_blocks, bt, c_skip * skip_size),
                                   lambda i: (0, i, 0)),
        ),
        compiler_params=pltpu.CompilerParams(
            dimension_semantics=("parallel",)),
    )(x_cbt, w0, w1, wr, br, ws, bs)

    # Lane-dense slab -> (N, B, C_skip, skip_size), channel-major per block.
    return out.reshape(n_blocks, b, c_skip, skip_size)


# --------------------------------------------------------------------------
# Parameter construction (synthetic, deterministic)
# --------------------------------------------------------------------------
def make_dilations(stack_len, dilations_per_layer):
    dil = []
    for _ in range(stack_len):
        dil.extend([2 ** i for i in range(dilations_per_layer)])
    return dil


def init_residual_stack_params(key, stack_len, dilations_per_layer,
                               res_layers_num, skip_layers_num):
    """Per-block params: w0/w1/wr are (C_out, C_in); ws is (C_skip, C_res)."""
    dilations = make_dilations(stack_len, dilations_per_layer)
    params = []
    for _ in dilations:
        key, k0, k1, k2, k3, k4, k5 = jax.random.split(key, 7)
        w0 = jax.random.normal(k0, (res_layers_num, res_layers_num), jnp.float32) * 0.3
        w1 = jax.random.normal(k1, (res_layers_num, res_layers_num), jnp.float32) * 0.3
        wr = jax.random.normal(k2, (res_layers_num, res_layers_num), jnp.float32) * 0.3
        br = jax.random.normal(k3, (res_layers_num,), jnp.float32) * 0.1
        ws = jax.random.normal(k4, (skip_layers_num, res_layers_num), jnp.float32) * 0.3
        bs = jax.random.normal(k5, (skip_layers_num,), jnp.float32) * 0.1
        params.append((w0, w1, wr, br, ws, bs))
    return dilations, params


# --------------------------------------------------------------------------
# Pure-JAX reference (correctness check only)
# --------------------------------------------------------------------------
def _reference_stack(x_nct, dilations, params, skip_size):
    hp = jax.lax.Precision.HIGHEST
    x = x_nct                                              # (B, C, T)
    skips = []
    for d, (w0, w1, wr, br, ws, bs) in zip(dilations, params):
        t_out = x.shape[2] - d
        x_lo = x[:, :, :t_out]
        x_hi = x[:, :, d:]
        dilated = (jnp.einsum('oi,bit->bot', w0, x_lo, precision=hp)
                   + jnp.einsum('oi,bit->bot', w1, x_hi, precision=hp))
        gated = jnp.tanh(dilated) * jax.nn.sigmoid(dilated)
        res = jnp.einsum('oi,bit->bot', wr, gated, precision=hp) + br[None, :, None]
        x = res + x_hi
        skip = jnp.einsum('oi,bit->bot', ws, gated, precision=hp) + bs[None, :, None]
        skips.append(skip[:, :, -skip_size:])
    return jnp.stack(skips)                                # (N, B, C_skip, skip)


# --------------------------------------------------------------------------
if __name__ == "__main__":
    stack_len = 2
    dilations_per_layer = 3      # dilations per layer: 1, 2, 4
    res_layers_num = 4           # residual channels
    skip_layers_num = 8          # skip channels
    B, T = 16, 48                # B=16 -> Bt=8 sublane-packed, 2 parallel steps
    skip_size = 16               # total shrink = 2*(1+2+4) = 14 -> 34 >= 16

    key = jax.random.PRNGKey(0)
    key, kx = jax.random.split(key)
    x = jax.random.normal(kx, (B, res_layers_num, T), jnp.float32)   # NCT

    dilations, params = init_residual_stack_params(
        key, stack_len, dilations_per_layer, res_layers_num, skip_layers_num)

    out = residual_stack_pallas(x, dilations, params, skip_size)
    out = jax.block_until_ready(out)

    ref = _reference_stack(x, dilations, params, skip_size)
    assert out.shape == (len(dilations), B, skip_layers_num, skip_size), out.shape
    assert jnp.allclose(out, ref, atol=1e-4, rtol=1e-4), \
        float(jnp.max(jnp.abs(out - ref)))

    print("KERNEL_OK")
</pallas_src>

<mosaic_0001>
module attributes {stable_mosaic.version = 11 : i64} {
  func.func @kernel(%arg0: i32, %arg1: memref<4x8x128xf32, #tpu.memory_space<vmem>>, %arg2: memref<6x16xf32, #tpu.memory_space<smem>>, %arg3: memref<6x16xf32, #tpu.memory_space<smem>>, %arg4: memref<6x16xf32, #tpu.memory_space<smem>>, %arg5: memref<6x4xf32, #tpu.memory_space<smem>>, %arg6: memref<6x32xf32, #tpu.memory_space<smem>>, %arg7: memref<6x8xf32, #tpu.memory_space<smem>>, %arg8: memref<6x8x128xf32, #tpu.memory_space<vmem>>) attributes {dimension_semantics = [#tpu.dimension_semantics<parallel>], iteration_bounds = array<i64: 2>, scalar_prefetch = 0 : i64, scratch_operands = 0 : i64, tpu.core_type = #tpu.core_type<tc>, window_params = [{transform_indices = @transform_0, window_bounds = array<i64: 4, 8, 128>}, {transform_indices = @transform_1, window_bounds = array<i64: 6, 16>}, {transform_indices = @transform_2, window_bounds = array<i64: 6, 16>}, {transform_indices = @transform_3, window_bounds = array<i64: 6, 16>}, {transform_indices = @transform_4, window_bounds = array<i64: 6, 4>}, {transform_indices = @transform_5, window_bounds = array<i64: 6, 32>}, {transform_indices = @transform_6, window_bounds = array<i64: 6, 8>}, {transform_indices = @transform_7, window_bounds = array<i64: 6, 8, 128>}]} {
    %c0 = arith.constant 0 : index
    %c0_0 = arith.constant 0 : index
    %c0_1 = arith.constant 0 : index
    %0 = vector.load %arg1[%c0, %c0_0, %c0_1] : memref<4x8x128xf32, #tpu.memory_space<vmem>>, vector<1x8x128xf32>
    %1 = vector.shape_cast %0 : vector<1x8x128xf32> to vector<8x128xf32>
    %c1 = arith.constant 1 : index
    %c0_2 = arith.constant 0 : index
    %c0_3 = arith.constant 0 : index
    %2 = vector.load %arg1[%c1, %c0_2, %c0_3] : memref<4x8x128xf32, #tpu.memory_space<vmem>>, vector<1x8x128xf32>
    %3 = vector.shape_cast %2 : vector<1x8x128xf32> to vector<8x128xf32>
    %c2 = arith.constant 2 : index
    %c0_4 = arith.constant 0 : index
    %c0_5 = arith.constant 0 : index
    %4 = vector.load %arg1[%c2, %c0_4, %c0_5] : memref<4x8x128xf32, #tpu.memory_space<vmem>>, vector<1x8x128xf32>
    %5 = vector.shape_cast %4 : vector<1x8x128xf32> to vector<8x128xf32>
    %c3 = arith.constant 3 : index
    %c0_6 = arith.constant 0 : index
    %c0_7 = arith.constant 0 : index
    %6 = vector.load %arg1[%c3, %c0_6, %c0_7] : memref<4x8x128xf32, #tpu.memory_space<vmem>>, vector<1x8x128xf32>
    %7 = vector.shape_cast %6 : vector<1x8x128xf32> to vector<8x128xf32>
    %8 = vector.extract_strided_slice %1 {offsets = [0, 1], sizes = [8, 127], strides = [1, 1]} : vector<8x128xf32> to vector<8x127xf32>
    %9 = vector.extract_strided_slice %1 {offsets = [0, 0], sizes = [8, 1], strides = [1, 1]} : vector<8x128xf32> to vector<8x1xf32>
    %10 = tpu.concatenate %8, %9 in 1 : vector<8x127xf32>, vector<8x1xf32> -> vector<8x128xf32>
    %11 = vector.extract_strided_slice %3 {offsets = [0, 1], sizes = [8, 127], strides = [1, 1]} : vector<8x128xf32> to vector<8x127xf32>
    %12 = vector.extract_strided_slice %3 {offsets = [0, 0], sizes = [8, 1], strides = [1, 1]} : vector<8x128xf32> to vector<8x1xf32>
    %13 = tpu.concatenate %11, %12 in 1 : vector<8x127xf32>, vector<8x1xf32> -> vector<8x128xf32>
    %14 = vector.extract_strided_slice %5 {offsets = [0, 1], sizes = [8, 127], strides = [1, 1]} : vector<8x128xf32> to vector<8x127xf32>
    %15 = vector.extract_strided_slice %5 {offsets = [0, 0], sizes = [8, 1], strides = [1, 1]} : vector<8x128xf32> to vector<8x1xf32>
    %16 = tpu.concatenate %14, %15 in 1 : vector<8x127xf32>, vector<8x1xf32> -> vector<8x128xf32>
    %17 = vector.extract_strided_slice %7 {offsets = [0, 1], sizes = [8, 127], strides = [1, 1]} : vector<8x128xf32> to vector<8x127xf32>
    %18 = vector.extract_strided_slice %7 {offsets = [0, 0], sizes = [8, 1], strides = [1, 1]} : vector<8x128xf32> to vector<8x1xf32>
    %19 = tpu.concatenate %17, %18 in 1 : vector<8x127xf32>, vector<8x1xf32> -> vector<8x128xf32>
    %c0_8 = arith.constant 0 : index
    %c0_9 = arith.constant 0 : index
    %20 = memref.load %arg2[%c0_8, %c0_9] : memref<6x16xf32, #tpu.memory_space<smem>>
    %21 = vector.broadcast %20 : f32 to vector<8x128xf32>
    %22 = arith.mulf %1, %21 : vector<8x128xf32>
    %c0_10 = arith.constant 0 : index
    %c0_11 = arith.constant 0 : index
    %23 = memref.load %arg3[%c0_10, %c0_11] : memref<6x16xf32, #tpu.memory_space<smem>>
    %24 = vector.broadcast %23 : f32 to vector<8x128xf32>
    %25 = arith.mulf %10, %24 : vector<8x128xf32>
    %26 = arith.addf %22, %25 : vector<8x128xf32>
    %c0_12 = arith.constant 0 : index
    %c1_13 = arith.constant 1 : index
    %27 = memref.load %arg2[%c0_12, %c1_13] : memref<6x16xf32, #tpu.memory_space<smem>>
    %28 = vector.broadcast %27 : f32 to vector<8x128xf32>
    %29 = arith.mulf %3, %28 : vector<8x128xf32>
    %30 = arith.addf %26, %29 : vector<8x128xf32>
    %c0_14 = arith.constant 0 : index
    %c1_15 = arith.constant 1 : index
    %31 = memref.load %arg3[%c0_14, %c1_15] : memref<6x16xf32, #tpu.memory_space<smem>>
    %32 = vector.broadcast %31 : f32 to vector<8x128xf32>
    %33 = arith.mulf %13, %32 : vector<8x128xf32>
    %34 = arith.addf %30, %33 : vector<8x128xf32>
    %c0_16 = arith.constant 0 : index
    %c2_17 = arith.constant 2 : index
    %35 = memref.load %arg2[%c0_16, %c2_17] : memref<6x16xf32, #tpu.memory_space<smem>>
    %36 = vector.broadcast %35 : f32 to vector<8x128xf32>
    %37 = arith.mulf %5, %36 : vector<8x128xf32>
    %38 = arith.addf %34, %37 : vector<8x128xf32>
    %c0_18 = arith.constant 0 : index
    %c2_19 = arith.constant 2 : index
    %39 = memref.load %arg3[%c0_18, %c2_19] : memref<6x16xf32, #tpu.memory_space<smem>>
    %40 = vector.broadcast %39 : f32 to vector<8x128xf32>
    %41 = arith.mulf %16, %40 : vector<8x128xf32>
    %42 = arith.addf %38, %41 : vector<8x128xf32>
    %c0_20 = arith.constant 0 : index
    %c3_21 = arith.constant 3 : index
    %43 = memref.load %arg2[%c0_20, %c3_21] : memref<6x16xf32, #tpu.memory_space<smem>>
    %44 = vector.broadcast %43 : f32 to vector<8x128xf32>
    %45 = arith.mulf %7, %44 : vector<8x128xf32>
    %46 = arith.addf %42, %45 : vector<8x128xf32>
    %c0_22 = arith.constant 0 : index
    %c3_23 = arith.constant 3 : index
    %47 = memref.load %arg3[%c0_22, %c3_23] : memref<6x16xf32, #tpu.memory_space<smem>>
    %48 = vector.broadcast %47 : f32 to vector<8x128xf32>
    %49 = arith.mulf %19, %48 : vector<8x128xf32>
    %50 = arith.addf %46, %49 : vector<8x128xf32>
    %cst = arith.constant -3.000000e+01 : f32
    %51 = vector.broadcast %cst : f32 to vector<8x128xf32>
    %52 = arith.maximumf %50, %51 : vector<8x128xf32>
    %cst_24 = arith.constant 0.000000e+00 : f32
    %53 = vector.broadcast %cst_24 : f32 to vector<8x128xf32>
    %54 = arith.subf %53, %52 : vector<8x128xf32>
    %55 = math.exp %54 : vector<8x128xf32>
    %cst_25 = arith.constant 1.000000e+00 : f32
    %56 = vector.broadcast %cst_25 : f32 to vector<8x128xf32>
    %57 = arith.subf %56, %55 : vector<8x128xf32>
    %58 = arith.mulf %55, %55 : vector<8x128xf32>
    %cst_26 = arith.constant 1.000000e+00 : f32
    %59 = vector.broadcast %cst_26 : f32 to vector<8x128xf32>
    %60 = arith.addf %59, %58 : vector<8x128xf32>
    %61 = tpu.reciprocal %60 : vector<8x128xf32> -> vector<8x128xf32>
    %62 = arith.mulf %57, %61 : vector<8x128xf32>
    %c0_27 = arith.constant 0 : index
    %c4 = arith.constant 4 : index
    %63 = memref.load %arg2[%c0_27, %c4] : memref<6x16xf32, #tpu.memory_space<smem>>
    %64 = vector.broadcast %63 : f32 to vector<8x128xf32>
    %65 = arith.mulf %1, %64 : vector<8x128xf32>
    %c0_28 = arith.constant 0 : index
    %c4_29 = arith.constant 4 : index
    %66 = memref.load %arg3[%c0_28, %c4_29] : memref<6x16xf32, #tpu.memory_space<smem>>
    %67 = vector.broadcast %66 : f32 to vector<8x128xf32>
    %68 = arith.mulf %10, %67 : vector<8x128xf32>
    %69 = arith.addf %65, %68 : vector<8x128xf32>
    %c0_30 = arith.constant 0 : index
    %c5 = arith.constant 5 : index
    %70 = memref.load %arg2[%c0_30, %c5] : memref<6x16xf32, #tpu.memory_space<smem>>
    %71 = vector.broadcast %70 : f32 to vector<8x128xf32>
    %72 = arith.mulf %3, %71 : vector<8x128xf32>
    %73 = arith.addf %69, %72 : vector<8x128xf32>
    %c0_31 = arith.constant 0 : index
    %c5_32 = arith.constant 5 : index
    %74 = memref.load %arg3[%c0_31, %c5_32] : memref<6x16xf32, #tpu.memory_space<smem>>
    %75 = vector.broadcast %74 : f32 to vector<8x128xf32>
    %76 = arith.mulf %13, %75 : vector<8x128xf32>
    %77 = arith.addf %73, %76 : vector<8x128xf32>
    %c0_33 = arith.constant 0 : index
    %c6 = arith.constant 6 : index
    %78 = memref.load %arg2[%c0_33, %c6] : memref<6x16xf32, #tpu.memory_space<smem>>
    %79 = vector.broadcast %78 : f32 to vector<8x128xf32>
    %80 = arith.mulf %5, %79 : vector<8x128xf32>
    %81 = arith.addf %77, %80 : vector<8x128xf32>
    %c0_34 = arith.constant 0 : index
    %c6_35 = arith.constant 6 : index
    %82 = memref.load %arg3[%c0_34, %c6_35] : memref<6x16xf32, #tpu.memory_space<smem>>
    %83 = vector.broadcast %82 : f32 to vector<8x128xf32>
    %84 = arith.mulf %16, %83 : vector<8x128xf32>
    %85 = arith.addf %81, %84 : vector<8x128xf32>
    %c0_36 = arith.constant 0 : index
    %c7 = arith.constant 7 : index
    %86 = memref.load %arg2[%c0_36, %c7] : memref<6x16xf32, #tpu.memory_space<smem>>
    %87 = vector.broadcast %86 : f32 to vector<8x128xf32>
    %88 = arith.mulf %7, %87 : vector<8x128xf32>
    %89 = arith.addf %85, %88 : vector<8x128xf32>
    %c0_37 = arith.constant 0 : index
    %c7_38 = arith.constant 7 : index
    %90 = memref.load %arg3[%c0_37, %c7_38] : memref<6x16xf32, #tpu.memory_space<smem>>
    %91 = vector.broadcast %90 : f32 to vector<8x128xf32>
    %92 = arith.mulf %19, %91 : vector<8x128xf32>
    %93 = arith.addf %89, %92 : vector<8x128xf32>
    %cst_39 = arith.constant -3.000000e+01 : f32
    %94 = vector.broadcast %cst_39 : f32 to vector<8x128xf32>
    %95 = arith.maximumf %93, %94 : vector<8x128xf32>
    %cst_40 = arith.constant 0.000000e+00 : f32
    %96 = vector.broadcast %cst_40 : f32 to vector<8x128xf32>
    %97 = arith.subf %96, %95 : vector<8x128xf32>
    %98 = math.exp %97 : vector<8x128xf32>
    %cst_41 = arith.constant 1.000000e+00 : f32
    %99 = vector.broadcast %cst_41 : f32 to vector<8x128xf32>
    %100 = arith.subf %99, %98 : vector<8x128xf32>
    %101 = arith.mulf %98, %98 : vector<8x128xf32>
    %cst_42 = arith.constant 1.000000e+00 : f32
    %102 = vector.broadcast %cst_42 : f32 to vector<8x128xf32>
    %103 = arith.addf %102, %101 : vector<8x128xf32>
    %104 = tpu.reciprocal %103 : vector<8x128xf32> -> vector<8x128xf32>
    %105 = arith.mulf %100, %104 : vector<8x128xf32>
    %c0_43 = arith.constant 0 : index
    %c8 = arith.constant 8 : index
    %106 = memref.load %arg2[%c0_43, %c8] : memref<6x16xf32, #tpu.memory_space<smem>>
    %107 = vector.broadcast %106 : f32 to vector<8x128xf32>
    %108 = arith.mulf %1, %107 : vector<8x128xf32>
    %c0_44 = arith.constant 0 : index
    %c8_45 = arith.constant 8 : index
    %109 = memref.load %arg3[%c0_44, %c8_45] : memref<6x16xf32, #tpu.memory_space<smem>>
    %110 = vector.broadcast %109 : f32 to vector<8x128xf32>
    %111 = arith.mulf %10, %110 : vector<8x128xf32>
    %112 = arith.addf %108, %111 : vector<8x128xf32>
    %c0_46 = arith.constant 0 : index
    %c9 = arith.constant 9 : index
    %113 = memref.load %arg2[%c0_46, %c9] : memref<6x16xf32, #tpu.memory_space<smem>>
    %114 = vector.broadcast %113 : f32 to vector<8x128xf32>
    %115 = arith.mulf %3, %114 : vector<8x128xf32>
    %116 = arith.addf %112, %115 : vector<8x128xf32>
    %c0_47 = arith.constant 0 : index
    %c9_48 = arith.constant 9 : index
    %117 = memref.load %arg3[%c0_47, %c9_48] : memref<6x16xf32, #tpu.memory_space<smem>>
    %118 = vector.broadcast %117 : f32 to vector<8x128xf32>
    %119 = arith.mulf %13, %118 : vector<8x128xf32>
    %120 = arith.addf %116, %119 : vector<8x128xf32>
    %c0_49 = arith.constant 0 : index
    %c10 = arith.constant 10 : index
    %121 = memref.load %arg2[%c0_49, %c10] : memref<6x16xf32, #tpu.memory_space<smem>>
    %122 = vector.broadcast %121 : f32 to vector<8x128xf32>
    %123 = arith.mulf %5, %122 : vector<8x128xf32>
    %124 = arith.addf %120, %123 : vector<8x128xf32>
    %c0_50 = arith.constant 0 : index
    %c10_51 = arith.constant 10 : index
    %125 = memref.load %arg3[%c0_50, %c10_51] : memref<6x16xf32, #tpu.memory_space<smem>>
    %126 = vector.broadcast %125 : f32 to vector<8x128xf32>
    %127 = arith.mulf %16, %126 : vector<8x128xf32>
    %128 = arith.addf %124, %127 : vector<8x128xf32>
    %c0_52 = arith.constant 0 : index
    %c11 = arith.constant 11 : index
    %129 = memref.load %arg2[%c0_52, %c11] : memref<6x16xf32, #tpu.memory_space<smem>>
    %130 = vector.broadcast %129 : f32 to vector<8x128xf32>
    %131 = arith.mulf %7, %130 : vector<8x128xf32>
    %132 = arith.addf %128, %131 : vector<8x128xf32>
    %c0_53 = arith.constant 0 : index
    %c11_54 = arith.constant 11 : index
    %133 = memref.load %arg3[%c0_53, %c11_54] : memref<6x16xf32, #tpu.memory_space<smem>>
    %134 = vector.broadcast %133 : f32 to vector<8x128xf32>
    %135 = arith.mulf %19, %134 : vector<8x128xf32>
    %136 = arith.addf %132, %135 : vector<8x128xf32>
    %cst_55 = arith.constant -3.000000e+01 : f32
    %137 = vector.broadcast %cst_55 : f32 to vector<8x128xf32>
    %138 = arith.maximumf %136, %137 : vector<8x128xf32>
    %cst_56 = arith.constant 0.000000e+00 : f32
    %139 = vector.broadcast %cst_56 : f32 to vector<8x128xf32>
    %140 = arith.subf %139, %138 : vector<8x128xf32>
    %141 = math.exp %140 : vector<8x128xf32>
    %cst_57 = arith.constant 1.000000e+00 : f32
    %142 = vector.broadcast %cst_57 : f32 to vector<8x128xf32>
    %143 = arith.subf %142, %141 : vector<8x128xf32>
    %144 = arith.mulf %141, %141 : vector<8x128xf32>
    %cst_58 = arith.constant 1.000000e+00 : f32
    %145 = vector.broadcast %cst_58 : f32 to vector<8x128xf32>
    %146 = arith.addf %145, %144 : vector<8x128xf32>
    %147 = tpu.reciprocal %146 : vector<8x128xf32> -> vector<8x128xf32>
    %148 = arith.mulf %143, %147 : vector<8x128xf32>
    %c0_59 = arith.constant 0 : index
    %c12 = arith.constant 12 : index
    %149 = memref.load %arg2[%c0_59, %c12] : memref<6x16xf32, #tpu.memory_space<smem>>
    %150 = vector.broadcast %149 : f32 to vector<8x128xf32>
    %151 = arith.mulf %1, %150 : vector<8x128xf32>
    %c0_60 = arith.constant 0 : index
    %c12_61 = arith.constant 12 : index
    %152 = memref.load %arg3[%c0_60, %c12_61] : memref<6x16xf32, #tpu.memory_space<smem>>
    %153 = vector.broadcast %152 : f32 to vector<8x128xf32>
    %154 = arith.mulf %10, %153 : vector<8x128xf32>
    %155 = arith.addf %151, %154 : vector<8x128xf32>
    %c0_62 = arith.constant 0 : index
    %c13 = arith.constant 13 : index
    %156 = memref.load %arg2[%c0_62, %c13] : memref<6x16xf32, #tpu.memory_space<smem>>
    %157 = vector.broadcast %156 : f32 to vector<8x128xf32>
    %158 = arith.mulf %3, %157 : vector<8x128xf32>
    %159 = arith.addf %155, %158 : vector<8x128xf32>
    %c0_63 = arith.constant 0 : index
    %c13_64 = arith.constant 13 : index
    %160 = memref.load %arg3[%c0_63, %c13_64] : memref<6x16xf32, #tpu.memory_space<smem>>
    %161 = vector.broadcast %160 : f32 to vector<8x128xf32>
    %162 = arith.mulf %13, %161 : vector<8x128xf32>
    %163 = arith.addf %159, %162 : vector<8x128xf32>
    %c0_65 = arith.constant 0 : index
    %c14 = arith.constant 14 : index
    %164 = memref.load %arg2[%c0_65, %c14] : memref<6x16xf32, #tpu.memory_space<smem>>
    %165 = vector.broadcast %164 : f32 to vector<8x128xf32>
    %166 = arith.mulf %5, %165 : vector<8x128xf32>
    %167 = arith.addf %163, %166 : vector<8x128xf32>
    %c0_66 = arith.constant 0 : index
    %c14_67 = arith.constant 14 : index
    %168 = memref.load %arg3[%c0_66, %c14_67] : memref<6x16xf32, #tpu.memory_space<smem>>
    %169 = vector.broadcast %168 : f32 to vector<8x128xf32>
    %170 = arith.mulf %16, %169 : vector<8x128xf32>
    %171 = arith.addf %167, %170 : vector<8x128xf32>
    %c0_68 = arith.constant 0 : index
    %c15 = arith.constant 15 : index
    %172 = memref.load %arg2[%c0_68, %c15] : memref<6x16xf32, #tpu.memory_space<smem>>
    %173 = vector.broadcast %172 : f32 to vector<8x128xf32>
    %174 = arith.mulf %7, %173 : vector<8x128xf32>
    %175 = arith.addf %171, %174 : vector<8x128xf32>
    %c0_69 = arith.constant 0 : index
    %c15_70 = arith.constant 15 : index
    %176 = memref.load %arg3[%c0_69, %c15_70] : memref<6x16xf32, #tpu.memory_space<smem>>
    %177 = vector.broadcast %176 : f32 to vector<8x128xf32>
    %178 = arith.mulf %19, %177 : vector<8x128xf32>
    %179 = arith.addf %175, %178 : vector<8x128xf32>
    %cst_71 = arith.constant -3.000000e+01 : f32
    %180 = vector.broadcast %cst_71 : f32 to vector<8x128xf32>
    %181 = arith.maximumf %179, %180 : vector<8x128xf32>
    %cst_72 = arith.constant 0.000000e+00 : f32
    %182 = vector.broadcast %cst_72 : f32 to vector<8x128xf32>
    %183 = arith.subf %182, %181 : vector<8x128xf32>
    %184 = math.exp %183 : vector<8x128xf32>
    %cst_73 = arith.constant 1.000000e+00 : f32
    %185 = vector.broadcast %cst_73 : f32 to vector<8x128xf32>
    %186 = arith.subf %185, %184 : vector<8x128xf32>
    %187 = arith.mulf %184, %184 : vector<8x128xf32>
    %cst_74 = arith.constant 1.000000e+00 : f32
    %188 = vector.broadcast %cst_74 : f32 to vector<8x128xf32>
    %189 = arith.addf %188, %187 : vector<8x128xf32>
    %190 = tpu.reciprocal %189 : vector<8x128xf32> -> vector<8x128xf32>
    %191 = arith.mulf %186, %190 : vector<8x128xf32>
    %c0_75 = arith.constant 0 : index
    %c0_76 = arith.constant 0 : index
    %192 = memref.load %arg4[%c0_75, %c0_76] : memref<6x16xf32, #tpu.memory_space<smem>>
    %193 = vector.broadcast %192 : f32 to vector<8x128xf32>
    %194 = arith.mulf %62, %193 : vector<8x128xf32>
    %c0_77 = arith.constant 0 : index
    %c1_78 = arith.constant 1 : index
    %195 = memref.load %arg4[%c0_77, %c1_78] : memref<6x16xf32, #tpu.memory_space<smem>>
    %196 = vector.broadcast %195 : f32 to vector<8x128xf32>
    %197 = arith.mulf %105, %196 : vector<8x128xf32>
    %198 = arith.addf %194, %197 : vector<8x128xf32>
    %c0_79 = arith.constant 0 : index
    %c2_80 = arith.constant 2 : index
    %199 = memref.load %arg4[%c0_79, %c2_80] : memref<6x16xf32, #tpu.memory_space<smem>>
    %200 = vector.broadcast %199 : f32 to vector<8x128xf32>
    %201 = arith.mulf %148, %200 : vector<8x128xf32>
    %202 = arith.addf %198, %201 : vector<8x128xf32>
    %c0_81 = arith.constant 0 : index
    %c3_82 = arith.constant 3 : index
    %203 = memref.load %arg4[%c0_81, %c3_82] : memref<6x16xf32, #tpu.memory_space<smem>>
    %204 = vector.broadcast %203 : f32 to vector<8x128xf32>
    %205 = arith.mulf %191, %204 : vector<8x128xf32>
    %206 = arith.addf %202, %205 : vector<8x128xf32>
    %c0_83 = arith.constant 0 : index
    %c0_84 = arith.constant 0 : index
    %207 = memref.load %arg5[%c0_83, %c0_84] : memref<6x4xf32, #tpu.memory_space<smem>>
    %208 = vector.broadcast %207 : f32 to vector<8x128xf32>
    %209 = arith.addf %206, %208 : vector<8x128xf32>
    %210 = arith.addf %209, %10 : vector<8x128xf32>
    %c0_85 = arith.constant 0 : index
    %c4_86 = arith.constant 4 : index
    %211 = memref.load %arg4[%c0_85, %c4_86] : memref<6x16xf32, #tpu.memory_space<smem>>
    %212 = vector.broadcast %211 : f32 to vector<8x128xf32>
    %213 = arith.mulf %62, %212 : vector<8x128xf32>
    %c0_87 = arith.constant 0 : index
    %c5_88 = arith.constant 5 : index
    %214 = memref.load %arg4[%c0_87, %c5_88] : memref<6x16xf32, #tpu.memory_space<smem>>
    %215 = vector.broadcast %214 : f32 to vector<8x128xf32>
    %216 = arith.mulf %105, %215 : vector<8x128xf32>
    %217 = arith.addf %213, %216 : vector<8x128xf32>
    %c0_89 = arith.constant 0 : index
    %c6_90 = arith.constant 6 : index
    %218 = memref.load %arg4[%c0_89, %c6_90] : memref<6x16xf32, #tpu.memory_space<smem>>
    %219 = vector.broadcast %218 : f32 to vector<8x128xf32>
    %220 = arith.mulf %148, %219 : vector<8x128xf32>
    %221 = arith.addf %217, %220 : vector<8x128xf32>
    %c0_91 = arith.constant 0 : index
    %c7_92 = arith.constant 7 : index
    %222 = memref.load %arg4[%c0_91, %c7_92] : memref<6x16xf32, #tpu.memory_space<smem>>
    %223 = vector.broadcast %222 : f32 to vector<8x128xf32>
    %224 = arith.mulf %191, %223 : vector<8x128xf32>
    %225 = arith.addf %221, %224 : vector<8x128xf32>
    %c0_93 = arith.constant 0 : index
    %c1_94 = arith.constant 1 : index
    %226 = memref.load %arg5[%c0_93, %c1_94] : memref<6x4xf32, #tpu.memory_space<smem>>
    %227 = vector.broadcast %226 : f32 to vector<8x128xf32>
    %228 = arith.addf %225, %227 : vector<8x128xf32>
    %229 = arith.addf %228, %13 : vector<8x128xf32>
    %c0_95 = arith.constant 0 : index
    %c8_96 = arith.constant 8 : index
    %230 = memref.load %arg4[%c0_95, %c8_96] : memref<6x16xf32, #tpu.memory_space<smem>>
    %231 = vector.broadcast %230 : f32 to vector<8x128xf32>
    %232 = arith.mulf %62, %231 : vector<8x128xf32>
    %c0_97 = arith.constant 0 : index
    %c9_98 = arith.constant 9 : index
    %233 = memref.load %arg4[%c0_97, %c9_98] : memref<6x16xf32, #tpu.memory_space<smem>>
    %234 = vector.broadcast %233 : f32 to vector<8x128xf32>
    %235 = arith.mulf %105, %234 : vector<8x128xf32>
    %236 = arith.addf %232, %235 : vector<8x128xf32>
    %c0_99 = arith.constant 0 : index
    %c10_100 = arith.constant 10 : index
    %237 = memref.load %arg4[%c0_99, %c10_100] : memref<6x16xf32, #tpu.memory_space<smem>>
    %238 = vector.broadcast %237 : f32 to vector<8x128xf32>
    %239 = arith.mulf %148, %238 : vector<8x128xf32>
    %240 = arith.addf %236, %239 : vector<8x128xf32>
    %c0_101 = arith.constant 0 : index
    %c11_102 = arith.constant 11 : index
    %241 = memref.load %arg4[%c0_101, %c11_102] : memref<6x16xf32, #tpu.memory_space<smem>>
    %242 = vector.broadcast %241 : f32 to vector<8x128xf32>
    %243 = arith.mulf %191, %242 : vector<8x128xf32>
    %244 = arith.addf %240, %243 : vector<8x128xf32>
    %c0_103 = arith.constant 0 : index
    %c2_104 = arith.constant 2 : index
    %245 = memref.load %arg5[%c0_103, %c2_104] : memref<6x4xf32, #tpu.memory_space<smem>>
    %246 = vector.broadcast %245 : f32 to vector<8x128xf32>
    %247 = arith.addf %244, %246 : vector<8x128xf32>
    %248 = arith.addf %247, %16 : vector<8x128xf32>
    %c0_105 = arith.constant 0 : index
    %c12_106 = arith.constant 12 : index
    %249 = memref.load %arg4[%c0_105, %c12_106] : memref<6x16xf32, #tpu.memory_space<smem>>
    %250 = vector.broadcast %249 : f32 to vector<8x128xf32>
    %251 = arith.mulf %62, %250 : vector<8x128xf32>
    %c0_107 = arith.constant 0 : index
    %c13_108 = arith.constant 13 : index
    %252 = memref.load %arg4[%c0_107, %c13_108] : memref<6x16xf32, #tpu.memory_space<smem>>
    %253 = vector.broadcast %252 : f32 to vector<8x128xf32>
    %254 = arith.mulf %105, %253 : vector<8x128xf32>
    %255 = arith.addf %251, %254 : vector<8x128xf32>
    %c0_109 = arith.constant 0 : index
    %c14_110 = arith.constant 14 : index
    %256 = memref.load %arg4[%c0_109, %c14_110] : memref<6x16xf32, #tpu.memory_space<smem>>
    %257 = vector.broadcast %256 : f32 to vector<8x128xf32>
    %258 = arith.mulf %148, %257 : vector<8x128xf32>
    %259 = arith.addf %255, %258 : vector<8x128xf32>
    %c0_111 = arith.constant 0 : index
    %c15_112 = arith.constant 15 : index
    %260 = memref.load %arg4[%c0_111, %c15_112] : memref<6x16xf32, #tpu.memory_space<smem>>
    %261 = vector.broadcast %260 : f32 to vector<8x128xf32>
    %262 = arith.mulf %191, %261 : vector<8x128xf32>
    %263 = arith.addf %259, %262 : vector<8x128xf32>
    %c0_113 = arith.constant 0 : index
    %c3_114 = arith.constant 3 : index
    %264 = memref.load %arg5[%c0_113, %c3_114] : memref<6x4xf32, #tpu.memory_space<smem>>
    %265 = vector.broadcast %264 : f32 to vector<8x128xf32>
    %266 = arith.addf %263, %265 : vector<8x128xf32>
    %267 = arith.addf %266, %19 : vector<8x128xf32>
    %268 = vector.extract_strided_slice %62 {offsets = [0, 31], sizes = [8, 16], strides = [1, 1]} : vector<8x128xf32> to vector<8x16xf32>
    %269 = vector.extract_strided_slice %105 {offsets = [0, 31], sizes = [8, 16], strides = [1, 1]} : vector<8x128xf32> to vector<8x16xf32>
    %270 = vector.extract_strided_slice %148 {offsets = [0, 31], sizes = [8, 16], strides = [1, 1]} : vector<8x128xf32> to vector<8x16xf32>
    %271 = vector.extract_strided_slice %191 {offsets = [0, 31], sizes = [8, 16], strides = [1, 1]} : vector<8x128xf32> to vector<8x16xf32>
    %c0_115 = arith.constant 0 : index
    %c0_116 = arith.constant 0 : index
    %272 = memref.load %arg6[%c0_115, %c0_116] : memref<6x32xf32, #tpu.memory_space<smem>>
    %273 = vector.broadcast %272 : f32 to vector<8x16xf32>
    %274 = arith.mulf %268, %273 : vector<8x16xf32>
    %c0_117 = arith.constant 0 : index
    %c1_118 = arith.constant 1 : index
    %275 = memref.load %arg6[%c0_117, %c1_118] : memref<6x32xf32, #tpu.memory_space<smem>>
    %276 = vector.broadcast %275 : f32 to vector<8x16xf32>
    %277 = arith.mulf %269, %276 : vector<8x16xf32>
    %278 = arith.addf %274, %277 : vector<8x16xf32>
    %c0_119 = arith.constant 0 : index
    %c2_120 = arith.constant 2 : index
    %279 = memref.load %arg6[%c0_119, %c2_120] : memref<6x32xf32, #tpu.memory_space<smem>>
    %280 = vector.broadcast %279 : f32 to vector<8x16xf32>
    %281 = arith.mulf %270, %280 : vector<8x16xf32>
    %282 = arith.addf %278, %281 : vector<8x16xf32>
    %c0_121 = arith.constant 0 : index
    %c3_122 = arith.constant 3 : index
    %283 = memref.load %arg6[%c0_121, %c3_122] : memref<6x32xf32, #tpu.memory_space<smem>>
    %284 = vector.broadcast %283 : f32 to vector<8x16xf32>
    %285 = arith.mulf %271, %284 : vector<8x16xf32>
    %286 = arith.addf %282, %285 : vector<8x16xf32>
    %c0_123 = arith.constant 0 : index
    %c0_124 = arith.constant 0 : index
    %287 = memref.load %arg7[%c0_123, %c0_124] : memref<6x8xf32, #tpu.memory_space<smem>>
    %288 = vector.broadcast %287 : f32 to vector<8x16xf32>
    %289 = arith.addf %286, %288 : vector<8x16xf32>
    %c0_125 = arith.constant 0 : index
    %c4_126 = arith.constant 4 : index
    %290 = memref.load %arg6[%c0_125, %c4_126] : memref<6x32xf32, #tpu.memory_space<smem>>
    %291 = vector.broadcast %290 : f32 to vector<8x16xf32>
    %292 = arith.mulf %268, %291 : vector<8x16xf32>
    %c0_127 = arith.constant 0 : index
    %c5_128 = arith.constant 5 : index
    %293 = memref.load %arg6[%c0_127, %c5_128] : memref<6x32xf32, #tpu.memory_space<smem>>
    %294 = vector.broadcast %293 : f32 to vector<8x16xf32>
    %295 = arith.mulf %269, %294 : vector<8x16xf32>
    %296 = arith.addf %292, %295 : vector<8x16xf32>
    %c0_129 = arith.constant 0 : index
    %c6_130 = arith.constant 6 : index
    %297 = memref.load %arg6[%c0_129, %c6_130] : memref<6x32xf32, #tpu.memory_space<smem>>
    %298 = vector.broadcast %297 : f32 to vector<8x16xf32>
    %299 = arith.mulf %270, %298 : vector<8x16xf32>
    %300 = arith.addf %296, %299 : vector<8x16xf32>
    %c0_131 = arith.constant 0 : index
    %c7_132 = arith.constant 7 : index
    %301 = memref.load %arg6[%c0_131, %c7_132] : memref<6x32xf32, #tpu.memory_space<smem>>
    %302 = vector.broadcast %301 : f32 to vector<8x16xf32>
    %303 = arith.mulf %271, %302 : vector<8x16xf32>
    %304 = arith.addf %300, %303 : vector<8x16xf32>
    %c0_133 = arith.constant 0 : index
    %c1_134 = arith.constant 1 : index
    %305 = memref.load %arg7[%c0_133, %c1_134] : memref<6x8xf32, #tpu.memory_space<smem>>
    %306 = vector.broadcast %305 : f32 to vector<8x16xf32>
    %307 = arith.addf %304, %306 : vector<8x16xf32>
    %c0_135 = arith.constant 0 : index
    %c8_136 = arith.constant 8 : index
    %308 = memref.load %arg6[%c0_135, %c8_136] : memref<6x32xf32, #tpu.memory_space<smem>>
    %309 = vector.broadcast %308 : f32 to vector<8x16xf32>
    %310 = arith.mulf %268, %309 : vector<8x16xf32>
    %c0_137 = arith.constant 0 : index
    %c9_138 = arith.constant 9 : index
    %311 = memref.load %arg6[%c0_137, %c9_138] : memref<6x32xf32, #tpu.memory_space<smem>>
    %312 = vector.broadcast %311 : f32 to vector<8x16xf32>
    %313 = arith.mulf %269, %312 : vector<8x16xf32>
    %314 = arith.addf %310, %313 : vector<8x16xf32>
    %c0_139 = arith.constant 0 : index
    %c10_140 = arith.constant 10 : index
    %315 = memref.load %arg6[%c0_139, %c10_140] : memref<6x32xf32, #tpu.memory_space<smem>>
    %316 = vector.broadcast %315 : f32 to vector<8x16xf32>
    %317 = arith.mulf %270, %316 : vector<8x16xf32>
    %318 = arith.addf %314, %317 : vector<8x16xf32>
    %c0_141 = arith.constant 0 : index
    %c11_142 = arith.constant 11 : index
    %319 = memref.load %arg6[%c0_141, %c11_142] : memref<6x32xf32, #tpu.memory_space<smem>>
    %320 = vector.broadcast %319 : f32 to vector<8x16xf32>
    %321 = arith.mulf %271, %320 : vector<8x16xf32>
    %322 = arith.addf %318, %321 : vector<8x16xf32>
    %c0_143 = arith.constant 0 : index
    %c2_144 = arith.constant 2 : index
    %323 = memref.load %arg7[%c0_143, %c2_144] : memref<6x8xf32, #tpu.memory_space<smem>>
    %324 = vector.broadcast %323 : f32 to vector<8x16xf32>
    %325 = arith.addf %322, %324 : vector<8x16xf32>
    %c0_145 = arith.constant 0 : index
    %c12_146 = arith.constant 12 : index
    %326 = memref.load %arg6[%c0_145, %c12_146] : memref<6x32xf32, #tpu.memory_space<smem>>
    %327 = vector.broadcast %326 : f32 to vector<8x16xf32>
    %328 = arith.mulf %268, %327 : vector<8x16xf32>
    %c0_147 = arith.constant 0 : index
    %c13_148 = arith.constant 13 : index
    %329 = memref.load %arg6[%c0_147, %c13_148] : memref<6x32xf32, #tpu.memory_space<smem>>
    %330 = vector.broadcast %329 : f32 to vector<8x16xf32>
    %331 = arith.mulf %269, %330 : vector<8x16xf32>
    %332 = arith.addf %328, %331 : vector<8x16xf32>
    %c0_149 = arith.constant 0 : index
    %c14_150 = arith.constant 14 : index
    %333 = memref.load %arg6[%c0_149, %c14_150] : memref<6x32xf32, #tpu.memory_space<smem>>
    %334 = vector.broadcast %333 : f32 to vector<8x16xf32>
    %335 = arith.mulf %270, %334 : vector<8x16xf32>
    %336 = arith.addf %332, %335 : vector<8x16xf32>
    %c0_151 = arith.constant 0 : index
    %c15_152 = arith.constant 15 : index
    %337 = memref.load %arg6[%c0_151, %c15_152] : memref<6x32xf32, #tpu.memory_space<smem>>
    %338 = vector.broadcast %337 : f32 to vector<8x16xf32>
    %339 = arith.mulf %271, %338 : vector<8x16xf32>
    %340 = arith.addf %336, %339 : vector<8x16xf32>
    %c0_153 = arith.constant 0 : index
    %c3_154 = arith.constant 3 : index
    %341 = memref.load %arg7[%c0_153, %c3_154] : memref<6x8xf32, #tpu.memory_space<smem>>
    %342 = vector.broadcast %341 : f32 to vector<8x16xf32>
    %343 = arith.addf %340, %342 : vector<8x16xf32>
    %c0_155 = arith.constant 0 : index
    %c16 = arith.constant 16 : index
    %344 = memref.load %arg6[%c0_155, %c16] : memref<6x32xf32, #tpu.memory_space<smem>>
    %345 = vector.broadcast %344 : f32 to vector<8x16xf32>
    %346 = arith.mulf %268, %345 : vector<8x16xf32>
    %c0_156 = arith.constant 0 : index
    %c17 = arith.constant 17 : index
    %347 = memref.load %arg6[%c0_156, %c17] : memref<6x32xf32, #tpu.memory_space<smem>>
    %348 = vector.broadcast %347 : f32 to vector<8x16xf32>
    %349 = arith.mulf %269, %348 : vector<8x16xf32>
    %350 = arith.addf %346, %349 : vector<8x16xf32>
    %c0_157 = arith.constant 0 : index
    %c18 = arith.constant 18 : index
    %351 = memref.load %arg6[%c0_157, %c18] : memref<6x32xf32, #tpu.memory_space<smem>>
    %352 = vector.broadcast %351 : f32 to vector<8x16xf32>
    %353 = arith.mulf %270, %352 : vector<8x16xf32>
    %354 = arith.addf %350, %353 : vector<8x16xf32>
    %c0_158 = arith.constant 0 : index
    %c19 = arith.constant 19 : index
    %355 = memref.load %arg6[%c0_158, %c19] : memref<6x32xf32, #tpu.memory_space<smem>>
    %356 = vector.broadcast %355 : f32 to vector<8x16xf32>
    %357 = arith.mulf %271, %356 : vector<8x16xf32>
    %358 = arith.addf %354, %357 : vector<8x16xf32>
    %c0_159 = arith.constant 0 : index
    %c4_160 = arith.constant 4 : index
    %359 = memref.load %arg7[%c0_159, %c4_160] : memref<6x8xf32, #tpu.memory_space<smem>>
    %360 = vector.broadcast %359 : f32 to vector<8x16xf32>
    %361 = arith.addf %358, %360 : vector<8x16xf32>
    %c0_161 = arith.constant 0 : index
    %c20 = arith.constant 20 : index
    %362 = memref.load %arg6[%c0_161, %c20] : memref<6x32xf32, #tpu.memory_space<smem>>
    %363 = vector.broadcast %362 : f32 to vector<8x16xf32>
    %364 = arith.mulf %268, %363 : vector<8x16xf32>
    %c0_162 = arith.constant 0 : index
    %c21 = arith.constant 21 : index
    %365 = memref.load %arg6[%c0_162, %c21] : memref<6x32xf32, #tpu.memory_space<smem>>
    %366 = vector.broadcast %365 : f32 to vector<8x16xf32>
    %367 = arith.mulf %269, %366 : vector<8x16xf32>
    %368 = arith.addf %364, %367 : vector<8x16xf32>
    %c0_163 = arith.constant 0 : index
    %c22 = arith.constant 22 : index
    %369 = memref.load %arg6[%c0_163, %c22] : memref<6x32xf32, #tpu.memory_space<smem>>
    %370 = vector.broadcast %369 : f32 to vector<8x16xf32>
    %371 = arith.mulf %270, %370 : vector<8x16xf32>
    %372 = arith.addf %368, %371 : vector<8x16xf32>
    %c0_164 = arith.constant 0 : index
    %c23 = arith.constant 23 : index
    %373 = memref.load %arg6[%c0_164, %c23] : memref<6x32xf32, #tpu.memory_space<smem>>
    %374 = vector.broadcast %373 : f32 to vector<8x16xf32>
    %375 = arith.mulf %271, %374 : vector<8x16xf32>
    %376 = arith.addf %372, %375 : vector<8x16xf32>
    %c0_165 = arith.constant 0 : index
    %c5_166 = arith.constant 5 : index
    %377 = memref.load %arg7[%c0_165, %c5_166] : memref<6x8xf32, #tpu.memory_space<smem>>
    %378 = vector.broadcast %377 : f32 to vector<8x16xf32>
    %379 = arith.addf %376, %378 : vector<8x16xf32>
    %c0_167 = arith.constant 0 : index
    %c24 = arith.constant 24 : index
    %380 = memref.load %arg6[%c0_167, %c24] : memref<6x32xf32, #tpu.memory_space<smem>>
    %381 = vector.broadcast %380 : f32 to vector<8x16xf32>
    %382 = arith.mulf %268, %381 : vector<8x16xf32>
    %c0_168 = arith.constant 0 : index
    %c25 = arith.constant 25 : index
    %383 = memref.load %arg6[%c0_168, %c25] : memref<6x32xf32, #tpu.memory_space<smem>>
    %384 = vector.broadcast %383 : f32 to vector<8x16xf32>
    %385 = arith.mulf %269, %384 : vector<8x16xf32>
    %386 = arith.addf %382, %385 : vector<8x16xf32>
    %c0_169 = arith.constant 0 : index
    %c26 = arith.constant 26 : index
    %387 = memref.load %arg6[%c0_169, %c26] : memref<6x32xf32, #tpu.memory_space<smem>>
    %388 = vector.broadcast %387 : f32 to vector<8x16xf32>
    %389 = arith.mulf %270, %388 : vector<8x16xf32>
    %390 = arith.addf %386, %389 : vector<8x16xf32>
    %c0_170 = arith.constant 0 : index
    %c27 = arith.constant 27 : index
    %391 = memref.load %arg6[%c0_170, %c27] : memref<6x32xf32, #tpu.memory_space<smem>>
    %392 = vector.broadcast %391 : f32 to vector<8x16xf32>
    %393 = arith.mulf %271, %392 : vector<8x16xf32>
    %394 = arith.addf %390, %393 : vector<8x16xf32>
    %c0_171 = arith.constant 0 : index
    %c6_172 = arith.constant 6 : index
    %395 = memref.load %arg7[%c0_171, %c6_172] : memref<6x8xf32, #tpu.memory_space<smem>>
    %396 = vector.broadcast %395 : f32 to vector<8x16xf32>
    %397 = arith.addf %394, %396 : vector<8x16xf32>
    %c0_173 = arith.constant 0 : index
    %c28 = arith.constant 28 : index
    %398 = memref.load %arg6[%c0_173, %c28] : memref<6x32xf32, #tpu.memory_space<smem>>
    %399 = vector.broadcast %398 : f32 to vector<8x16xf32>
    %400 = arith.mulf %268, %399 : vector<8x16xf32>
    %c0_174 = arith.constant 0 : index
    %c29 = arith.constant 29 : index
    %401 = memref.load %arg6[%c0_174, %c29] : memref<6x32xf32, #tpu.memory_space<smem>>
    %402 = vector.broadcast %401 : f32 to vector<8x16xf32>
    %403 = arith.mulf %269, %402 : vector<8x16xf32>
    %404 = arith.addf %400, %403 : vector<8x16xf32>
    %c0_175 = arith.constant 0 : index
    %c30 = arith.constant 30 : index
    %405 = memref.load %arg6[%c0_175, %c30] : memref<6x32xf32, #tpu.memory_space<smem>>
    %406 = vector.broadcast %405 : f32 to vector<8x16xf32>
    %407 = arith.mulf %270, %406 : vector<8x16xf32>
    %408 = arith.addf %404, %407 : vector<8x16xf32>
    %c0_176 = arith.constant 0 : index
    %c31 = arith.constant 31 : index
    %409 = memref.load %arg6[%c0_176, %c31] : memref<6x32xf32, #tpu.memory_space<smem>>
    %410 = vector.broadcast %409 : f32 to vector<8x16xf32>
    %411 = arith.mulf %271, %410 : vector<8x16xf32>
    %412 = arith.addf %408, %411 : vector<8x16xf32>
    %c0_177 = arith.constant 0 : index
    %c7_178 = arith.constant 7 : index
    %413 = memref.load %arg7[%c0_177, %c7_178] : memref<6x8xf32, #tpu.memory_space<smem>>
    %414 = vector.broadcast %413 : f32 to vector<8x16xf32>
    %415 = arith.addf %412, %414 : vector<8x16xf32>
    %416 = tpu.concatenate %289, %307, %325, %343, %361, %379, %397, %415 in 1 : vector<8x16xf32>, vector<8x16xf32>, vector<8x16xf32>, vector<8x16xf32>, vector<8x16xf32>, vector<8x16xf32>, vector<8x16xf32>, vector<8x16xf32> -> vector<8x128xf32>
    %c0_179 = arith.constant 0 : index
    %c0_180 = arith.constant 0 : index
    %c0_181 = arith.constant 0 : index
    %417 = vector.load %arg8[%c0_179, %c0_180, %c0_181] : memref<6x8x128xf32, #tpu.memory_space<vmem>>, vector<1x8x128xf32>
    %418 = vector.shape_cast %417 : vector<1x8x128xf32> to vector<8x128xf32>
    %419 = vector.shape_cast %416 : vector<8x128xf32> to vector<1x8x128xf32>
    tpu.vector_store %arg8[%c0_179, %c0_180, %c0_181], %419 {strides = array<i32>} : memref<6x8x128xf32, #tpu.memory_space<vmem>>, vector<1x8x128xf32>,
    %420 = vector.extract_strided_slice %210 {offsets = [0, 2], sizes = [8, 126], strides = [1, 1]} : vector<8x128xf32> to vector<8x126xf32>
    %421 = vector.extract_strided_slice %210 {offsets = [0, 0], sizes = [8, 2], strides = [1, 1]} : vector<8x128xf32> to vector<8x2xf32>
    %422 = tpu.concatenate %420, %421 in 1 : vector<8x126xf32>, vector<8x2xf32> -> vector<8x128xf32>
    %423 = vector.extract_strided_slice %229 {offsets = [0, 2], sizes = [8, 126], strides = [1, 1]} : vector<8x128xf32> to vector<8x126xf32>
    %424 = vector.extract_strided_slice %229 {offsets = [0, 0], sizes = [8, 2], strides = [1, 1]} : vector<8x128xf32> to vector<8x2xf32>
    %425 = tpu.concatenate %423, %424 in 1 : vector<8x126xf32>, vector<8x2xf32> -> vector<8x128xf32>
    %426 = vector.extract_strided_slice %248 {offsets = [0, 2], sizes = [8, 126], strides = [1, 1]} : vector<8x128xf32> to vector<8x126xf32>
    %427 = vector.extract_strided_slice %248 {offsets = [0, 0], sizes = [8, 2], strides = [1, 1]} : vector<8x128xf32> to vector<8x2xf32>
    %428 = tpu.concatenate %426, %427 in 1 : vector<8x126xf32>, vector<8x2xf32> -> vector<8x128xf32>
    %429 = vector.extract_strided_slice %267 {offsets = [0, 2], sizes = [8, 126], strides = [1, 1]} : vector<8x128xf32> to vector<8x126xf32>
    %430 = vector.extract_strided_slice %267 {offsets = [0, 0], sizes = [8, 2], strides = [1, 1]} : vector<8x128xf32> to vector<8x2xf32>
    %431 = tpu.concatenate %429, %430 in 1 : vector<8x126xf32>, vector<8x2xf32> -> vector<8x128xf32>
    %c1_182 = arith.constant 1 : index
    %c0_183 = arith.constant 0 : index
    %432 = memref.load %arg2[%c1_182, %c0_183] : memref<6x16xf32, #tpu.memory_space<smem>>
    %433 = vector.broadcast %432 : f32 to vector<8x128xf32>
    %434 = arith.mulf %210, %433 : vector<8x128xf32>
    %c1_184 = arith.constant 1 : index
    %c0_185 = arith.constant 0 : index
    %435 = memref.load %arg3[%c1_184, %c0_185] : memref<6x16xf32, #tpu.memory_space<smem>>
    %436 = vector.broadcast %435 : f32 to vector<8x128xf32>
    %437 = arith.mulf %422, %436 : vector<8x128xf32>
    %438 = arith.addf %434, %437 : vector<8x128xf32>
    %c1_186 = arith.constant 1 : index
    %c1_187 = arith.constant 1 : index
    %439 = memref.load %arg2[%c1_186, %c1_187] : memref<6x16xf32, #tpu.memory_space<smem>>
    %440 = vector.broadcast %439 : f32 to vector<8x128xf32>
    %441 = arith.mulf %229, %440 : vector<8x128xf32>
    %442 = arith.addf %438, %441 : vector<8x128xf32>
    %c1_188 = arith.constant 1 : index
    %c1_189 = arith.constant 1 : index
    %443 = memref.load %arg3[%c1_188, %c1_189] : memref<6x16xf32, #tpu.memory_space<smem>>
    %444 = vector.broadcast %443 : f32 to vector<8x128xf32>
    %445 = arith.mulf %425, %444 : vector<8x128xf32>
    %446 = arith.addf %442, %445 : vector<8x128xf32>
    %c1_190 = arith.constant 1 : index
    %c2_191 = arith.constant 2 : index
    %447 = memref.load %arg2[%c1_190, %c2_191] : memref<6x16xf32, #tpu.memory_space<smem>>
    %448 = vector.broadcast %447 : f32 to vector<8x128xf32>
    %449 = arith.mulf %248, %448 : vector<8x128xf32>
    %450 = arith.addf %446, %449 : vector<8x128xf32>
    %c1_192 = arith.constant 1 : index
    %c2_193 = arith.constant 2 : index
    %451 = memref.load %arg3[%c1_192, %c2_193] : memref<6x16xf32, #tpu.memory_space<smem>>
    %452 = vector.broadcast %451 : f32 to vector<8x128xf32>
    %453 = arith.mulf %428, %452 : vector<8x128xf32>
    %454 = arith.addf %450, %453 : vector<8x128xf32>
    %c1_194 = arith.constant 1 : index
    %c3_195 = arith.constant 3 : index
    %455 = memref.load %arg2[%c1_194, %c3_195] : memref<6x16xf32, #tpu.memory_space<smem>>
    %456 = vector.broadcast %455 : f32 to vector<8x128xf32>
    %457 = arith.mulf %267, %456 : vector<8x128xf32>
    %458 = arith.addf %454, %457 : vector<8x128xf32>
    %c1_196 = arith.constant 1 : index
    %c3_197 = arith.constant 3 : index
    %459 = memref.load %arg3[%c1_196, %c3_197] : memref<6x16xf32, #tpu.memory_space<smem>>
    %460 = vector.broadcast %459 : f32 to vector<8x128xf32>
    %461 = arith.mulf %431, %460 : vector<8x128xf32>
    %462 = arith.addf %458, %461 : vector<8x128xf32>
    %cst_198 = arith.constant -3.000000e+01 : f32
    %463 = vector.broadcast %cst_198 : f32 to vector<8x128xf32>
    %464 = arith.maximumf %462, %463 : vector<8x128xf32>
    %cst_199 = arith.constant 0.000000e+00 : f32
    %465 = vector.broadcast %cst_199 : f32 to vector<8x128xf32>
    %466 = arith.subf %465, %464 : vector<8x128xf32>
    %467 = math.exp %466 : vector<8x128xf32>
    %cst_200 = arith.constant 1.000000e+00 : f32
    %468 = vector.broadcast %cst_200 : f32 to vector<8x128xf32>
    %469 = arith.subf %468, %467 : vector<8x128xf32>
    %470 = arith.mulf %467, %467 : vector<8x128xf32>
    %cst_201 = arith.constant 1.000000e+00 : f32
    %471 = vector.broadcast %cst_201 : f32 to vector<8x128xf32>
    %472 = arith.addf %471, %470 : vector<8x128xf32>
    %473 = tpu.reciprocal %472 : vector<8x128xf32> -> vector<8x128xf32>
    %474 = arith.mulf %469, %473 : vector<8x128xf32>
    %c1_202 = arith.constant 1 : index
    %c4_203 = arith.constant 4 : index
    %475 = memref.load %arg2[%c1_202, %c4_203] : memref<6x16xf32, #tpu.memory_space<smem>>
    %476 = vector.broadcast %475 : f32 to vector<8x128xf32>
    %477 = arith.mulf %210, %476 : vector<8x128xf32>
    %c1_204 = arith.constant 1 : index
    %c4_205 = arith.constant 4 : index
    %478 = memref.load %arg3[%c1_204, %c4_205] : memref<6x16xf32, #tpu.memory_space<smem>>
    %479 = vector.broadcast %478 : f32 to vector<8x128xf32>
    %480 = arith.mulf %422, %479 : vector<8x128xf32>
    %481 = arith.addf %477, %480 : vector<8x128xf32>
    %c1_206 = arith.constant 1 : index
    %c5_207 = arith.constant 5 : index
    %482 = memref.load %arg2[%c1_206, %c5_207] : memref<6x16xf32, #tpu.memory_space<smem>>
    %483 = vector.broadcast %482 : f32 to vector<8x128xf32>
    %484 = arith.mulf %229, %483 : vector<8x128xf32>
    %485 = arith.addf %481, %484 : vector<8x128xf32>
    %c1_208 = arith.constant 1 : index
    %c5_209 = arith.constant 5 : index
    %486 = memref.load %arg3[%c1_208, %c5_209] : memref<6x16xf32, #tpu.memory_space<smem>>
    %487 = vector.broadcast %486 : f32 to vector<8x128xf32>
    %488 = arith.mulf %425, %487 : vector<8x128xf32>
    %489 = arith.addf %485, %488 : vector<8x128xf32>
    %c1_210 = arith.constant 1 : index
    %c6_211 = arith.constant 6 : index
    %490 = memref.load %arg2[%c1_210, %c6_211] : memref<6x16xf32, #tpu.memory_space<smem>>
    %491 = vector.broadcast %490 : f32 to vector<8x128xf32>
    %492 = arith.mulf %248, %491 : vector<8x128xf32>
    %493 = arith.addf %489, %492 : vector<8x128xf32>
    %c1_212 = arith.constant 1 : index
    %c6_213 = arith.constant 6 : index
    %494 = memref.load %arg3[%c1_212, %c6_213] : memref<6x16xf32, #tpu.memory_space<smem>>
    %495 = vector.broadcast %494 : f32 to vector<8x128xf32>
    %496 = arith.mulf %428, %495 : vector<8x128xf32>
    %497 = arith.addf %493, %496 : vector<8x128xf32>
    %c1_214 = arith.constant 1 : index
    %c7_215 = arith.constant 7 : index
    %498 = memref.load %arg2[%c1_214, %c7_215] : memref<6x16xf32, #tpu.memory_space<smem>>
    %499 = vector.broadcast %498 : f32 to vector<8x128xf32>
    %500 = arith.mulf %267, %499 : vector<8x128xf32>
    %501 = arith.addf %497, %500 : vector<8x128xf32>
    %c1_216 = arith.constant 1 : index
    %c7_217 = arith.constant 7 : index
    %502 = memref.load %arg3[%c1_216, %c7_217] : memref<6x16xf32, #tpu.memory_space<smem>>
    %503 = vector.broadcast %502 : f32 to vector<8x128xf32>
    %504 = arith.mulf %431, %503 : vector<8x128xf32>
    %505 = arith.addf %501, %504 : vector<8x128xf32>
    %cst_218 = arith.constant -3.000000e+01 : f32
    %506 = vector.broadcast %cst_218 : f32 to vector<8x128xf32>
    %507 = arith.maximumf %505, %506 : vector<8x128xf32>
    %cst_219 = arith.constant 0.000000e+00 : f32
    %508 = vector.broadcast %cst_219 : f32 to vector<8x128xf32>
    %509 = arith.subf %508, %507 : vector<8x128xf32>
    %510 = math.exp %509 : vector<8x128xf32>
    %cst_220 = arith.constant 1.000000e+00 : f32
    %511 = vector.broadcast %cst_220 : f32 to vector<8x128xf32>
    %512 = arith.subf %511, %510 : vector<8x128xf32>
    %513 = arith.mulf %510, %510 : vector<8x128xf32>
    %cst_221 = arith.constant 1.000000e+00 : f32
    %514 = vector.broadcast %cst_221 : f32 to vector<8x128xf32>
    %515 = arith.addf %514, %513 : vector<8x128xf32>
    %516 = tpu.reciprocal %515 : vector<8x128xf32> -> vector<8x128xf32>
    %517 = arith.mulf %512, %516 : vector<8x128xf32>
    %c1_222 = arith.constant 1 : index
    %c8_223 = arith.constant 8 : index
    %518 = memref.load %arg2[%c1_222, %c8_223] : memref<6x16xf32, #tpu.memory_space<smem>>
    %519 = vector.broadcast %518 : f32 to vector<8x128xf32>
    %520 = arith.mulf %210, %519 : vector<8x128xf32>
    %c1_224 = arith.constant 1 : index
    %c8_225 = arith.constant 8 : index
    %521 = memref.load %arg3[%c1_224, %c8_225] : memref<6x16xf32, #tpu.memory_space<smem>>
    %522 = vector.broadcast %521 : f32 to vector<8x128xf32>
    %523 = arith.mulf %422, %522 : vector<8x128xf32>
    %524 = arith.addf %520, %523 : vector<8x128xf32>
    %c1_226 = arith.constant 1 : index
    %c9_227 = arith.constant 9 : index
    %525 = memref.load %arg2[%c1_226, %c9_227] : memref<6x16xf32, #tpu.memory_space<smem>>
    %526 = vector.broadcast %525 : f32 to vector<8x128xf32>
    %527 = arith.mulf %229, %526 : vector<8x128xf32>
    %528 = arith.addf %524, %527 : vector<8x128xf32>
    %c1_228 = arith.constant 1 : index
    %c9_229 = arith.constant 9 : index
    %529 = memref.load %arg3[%c1_228, %c9_229] : memref<6x16xf32, #tpu.memory_space<smem>>
    %530 = vector.broadcast %529 : f32 to vector<8x128xf32>
    %531 = arith.mulf %425, %530 : vector<8x128xf32>
    %532 = arith.addf %528, %531 : vector<8x128xf32>
    %c1_230 = arith.constant 1 : index
    %c10_231 = arith.constant 10 : index
    %533 = memref.load %arg2[%c1_230, %c10_231] : memref<6x16xf32, #tpu.memory_space<smem>>
    %534 = vector.broadcast %533 : f32 to vector<8x128xf32>
    %535 = arith.mulf %248, %534 : vector<8x128xf32>
    %536 = arith.addf %532, %535 : vector<8x128xf32>
    %c1_232 = arith.constant 1 : index
    %c10_233 = arith.constant 10 : index
    %537 = memref.load %arg3[%c1_232, %c10_233] : memref<6x16xf32, #tpu.memory_space<smem>>
    %538 = vector.broadcast %537 : f32 to vector<8x128xf32>
    %539 = arith.mulf %428, %538 : vector<8x128xf32>
    %540 = arith.addf %536, %539 : vector<8x128xf32>
    %c1_234 = arith.constant 1 : index
    %c11_235 = arith.constant 11 : index
    %541 = memref.load %arg2[%c1_234, %c11_235] : memref<6x16xf32, #tpu.memory_space<smem>>
    %542 = vector.broadcast %541 : f32 to vector<8x128xf32>
    %543 = arith.mulf %267, %542 : vector<8x128xf32>
    %544 = arith.addf %540, %543 : vector<8x128xf32>
    %c1_236 = arith.constant 1 : index
    %c11_237 = arith.constant 11 : index
    %545 = memref.load %arg3[%c1_236, %c11_237] : memref<6x16xf32, #tpu.memory_space<smem>>
    %546 = vector.broadcast %545 : f32 to vector<8x128xf32>
    %547 = arith.mulf %431, %546 : vector<8x128xf32>
    %548 = arith.addf %544, %547 : vector<8x128xf32>
    %cst_238 = arith.constant -3.000000e+01 : f32
    %549 = vector.broadcast %cst_238 : f32 to vector<8x128xf32>
    %550 = arith.maximumf %548, %549 : vector<8x128xf32>
    %cst_239 = arith.constant 0.000000e+00 : f32
    %551 = vector.broadcast %cst_239 : f32 to vector<8x128xf32>
    %552 = arith.subf %551, %550 : vector<8x128xf32>
    %553 = math.exp %552 : vector<8x128xf32>
    %cst_240 = arith.constant 1.000000e+00 : f32
    %554 = vector.broadcast %cst_240 : f32 to vector<8x128xf32>
    %555 = arith.subf %554, %553 : vector<8x128xf32>
    %556 = arith.mulf %553, %553 : vector<8x128xf32>
    %cst_241 = arith.constant 1.000000e+00 : f32
    %557 = vector.broadcast %cst_241 : f32 to vector<8x128xf32>
    %558 = arith.addf %557, %556 : vector<8x128xf32>
    %559 = tpu.reciprocal %558 : vector<8x128xf32> -> vector<8x128xf32>
    %560 = arith.mulf %555, %559 : vector<8x128xf32>
    %c1_242 = arith.constant 1 : index
    %c12_243 = arith.constant 12 : index
    %561 = memref.load %arg2[%c1_242, %c12_243] : memref<6x16xf32, #tpu.memory_space<smem>>
    %562 = vector.broadcast %561 : f32 to vector<8x128xf32>
    %563 = arith.mulf %210, %562 : vector<8x128xf32>
    %c1_244 = arith.constant 1 : index
    %c12_245 = arith.constant 12 : index
    %564 = memref.load %arg3[%c1_244, %c12_245] : memref<6x16xf32, #tpu.memory_space<smem>>
    %565 = vector.broadcast %564 : f32 to vector<8x128xf32>
    %566 = arith.mulf %422, %565 : vector<8x128xf32>
    %567 = arith.addf %563, %566 : vector<8x128xf32>
    %c1_246 = arith.constant 1 : index
    %c13_247 = arith.constant 13 : index
    %568 = memref.load %arg2[%c1_246, %c13_247] : memref<6x16xf32, #tpu.memory_space<smem>>
    %569 = vector.broadcast %568 : f32 to vector<8x128xf32>
    %570 = arith.mulf %229, %569 : vector<8x128xf32>
    %571 = arith.addf %567, %570 : vector<8x128xf32>
    %c1_248 = arith.constant 1 : index
    %c13_249 = arith.constant 13 : index
    %572 = memref.load %arg3[%c1_248, %c13_249] : memref<6x16xf32, #tpu.memory_space<smem>>
    %573 = vector.broadcast %572 : f32 to vector<8x128xf32>
    %574 = arith.mulf %425, %573 : vector<8x128xf32>
    %575 = arith.addf %571, %574 : vector<8x128xf32>
    %c1_250 = arith.constant 1 : index
    %c14_251 = arith.constant 14 : index
    %576 = memref.load %arg2[%c1_250, %c14_251] : memref<6x16xf32, #tpu.memory_space<smem>>
    %577 = vector.broadcast %576 : f32 to vector<8x128xf32>
    %578 = arith.mulf %248, %577 : vector<8x128xf32>
    %579 = arith.addf %575, %578 : vector<8x128xf32>
    %c1_252 = arith.constant 1 : index
    %c14_253 = arith.constant 14 : index
    %580 = memref.load %arg3[%c1_252, %c14_253] : memref<6x16xf32, #tpu.memory_space<smem>>
    %581 = vector.broadcast %580 : f32 to vector<8x128xf32>
    %582 = arith.mulf %428, %581 : vector<8x128xf32>
    %583 = arith.addf %579, %582 : vector<8x128xf32>
    %c1_254 = arith.constant 1 : index
    %c15_255 = arith.constant 15 : index
    %584 = memref.load %arg2[%c1_254, %c15_255] : memref<6x16xf32, #tpu.memory_space<smem>>
    %585 = vector.broadcast %584 : f32 to vector<8x128xf32>
    %586 = arith.mulf %267, %585 : vector<8x128xf32>
    %587 = arith.addf %583, %586 : vector<8x128xf32>
    %c1_256 = arith.constant 1 : index
    %c15_257 = arith.constant 15 : index
    %588 = memref.load %arg3[%c1_256, %c15_257] : memref<6x16xf32, #tpu.memory_space<smem>>
    %589 = vector.broadcast %588 : f32 to vector<8x128xf32>
    %590 = arith.mulf %431, %589 : vector<8x128xf32>
    %591 = arith.addf %587, %590 : vector<8x128xf32>
    %cst_258 = arith.constant -3.000000e+01 : f32
    %592 = vector.broadcast %cst_258 : f32 to vector<8x128xf32>
    %593 = arith.maximumf %591, %592 : vector<8x128xf32>
    %cst_259 = arith.constant 0.000000e+00 : f32
    %594 = vector.broadcast %cst_259 : f32 to vector<8x128xf32>
    %595 = arith.subf %594, %593 : vector<8x128xf32>
    %596 = math.exp %595 : vector<8x128xf32>
    %cst_260 = arith.constant 1.000000e+00 : f32
    %597 = vector.broadcast %cst_260 : f32 to vector<8x128xf32>
    %598 = arith.subf %597, %596 : vector<8x128xf32>
    %599 = arith.mulf %596, %596 : vector<8x128xf32>
    %cst_261 = arith.constant 1.000000e+00 : f32
    %600 = vector.broadcast %cst_261 : f32 to vector<8x128xf32>
    %601 = arith.addf %600, %599 : vector<8x128xf32>
    %602 = tpu.reciprocal %601 : vector<8x128xf32> -> vector<8x128xf32>
    %603 = arith.mulf %598, %602 : vector<8x128xf32>
    %c1_262 = arith.constant 1 : index
    %c0_263 = arith.constant 0 : index
    %604 = memref.load %arg4[%c1_262, %c0_263] : memref<6x16xf32, #tpu.memory_space<smem>>
    %605 = vector.broadcast %604 : f32 to vector<8x128xf32>
    %606 = arith.mulf %474, %605 : vector<8x128xf32>
    %c1_264 = arith.constant 1 : index
    %c1_265 = arith.constant 1 : index
    %607 = memref.load %arg4[%c1_264, %c1_265] : memref<6x16xf32, #tpu.memory_space<smem>>
    %608 = vector.broadcast %607 : f32 to vector<8x128xf32>
    %609 = arith.mulf %517, %608 : vector<8x128xf32>
    %610 = arith.addf %606, %609 : vector<8x128xf32>
    %c1_266 = arith.constant 1 : index
    %c2_267 = arith.constant 2 : index
    %611 = memref.load %arg4[%c1_266, %c2_267] : memref<6x16xf32, #tpu.memory_space<smem>>
    %612 = vector.broadcast %611 : f32 to vector<8x128xf32>
    %613 = arith.mulf %560, %612 : vector<8x128xf32>
    %614 = arith.addf %610, %613 : vector<8x128xf32>
    %c1_268 = arith.constant 1 : index
    %c3_269 = arith.constant 3 : index
    %615 = memref.load %arg4[%c1_268, %c3_269] : memref<6x16xf32, #tpu.memory_space<smem>>
    %616 = vector.broadcast %615 : f32 to vector<8x128xf32>
    %617 = arith.mulf %603, %616 : vector<8x128xf32>
    %618 = arith.addf %614, %617 : vector<8x128xf32>
    %c1_270 = arith.constant 1 : index
    %c0_271 = arith.constant 0 : index
    %619 = memref.load %arg5[%c1_270, %c0_271] : memref<6x4xf32, #tpu.memory_space<smem>>
    %620 = vector.broadcast %619 : f32 to vector<8x128xf32>
    %621 = arith.addf %618, %620 : vector<8x128xf32>
    %622 = arith.addf %621, %422 : vector<8x128xf32>
    %c1_272 = arith.constant 1 : index
    %c4_273 = arith.constant 4 : index
    %623 = memref.load %arg4[%c1_272, %c4_273] : memref<6x16xf32, #tpu.memory_space<smem>>
    %624 = vector.broadcast %623 : f32 to vector<8x128xf32>
    %625 = arith.mulf %474, %624 : vector<8x128xf32>
    %c1_274 = arith.constant 1 : index
    %c5_275 = arith.constant 5 : index
    %626 = memref.load %arg4[%c1_274, %c5_275] : memref<6x16xf32, #tpu.memory_space<smem>>
    %627 = vector.broadcast %626 : f32 to vector<8x128xf32>
    %628 = arith.mulf %517, %627 : vector<8x128xf32>
    %629 = arith.addf %625, %628 : vector<8x128xf32>
    %c1_276 = arith.constant 1 : index
    %c6_277 = arith.constant 6 : index
    %630 = memref.load %arg4[%c1_276, %c6_277] : memref<6x16xf32, #tpu.memory_space<smem>>
    %631 = vector.broadcast %630 : f32 to vector<8x128xf32>
    %632 = arith.mulf %560, %631 : vector<8x128xf32>
    %633 = arith.addf %629, %632 : vector<8x128xf32>
    %c1_278 = arith.constant 1 : index
    %c7_279 = arith.constant 7 : index
    %634 = memref.load %arg4[%c1_278, %c7_279] : memref<6x16xf32, #tpu.memory_space<smem>>
    %635 = vector.broadcast %634 : f32 to vector<8x128xf32>
    %636 = arith.mulf %603, %635 : vector<8x128xf32>
    %637 = arith.addf %633, %636 : vector<8x128xf32>
    %c1_280 = arith.constant 1 : index
    %c1_281 = arith.constant 1 : index
    %638 = memref.load %arg5[%c1_280, %c1_281] : memref<6x4xf32, #tpu.memory_space<smem>>
    %639 = vector.broadcast %638 : f32 to vector<8x128xf32>
    %640 = arith.addf %637, %639 : vector<8x128xf32>
    %641 = arith.addf %640, %425 : vector<8x128xf32>
    %c1_282 = arith.constant 1 : index
    %c8_283 = arith.constant 8 : index
    %642 = memref.load %arg4[%c1_282, %c8_283] : memref<6x16xf32, #tpu.memory_space<smem>>
    %643 = vector.broadcast %642 : f32 to vector<8x128xf32>
    %644 = arith.mulf %474, %643 : vector<8x128xf32>
    %c1_284 = arith.constant 1 : index
    %c9_285 = arith.constant 9 : index
    %645 = memref.load %arg4[%c1_284, %c9_285] : memref<6x16xf32, #tpu.memory_space<smem>>
    %646 = vector.broadcast %645 : f32 to vector<8x128xf32>
    %647 = arith.mulf %517, %646 : vector<8x128xf32>
    %648 = arith.addf %644, %647 : vector<8x128xf32>
    %c1_286 = arith.constant 1 : index
    %c10_287 = arith.constant 10 : index
    %649 = memref.load %arg4[%c1_286, %c10_287] : memref<6x16xf32, #tpu.memory_space<smem>>
    %650 = vector.broadcast %649 : f32 to vector<8x128xf32>
    %651 = arith.mulf %560, %650 : vector<8x128xf32>
    %652 = arith.addf %648, %651 : vector<8x128xf32>
    %c1_288 = arith.constant 1 : index
    %c11_289 = arith.constant 11 : index
    %653 = memref.load %arg4[%c1_288, %c11_289] : memref<6x16xf32, #tpu.memory_space<smem>>
    %654 = vector.broadcast %653 : f32 to vector<8x128xf32>
    %655 = arith.mulf %603, %654 : vector<8x128xf32>
    %656 = arith.addf %652, %655 : vector<8x128xf32>
    %c1_290 = arith.constant 1 : index
    %c2_291 = arith.constant 2 : index
    %657 = memref.load %arg5[%c1_290, %c2_291] : memref<6x4xf32, #tpu.memory_space<smem>>
    %658 = vector.broadcast %657 : f32 to vector<8x128xf32>
    %659 = arith.addf %656, %658 : vector<8x128xf32>
    %660 = arith.addf %659, %428 : vector<8x128xf32>
    %c1_292 = arith.constant 1 : index
    %c12_293 = arith.constant 12 : index
    %661 = memref.load %arg4[%c1_292, %c12_293] : memref<6x16xf32, #tpu.memory_space<smem>>
    %662 = vector.broadcast %661 : f32 to vector<8x128xf32>
    %663 = arith.mulf %474, %662 : vector<8x128xf32>
    %c1_294 = arith.constant 1 : index
    %c13_295 = arith.constant 13 : index
    %664 = memref.load %arg4[%c1_294, %c13_295] : memref<6x16xf32, #tpu.memory_space<smem>>
    %665 = vector.broadcast %664 : f32 to vector<8x128xf32>
    %666 = arith.mulf %517, %665 : vector<8x128xf32>
    %667 = arith.addf %663, %666 : vector<8x128xf32>
    %c1_296 = arith.constant 1 : index
    %c14_297 = arith.constant 14 : index
    %668 = memref.load %arg4[%c1_296, %c14_297] : memref<6x16xf32, #tpu.memory_space<smem>>
    %669 = vector.broadcast %668 : f32 to vector<8x128xf32>
    %670 = arith.mulf %560, %669 : vector<8x128xf32>
    %671 = arith.addf %667, %670 : vector<8x128xf32>
    %c1_298 = arith.constant 1 : index
    %c15_299 = arith.constant 15 : index
    %672 = memref.load %arg4[%c1_298, %c15_299] : memref<6x16xf32, #tpu.memory_space<smem>>
    %673 = vector.broadcast %672 : f32 to vector<8x128xf32>
    %674 = arith.mulf %603, %673 : vector<8x128xf32>
    %675 = arith.addf %671, %674 : vector<8x128xf32>
    %c1_300 = arith.constant 1 : index
    %c3_301 = arith.constant 3 : index
    %676 = memref.load %arg5[%c1_300, %c3_301] : memref<6x4xf32, #tpu.memory_space<smem>>
    %677 = vector.broadcast %676 : f32 to vector<8x128xf32>
    %678 = arith.addf %675, %677 : vector<8x128xf32>
    %679 = arith.addf %678, %431 : vector<8x128xf32>
    %680 = vector.extract_strided_slice %474 {offsets = [0, 29], sizes = [8, 16], strides = [1, 1]} : vector<8x128xf32> to vector<8x16xf32>
    %681 = vector.extract_strided_slice %517 {offsets = [0, 29], sizes = [8, 16], strides = [1, 1]} : vector<8x128xf32> to vector<8x16xf32>
    %682 = vector.extract_strided_slice %560 {offsets = [0, 29], sizes = [8, 16], strides = [1, 1]} : vector<8x128xf32> to vector<8x16xf32>
    %683 = vector.extract_strided_slice %603 {offsets = [0, 29], sizes = [8, 16], strides = [1, 1]} : vector<8x128xf32> to vector<8x16xf32>
    %c1_302 = arith.constant 1 : index
    %c0_303 = arith.constant 0 : index
    %684 = memref.load %arg6[%c1_302, %c0_303] : memref<6x32xf32, #tpu.memory_space<smem>>
    %685 = vector.broadcast %684 : f32 to vector<8x16xf32>
    %686 = arith.mulf %680, %685 : vector<8x16xf32>
    %c1_304 = arith.constant 1 : index
    %c1_305 = arith.constant 1 : index
    %687 = memref.load %arg6[%c1_304, %c1_305] : memref<6x32xf32, #tpu.memory_space<smem>>
    %688 = vector.broadcast %687 : f32 to vector<8x16xf32>
    %689 = arith.mulf %681, %688 : vector<8x16xf32>
    %690 = arith.addf %686, %689 : vector<8x16xf32>
    %c1_306 = arith.constant 1 : index
    %c2_307 = arith.constant 2 : index
    %691 = memref.load %arg6[%c1_306, %c2_307] : memref<6x32xf32, #tpu.memory_space<smem>>
    %692 = vector.broadcast %691 : f32 to vector<8x16xf32>
    %693 = arith.mulf %682, %692 : vector<8x16xf32>
    %694 = arith.addf %690, %693 : vector<8x16xf32>
    %c1_308 = arith.constant 1 : index
    %c3_309 = arith.constant 3 : index
    %695 = memref.load %arg6[%c1_308, %c3_309] : memref<6x32xf32, #tpu.memory_space<smem>>
    %696 = vector.broadcast %695 : f32 to vector<8x16xf32>
    %697 = arith.mulf %683, %696 : vector<8x16xf32>
    %698 = arith.addf %694, %697 : vector<8x16xf32>
    %c1_310 = arith.constant 1 : index
    %c0_311 = arith.constant 0 : index
    %699 = memref.load %arg7[%c1_310, %c0_311] : memref<6x8xf32, #tpu.memory_space<smem>>
    %700 = vector.broadcast %699 : f32 to vector<8x16xf32>
    %701 = arith.addf %698, %700 : vector<8x16xf32>
    %c1_312 = arith.constant 1 : index
    %c4_313 = arith.constant 4 : index
    %702 = memref.load %arg6[%c1_312, %c4_313] : memref<6x32xf32, #tpu.memory_space<smem>>
    %703 = vector.broadcast %702 : f32 to vector<8x16xf32>
    %704 = arith.mulf %680, %703 : vector<8x16xf32>
    %c1_314 = arith.constant 1 : index
    %c5_315 = arith.constant 5 : index
    %705 = memref.load %arg6[%c1_314, %c5_315] : memref<6x32xf32, #tpu.memory_space<smem>>
    %706 = vector.broadcast %705 : f32 to vector<8x16xf32>
    %707 = arith.mulf %681, %706 : vector<8x16xf32>
    %708 = arith.addf %704, %707 : vector<8x16xf32>
    %c1_316 = arith.constant 1 : index
    %c6_317 = arith.constant 6 : index
    %709 = memref.load %arg6[%c1_316, %c6_317] : memref<6x32xf32, #tpu.memory_space<smem>>
    %710 = vector.broadcast %709 : f32 to vector<8x16xf32>
    %711 = arith.mulf %682, %710 : vector<8x16xf32>
    %712 = arith.addf %708, %711 : vector<8x16xf32>
    %c1_318 = arith.constant 1 : index
    %c7_319 = arith.constant 7 : index
    %713 = memref.load %arg6[%c1_318, %c7_319] : memref<6x32xf32, #tpu.memory_space<smem>>
    %714 = vector.broadcast %713 : f32 to vector<8x16xf32>
    %715 = arith.mulf %683, %714 : vector<8x16xf32>
    %716 = arith.addf %712, %715 : vector<8x16xf32>
    %c1_320 = arith.constant 1 : index
    %c1_321 = arith.constant 1 : index
    %717 = memref.load %arg7[%c1_320, %c1_321] : memref<6x8xf32, #tpu.memory_space<smem>>
    %718 = vector.broadcast %717 : f32 to vector<8x16xf32>
    %719 = arith.addf %716, %718 : vector<8x16xf32>
    %c1_322 = arith.constant 1 : index
    %c8_323 = arith.constant 8 : index
    %720 = memref.load %arg6[%c1_322, %c8_323] : memref<6x32xf32, #tpu.memory_space<smem>>
    %721 = vector.broadcast %720 : f32 to vector<8x16xf32>
    %722 = arith.mulf %680, %721 : vector<8x16xf32>
    %c1_324 = arith.constant 1 : index
    %c9_325 = arith.constant 9 : index
    %723 = memref.load %arg6[%c1_324, %c9_325] : memref<6x32xf32, #tpu.memory_space<smem>>
    %724 = vector.broadcast %723 : f32 to vector<8x16xf32>
    %725 = arith.mulf %681, %724 : vector<8x16xf32>
    %726 = arith.addf %722, %725 : vector<8x16xf32>
    %c1_326 = arith.constant 1 : index
    %c10_327 = arith.constant 10 : index
    %727 = memref.load %arg6[%c1_326, %c10_327] : memref<6x32xf32, #tpu.memory_space<smem>>
    %728 = vector.broadcast %727 : f32 to vector<8x16xf32>
    %729 = arith.mulf %682, %728 : vector<8x16xf32>
    %730 = arith.addf %726, %729 : vector<8x16xf32>
    %c1_328 = arith.constant 1 : index
    %c11_329 = arith.constant 11 : index
    %731 = memref.load %arg6[%c1_328, %c11_329] : memref<6x32xf32, #tpu.memory_space<smem>>
    %732 = vector.broadcast %731 : f32 to vector<8x16xf32>
    %733 = arith.mulf %683, %732 : vector<8x16xf32>
    %734 = arith.addf %730, %733 : vector<8x16xf32>
    %c1_330 = arith.constant 1 : index
    %c2_331 = arith.constant 2 : index
    %735 = memref.load %arg7[%c1_330, %c2_331] : memref<6x8xf32, #tpu.memory_space<smem>>
    %736 = vector.broadcast %735 : f32 to vector<8x16xf32>
    %737 = arith.addf %734, %736 : vector<8x16xf32>
    %c1_332 = arith.constant 1 : index
    %c12_333 = arith.constant 12 : index
    %738 = memref.load %arg6[%c1_332, %c12_333] : memref<6x32xf32, #tpu.memory_space<smem>>
    %739 = vector.broadcast %738 : f32 to vector<8x16xf32>
    %740 = arith.mulf %680, %739 : vector<8x16xf32>
    %c1_334 = arith.constant 1 : index
    %c13_335 = arith.constant 13 : index
    %741 = memref.load %arg6[%c1_334, %c13_335] : memref<6x32xf32, #tpu.memory_space<smem>>
    %742 = vector.broadcast %741 : f32 to vector<8x16xf32>
    %743 = arith.mulf %681, %742 : vector<8x16xf32>
    %744 = arith.addf %740, %743 : vector<8x16xf32>
    %c1_336 = arith.constant 1 : index
    %c14_337 = arith.constant 14 : index
    %745 = memref.load %arg6[%c1_336, %c14_337] : memref<6x32xf32, #tpu.memory_space<smem>>
    %746 = vector.broadcast %745 : f32 to vector<8x16xf32>
    %747 = arith.mulf %682, %746 : vector<8x16xf32>
    %748 = arith.addf %744, %747 : vector<8x16xf32>
    %c1_338 = arith.constant 1 : index
    %c15_339 = arith.constant 15 : index
    %749 = memref.load %arg6[%c1_338, %c15_339] : memref<6x32xf32, #tpu.memory_space<smem>>
    %750 = vector.broadcast %749 : f32 to vector<8x16xf32>
    %751 = arith.mulf %683, %750 : vector<8x16xf32>
    %752 = arith.addf %748, %751 : vector<8x16xf32>
    %c1_340 = arith.constant 1 : index
    %c3_341 = arith.constant 3 : index
    %753 = memref.load %arg7[%c1_340, %c3_341] : memref<6x8xf32, #tpu.memory_space<smem>>
    %754 = vector.broadcast %753 : f32 to vector<8x16xf32>
    %755 = arith.addf %752, %754 : vector<8x16xf32>
    %c1_342 = arith.constant 1 : index
    %c16_343 = arith.constant 16 : index
    %756 = memref.load %arg6[%c1_342, %c16_343] : memref<6x32xf32, #tpu.memory_space<smem>>
    %757 = vector.broadcast %756 : f32 to vector<8x16xf32>
    %758 = arith.mulf %680, %757 : vector<8x16xf32>
    %c1_344 = arith.constant 1 : index
    %c17_345 = arith.constant 17 : index
    %759 = memref.load %arg6[%c1_344, %c17_345] : memref<6x32xf32, #tpu.memory_space<smem>>
    %760 = vector.broadcast %759 : f32 to vector<8x16xf32>
    %761 = arith.mulf %681, %760 : vector<8x16xf32>
    %762 = arith.addf %758, %761 : vector<8x16xf32>
    %c1_346 = arith.constant 1 : index
    %c18_347 = arith.constant 18 : index
    %763 = memref.load %arg6[%c1_346, %c18_347] : memref<6x32xf32, #tpu.memory_space<smem>>
    %764 = vector.broadcast %763 : f32 to vector<8x16xf32>
    %765 = arith.mulf %682, %764 : vector<8x16xf32>
    %766 = arith.addf %762, %765 : vector<8x16xf32>
    %c1_348 = arith.constant 1 : index
    %c19_349 = arith.constant 19 : index
    %767 = memref.load %arg6[%c1_348, %c19_349] : memref<6x32xf32, #tpu.memory_space<smem>>
    %768 = vector.broadcast %767 : f32 to vector<8x16xf32>
    %769 = arith.mulf %683, %768 : vector<8x16xf32>
    %770 = arith.addf %766, %769 : vector<8x16xf32>
    %c1_350 = arith.constant 1 : index
    %c4_351 = arith.constant 4 : index
    %771 = memref.load %arg7[%c1_350, %c4_351] : memref<6x8xf32, #tpu.memory_space<smem>>
    %772 = vector.broadcast %771 : f32 to vector<8x16xf32>
    %773 = arith.addf %770, %772 : vector<8x16xf32>
    %c1_352 = arith.constant 1 : index
    %c20_353 = arith.constant 20 : index
    %774 = memref.load %arg6[%c1_352, %c20_353] : memref<6x32xf32, #tpu.memory_space<smem>>
    %775 = vector.broadcast %774 : f32 to vector<8x16xf32>
    %776 = arith.mulf %680, %775 : vector<8x16xf32>
    %c1_354 = arith.constant 1 : index
    %c21_355 = arith.constant 21 : index
    %777 = memref.load %arg6[%c1_354, %c21_355] : memref<6x32xf32, #tpu.memory_space<smem>>
    %778 = vector.broadcast %777 : f32 to vector<8x16xf32>
    %779 = arith.mulf %681, %778 : vector<8x16xf32>
    %780 = arith.addf %776, %779 : vector<8x16xf32>
    %c1_356 = arith.constant 1 : index
    %c22_357 = arith.constant 22 : index
    %781 = memref.load %arg6[%c1_356, %c22_357] : memref<6x32xf32, #tpu.memory_space<smem>>
    %782 = vector.broadcast %781 : f32 to vector<8x16xf32>
    %783 = arith.mulf %682, %782 : vector<8x16xf32>
    %784 = arith.addf %780, %783 : vector<8x16xf32>
    %c1_358 = arith.constant 1 : index
    %c23_359 = arith.constant 23 : index
    %785 = memref.load %arg6[%c1_358, %c23_359] : memref<6x32xf32, #tpu.memory_space<smem>>
    %786 = vector.broadcast %785 : f32 to vector<8x16xf32>
    %787 = arith.mulf %683, %786 : vector<8x16xf32>
    %788 = arith.addf %784, %787 : vector<8x16xf32>
    %c1_360 = arith.constant 1 : index
    %c5_361 = arith.constant 5 : index
    %789 = memref.load %arg7[%c1_360, %c5_361] : memref<6x8xf32, #tpu.memory_space<smem>>
    %790 = vector.broadcast %789 : f32 to vector<8x16xf32>
    %791 = arith.addf %788, %790 : vector<8x16xf32>
    %c1_362 = arith.constant 1 : index
    %c24_363 = arith.constant 24 : index
    %792 = memref.load %arg6[%c1_362, %c24_363] : memref<6x32xf32, #tpu.memory_space<smem>>
    %793 = vector.broadcast %792 : f32 to vector<8x16xf32>
    %794 = arith.mulf %680, %793 : vector<8x16xf32>
    %c1_364 = arith.constant 1 : index
    %c25_365 = arith.constant 25 : index
    %795 = memref.load %arg6[%c1_364, %c25_365] : memref<6x32xf32, #tpu.memory_space<smem>>
    %796 = vector.broadcast %795 : f32 to vector<8x16xf32>
    %797 = arith.mulf %681, %796 : vector<8x16xf32>
    %798 = arith.addf %794, %797 : vector<8x16xf32>
    %c1_366 = arith.constant 1 : index
    %c26_367 = arith.constant 26 : index
    %799 = memref.load %arg6[%c1_366, %c26_367] : memref<6x32xf32, #tpu.memory_space<smem>>
    %800 = vector.broadcast %799 : f32 to vector<8x16xf32>
    %801 = arith.mulf %682, %800 : vector<8x16xf32>
    %802 = arith.addf %798, %801 : vector<8x16xf32>
    %c1_368 = arith.constant 1 : index
    %c27_369 = arith.constant 27 : index
    %803 = memref.load %arg6[%c1_368, %c27_369] : memref<6x32xf32, #tpu.memory_space<smem>>
    %804 = vector.broadcast %803 : f32 to vector<8x16xf32>
    %805 = arith.mulf %683, %804 : vector<8x16xf32>
    %806 = arith.addf %802, %805 : vector<8x16xf32>
    %c1_370 = arith.constant 1 : index
    %c6_371 = arith.constant 6 : index
    %807 = memref.load %arg7[%c1_370, %c6_371] : memref<6x8xf32, #tpu.memory_space<smem>>
    %808 = vector.broadcast %807 : f32 to vector<8x16xf32>
    %809 = arith.addf %806, %808 : vector<8x16xf32>
    %c1_372 = arith.constant 1 : index
    %c28_373 = arith.constant 28 : index
    %810 = memref.load %arg6[%c1_372, %c28_373] : memref<6x32xf32, #tpu.memory_space<smem>>
    %811 = vector.broadcast %810 : f32 to vector<8x16xf32>
    %812 = arith.mulf %680, %811 : vector<8x16xf32>
    %c1_374 = arith.constant 1 : index
    %c29_375 = arith.constant 29 : index
    %813 = memref.load %arg6[%c1_374, %c29_375] : memref<6x32xf32, #tpu.memory_space<smem>>
    %814 = vector.broadcast %813 : f32 to vector<8x16xf32>
    %815 = arith.mulf %681, %814 : vector<8x16xf32>
    %816 = arith.addf %812, %815 : vector<8x16xf32>
    %c1_376 = arith.constant 1 : index
    %c30_377 = arith.constant 30 : index
    %817 = memref.load %arg6[%c1_376, %c30_377] : memref<6x32xf32, #tpu.memory_space<smem>>
    %818 = vector.broadcast %817 : f32 to vector<8x16xf32>
    %819 = arith.mulf %682, %818 : vector<8x16xf32>
    %820 = arith.addf %816, %819 : vector<8x16xf32>
    %c1_378 = arith.constant 1 : index
    %c31_379 = arith.constant 31 : index
    %821 = memref.load %arg6[%c1_378, %c31_379] : memref<6x32xf32, #tpu.memory_space<smem>>
    %822 = vector.broadcast %821 : f32 to vector<8x16xf32>
    %823 = arith.mulf %683, %822 : vector<8x16xf32>
    %824 = arith.addf %820, %823 : vector<8x16xf32>
    %c1_380 = arith.constant 1 : index
    %c7_381 = arith.constant 7 : index
    %825 = memref.load %arg7[%c1_380, %c7_381] : memref<6x8xf32, #tpu.memory_space<smem>>
    %826 = vector.broadcast %825 : f32 to vector<8x16xf32>
    %827 = arith.addf %824, %826 : vector<8x16xf32>
    %828 = tpu.concatenate %701, %719, %737, %755, %773, %791, %809, %827 in 1 : vector<8x16xf32>, vector<8x16xf32>, vector<8x16xf32>, vector<8x16xf32>, vector<8x16xf32>, vector<8x16xf32>, vector<8x16xf32>, vector<8x16xf32> -> vector<8x128xf32>
    %c1_382 = arith.constant 1 : index
    %c0_383 = arith.constant 0 : index
    %c0_384 = arith.constant 0 : index
    %829 = vector.load %arg8[%c1_382, %c0_383, %c0_384] : memref<6x8x128xf32, #tpu.memory_space<vmem>>, vector<1x8x128xf32>
    %830 = vector.shape_cast %829 : vector<1x8x128xf32> to vector<8x128xf32>
    %831 = vector.shape_cast %828 : vector<8x128xf32> to vector<1x8x128xf32>
    tpu.vector_store %arg8[%c1_382, %c0_383, %c0_384], %831 {strides = array<i32>} : memref<6x8x128xf32, #tpu.memory_space<vmem>>, vector<1x8x128xf32>,
    %832 = vector.extract_strided_slice %622 {offsets = [0, 4], sizes = [8, 124], strides = [1, 1]} : vector<8x128xf32> to vector<8x124xf32>
    %833 = vector.extract_strided_slice %622 {offsets = [0, 0], sizes = [8, 4], strides = [1, 1]} : vector<8x128xf32> to vector<8x4xf32>
    %834 = tpu.concatenate %832, %833 in 1 : vector<8x124xf32>, vector<8x4xf32> -> vector<8x128xf32>
    %835 = vector.extract_strided_slice %641 {offsets = [0, 4], sizes = [8, 124], strides = [1, 1]} : vector<8x128xf32> to vector<8x124xf32>
    %836 = vector.extract_strided_slice %641 {offsets = [0, 0], sizes = [8, 4], strides = [1, 1]} : vector<8x128xf32> to vector<8x4xf32>
    %837 = tpu.concatenate %835, %836 in 1 : vector<8x124xf32>, vector<8x4xf32> -> vector<8x128xf32>
    %838 = vector.extract_strided_slice %660 {offsets = [0, 4], sizes = [8, 124], strides = [1, 1]} : vector<8x128xf32> to vector<8x124xf32>
    %839 = vector.extract_strided_slice %660 {offsets = [0, 0], sizes = [8, 4], strides = [1, 1]} : vector<8x128xf32> to vector<8x4xf32>
    %840 = tpu.concatenate %838, %839 in 1 : vector<8x124xf32>, vector<8x4xf32> -> vector<8x128xf32>
    %841 = vector.extract_strided_slice %679 {offsets = [0, 4], sizes = [8, 124], strides = [1, 1]} : vector<8x128xf32> to vector<8x124xf32>
    %842 = vector.extract_strided_slice %679 {offsets = [0, 0], sizes = [8, 4], strides = [1, 1]} : vector<8x128xf32> to vector<8x4xf32>
    %843 = tpu.concatenate %841, %842 in 1 : vector<8x124xf32>, vector<8x4xf32> -> vector<8x128xf32>
    %c2_385 = arith.constant 2 : index
    %c0_386 = arith.constant 0 : index
    %844 = memref.load %arg2[%c2_385, %c0_386] : memref<6x16xf32, #tpu.memory_space<smem>>
    %845 = vector.broadcast %844 : f32 to vector<8x128xf32>
    %846 = arith.mulf %622, %845 : vector<8x128xf32>
    %c2_387 = arith.constant 2 : index
    %c0_388 = arith.constant 0 : index
    %847 = memref.load %arg3[%c2_387, %c0_388] : memref<6x16xf32, #tpu.memory_space<smem>>
    %848 = vector.broadcast %847 : f32 to vector<8x128xf32>
    %849 = arith.mulf %834, %848 : vector<8x128xf32>
    %850 = arith.addf %846, %849 : vector<8x128xf32>
    %c2_389 = arith.constant 2 : index
    %c1_390 = arith.constant 1 : index
    %851 = memref.load %arg2[%c2_389, %c1_390] : memref<6x16xf32, #tpu.memory_space<smem>>
    %852 = vector.broadcast %851 : f32 to vector<8x128xf32>
    %853 = arith.mulf %641, %852 : vector<8x128xf32>
    %854 = arith.addf %850, %853 : vector<8x128xf32>
    %c2_391 = arith.constant 2 : index
    %c1_392 = arith.constant 1 : index
    %855 = memref.load %arg3[%c2_391, %c1_392] : memref<6x16xf32, #tpu.memory_space<smem>>
    %856 = vector.broadcast %855 : f32 to vector<8x128xf32>
    %857 = arith.mulf %837, %856 : vector<8x128xf32>
    %858 = arith.addf %854, %857 : vector<8x128xf32>
    %c2_393 = arith.constant 2 : index
    %c2_394 = arith.constant 2 : index
    %859 = memref.load %arg2[%c2_393, %c2_394] : memref<6x16xf32, #tpu.memory_space<smem>>
    %860 = vector.broadcast %859 : f32 to vector<8x128xf32>
    %861 = arith.mulf %660, %860 : vector<8x128xf32>
    %862 = arith.addf %858, %861 : vector<8x128xf32>
    %c2_395 = arith.constant 2 : index
    %c2_396 = arith.constant 2 : index
    %863 = memref.load %arg3[%c2_395, %c2_396] : memref<6x16xf32, #tpu.memory_space<smem>>
    %864 = vector.broadcast %863 : f32 to vector<8x128xf32>
    %865 = arith.mulf %840, %864 : vector<8x128xf32>
    %866 = arith.addf %862, %865 : vector<8x128xf32>
    %c2_397 = arith.constant 2 : index
    %c3_398 = arith.constant 3 : index
    %867 = memref.load %arg2[%c2_397, %c3_398] : memref<6x16xf32, #tpu.memory_space<smem>>
    %868 = vector.broadcast %867 : f32 to vector<8x128xf32>
    %869 = arith.mulf %679, %868 : vector<8x128xf32>
    %870 = arith.addf %866, %869 : vector<8x128xf32>
    %c2_399 = arith.constant 2 : index
    %c3_400 = arith.constant 3 : index
    %871 = memref.load %arg3[%c2_399, %c3_400] : memref<6x16xf32, #tpu.memory_space<smem>>
    %872 = vector.broadcast %871 : f32 to vector<8x128xf32>
    %873 = arith.mulf %843, %872 : vector<8x128xf32>
    %874 = arith.addf %870, %873 : vector<8x128xf32>
    %cst_401 = arith.constant -3.000000e+01 : f32
    %875 = vector.broadcast %cst_401 : f32 to vector<8x128xf32>
    %876 = arith.maximumf %874, %875 : vector<8x128xf32>
    %cst_402 = arith.constant 0.000000e+00 : f32
    %877 = vector.broadcast %cst_402 : f32 to vector<8x128xf32>
    %878 = arith.subf %877, %876 : vector<8x128xf32>
    %879 = math.exp %878 : vector<8x128xf32>
    %cst_403 = arith.constant 1.000000e+00 : f32
    %880 = vector.broadcast %cst_403 : f32 to vector<8x128xf32>
    %881 = arith.subf %880, %879 : vector<8x128xf32>
    %882 = arith.mulf %879, %879 : vector<8x128xf32>
    %cst_404 = arith.constant 1.000000e+00 : f32
    %883 = vector.broadcast %cst_404 : f32 to vector<8x128xf32>
    %884 = arith.addf %883, %882 : vector<8x128xf32>
    %885 = tpu.reciprocal %884 : vector<8x128xf32> -> vector<8x128xf32>
    %886 = arith.mulf %881, %885 : vector<8x128xf32>
    %c2_405 = arith.constant 2 : index
    %c4_406 = arith.constant 4 : index
    %887 = memref.load %arg2[%c2_405, %c4_406] : memref<6x16xf32, #tpu.memory_space<smem>>
    %888 = vector.broadcast %887 : f32 to vector<8x128xf32>
    %889 = arith.mulf %622, %888 : vector<8x128xf32>
    %c2_407 = arith.constant 2 : index
    %c4_408 = arith.constant 4 : index
    %890 = memref.load %arg3[%c2_407, %c4_408] : memref<6x16xf32, #tpu.memory_space<smem>>
    %891 = vector.broadcast %890 : f32 to vector<8x128xf32>
    %892 = arith.mulf %834, %891 : vector<8x128xf32>
    %893 = arith.addf %889, %892 : vector<8x128xf32>
    %c2_409 = arith.constant 2 : index
    %c5_410 = arith.constant 5 : index
    %894 = memref.load %arg2[%c2_409, %c5_410] : memref<6x16xf32, #tpu.memory_space<smem>>
    %895 = vector.broadcast %894 : f32 to vector<8x128xf32>
    %896 = arith.mulf %641, %895 : vector<8x128xf32>
    %897 = arith.addf %893, %896 : vector<8x128xf32>
    %c2_411 = arith.constant 2 : index
    %c5_412 = arith.constant 5 : index
    %898 = memref.load %arg3[%c2_411, %c5_412] : memref<6x16xf32, #tpu.memory_space<smem>>
    %899 = vector.broadcast %898 : f32 to vector<8x128xf32>
    %900 = arith.mulf %837, %899 : vector<8x128xf32>
    %901 = arith.addf %897, %900 : vector<8x128xf32>
    %c2_413 = arith.constant 2 : index
    %c6_414 = arith.constant 6 : index
    %902 = memref.load %arg2[%c2_413, %c6_414] : memref<6x16xf32, #tpu.memory_space<smem>>
    %903 = vector.broadcast %902 : f32 to vector<8x128xf32>
    %904 = arith.mulf %660, %903 : vector<8x128xf32>
    %905 = arith.addf %901, %904 : vector<8x128xf32>
    %c2_415 = arith.constant 2 : index
    %c6_416 = arith.constant 6 : index
    %906 = memref.load %arg3[%c2_415, %c6_416] : memref<6x16xf32, #tpu.memory_space<smem>>
    %907 = vector.broadcast %906 : f32 to vector<8x128xf32>
    %908 = arith.mulf %840, %907 : vector<8x128xf32>
    %909 = arith.addf %905, %908 : vector<8x128xf32>
    %c2_417 = arith.constant 2 : index
    %c7_418 = arith.constant 7 : index
    %910 = memref.load %arg2[%c2_417, %c7_418] : memref<6x16xf32, #tpu.memory_space<smem>>
    %911 = vector.broadcast %910 : f32 to vector<8x128xf32>
    %912 = arith.mulf %679, %911 : vector<8x128xf32>
    %913 = arith.addf %909, %912 : vector<8x128xf32>
    %c2_419 = arith.constant 2 : index
    %c7_420 = arith.constant 7 : index
    %914 = memref.load %arg3[%c2_419, %c7_420] : memref<6x16xf32, #tpu.memory_space<smem>>
    %915 = vector.broadcast %914 : f32 to vector<8x128xf32>
    %916 = arith.mulf %843, %915 : vector<8x128xf32>
    %917 = arith.addf %913, %916 : vector<8x128xf32>
    %cst_421 = arith.constant -3.000000e+01 : f32
    %918 = vector.broadcast %cst_421 : f32 to vector<8x128xf32>
    %919 = arith.maximumf %917, %918 : vector<8x128xf32>
    %cst_422 = arith.constant 0.000000e+00 : f32
    %920 = vector.broadcast %cst_422 : f32 to vector<8x128xf32>
    %921 = arith.subf %920, %919 : vector<8x128xf32>
    %922 = math.exp %921 : vector<8x128xf32>
    %cst_423 = arith.constant 1.000000e+00 : f32
    %923 = vector.broadcast %cst_423 : f32 to vector<8x128xf32>
    %924 = arith.subf %923, %922 : vector<8x128xf32>
    %925 = arith.mulf %922, %922 : vector<8x128xf32>
    %cst_424 = arith.constant 1.000000e+00 : f32
    %926 = vector.broadcast %cst_424 : f32 to vector<8x128xf32>
    %927 = arith.addf %926, %925 : vector<8x128xf32>
    %928 = tpu.reciprocal %927 : vector<8x128xf32> -> vector<8x128xf32>
    %929 = arith.mulf %924, %928 : vector<8x128xf32>
    %c2_425 = arith.constant 2 : index
    %c8_426 = arith.constant 8 : index
    %930 = memref.load %arg2[%c2_425, %c8_426] : memref<6x16xf32, #tpu.memory_space<smem>>
    %931 = vector.broadcast %930 : f32 to vector<8x128xf32>
    %932 = arith.mulf %622, %931 : vector<8x128xf32>
    %c2_427 = arith.constant 2 : index
    %c8_428 = arith.constant 8 : index
    %933 = memref.load %arg3[%c2_427, %c8_428] : memref<6x16xf32, #tpu.memory_space<smem>>
    %934 = vector.broadcast %933 : f32 to vector<8x128xf32>
    %935 = arith.mulf %834, %934 : vector<8x128xf32>
    %936 = arith.addf %932, %935 : vector<8x128xf32>
    %c2_429 = arith.constant 2 : index
    %c9_430 = arith.constant 9 : index
    %937 = memref.load %arg2[%c2_429, %c9_430] : memref<6x16xf32, #tpu.memory_space<smem>>
    %938 = vector.broadcast %937 : f32 to vector<8x128xf32>
    %939 = arith.mulf %641, %938 : vector<8x128xf32>
    %940 = arith.addf %936, %939 : vector<8x128xf32>
    %c2_431 = arith.constant 2 : index
    %c9_432 = arith.constant 9 : index
    %941 = memref.load %arg3[%c2_431, %c9_432] : memref<6x16xf32, #tpu.memory_space<smem>>
    %942 = vector.broadcast %941 : f32 to vector<8x128xf32>
    %943 = arith.mulf %837, %942 : vector<8x128xf32>
    %944 = arith.addf %940, %943 : vector<8x128xf32>
    %c2_433 = arith.constant 2 : index
    %c10_434 = arith.constant 10 : index
    %945 = memref.load %arg2[%c2_433, %c10_434] : memref<6x16xf32, #tpu.memory_space<smem>>
    %946 = vector.broadcast %945 : f32 to vector<8x128xf32>
    %947 = arith.mulf %660, %946 : vector<8x128xf32>
    %948 = arith.addf %944, %947 : vector<8x128xf32>
    %c2_435 = arith.constant 2 : index
    %c10_436 = arith.constant 10 : index
    %949 = memref.load %arg3[%c2_435, %c10_436] : memref<6x16xf32, #tpu.memory_space<smem>>
    %950 = vector.broadcast %949 : f32 to vector<8x128xf32>
    %951 = arith.mulf %840, %950 : vector<8x128xf32>
    %952 = arith.addf %948, %951 : vector<8x128xf32>
    %c2_437 = arith.constant 2 : index
    %c11_438 = arith.constant 11 : index
    %953 = memref.load %arg2[%c2_437, %c11_438] : memref<6x16xf32, #tpu.memory_space<smem>>
    %954 = vector.broadcast %953 : f32 to vector<8x128xf32>
    %955 = arith.mulf %679, %954 : vector<8x128xf32>
    %956 = arith.addf %952, %955 : vector<8x128xf32>
    %c2_439 = arith.constant 2 : index
    %c11_440 = arith.constant 11 : index
    %957 = memref.load %arg3[%c2_439, %c11_440] : memref<6x16xf32, #tpu.memory_space<smem>>
    %958 = vector.broadcast %957 : f32 to vector<8x128xf32>
    %959 = arith.mulf %843, %958 : vector<8x128xf32>
    %960 = arith.addf %956, %959 : vector<8x128xf32>
    %cst_441 = arith.constant -3.000000e+01 : f32
    %961 = vector.broadcast %cst_441 : f32 to vector<8x128xf32>
    %962 = arith.maximumf %960, %961 : vector<8x128xf32>
    %cst_442 = arith.constant 0.000000e+00 : f32
    %963 = vector.broadcast %cst_442 : f32 to vector<8x128xf32>
    %964 = arith.subf %963, %962 : vector<8x128xf32>
    %965 = math.exp %964 : vector<8x128xf32>
    %cst_443 = arith.constant 1.000000e+00 : f32
    %966 = vector.broadcast %cst_443 : f32 to vector<8x128xf32>
    %967 = arith.subf %966, %965 : vector<8x128xf32>
    %968 = arith.mulf %965, %965 : vector<8x128xf32>
    %cst_444 = arith.constant 1.000000e+00 : f32
    %969 = vector.broadcast %cst_444 : f32 to vector<8x128xf32>
    %970 = arith.addf %969, %968 : vector<8x128xf32>
    %971 = tpu.reciprocal %970 : vector<8x128xf32> -> vector<8x128xf32>
    %972 = arith.mulf %967, %971 : vector<8x128xf32>
    %c2_445 = arith.constant 2 : index
    %c12_446 = arith.constant 12 : index
    %973 = memref.load %arg2[%c2_445, %c12_446] : memref<6x16xf32, #tpu.memory_space<smem>>
    %974 = vector.broadcast %973 : f32 to vector<8x128xf32>
    %975 = arith.mulf %622, %974 : vector<8x128xf32>
    %c2_447 = arith.constant 2 : index
    %c12_448 = arith.constant 12 : index
    %976 = memref.load %arg3[%c2_447, %c12_448] : memref<6x16xf32, #tpu.memory_space<smem>>
    %977 = vector.broadcast %976 : f32 to vector<8x128xf32>
    %978 = arith.mulf %834, %977 : vector<8x128xf32>
    %979 = arith.addf %975, %978 : vector<8x128xf32>
    %c2_449 = arith.constant 2 : index
    %c13_450 = arith.constant 13 : index
    %980 = memref.load %arg2[%c2_449, %c13_450] : memref<6x16xf32, #tpu.memory_space<smem>>
    %981 = vector.broadcast %980 : f32 to vector<8x128xf32>
    %982 = arith.mulf %641, %981 : vector<8x128xf32>
    %983 = arith.addf %979, %982 : vector<8x128xf32>
    %c2_451 = arith.constant 2 : index
    %c13_452 = arith.constant 13 : index
    %984 = memref.load %arg3[%c2_451, %c13_452] : memref<6x16xf32, #tpu.memory_space<smem>>
    %985 = vector.broadcast %984 : f32 to vector<8x128xf32>
    %986 = arith.mulf %837, %985 : vector<8x128xf32>
    %987 = arith.addf %983, %986 : vector<8x128xf32>
    %c2_453 = arith.constant 2 : index
    %c14_454 = arith.constant 14 : index
    %988 = memref.load %arg2[%c2_453, %c14_454] : memref<6x16xf32, #tpu.memory_space<smem>>
    %989 = vector.broadcast %988 : f32 to vector<8x128xf32>
    %990 = arith.mulf %660, %989 : vector<8x128xf32>
    %991 = arith.addf %987, %990 : vector<8x128xf32>
    %c2_455 = arith.constant 2 : index
    %c14_456 = arith.constant 14 : index
    %992 = memref.load %arg3[%c2_455, %c14_456] : memref<6x16xf32, #tpu.memory_space<smem>>
    %993 = vector.broadcast %992 : f32 to vector<8x128xf32>
    %994 = arith.mulf %840, %993 : vector<8x128xf32>
    %995 = arith.addf %991, %994 : vector<8x128xf32>
    %c2_457 = arith.constant 2 : index
    %c15_458 = arith.constant 15 : index
    %996 = memref.load %arg2[%c2_457, %c15_458] : memref<6x16xf32, #tpu.memory_space<smem>>
    %997 = vector.broadcast %996 : f32 to vector<8x128xf32>
    %998 = arith.mulf %679, %997 : vector<8x128xf32>
    %999 = arith.addf %995, %998 : vector<8x128xf32>
    %c2_459 = arith.constant 2 : index
    %c15_460 = arith.constant 15 : index
    %1000 = memref.load %arg3[%c2_459, %c15_460] : memref<6x16xf32, #tpu.memory_space<smem>>
    %1001 = vector.broadcast %1000 : f32 to vector<8x128xf32>
    %1002 = arith.mulf %843, %1001 : vector<8x128xf32>
    %1003 = arith.addf %999, %1002 : vector<8x128xf32>
    %cst_461 = arith.constant -3.000000e+01 : f32
    %1004 = vector.broadcast %cst_461 : f32 to vector<8x128xf32>
    %1005 = arith.maximumf %1003, %1004 : vector<8x128xf32>
    %cst_462 = arith.constant 0.000000e+00 : f32
    %1006 = vector.broadcast %cst_462 : f32 to vector<8x128xf32>
    %1007 = arith.subf %1006, %1005 : vector<8x128xf32>
    %1008 = math.exp %1007 : vector<8x128xf32>
    %cst_463 = arith.constant 1.000000e+00 : f32
    %1009 = vector.broadcast %cst_463 : f32 to vector<8x128xf32>
    %1010 = arith.subf %1009, %1008 : vector<8x128xf32>
    %1011 = arith.mulf %1008, %1008 : vector<8x128xf32>
    %cst_464 = arith.constant 1.000000e+00 : f32
    %1012 = vector.broadcast %cst_464 : f32 to vector<8x128xf32>
    %1013 = arith.addf %1012, %1011 : vector<8x128xf32>
    %1014 = tpu.reciprocal %1013 : vector<8x128xf32> -> vector<8x128xf32>
    %1015 = arith.mulf %1010, %1014 : vector<8x128xf32>
    %c2_465 = arith.constant 2 : index
    %c0_466 = arith.constant 0 : index
    %1016 = memref.load %arg4[%c2_465, %c0_466] : memref<6x16xf32, #tpu.memory_space<smem>>
    %1017 = vector.broadcast %1016 : f32 to vector<8x128xf32>
    %1018 = arith.mulf %886, %1017 : vector<8x128xf32>
    %c2_467 = arith.constant 2 : index
    %c1_468 = arith.constant 1 : index
    %1019 = memref.load %arg4[%c2_467, %c1_468] : memref<6x16xf32, #tpu.memory_space<smem>>
    %1020 = vector.broadcast %1019 : f32 to vector<8x128xf32>
    %1021 = arith.mulf %929, %1020 : vector<8x128xf32>
    %1022 = arith.addf %1018, %1021 : vector<8x128xf32>
    %c2_469 = arith.constant 2 : index
    %c2_470 = arith.constant 2 : index
    %1023 = memref.load %arg4[%c2_469, %c2_470] : memref<6x16xf32, #tpu.memory_space<smem>>
    %1024 = vector.broadcast %1023 : f32 to vector<8x128xf32>
    %1025 = arith.mulf %972, %1024 : vector<8x128xf32>
    %1026 = arith.addf %1022, %1025 : vector<8x128xf32>
    %c2_471 = arith.constant 2 : index
    %c3_472 = arith.constant 3 : index
    %1027 = memref.load %arg4[%c2_471, %c3_472] : memref<6x16xf32, #tpu.memory_space<smem>>
    %1028 = vector.broadcast %1027 : f32 to vector<8x128xf32>
    %1029 = arith.mulf %1015, %1028 : vector<8x128xf32>
    %1030 = arith.addf %1026, %1029 : vector<8x128xf32>
    %c2_473 = arith.constant 2 : index
    %c0_474 = arith.constant 0 : index
    %1031 = memref.load %arg5[%c2_473, %c0_474] : memref<6x4xf32, #tpu.memory_space<smem>>
    %1032 = vector.broadcast %1031 : f32 to vector<8x128xf32>
    %1033 = arith.addf %1030, %1032 : vector<8x128xf32>
    %1034 = arith.addf %1033, %834 : vector<8x128xf32>
    %c2_475 = arith.constant 2 : index
    %c4_476 = arith.constant 4 : index
    %1035 = memref.load %arg4[%c2_475, %c4_476] : memref<6x16xf32, #tpu.memory_space<smem>>
    %1036 = vector.broadcast %1035 : f32 to vector<8x128xf32>
    %1037 = arith.mulf %886, %1036 : vector<8x128xf32>
    %c2_477 = arith.constant 2 : index
    %c5_478 = arith.constant 5 : index
    %1038 = memref.load %arg4[%c2_477, %c5_478] : memref<6x16xf32, #tpu.memory_space<smem>>
    %1039 = vector.broadcast %1038 : f32 to vector<8x128xf32>
    %1040 = arith.mulf %929, %1039 : vector<8x128xf32>
    %1041 = arith.addf %1037, %1040 : vector<8x128xf32>
    %c2_479 = arith.constant 2 : index
    %c6_480 = arith.constant 6 : index
    %1042 = memref.load %arg4[%c2_479, %c6_480] : memref<6x16xf32, #tpu.memory_space<smem>>
    %1043 = vector.broadcast %1042 : f32 to vector<8x128xf32>
    %1044 = arith.mulf %972, %1043 : vector<8x128xf32>
    %1045 = arith.addf %1041, %1044 : vector<8x128xf32>
    %c2_481 = arith.constant 2 : index
    %c7_482 = arith.constant 7 : index
    %1046 = memref.load %arg4[%c2_481, %c7_482] : memref<6x16xf32, #tpu.memory_space<smem>>
    %1047 = vector.broadcast %1046 : f32 to vector<8x128xf32>
    %1048 = arith.mulf %1015, %1047 : vector<8x128xf32>
    %1049 = arith.addf %1045, %1048 : vector<8x128xf32>
    %c2_483 = arith.constant 2 : index
    %c1_484 = arith.constant 1 : index
    %1050 = memref.load %arg5[%c2_483, %c1_484] : memref<6x4xf32, #tpu.memory_space<smem>>
    %1051 = vector.broadcast %1050 : f32 to vector<8x128xf32>
    %1052 = arith.addf %1049, %1051 : vector<8x128xf32>
    %1053 = arith.addf %1052, %837 : vector<8x128xf32>
    %c2_485 = arith.constant 2 : index
    %c8_486 = arith.constant 8 : index
    %1054 = memref.load %arg4[%c2_485, %c8_486] : memref<6x16xf32, #tpu.memory_space<smem>>
    %1055 = vector.broadcast %1054 : f32 to vector<8x128xf32>
    %1056 = arith.mulf %886, %1055 : vector<8x128xf32>
    %c2_487 = arith.constant 2 : index
    %c9_488 = arith.constant 9 : index
    %1057 = memref.load %arg4[%c2_487, %c9_488] : memref<6x16xf32, #tpu.memory_space<smem>>
    %1058 = vector.broadcast %1057 : f32 to vector<8x128xf32>
    %1059 = arith.mulf %929, %1058 : vector<8x128xf32>
    %1060 = arith.addf %1056, %1059 : vector<8x128xf32>
    %c2_489 = arith.constant 2 : index
    %c10_490 = arith.constant 10 : index
    %1061 = memref.load %arg4[%c2_489, %c10_490] : memref<6x16xf32, #tpu.memory_space<smem>>
    %1062 = vector.broadcast %1061 : f32 to vector<8x128xf32>
    %1063 = arith.mulf %972, %1062 : vector<8x128xf32>
    %1064 = arith.addf %1060, %1063 : vector<8x128xf32>
    %c2_491 = arith.constant 2 : index
    %c11_492 = arith.constant 11 : index
    %1065 = memref.load %arg4[%c2_491, %c11_492] : memref<6x16xf32, #tpu.memory_space<smem>>
    %1066 = vector.broadcast %1065 : f32 to vector<8x128xf32>
    %1067 = arith.mulf %1015, %1066 : vector<8x128xf32>
    %1068 = arith.addf %1064, %1067 : vector<8x128xf32>
    %c2_493 = arith.constant 2 : index
    %c2_494 = arith.constant 2 : index
    %1069 = memref.load %arg5[%c2_493, %c2_494] : memref<6x4xf32, #tpu.memory_space<smem>>
    %1070 = vector.broadcast %1069 : f32 to vector<8x128xf32>
    %1071 = arith.addf %1068, %1070 : vector<8x128xf32>
    %1072 = arith.addf %1071, %840 : vector<8x128xf32>
    %c2_495 = arith.constant 2 : index
    %c12_496 = arith.constant 12 : index
    %1073 = memref.load %arg4[%c2_495, %c12_496] : memref<6x16xf32, #tpu.memory_space<smem>>
    %1074 = vector.broadcast %1073 : f32 to vector<8x128xf32>
    %1075 = arith.mulf %886, %1074 : vector<8x128xf32>
    %c2_497 = arith.constant 2 : index
    %c13_498 = arith.constant 13 : index
    %1076 = memref.load %arg4[%c2_497, %c13_498] : memref<6x16xf32, #tpu.memory_space<smem>>
    %1077 = vector.broadcast %1076 : f32 to vector<8x128xf32>
    %1078 = arith.mulf %929, %1077 : vector<8x128xf32>
    %1079 = arith.addf %1075, %1078 : vector<8x128xf32>
    %c2_499 = arith.constant 2 : index
    %c14_500 = arith.constant 14 : index
    %1080 = memref.load %arg4[%c2_499, %c14_500] : memref<6x16xf32, #tpu.memory_space<smem>>
    %1081 = vector.broadcast %1080 : f32 to vector<8x128xf32>
    %1082 = arith.mulf %972, %1081 : vector<8x128xf32>
    %1083 = arith.addf %1079, %1082 : vector<8x128xf32>
    %c2_501 = arith.constant 2 : index
    %c15_502 = arith.constant 15 : index
    %1084 = memref.load %arg4[%c2_501, %c15_502] : memref<6x16xf32, #tpu.memory_space<smem>>
    %1085 = vector.broadcast %1084 : f32 to vector<8x128xf32>
    %1086 = arith.mulf %1015, %1085 : vector<8x128xf32>
    %1087 = arith.addf %1083, %1086 : vector<8x128xf32>
    %c2_503 = arith.constant 2 : index
    %c3_504 = arith.constant 3 : index
    %1088 = memref.load %arg5[%c2_503, %c3_504] : memref<6x4xf32, #tpu.memory_space<smem>>
    %1089 = vector.broadcast %1088 : f32 to vector<8x128xf32>
    %1090 = arith.addf %1087, %1089 : vector<8x128xf32>
    %1091 = arith.addf %1090, %843 : vector<8x128xf32>
    %1092 = vector.extract_strided_slice %886 {offsets = [0, 25], sizes = [8, 16], strides = [1, 1]} : vector<8x128xf32> to vector<8x16xf32>
    %1093 = vector.extract_strided_slice %929 {offsets = [0, 25], sizes = [8, 16], strides = [1, 1]} : vector<8x128xf32> to vector<8x16xf32>
    %1094 = vector.extract_strided_slice %972 {offsets = [0, 25], sizes = [8, 16], strides = [1, 1]} : vector<8x128xf32> to vector<8x16xf32>
    %1095 = vector.extract_strided_slice %1015 {offsets = [0, 25], sizes = [8, 16], strides = [1, 1]} : vector<8x128xf32> to vector<8x16xf32>
    %c2_505 = arith.constant 2 : index
    %c0_506 = arith.constant 0 : index
    %1096 = memref.load %arg6[%c2_505, %c0_506] : memref<6x32xf32, #tpu.memory_space<smem>>
    %1097 = vector.broadcast %1096 : f32 to vector<8x16xf32>
    %1098 = arith.mulf %1092, %1097 : vector<8x16xf32>
    %c2_507 = arith.constant 2 : index
    %c1_508 = arith.constant 1 : index
    %1099 = memref.load %arg6[%c2_507, %c1_508] : memref<6x32xf32, #tpu.memory_space<smem>>
    %1100 = vector.broadcast %1099 : f32 to vector<8x16xf32>
    %1101 = arith.mulf %1093, %1100 : vector<8x16xf32>
    %1102 = arith.addf %1098, %1101 : vector<8x16xf32>
    %c2_509 = arith.constant 2 : index
    %c2_510 = arith.constant 2 : index
    %1103 = memref.load %arg6[%c2_509, %c2_510] : memref<6x32xf32, #tpu.memory_space<smem>>
    %1104 = vector.broadcast %1103 : f32 to vector<8x16xf32>
    %1105 = arith.mulf %1094, %1104 : vector<8x16xf32>
    %1106 = arith.addf %1102, %1105 : vector<8x16xf32>
    %c2_511 = arith.constant 2 : index
    %c3_512 = arith.constant 3 : index
    %1107 = memref.load %arg6[%c2_511, %c3_512] : memref<6x32xf32, #tpu.memory_space<smem>>
    %1108 = vector.broadcast %1107 : f32 to vector<8x16xf32>
    %1109 = arith.mulf %1095, %1108 : vector<8x16xf32>
    %1110 = arith.addf %1106, %1109 : vector<8x16xf32>
    %c2_513 = arith.constant 2 : index
    %c0_514 = arith.constant 0 : index
    %1111 = memref.load %arg7[%c2_513, %c0_514] : memref<6x8xf32, #tpu.memory_space<smem>>
    %1112 = vector.broadcast %1111 : f32 to vector<8x16xf32>
    %1113 = arith.addf %1110, %1112 : vector<8x16xf32>
    %c2_515 = arith.constant 2 : index
    %c4_516 = arith.constant 4 : index
    %1114 = memref.load %arg6[%c2_515, %c4_516] : memref<6x32xf32, #tpu.memory_space<smem>>
    %1115 = vector.broadcast %1114 : f32 to vector<8x16xf32>
    %1116 = arith.mulf %1092, %1115 : vector<8x16xf32>
    %c2_517 = arith.constant 2 : index
    %c5_518 = arith.constant 5 : index
    %1117 = memref.load %arg6[%c2_517, %c5_518] : memref<6x32xf32, #tpu.memory_space<smem>>
    %1118 = vector.broadcast %1117 : f32 to vector<8x16xf32>
    %1119 = arith.mulf %1093, %1118 : vector<8x16xf32>
    %1120 = arith.addf %1116, %1119 : vector<8x16xf32>
    %c2_519 = arith.constant 2 : index
    %c6_520 = arith.constant 6 : index
    %1121 = memref.load %arg6[%c2_519, %c6_520] : memref<6x32xf32, #tpu.memory_space<smem>>
    %1122 = vector.broadcast %1121 : f32 to vector<8x16xf32>
    %1123 = arith.mulf %1094, %1122 : vector<8x16xf32>
    %1124 = arith.addf %1120, %1123 : vector<8x16xf32>
    %c2_521 = arith.constant 2 : index
    %c7_522 = arith.constant 7 : index
    %1125 = memref.load %arg6[%c2_521, %c7_522] : memref<6x32xf32, #tpu.memory_space<smem>>
    %1126 = vector.broadcast %1125 : f32 to vector<8x16xf32>
    %1127 = arith.mulf %1095, %1126 : vector<8x16xf32>
    %1128 = arith.addf %1124, %1127 : vector<8x16xf32>
    %c2_523 = arith.constant 2 : index
    %c1_524 = arith.constant 1 : index
    %1129 = memref.load %arg7[%c2_523, %c1_524] : memref<6x8xf32, #tpu.memory_space<smem>>
    %1130 = vector.broadcast %1129 : f32 to vector<8x16xf32>
    %1131 = arith.addf %1128, %1130 : vector<8x16xf32>
    %c2_525 = arith.constant 2 : index
    %c8_526 = arith.constant 8 : index
    %1132 = memref.load %arg6[%c2_525, %c8_526] : memref<6x32xf32, #tpu.memory_space<smem>>
    %1133 = vector.broadcast %1132 : f32 to vector<8x16xf32>
    %1134 = arith.mulf %1092, %1133 : vector<8x16xf32>
    %c2_527 = arith.constant 2 : index
    %c9_528 = arith.constant 9 : index
    %1135 = memref.load %arg6[%c2_527, %c9_528] : memref<6x32xf32, #tpu.memory_space<smem>>
    %1136 = vector.broadcast %1135 : f32 to vector<8x16xf32>
    %1137 = arith.mulf %1093, %1136 : vector<8x16xf32>
    %1138 = arith.addf %1134, %1137 : vector<8x16xf32>
    %c2_529 = arith.constant 2 : index
    %c10_530 = arith.constant 10 : index
    %1139 = memref.load %arg6[%c2_529, %c10_530] : memref<6x32xf32, #tpu.memory_space<smem>>
    %1140 = vector.broadcast %1139 : f32 to vector<8x16xf32>
    %1141 = arith.mulf %1094, %1140 : vector<8x16xf32>
    %1142 = arith.addf %1138, %1141 : vector<8x16xf32>
    %c2_531 = arith.constant 2 : index
    %c11_532 = arith.constant 11 : index
    %1143 = memref.load %arg6[%c2_531, %c11_532] : memref<6x32xf32, #tpu.memory_space<smem>>
    %1144 = vector.broadcast %1143 : f32 to vector<8x16xf32>
    %1145 = arith.mulf %1095, %1144 : vector<8x16xf32>
    %1146 = arith.addf %1142, %1145 : vector<8x16xf32>
    %c2_533 = arith.constant 2 : index
    %c2_534 = arith.constant 2 : index
    %1147 = memref.load %arg7[%c2_533, %c2_534] : memref<6x8xf32, #tpu.memory_space<smem>>
    %1148 = vector.broadcast %1147 : f32 to vector<8x16xf32>
    %1149 = arith.addf %1146, %1148 : vector<8x16xf32>
    %c2_535 = arith.constant 2 : index
    %c12_536 = arith.constant 12 : index
    %1150 = memref.load %arg6[%c2_535, %c12_536] : memref<6x32xf32, #tpu.memory_space<smem>>
    %1151 = vector.broadcast %1150 : f32 to vector<8x16xf32>
    %1152 = arith.mulf %1092, %1151 : vector<8x16xf32>
    %c2_537 = arith.constant 2 : index
    %c13_538 = arith.constant 13 : index
    %1153 = memref.load %arg6[%c2_537, %c13_538] : memref<6x32xf32, #tpu.memory_space<smem>>
    %1154 = vector.broadcast %1153 : f32 to vector<8x16xf32>
    %1155 = arith.mulf %1093, %1154 : vector<8x16xf32>
    %1156 = arith.addf %1152, %1155 : vector<8x16xf32>
    %c2_539 = arith.constant 2 : index
    %c14_540 = arith.constant 14 : index
    %1157 = memref.load %arg6[%c2_539, %c14_540] : memref<6x32xf32, #tpu.memory_space<smem>>
    %1158 = vector.broadcast %1157 : f32 to vector<8x16xf32>
    %1159 = arith.mulf %1094, %1158 : vector<8x16xf32>
    %1160 = arith.addf %1156, %1159 : vector<8x16xf32>
    %c2_541 = arith.constant 2 : index
    %c15_542 = arith.constant 15 : index
    %1161 = memref.load %arg6[%c2_541, %c15_542] : memref<6x32xf32, #tpu.memory_space<smem>>
    %1162 = vector.broadcast %1161 : f32 to vector<8x16xf32>
    %1163 = arith.mulf %1095, %1162 : vector<8x16xf32>
    %1164 = arith.addf %1160, %1163 : vector<8x16xf32>
    %c2_543 = arith.constant 2 : index
    %c3_544 = arith.constant 3 : index
    %1165 = memref.load %arg7[%c2_543, %c3_544] : memref<6x8xf32, #tpu.memory_space<smem>>
    %1166 = vector.broadcast %1165 : f32 to vector<8x16xf32>
    %1167 = arith.addf %1164, %1166 : vector<8x16xf32>
    %c2_545 = arith.constant 2 : index
    %c16_546 = arith.constant 16 : index
    %1168 = memref.load %arg6[%c2_545, %c16_546] : memref<6x32xf32, #tpu.memory_space<smem>>
    %1169 = vector.broadcast %1168 : f32 to vector<8x16xf32>
    %1170 = arith.mulf %1092, %1169 : vector<8x16xf32>
    %c2_547 = arith.constant 2 : index
    %c17_548 = arith.constant 17 : index
    %1171 = memref.load %arg6[%c2_547, %c17_548] : memref<6x32xf32, #tpu.memory_space<smem>>
    %1172 = vector.broadcast %1171 : f32 to vector<8x16xf32>
    %1173 = arith.mulf %1093, %1172 : vector<8x16xf32>
    %1174 = arith.addf %1170, %1173 : vector<8x16xf32>
    %c2_549 = arith.constant 2 : index
    %c18_550 = arith.constant 18 : index
    %1175 = memref.load %arg6[%c2_549, %c18_550] : memref<6x32xf32, #tpu.memory_space<smem>>
    %1176 = vector.broadcast %1175 : f32 to vector<8x16xf32>
    %1177 = arith.mulf %1094, %1176 : vector<8x16xf32>
    %1178 = arith.addf %1174, %1177 : vector<8x16xf32>
    %c2_551 = arith.constant 2 : index
    %c19_552 = arith.constant 19 : index
    %1179 = memref.load %arg6[%c2_551, %c19_552] : memref<6x32xf32, #tpu.memory_space<smem>>
    %1180 = vector.broadcast %1179 : f32 to vector<8x16xf32>
    %1181 = arith.mulf %1095, %1180 : vector<8x16xf32>
    %1182 = arith.addf %1178, %1181 : vector<8x16xf32>
    %c2_553 = arith.constant 2 : index
    %c4_554 = arith.constant 4 : index
    %1183 = memref.load %arg7[%c2_553, %c4_554] : memref<6x8xf32, #tpu.memory_space<smem>>
    %1184 = vector.broadcast %1183 : f32 to vector<8x16xf32>
    %1185 = arith.addf %1182, %1184 : vector<8x16xf32>
    %c2_555 = arith.constant 2 : index
    %c20_556 = arith.constant 20 : index
    %1186 = memref.load %arg6[%c2_555, %c20_556] : memref<6x32xf32, #tpu.memory_space<smem>>
    %1187 = vector.broadcast %1186 : f32 to vector<8x16xf32>
    %1188 = arith.mulf %1092, %1187 : vector<8x16xf32>
    %c2_557 = arith.constant 2 : index
    %c21_558 = arith.constant 21 : index
    %1189 = memref.load %arg6[%c2_557, %c21_558] : memref<6x32xf32, #tpu.memory_space<smem>>
    %1190 = vector.broadcast %1189 : f32 to vector<8x16xf32>
    %1191 = arith.mulf %1093, %1190 : vector<8x16xf32>
    %1192 = arith.addf %1188, %1191 : vector<8x16xf32>
    %c2_559 = arith.constant 2 : index
    %c22_560 = arith.constant 22 : index
    %1193 = memref.load %arg6[%c2_559, %c22_560] : memref<6x32xf32, #tpu.memory_space<smem>>
    %1194 = vector.broadcast %1193 : f32 to vector<8x16xf32>
    %1195 = arith.mulf %1094, %1194 : vector<8x16xf32>
    %1196 = arith.addf %1192, %1195 : vector<8x16xf32>
    %c2_561 = arith.constant 2 : index
    %c23_562 = arith.constant 23 : index
    %1197 = memref.load %arg6[%c2_561, %c23_562] : memref<6x32xf32, #tpu.memory_space<smem>>
    %1198 = vector.broadcast %1197 : f32 to vector<8x16xf32>
    %1199 = arith.mulf %1095, %1198 : vector<8x16xf32>
    %1200 = arith.addf %1196, %1199 : vector<8x16xf32>
    %c2_563 = arith.constant 2 : index
    %c5_564 = arith.constant 5 : index
    %1201 = memref.load %arg7[%c2_563, %c5_564] : memref<6x8xf32, #tpu.memory_space<smem>>
    %1202 = vector.broadcast %1201 : f32 to vector<8x16xf32>
    %1203 = arith.addf %1200, %1202 : vector<8x16xf32>
    %c2_565 = arith.constant 2 : index
    %c24_566 = arith.constant 24 : index
    %1204 = memref.load %arg6[%c2_565, %c24_566] : memref<6x32xf32, #tpu.memory_space<smem>>
    %1205 = vector.broadcast %1204 : f32 to vector<8x16xf32>
    %1206 = arith.mulf %1092, %1205 : vector<8x16xf32>
    %c2_567 = arith.constant 2 : index
    %c25_568 = arith.constant 25 : index
    %1207 = memref.load %arg6[%c2_567, %c25_568] : memref<6x32xf32, #tpu.memory_space<smem>>
    %1208 = vector.broadcast %1207 : f32 to vector<8x16xf32>
    %1209 = arith.mulf %1093, %1208 : vector<8x16xf32>
    %1210 = arith.addf %1206, %1209 : vector<8x16xf32>
    %c2_569 = arith.constant 2 : index
    %c26_570 = arith.constant 26 : index
    %1211 = memref.load %arg6[%c2_569, %c26_570] : memref<6x32xf32, #tpu.memory_space<smem>>
    %1212 = vector.broadcast %1211 : f32 to vector<8x16xf32>
    %1213 = arith.mulf %1094, %1212 : vector<8x16xf32>
    %1214 = arith.addf %1210, %1213 : vector<8x16xf32>
    %c2_571 = arith.constant 2 : index
    %c27_572 = arith.constant 27 : index
    %1215 = memref.load %arg6[%c2_571, %c27_572] : memref<6x32xf32, #tpu.memory_space<smem>>
    %1216 = vector.broadcast %1215 : f32 to vector<8x16xf32>
    %1217 = arith.mulf %1095, %1216 : vector<8x16xf32>
    %1218 = arith.addf %1214, %1217 : vector<8x16xf32>
    %c2_573 = arith.constant 2 : index
    %c6_574 = arith.constant 6 : index
    %1219 = memref.load %arg7[%c2_573, %c6_574] : memref<6x8xf32, #tpu.memory_space<smem>>
    %1220 = vector.broadcast %1219 : f32 to vector<8x16xf32>
    %1221 = arith.addf %1218, %1220 : vector<8x16xf32>
    %c2_575 = arith.constant 2 : index
    %c28_576 = arith.constant 28 : index
    %1222 = memref.load %arg6[%c2_575, %c28_576] : memref<6x32xf32, #tpu.memory_space<smem>>
    %1223 = vector.broadcast %1222 : f32 to vector<8x16xf32>
    %1224 = arith.mulf %1092, %1223 : vector<8x16xf32>
    %c2_577 = arith.constant 2 : index
    %c29_578 = arith.constant 29 : index
    %1225 = memref.load %arg6[%c2_577, %c29_578] : memref<6x32xf32, #tpu.memory_space<smem>>
    %1226 = vector.broadcast %1225 : f32 to vector<8x16xf32>
    %1227 = arith.mulf %1093, %1226 : vector<8x16xf32>
    %1228 = arith.addf %1224, %1227 : vector<8x16xf32>
    %c2_579 = arith.constant 2 : index
    %c30_580 = arith.constant 30 : index
    %1229 = memref.load %arg6[%c2_579, %c30_580] : memref<6x32xf32, #tpu.memory_space<smem>>
    %1230 = vector.broadcast %1229 : f32 to vector<8x16xf32>
    %1231 = arith.mulf %1094, %1230 : vector<8x16xf32>
    %1232 = arith.addf %1228, %1231 : vector<8x16xf32>
    %c2_581 = arith.constant 2 : index
    %c31_582 = arith.constant 31 : index
    %1233 = memref.load %arg6[%c2_581, %c31_582] : memref<6x32xf32, #tpu.memory_space<smem>>
    %1234 = vector.broadcast %1233 : f32 to vector<8x16xf32>
    %1235 = arith.mulf %1095, %1234 : vector<8x16xf32>
    %1236 = arith.addf %1232, %1235 : vector<8x16xf32>
    %c2_583 = arith.constant 2 : index
    %c7_584 = arith.constant 7 : index
    %1237 = memref.load %arg7[%c2_583, %c7_584] : memref<6x8xf32, #tpu.memory_space<smem>>
    %1238 = vector.broadcast %1237 : f32 to vector<8x16xf32>
    %1239 = arith.addf %1236, %1238 : vector<8x16xf32>
    %1240 = tpu.concatenate %1113, %1131, %1149, %1167, %1185, %1203, %1221, %1239 in 1 : vector<8x16xf32>, vector<8x16xf32>, vector<8x16xf32>, vector<8x16xf32>, vector<8x16xf32>, vector<8x16xf32>, vector<8x16xf32>, vector<8x16xf32> -> vector<8x128xf32>
    %c2_585 = arith.constant 2 : index
    %c0_586 = arith.constant 0 : index
    %c0_587 = arith.constant 0 : index
    %1241 = vector.load %arg8[%c2_585, %c0_586, %c0_587] : memref<6x8x128xf32, #tpu.memory_space<vmem>>, vector<1x8x128xf32>
    %1242 = vector.shape_cast %1241 : vector<1x8x128xf32> to vector<8x128xf32>
    %1243 = vector.shape_cast %1240 : vector<8x128xf32> to vector<1x8x128xf32>
    tpu.vector_store %arg8[%c2_585, %c0_586, %c0_587], %1243 {strides = array<i32>} : memref<6x8x128xf32, #tpu.memory_space<vmem>>, vector<1x8x128xf32>,
    %1244 = vector.extract_strided_slice %1034 {offsets = [0, 1], sizes = [8, 127], strides = [1, 1]} : vector<8x128xf32> to vector<8x127xf32>
    %1245 = vector.extract_strided_slice %1034 {offsets = [0, 0], sizes = [8, 1], strides = [1, 1]} : vector<8x128xf32> to vector<8x1xf32>
    %1246 = tpu.concatenate %1244, %1245 in 1 : vector<8x127xf32>, vector<8x1xf32> -> vector<8x128xf32>
    %1247 = vector.extract_strided_slice %1053 {offsets = [0, 1], sizes = [8, 127], strides = [1, 1]} : vector<8x128xf32> to vector<8x127xf32>
    %1248 = vector.extract_strided_slice %1053 {offsets = [0, 0], sizes = [8, 1], strides = [1, 1]} : vector<8x128xf32> to vector<8x1xf32>
    %1249 = tpu.concatenate %1247, %1248 in 1 : vector<8x127xf32>, vector<8x1xf32> -> vector<8x128xf32>
    %1250 = vector.extract_strided_slice %1072 {offsets = [0, 1], sizes = [8, 127], strides = [1, 1]} : vector<8x128xf32> to vector<8x127xf32>
    %1251 = vector.extract_strided_slice %1072 {offsets = [0, 0], sizes = [8, 1], strides = [1, 1]} : vector<8x128xf32> to vector<8x1xf32>
    %1252 = tpu.concatenate %1250, %1251 in 1 : vector<8x127xf32>, vector<8x1xf32> -> vector<8x128xf32>
    %1253 = vector.extract_strided_slice %1091 {offsets = [0, 1], sizes = [8, 127], strides = [1, 1]} : vector<8x128xf32> to vector<8x127xf32>
    %1254 = vector.extract_strided_slice %1091 {offsets = [0, 0], sizes = [8, 1], strides = [1, 1]} : vector<8x128xf32> to vector<8x1xf32>
    %1255 = tpu.concatenate %1253, %1254 in 1 : vector<8x127xf32>, vector<8x1xf32> -> vector<8x128xf32>
    %c3_588 = arith.constant 3 : index
    %c0_589 = arith.constant 0 : index
    %1256 = memref.load %arg2[%c3_588, %c0_589] : memref<6x16xf32, #tpu.memory_space<smem>>
    %1257 = vector.broadcast %1256 : f32 to vector<8x128xf32>
    %1258 = arith.mulf %1034, %1257 : vector<8x128xf32>
    %c3_590 = arith.constant 3 : index
    %c0_591 = arith.constant 0 : index
    %1259 = memref.load %arg3[%c3_590, %c0_591] : memref<6x16xf32, #tpu.memory_space<smem>>
    %1260 = vector.broadcast %1259 : f32 to vector<8x128xf32>
    %1261 = arith.mulf %1246, %1260 : vector<8x128xf32>
    %1262 = arith.addf %1258, %1261 : vector<8x128xf32>
    %c3_592 = arith.constant 3 : index
    %c1_593 = arith.constant 1 : index
    %1263 = memref.load %arg2[%c3_592, %c1_593] : memref<6x16xf32, #tpu.memory_space<smem>>
    %1264 = vector.broadcast %1263 : f32 to vector<8x128xf32>
    %1265 = arith.mulf %1053, %1264 : vector<8x128xf32>
    %1266 = arith.addf %1262, %1265 : vector<8x128xf32>
    %c3_594 = arith.constant 3 : index
    %c1_595 = arith.constant 1 : index
    %1267 = memref.load %arg3[%c3_594, %c1_595] : memref<6x16xf32, #tpu.memory_space<smem>>
    %1268 = vector.broadcast %1267 : f32 to vector<8x128xf32>
    %1269 = arith.mulf %1249, %1268 : vector<8x128xf32>
    %1270 = arith.addf %1266, %1269 : vector<8x128xf32>
    %c3_596 = arith.constant 3 : index
    %c2_597 = arith.constant 2 : index
    %1271 = memref.load %arg2[%c3_596, %c2_597] : memref<6x16xf32, #tpu.memory_space<smem>>
    %1272 = vector.broadcast %1271 : f32 to vector<8x128xf32>
    %1273 = arith.mulf %1072, %1272 : vector<8x128xf32>
    %1274 = arith.addf %1270, %1273 : vector<8x128xf32>
    %c3_598 = arith.constant 3 : index
    %c2_599 = arith.constant 2 : index
    %1275 = memref.load %arg3[%c3_598, %c2_599] : memref<6x16xf32, #tpu.memory_space<smem>>
    %1276 = vector.broadcast %1275 : f32 to vector<8x128xf32>
    %1277 = arith.mulf %1252, %1276 : vector<8x128xf32>
    %1278 = arith.addf %1274, %1277 : vector<8x128xf32>
    %c3_600 = arith.constant 3 : index
    %c3_601 = arith.constant 3 : index
    %1279 = memref.load %arg2[%c3_600, %c3_601] : memref<6x16xf32, #tpu.memory_space<smem>>
    %1280 = vector.broadcast %1279 : f32 to vector<8x128xf32>
    %1281 = arith.mulf %1091, %1280 : vector<8x128xf32>
    %1282 = arith.addf %1278, %1281 : vector<8x128xf32>
    %c3_602 = arith.constant 3 : index
    %c3_603 = arith.constant 3 : index
    %1283 = memref.load %arg3[%c3_602, %c3_603] : memref<6x16xf32, #tpu.memory_space<smem>>
    %1284 = vector.broadcast %1283 : f32 to vector<8x128xf32>
    %1285 = arith.mulf %1255, %1284 : vector<8x128xf32>
    %1286 = arith.addf %1282, %1285 : vector<8x128xf32>
    %cst_604 = arith.constant -3.000000e+01 : f32
    %1287 = vector.broadcast %cst_604 : f32 to vector<8x128xf32>
    %1288 = arith.maximumf %1286, %1287 : vector<8x128xf32>
    %cst_605 = arith.constant 0.000000e+00 : f32
    %1289 = vector.broadcast %cst_605 : f32 to vector<8x128xf32>
    %1290 = arith.subf %1289, %1288 : vector<8x128xf32>
    %1291 = math.exp %1290 : vector<8x128xf32>
    %cst_606 = arith.constant 1.000000e+00 : f32
    %1292 = vector.broadcast %cst_606 : f32 to vector<8x128xf32>
    %1293 = arith.subf %1292, %1291 : vector<8x128xf32>
    %1294 = arith.mulf %1291, %1291 : vector<8x128xf32>
    %cst_607 = arith.constant 1.000000e+00 : f32
    %1295 = vector.broadcast %cst_607 : f32 to vector<8x128xf32>
    %1296 = arith.addf %1295, %1294 : vector<8x128xf32>
    %1297 = tpu.reciprocal %1296 : vector<8x128xf32> -> vector<8x128xf32>
    %1298 = arith.mulf %1293, %1297 : vector<8x128xf32>
    %c3_608 = arith.constant 3 : index
    %c4_609 = arith.constant 4 : index
    %1299 = memref.load %arg2[%c3_608, %c4_609] : memref<6x16xf32, #tpu.memory_space<smem>>
    %1300 = vector.broadcast %1299 : f32 to vector<8x128xf32>
    %1301 = arith.mulf %1034, %1300 : vector<8x128xf32>
    %c3_610 = arith.constant 3 : index
    %c4_611 = arith.constant 4 : index
    %1302 = memref.load %arg3[%c3_610, %c4_611] : memref<6x16xf32, #tpu.memory_space<smem>>
    %1303 = vector.broadcast %1302 : f32 to vector<8x128xf32>
    %1304 = arith.mulf %1246, %1303 : vector<8x128xf32>
    %1305 = arith.addf %1301, %1304 : vector<8x128xf32>
    %c3_612 = arith.constant 3 : index
    %c5_613 = arith.constant 5 : index
    %1306 = memref.load %arg2[%c3_612, %c5_613] : memref<6x16xf32, #tpu.memory_space<smem>>
    %1307 = vector.broadcast %1306 : f32 to vector<8x128xf32>
    %1308 = arith.mulf %1053, %1307 : vector<8x128xf32>
    %1309 = arith.addf %1305, %1308 : vector<8x128xf32>
    %c3_614 = arith.constant 3 : index
    %c5_615 = arith.constant 5 : index
    %1310 = memref.load %arg3[%c3_614, %c5_615] : memref<6x16xf32, #tpu.memory_space<smem>>
    %1311 = vector.broadcast %1310 : f32 to vector<8x128xf32>
    %1312 = arith.mulf %1249, %1311 : vector<8x128xf32>
    %1313 = arith.addf %1309, %1312 : vector<8x128xf32>
    %c3_616 = arith.constant 3 : index
    %c6_617 = arith.constant 6 : index
    %1314 = memref.load %arg2[%c3_616, %c6_617] : memref<6x16xf32, #tpu.memory_space<smem>>
    %1315 = vector.broadcast %1314 : f32 to vector<8x128xf32>
    %1316 = arith.mulf %1072, %1315 : vector<8x128xf32>
    %1317 = arith.addf %1313, %1316 : vector<8x128xf32>
    %c3_618 = arith.constant 3 : index
    %c6_619 = arith.constant 6 : index
    %1318 = memref.load %arg3[%c3_618, %c6_619] : memref<6x16xf32, #tpu.memory_space<smem>>
    %1319 = vector.broadcast %1318 : f32 to vector<8x128xf32>
    %1320 = arith.mulf %1252, %1319 : vector<8x128xf32>
    %1321 = arith.addf %1317, %1320 : vector<8x128xf32>
    %c3_620 = arith.constant 3 : index
    %c7_621 = arith.constant 7 : index
    %1322 = memref.load %arg2[%c3_620, %c7_621] : memref<6x16xf32, #tpu.memory_space<smem>>
    %1323 = vector.broadcast %1322 : f32 to vector<8x128xf32>
    %1324 = arith.mulf %1091, %1323 : vector<8x128xf32>
    %1325 = arith.addf %1321, %1324 : vector<8x128xf32>
    %c3_622 = arith.constant 3 : index
    %c7_623 = arith.constant 7 : index
    %1326 = memref.load %arg3[%c3_622, %c7_623] : memref<6x16xf32, #tpu.memory_space<smem>>
    %1327 = vector.broadcast %1326 : f32 to vector<8x128xf32>
    %1328 = arith.mulf %1255, %1327 : vector<8x128xf32>
    %1329 = arith.addf %1325, %1328 : vector<8x128xf32>
    %cst_624 = arith.constant -3.000000e+01 : f32
    %1330 = vector.broadcast %cst_624 : f32 to vector<8x128xf32>
    %1331 = arith.maximumf %1329, %1330 : vector<8x128xf32>
    %cst_625 = arith.constant 0.000000e+00 : f32
    %1332 = vector.broadcast %cst_625 : f32 to vector<8x128xf32>
    %1333 = arith.subf %1332, %1331 : vector<8x128xf32>
    %1334 = math.exp %1333 : vector<8x128xf32>
    %cst_626 = arith.constant 1.000000e+00 : f32
    %1335 = vector.broadcast %cst_626 : f32 to vector<8x128xf32>
    %1336 = arith.subf %1335, %1334 : vector<8x128xf32>
    %1337 = arith.mulf %1334, %1334 : vector<8x128xf32>
    %cst_627 = arith.constant 1.000000e+00 : f32
    %1338 = vector.broadcast %cst_627 : f32 to vector<8x128xf32>
    %1339 = arith.addf %1338, %1337 : vector<8x128xf32>
    %1340 = tpu.reciprocal %1339 : vector<8x128xf32> -> vector<8x128xf32>
    %1341 = arith.mulf %1336, %1340 : vector<8x128xf32>
    %c3_628 = arith.constant 3 : index
    %c8_629 = arith.constant 8 : index
    %1342 = memref.load %arg2[%c3_628, %c8_629] : memref<6x16xf32, #tpu.memory_space<smem>>
    %1343 = vector.broadcast %1342 : f32 to vector<8x128xf32>
    %1344 = arith.mulf %1034, %1343 : vector<8x128xf32>
    %c3_630 = arith.constant 3 : index
    %c8_631 = arith.constant 8 : index
    %1345 = memref.load %arg3[%c3_630, %c8_631] : memref<6x16xf32, #tpu.memory_space<smem>>
    %1346 = vector.broadcast %1345 : f32 to vector<8x128xf32>
    %1347 = arith.mulf %1246, %1346 : vector<8x128xf32>
    %1348 = arith.addf %1344, %1347 : vector<8x128xf32>
    %c3_632 = arith.constant 3 : index
    %c9_633 = arith.constant 9 : index
    %1349 = memref.load %arg2[%c3_632, %c9_633] : memref<6x16xf32, #tpu.memory_space<smem>>
    %1350 = vector.broadcast %1349 : f32 to vector<8x128xf32>
    %1351 = arith.mulf %1053, %1350 : vector<8x128xf32>
    %1352 = arith.addf %1348, %1351 : vector<8x128xf32>
    %c3_634 = arith.constant 3 : index
    %c9_635 = arith.constant 9 : index
    %1353 = memref.load %arg3[%c3_634, %c9_635] : memref<6x16xf32, #tpu.memory_space<smem>>
    %1354 = vector.broadcast %1353 : f32 to vector<8x128xf32>
    %1355 = arith.mulf %1249, %1354 : vector<8x128xf32>
    %1356 = arith.addf %1352, %1355 : vector<8x128xf32>
    %c3_636 = arith.constant 3 : index
    %c10_637 = arith.constant 10 : index
    %1357 = memref.load %arg2[%c3_636, %c10_637] : memref<6x16xf32, #tpu.memory_space<smem>>
    %1358 = vector.broadcast %1357 : f32 to vector<8x128xf32>
    %1359 = arith.mulf %1072, %1358 : vector<8x128xf32>
    %1360 = arith.addf %1356, %1359 : vector<8x128xf32>
    %c3_638 = arith.constant 3 : index
    %c10_639 = arith.constant 10 : index
    %1361 = memref.load %arg3[%c3_638, %c10_639] : memref<6x16xf32, #tpu.memory_space<smem>>
    %1362 = vector.broadcast %1361 : f32 to vector<8x128xf32>
    %1363 = arith.mulf %1252, %1362 : vector<8x128xf32>
    %1364 = arith.addf %1360, %1363 : vector<8x128xf32>
    %c3_640 = arith.constant 3 : index
    %c11_641 = arith.constant 11 : index
    %1365 = memref.load %arg2[%c3_640, %c11_641] : memref<6x16xf32, #tpu.memory_space<smem>>
    %1366 = vector.broadcast %1365 : f32 to vector<8x128xf32>
    %1367 = arith.mulf %1091, %1366 : vector<8x128xf32>
    %1368 = arith.addf %1364, %1367 : vector<8x128xf32>
    %c3_642 = arith.constant 3 : index
    %c11_643 = arith.constant 11 : index
    %1369 = memref.load %arg3[%c3_642, %c11_643] : memref<6x16xf32, #tpu.memory_space<smem>>
    %1370 = vector.broadcast %1369 : f32 to vector<8x128xf32>
    %1371 = arith.mulf %1255, %1370 : vector<8x128xf32>
    %1372 = arith.addf %1368, %1371 : vector<8x128xf32>
    %cst_644 = arith.constant -3.000000e+01 : f32
    %1373 = vector.broadcast %cst_644 : f32 to vector<8x128xf32>
    %1374 = arith.maximumf %1372, %1373 : vector<8x128xf32>
    %cst_645 = arith.constant 0.000000e+00 : f32
    %1375 = vector.broadcast %cst_645 : f32 to vector<8x128xf32>
    %1376 = arith.subf %1375, %1374 : vector<8x128xf32>
    %1377 = math.exp %1376 : vector<8x128xf32>
    %cst_646 = arith.constant 1.000000e+00 : f32
    %1378 = vector.broadcast %cst_646 : f32 to vector<8x128xf32>
    %1379 = arith.subf %1378, %1377 : vector<8x128xf32>
    %1380 = arith.mulf %1377, %1377 : vector<8x128xf32>
    %cst_647 = arith.constant 1.000000e+00 : f32
    %1381 = vector.broadcast %cst_647 : f32 to vector<8x128xf32>
    %1382 = arith.addf %1381, %1380 : vector<8x128xf32>
    %1383 = tpu.reciprocal %1382 : vector<8x128xf32> -> vector<8x128xf32>
    %1384 = arith.mulf %1379, %1383 : vector<8x128xf32>
    %c3_648 = arith.constant 3 : index
    %c12_649 = arith.constant 12 : index
    %1385 = memref.load %arg2[%c3_648, %c12_649] : memref<6x16xf32, #tpu.memory_space<smem>>
    %1386 = vector.broadcast %1385 : f32 to vector<8x128xf32>
    %1387 = arith.mulf %1034, %1386 : vector<8x128xf32>
    %c3_650 = arith.constant 3 : index
    %c12_651 = arith.constant 12 : index
    %1388 = memref.load %arg3[%c3_650, %c12_651] : memref<6x16xf32, #tpu.memory_space<smem>>
    %1389 = vector.broadcast %1388 : f32 to vector<8x128xf32>
    %1390 = arith.mulf %1246, %1389 : vector<8x128xf32>
    %1391 = arith.addf %1387, %1390 : vector<8x128xf32>
    %c3_652 = arith.constant 3 : index
    %c13_653 = arith.constant 13 : index
    %1392 = memref.load %arg2[%c3_652, %c13_653] : memref<6x16xf32, #tpu.memory_space<smem>>
    %1393 = vector.broadcast %1392 : f32 to vector<8x128xf32>
    %1394 = arith.mulf %1053, %1393 : vector<8x128xf32>
    %1395 = arith.addf %1391, %1394 : vector<8x128xf32>
    %c3_654 = arith.constant 3 : index
    %c13_655 = arith.constant 13 : index
    %1396 = memref.load %arg3[%c3_654, %c13_655] : memref<6x16xf32, #tpu.memory_space<smem>>
    %1397 = vector.broadcast %1396 : f32 to vector<8x128xf32>
    %1398 = arith.mulf %1249, %1397 : vector<8x128xf32>
    %1399 = arith.addf %1395, %1398 : vector<8x128xf32>
    %c3_656 = arith.constant 3 : index
    %c14_657 = arith.constant 14 : index
    %1400 = memref.load %arg2[%c3_656, %c14_657] : memref<6x16xf32, #tpu.memory_space<smem>>
    %1401 = vector.broadcast %1400 : f32 to vector<8x128xf32>
    %1402 = arith.mulf %1072, %1401 : vector<8x128xf32>
    %1403 = arith.addf %1399, %1402 : vector<8x128xf32>
    %c3_658 = arith.constant 3 : index
    %c14_659 = arith.constant 14 : index
    %1404 = memref.load %arg3[%c3_658, %c14_659] : memref<6x16xf32, #tpu.memory_space<smem>>
    %1405 = vector.broadcast %1404 : f32 to vector<8x128xf32>
    %1406 = arith.mulf %1252, %1405 : vector<8x128xf32>
    %1407 = arith.addf %1403, %1406 : vector<8x128xf32>
    %c3_660 = arith.constant 3 : index
    %c15_661 = arith.constant 15 : index
    %1408 = memref.load %arg2[%c3_660, %c15_661] : memref<6x16xf32, #tpu.memory_space<smem>>
    %1409 = vector.broadcast %1408 : f32 to vector<8x128xf32>
    %1410 = arith.mulf %1091, %1409 : vector<8x128xf32>
    %1411 = arith.addf %1407, %1410 : vector<8x128xf32>
    %c3_662 = arith.constant 3 : index
    %c15_663 = arith.constant 15 : index
    %1412 = memref.load %arg3[%c3_662, %c15_663] : memref<6x16xf32, #tpu.memory_space<smem>>
    %1413 = vector.broadcast %1412 : f32 to vector<8x128xf32>
    %1414 = arith.mulf %1255, %1413 : vector<8x128xf32>
    %1415 = arith.addf %1411, %1414 : vector<8x128xf32>
    %cst_664 = arith.constant -3.000000e+01 : f32
    %1416 = vector.broadcast %cst_664 : f32 to vector<8x128xf32>
    %1417 = arith.maximumf %1415, %1416 : vector<8x128xf32>
    %cst_665 = arith.constant 0.000000e+00 : f32
    %1418 = vector.broadcast %cst_665 : f32 to vector<8x128xf32>
    %1419 = arith.subf %1418, %1417 : vector<8x128xf32>
    %1420 = math.exp %1419 : vector<8x128xf32>
    %cst_666 = arith.constant 1.000000e+00 : f32
    %1421 = vector.broadcast %cst_666 : f32 to vector<8x128xf32>
    %1422 = arith.subf %1421, %1420 : vector<8x128xf32>
    %1423 = arith.mulf %1420, %1420 : vector<8x128xf32>
    %cst_667 = arith.constant 1.000000e+00 : f32
    %1424 = vector.broadcast %cst_667 : f32 to vector<8x128xf32>
    %1425 = arith.addf %1424, %1423 : vector<8x128xf32>
    %1426 = tpu.reciprocal %1425 : vector<8x128xf32> -> vector<8x128xf32>
    %1427 = arith.mulf %1422, %1426 : vector<8x128xf32>
    %c3_668 = arith.constant 3 : index
    %c0_669 = arith.constant 0 : index
    %1428 = memref.load %arg4[%c3_668, %c0_669] : memref<6x16xf32, #tpu.memory_space<smem>>
    %1429 = vector.broadcast %1428 : f32 to vector<8x128xf32>
    %1430 = arith.mulf %1298, %1429 : vector<8x128xf32>
    %c3_670 = arith.constant 3 : index
    %c1_671 = arith.constant 1 : index
    %1431 = memref.load %arg4[%c3_670, %c1_671] : memref<6x16xf32, #tpu.memory_space<smem>>
    %1432 = vector.broadcast %1431 : f32 to vector<8x128xf32>
    %1433 = arith.mulf %1341, %1432 : vector<8x128xf32>
    %1434 = arith.addf %1430, %1433 : vector<8x128xf32>
    %c3_672 = arith.constant 3 : index
    %c2_673 = arith.constant 2 : index
    %1435 = memref.load %arg4[%c3_672, %c2_673] : memref<6x16xf32, #tpu.memory_space<smem>>
    %1436 = vector.broadcast %1435 : f32 to vector<8x128xf32>
    %1437 = arith.mulf %1384, %1436 : vector<8x128xf32>
    %1438 = arith.addf %1434, %1437 : vector<8x128xf32>
    %c3_674 = arith.constant 3 : index
    %c3_675 = arith.constant 3 : index
    %1439 = memref.load %arg4[%c3_674, %c3_675] : memref<6x16xf32, #tpu.memory_space<smem>>
    %1440 = vector.broadcast %1439 : f32 to vector<8x128xf32>
    %1441 = arith.mulf %1427, %1440 : vector<8x128xf32>
    %1442 = arith.addf %1438, %1441 : vector<8x128xf32>
    %c3_676 = arith.constant 3 : index
    %c0_677 = arith.constant 0 : index
    %1443 = memref.load %arg5[%c3_676, %c0_677] : memref<6x4xf32, #tpu.memory_space<smem>>
    %1444 = vector.broadcast %1443 : f32 to vector<8x128xf32>
    %1445 = arith.addf %1442, %1444 : vector<8x128xf32>
    %1446 = arith.addf %1445, %1246 : vector<8x128xf32>
    %c3_678 = arith.constant 3 : index
    %c4_679 = arith.constant 4 : index
    %1447 = memref.load %arg4[%c3_678, %c4_679] : memref<6x16xf32, #tpu.memory_space<smem>>
    %1448 = vector.broadcast %1447 : f32 to vector<8x128xf32>
    %1449 = arith.mulf %1298, %1448 : vector<8x128xf32>
    %c3_680 = arith.constant 3 : index
    %c5_681 = arith.constant 5 : index
    %1450 = memref.load %arg4[%c3_680, %c5_681] : memref<6x16xf32, #tpu.memory_space<smem>>
    %1451 = vector.broadcast %1450 : f32 to vector<8x128xf32>
    %1452 = arith.mulf %1341, %1451 : vector<8x128xf32>
    %1453 = arith.addf %1449, %1452 : vector<8x128xf32>
    %c3_682 = arith.constant 3 : index
    %c6_683 = arith.constant 6 : index
    %1454 = memref.load %arg4[%c3_682, %c6_683] : memref<6x16xf32, #tpu.memory_space<smem>>
    %1455 = vector.broadcast %1454 : f32 to vector<8x128xf32>
    %1456 = arith.mulf %1384, %1455 : vector<8x128xf32>
    %1457 = arith.addf %1453, %1456 : vector<8x128xf32>
    %c3_684 = arith.constant 3 : index
    %c7_685 = arith.constant 7 : index
    %1458 = memref.load %arg4[%c3_684, %c7_685] : memref<6x16xf32, #tpu.memory_space<smem>>
    %1459 = vector.broadcast %1458 : f32 to vector<8x128xf32>
    %1460 = arith.mulf %1427, %1459 : vector<8x128xf32>
    %1461 = arith.addf %1457, %1460 : vector<8x128xf32>
    %c3_686 = arith.constant 3 : index
    %c1_687 = arith.constant 1 : index
    %1462 = memref.load %arg5[%c3_686, %c1_687] : memref<6x4xf32, #tpu.memory_space<smem>>
    %1463 = vector.broadcast %1462 : f32 to vector<8x128xf32>
    %1464 = arith.addf %1461, %1463 : vector<8x128xf32>
    %1465 = arith.addf %1464, %1249 : vector<8x128xf32>
    %c3_688 = arith.constant 3 : index
    %c8_689 = arith.constant 8 : index
    %1466 = memref.load %arg4[%c3_688, %c8_689] : memref<6x16xf32, #tpu.memory_space<smem>>
    %1467 = vector.broadcast %1466 : f32 to vector<8x128xf32>
    %1468 = arith.mulf %1298, %1467 : vector<8x128xf32>
    %c3_690 = arith.constant 3 : index
    %c9_691 = arith.constant 9 : index
    %1469 = memref.load %arg4[%c3_690, %c9_691] : memref<6x16xf32, #tpu.memory_space<smem>>
    %1470 = vector.broadcast %1469 : f32 to vector<8x128xf32>
    %1471 = arith.mulf %1341, %1470 : vector<8x128xf32>
    %1472 = arith.addf %1468, %1471 : vector<8x128xf32>
    %c3_692 = arith.constant 3 : index
    %c10_693 = arith.constant 10 : index
    %1473 = memref.load %arg4[%c3_692, %c10_693] : memref<6x16xf32, #tpu.memory_space<smem>>
    %1474 = vector.broadcast %1473 : f32 to vector<8x128xf32>
    %1475 = arith.mulf %1384, %1474 : vector<8x128xf32>
    %1476 = arith.addf %1472, %1475 : vector<8x128xf32>
    %c3_694 = arith.constant 3 : index
    %c11_695 = arith.constant 11 : index
    %1477 = memref.load %arg4[%c3_694, %c11_695] : memref<6x16xf32, #tpu.memory_space<smem>>
    %1478 = vector.broadcast %1477 : f32 to vector<8x128xf32>
    %1479 = arith.mulf %1427, %1478 : vector<8x128xf32>
    %1480 = arith.addf %1476, %1479 : vector<8x128xf32>
    %c3_696 = arith.constant 3 : index
    %c2_697 = arith.constant 2 : index
    %1481 = memref.load %arg5[%c3_696, %c2_697] : memref<6x4xf32, #tpu.memory_space<smem>>
    %1482 = vector.broadcast %1481 : f32 to vector<8x128xf32>
    %1483 = arith.addf %1480, %1482 : vector<8x128xf32>
    %1484 = arith.addf %1483, %1252 : vector<8x128xf32>
    %c3_698 = arith.constant 3 : index
    %c12_699 = arith.constant 12 : index
    %1485 = memref.load %arg4[%c3_698, %c12_699] : memref<6x16xf32, #tpu.memory_space<smem>>
    %1486 = vector.broadcast %1485 : f32 to vector<8x128xf32>
    %1487 = arith.mulf %1298, %1486 : vector<8x128xf32>
    %c3_700 = arith.constant 3 : index
    %c13_701 = arith.constant 13 : index
    %1488 = memref.load %arg4[%c3_700, %c13_701] : memref<6x16xf32, #tpu.memory_space<smem>>
    %1489 = vector.broadcast %1488 : f32 to vector<8x128xf32>
    %1490 = arith.mulf %1341, %1489 : vector<8x128xf32>
    %1491 = arith.addf %1487, %1490 : vector<8x128xf32>
    %c3_702 = arith.constant 3 : index
    %c14_703 = arith.constant 14 : index
    %1492 = memref.load %arg4[%c3_702, %c14_703] : memref<6x16xf32, #tpu.memory_space<smem>>
    %1493 = vector.broadcast %1492 : f32 to vector<8x128xf32>
    %1494 = arith.mulf %1384, %1493 : vector<8x128xf32>
    %1495 = arith.addf %1491, %1494 : vector<8x128xf32>
    %c3_704 = arith.constant 3 : index
    %c15_705 = arith.constant 15 : index
    %1496 = memref.load %arg4[%c3_704, %c15_705] : memref<6x16xf32, #tpu.memory_space<smem>>
    %1497 = vector.broadcast %1496 : f32 to vector<8x128xf32>
    %1498 = arith.mulf %1427, %1497 : vector<8x128xf32>
    %1499 = arith.addf %1495, %1498 : vector<8x128xf32>
    %c3_706 = arith.constant 3 : index
    %c3_707 = arith.constant 3 : index
    %1500 = memref.load %arg5[%c3_706, %c3_707] : memref<6x4xf32, #tpu.memory_space<smem>>
    %1501 = vector.broadcast %1500 : f32 to vector<8x128xf32>
    %1502 = arith.addf %1499, %1501 : vector<8x128xf32>
    %1503 = arith.addf %1502, %1255 : vector<8x128xf32>
    %1504 = vector.extract_strided_slice %1298 {offsets = [0, 24], sizes = [8, 16], strides = [1, 1]} : vector<8x128xf32> to vector<8x16xf32>
    %1505 = vector.extract_strided_slice %1341 {offsets = [0, 24], sizes = [8, 16], strides = [1, 1]} : vector<8x128xf32> to vector<8x16xf32>
    %1506 = vector.extract_strided_slice %1384 {offsets = [0, 24], sizes = [8, 16], strides = [1, 1]} : vector<8x128xf32> to vector<8x16xf32>
    %1507 = vector.extract_strided_slice %1427 {offsets = [0, 24], sizes = [8, 16], strides = [1, 1]} : vector<8x128xf32> to vector<8x16xf32>
    %c3_708 = arith.constant 3 : index
    %c0_709 = arith.constant 0 : index
    %1508 = memref.load %arg6[%c3_708, %c0_709] : memref<6x32xf32, #tpu.memory_space<smem>>
    %1509 = vector.broadcast %1508 : f32 to vector<8x16xf32>
    %1510 = arith.mulf %1504, %1509 : vector<8x16xf32>
    %c3_710 = arith.constant 3 : index
    %c1_711 = arith.constant 1 : index
    %1511 = memref.load %arg6[%c3_710, %c1_711] : memref<6x32xf32, #tpu.memory_space<smem>>
    %1512 = vector.broadcast %1511 : f32 to vector<8x16xf32>
    %1513 = arith.mulf %1505, %1512 : vector<8x16xf32>
    %1514 = arith.addf %1510, %1513 : vector<8x16xf32>
    %c3_712 = arith.constant 3 : index
    %c2_713 = arith.constant 2 : index
    %1515 = memref.load %arg6[%c3_712, %c2_713] : memref<6x32xf32, #tpu.memory_space<smem>>
    %1516 = vector.broadcast %1515 : f32 to vector<8x16xf32>
    %1517 = arith.mulf %1506, %1516 : vector<8x16xf32>
    %1518 = arith.addf %1514, %1517 : vector<8x16xf32>
    %c3_714 = arith.constant 3 : index
    %c3_715 = arith.constant 3 : index
    %1519 = memref.load %arg6[%c3_714, %c3_715] : memref<6x32xf32, #tpu.memory_space<smem>>
    %1520 = vector.broadcast %1519 : f32 to vector<8x16xf32>
    %1521 = arith.mulf %1507, %1520 : vector<8x16xf32>
    %1522 = arith.addf %1518, %1521 : vector<8x16xf32>
    %c3_716 = arith.constant 3 : index
    %c0_717 = arith.constant 0 : index
    %1523 = memref.load %arg7[%c3_716, %c0_717] : memref<6x8xf32, #tpu.memory_space<smem>>
    %1524 = vector.broadcast %1523 : f32 to vector<8x16xf32>
    %1525 = arith.addf %1522, %1524 : vector<8x16xf32>
    %c3_718 = arith.constant 3 : index
    %c4_719 = arith.constant 4 : index
    %1526 = memref.load %arg6[%c3_718, %c4_719] : memref<6x32xf32, #tpu.memory_space<smem>>
    %1527 = vector.broadcast %1526 : f32 to vector<8x16xf32>
    %1528 = arith.mulf %1504, %1527 : vector<8x16xf32>
    %c3_720 = arith.constant 3 : index
    %c5_721 = arith.constant 5 : index
    %1529 = memref.load %arg6[%c3_720, %c5_721] : memref<6x32xf32, #tpu.memory_space<smem>>
    %1530 = vector.broadcast %1529 : f32 to vector<8x16xf32>
    %1531 = arith.mulf %1505, %1530 : vector<8x16xf32>
    %1532 = arith.addf %1528, %1531 : vector<8x16xf32>
    %c3_722 = arith.constant 3 : index
    %c6_723 = arith.constant 6 : index
    %1533 = memref.load %arg6[%c3_722, %c6_723] : memref<6x32xf32, #tpu.memory_space<smem>>
    %1534 = vector.broadcast %1533 : f32 to vector<8x16xf32>
    %1535 = arith.mulf %1506, %1534 : vector<8x16xf32>
    %1536 = arith.addf %1532, %1535 : vector<8x16xf32>
    %c3_724 = arith.constant 3 : index
    %c7_725 = arith.constant 7 : index
    %1537 = memref.load %arg6[%c3_724, %c7_725] : memref<6x32xf32, #tpu.memory_space<smem>>
    %1538 = vector.broadcast %1537 : f32 to vector<8x16xf32>
    %1539 = arith.mulf %1507, %1538 : vector<8x16xf32>
    %1540 = arith.addf %1536, %1539 : vector<8x16xf32>
    %c3_726 = arith.constant 3 : index
    %c1_727 = arith.constant 1 : index
    %1541 = memref.load %arg7[%c3_726, %c1_727] : memref<6x8xf32, #tpu.memory_space<smem>>
    %1542 = vector.broadcast %1541 : f32 to vector<8x16xf32>
    %1543 = arith.addf %1540, %1542 : vector<8x16xf32>
    %c3_728 = arith.constant 3 : index
    %c8_729 = arith.constant 8 : index
    %1544 = memref.load %arg6[%c3_728, %c8_729] : memref<6x32xf32, #tpu.memory_space<smem>>
    %1545 = vector.broadcast %1544 : f32 to vector<8x16xf32>
    %1546 = arith.mulf %1504, %1545 : vector<8x16xf32>
    %c3_730 = arith.constant 3 : index
    %c9_731 = arith.constant 9 : index
    %1547 = memref.load %arg6[%c3_730, %c9_731] : memref<6x32xf32, #tpu.memory_space<smem>>
    %1548 = vector.broadcast %1547 : f32 to vector<8x16xf32>
    %1549 = arith.mulf %1505, %1548 : vector<8x16xf32>
    %1550 = arith.addf %1546, %1549 : vector<8x16xf32>
    %c3_732 = arith.constant 3 : index
    %c10_733 = arith.constant 10 : index
    %1551 = memref.load %arg6[%c3_732, %c10_733] : memref<6x32xf32, #tpu.memory_space<smem>>
    %1552 = vector.broadcast %1551 : f32 to vector<8x16xf32>
    %1553 = arith.mulf %1506, %1552 : vector<8x16xf32>
    %1554 = arith.addf %1550, %1553 : vector<8x16xf32>
    %c3_734 = arith.constant 3 : index
    %c11_735 = arith.constant 11 : index
    %1555 = memref.load %arg6[%c3_734, %c11_735] : memref<6x32xf32, #tpu.memory_space<smem>>
    %1556 = vector.broadcast %1555 : f32 to vector<8x16xf32>
    %1557 = arith.mulf %1507, %1556 : vector<8x16xf32>
    %1558 = arith.addf %1554, %1557 : vector<8x16xf32>
    %c3_736 = arith.constant 3 : index
    %c2_737 = arith.constant 2 : index
    %1559 = memref.load %arg7[%c3_736, %c2_737] : memref<6x8xf32, #tpu.memory_space<smem>>
    %1560 = vector.broadcast %1559 : f32 to vector<8x16xf32>
    %1561 = arith.addf %1558, %1560 : vector<8x16xf32>
    %c3_738 = arith.constant 3 : index
    %c12_739 = arith.constant 12 : index
    %1562 = memref.load %arg6[%c3_738, %c12_739] : memref<6x32xf32, #tpu.memory_space<smem>>
    %1563 = vector.broadcast %1562 : f32 to vector<8x16xf32>
    %1564 = arith.mulf %1504, %1563 : vector<8x16xf32>
    %c3_740 = arith.constant 3 : index
    %c13_741 = arith.constant 13 : index
    %1565 = memref.load %arg6[%c3_740, %c13_741] : memref<6x32xf32, #tpu.memory_space<smem>>
    %1566 = vector.broadcast %1565 : f32 to vector<8x16xf32>
    %1567 = arith.mulf %1505, %1566 : vector<8x16xf32>
    %1568 = arith.addf %1564, %1567 : vector<8x16xf32>
    %c3_742 = arith.constant 3 : index
    %c14_743 = arith.constant 14 : index
    %1569 = memref.load %arg6[%c3_742, %c14_743] : memref<6x32xf32, #tpu.memory_space<smem>>
    %1570 = vector.broadcast %1569 : f32 to vector<8x16xf32>
    %1571 = arith.mulf %1506, %1570 : vector<8x16xf32>
    %1572 = arith.addf %1568, %1571 : vector<8x16xf32>
    %c3_744 = arith.constant 3 : index
    %c15_745 = arith.constant 15 : index
    %1573 = memref.load %arg6[%c3_744, %c15_745] : memref<6x32xf32, #tpu.memory_space<smem>>
    %1574 = vector.broadcast %1573 : f32 to vector<8x16xf32>
    %1575 = arith.mulf %1507, %1574 : vector<8x16xf32>
    %1576 = arith.addf %1572, %1575 : vector<8x16xf32>
    %c3_746 = arith.constant 3 : index
    %c3_747 = arith.constant 3 : index
    %1577 = memref.load %arg7[%c3_746, %c3_747] : memref<6x8xf32, #tpu.memory_space<smem>>
    %1578 = vector.broadcast %1577 : f32 to vector<8x16xf32>
    %1579 = arith.addf %1576, %1578 : vector<8x16xf32>
    %c3_748 = arith.constant 3 : index
    %c16_749 = arith.constant 16 : index
    %1580 = memref.load %arg6[%c3_748, %c16_749] : memref<6x32xf32, #tpu.memory_space<smem>>
    %1581 = vector.broadcast %1580 : f32 to vector<8x16xf32>
    %1582 = arith.mulf %1504, %1581 : vector<8x16xf32>
    %c3_750 = arith.constant 3 : index
    %c17_751 = arith.constant 17 : index
    %1583 = memref.load %arg6[%c3_750, %c17_751] : memref<6x32xf32, #tpu.memory_space<smem>>
    %1584 = vector.broadcast %1583 : f32 to vector<8x16xf32>
    %1585 = arith.mulf %1505, %1584 : vector<8x16xf32>
    %1586 = arith.addf %1582, %1585 : vector<8x16xf32>
    %c3_752 = arith.constant 3 : index
    %c18_753 = arith.constant 18 : index
    %1587 = memref.load %arg6[%c3_752, %c18_753] : memref<6x32xf32, #tpu.memory_space<smem>>
    %1588 = vector.broadcast %1587 : f32 to vector<8x16xf32>
    %1589 = arith.mulf %1506, %1588 : vector<8x16xf32>
    %1590 = arith.addf %1586, %1589 : vector<8x16xf32>
    %c3_754 = arith.constant 3 : index
    %c19_755 = arith.constant 19 : index
    %1591 = memref.load %arg6[%c3_754, %c19_755] : memref<6x32xf32, #tpu.memory_space<smem>>
    %1592 = vector.broadcast %1591 : f32 to vector<8x16xf32>
    %1593 = arith.mulf %1507, %1592 : vector<8x16xf32>
    %1594 = arith.addf %1590, %1593 : vector<8x16xf32>
    %c3_756 = arith.constant 3 : index
    %c4_757 = arith.constant 4 : index
    %1595 = memref.load %arg7[%c3_756, %c4_757] : memref<6x8xf32, #tpu.memory_space<smem>>
    %1596 = vector.broadcast %1595 : f32 to vector<8x16xf32>
    %1597 = arith.addf %1594, %1596 : vector<8x16xf32>
    %c3_758 = arith.constant 3 : index
    %c20_759 = arith.constant 20 : index
    %1598 = memref.load %arg6[%c3_758, %c20_759] : memref<6x32xf32, #tpu.memory_space<smem>>
    %1599 = vector.broadcast %1598 : f32 to vector<8x16xf32>
    %1600 = arith.mulf %1504, %1599 : vector<8x16xf32>
    %c3_760 = arith.constant 3 : index
    %c21_761 = arith.constant 21 : index
    %1601 = memref.load %arg6[%c3_760, %c21_761] : memref<6x32xf32, #tpu.memory_space<smem>>
    %1602 = vector.broadcast %1601 : f32 to vector<8x16xf32>
    %1603 = arith.mulf %1505, %1602 : vector<8x16xf32>
    %1604 = arith.addf %1600, %1603 : vector<8x16xf32>
    %c3_762 = arith.constant 3 : index
    %c22_763 = arith.constant 22 : index
    %1605 = memref.load %arg6[%c3_762, %c22_763] : memref<6x32xf32, #tpu.memory_space<smem>>
    %1606 = vector.broadcast %1605 : f32 to vector<8x16xf32>
    %1607 = arith.mulf %1506, %1606 : vector<8x16xf32>
    %1608 = arith.addf %1604, %1607 : vector<8x16xf32>
    %c3_764 = arith.constant 3 : index
    %c23_765 = arith.constant 23 : index
    %1609 = memref.load %arg6[%c3_764, %c23_765] : memref<6x32xf32, #tpu.memory_space<smem>>
    %1610 = vector.broadcast %1609 : f32 to vector<8x16xf32>
    %1611 = arith.mulf %1507, %1610 : vector<8x16xf32>
    %1612 = arith.addf %1608, %1611 : vector<8x16xf32>
    %c3_766 = arith.constant 3 : index
    %c5_767 = arith.constant 5 : index
    %1613 = memref.load %arg7[%c3_766, %c5_767] : memref<6x8xf32, #tpu.memory_space<smem>>
    %1614 = vector.broadcast %1613 : f32 to vector<8x16xf32>
    %1615 = arith.addf %1612, %1614 : vector<8x16xf32>
    %c3_768 = arith.constant 3 : index
    %c24_769 = arith.constant 24 : index
    %1616 = memref.load %arg6[%c3_768, %c24_769] : memref<6x32xf32, #tpu.memory_space<smem>>
    %1617 = vector.broadcast %1616 : f32 to vector<8x16xf32>
    %1618 = arith.mulf %1504, %1617 : vector<8x16xf32>
    %c3_770 = arith.constant 3 : index
    %c25_771 = arith.constant 25 : index
    %1619 = memref.load %arg6[%c3_770, %c25_771] : memref<6x32xf32, #tpu.memory_space<smem>>
    %1620 = vector.broadcast %1619 : f32 to vector<8x16xf32>
    %1621 = arith.mulf %1505, %1620 : vector<8x16xf32>
    %1622 = arith.addf %1618, %1621 : vector<8x16xf32>
    %c3_772 = arith.constant 3 : index
    %c26_773 = arith.constant 26 : index
    %1623 = memref.load %arg6[%c3_772, %c26_773] : memref<6x32xf32, #tpu.memory_space<smem>>
    %1624 = vector.broadcast %1623 : f32 to vector<8x16xf32>
    %1625 = arith.mulf %1506, %1624 : vector<8x16xf32>
    %1626 = arith.addf %1622, %1625 : vector<8x16xf32>
    %c3_774 = arith.constant 3 : index
    %c27_775 = arith.constant 27 : index
    %1627 = memref.load %arg6[%c3_774, %c27_775] : memref<6x32xf32, #tpu.memory_space<smem>>
    %1628 = vector.broadcast %1627 : f32 to vector<8x16xf32>
    %1629 = arith.mulf %1507, %1628 : vector<8x16xf32>
    %1630 = arith.addf %1626, %1629 : vector<8x16xf32>
    %c3_776 = arith.constant 3 : index
    %c6_777 = arith.constant 6 : index
    %1631 = memref.load %arg7[%c3_776, %c6_777] : memref<6x8xf32, #tpu.memory_space<smem>>
    %1632 = vector.broadcast %1631 : f32 to vector<8x16xf32>
    %1633 = arith.addf %1630, %1632 : vector<8x16xf32>
    %c3_778 = arith.constant 3 : index
    %c28_779 = arith.constant 28 : index
    %1634 = memref.load %arg6[%c3_778, %c28_779] : memref<6x32xf32, #tpu.memory_space<smem>>
    %1635 = vector.broadcast %1634 : f32 to vector<8x16xf32>
    %1636 = arith.mulf %1504, %1635 : vector<8x16xf32>
    %c3_780 = arith.constant 3 : index
    %c29_781 = arith.constant 29 : index
    %1637 = memref.load %arg6[%c3_780, %c29_781] : memref<6x32xf32, #tpu.memory_space<smem>>
    %1638 = vector.broadcast %1637 : f32 to vector<8x16xf32>
    %1639 = arith.mulf %1505, %1638 : vector<8x16xf32>
    %1640 = arith.addf %1636, %1639 : vector<8x16xf32>
    %c3_782 = arith.constant 3 : index
    %c30_783 = arith.constant 30 : index
    %1641 = memref.load %arg6[%c3_782, %c30_783] : memref<6x32xf32, #tpu.memory_space<smem>>
    %1642 = vector.broadcast %1641 : f32 to vector<8x16xf32>
    %1643 = arith.mulf %1506, %1642 : vector<8x16xf32>
    %1644 = arith.addf %1640, %1643 : vector<8x16xf32>
    %c3_784 = arith.constant 3 : index
    %c31_785 = arith.constant 31 : index
    %1645 = memref.load %arg6[%c3_784, %c31_785] : memref<6x32xf32, #tpu.memory_space<smem>>
    %1646 = vector.broadcast %1645 : f32 to vector<8x16xf32>
    %1647 = arith.mulf %1507, %1646 : vector<8x16xf32>
    %1648 = arith.addf %1644, %1647 : vector<8x16xf32>
    %c3_786 = arith.constant 3 : index
    %c7_787 = arith.constant 7 : index
    %1649 = memref.load %arg7[%c3_786, %c7_787] : memref<6x8xf32, #tpu.memory_space<smem>>
    %1650 = vector.broadcast %1649 : f32 to vector<8x16xf32>
    %1651 = arith.addf %1648, %1650 : vector<8x16xf32>
    %1652 = tpu.concatenate %1525, %1543, %1561, %1579, %1597, %1615, %1633, %1651 in 1 : vector<8x16xf32>, vector<8x16xf32>, vector<8x16xf32>, vector<8x16xf32>, vector<8x16xf32>, vector<8x16xf32>, vector<8x16xf32>, vector<8x16xf32> -> vector<8x128xf32>
    %c3_788 = arith.constant 3 : index
    %c0_789 = arith.constant 0 : index
    %c0_790 = arith.constant 0 : index
    %1653 = vector.load %arg8[%c3_788, %c0_789, %c0_790] : memref<6x8x128xf32, #tpu.memory_space<vmem>>, vector<1x8x128xf32>
    %1654 = vector.shape_cast %1653 : vector<1x8x128xf32> to vector<8x128xf32>
    %1655 = vector.shape_cast %1652 : vector<8x128xf32> to vector<1x8x128xf32>
    tpu.vector_store %arg8[%c3_788, %c0_789, %c0_790], %1655 {strides = array<i32>} : memref<6x8x128xf32, #tpu.memory_space<vmem>>, vector<1x8x128xf32>,
    %1656 = vector.extract_strided_slice %1446 {offsets = [0, 2], sizes = [8, 126], strides = [1, 1]} : vector<8x128xf32> to vector<8x126xf32>
    %1657 = vector.extract_strided_slice %1446 {offsets = [0, 0], sizes = [8, 2], strides = [1, 1]} : vector<8x128xf32> to vector<8x2xf32>
    %1658 = tpu.concatenate %1656, %1657 in 1 : vector<8x126xf32>, vector<8x2xf32> -> vector<8x128xf32>
    %1659 = vector.extract_strided_slice %1465 {offsets = [0, 2], sizes = [8, 126], strides = [1, 1]} : vector<8x128xf32> to vector<8x126xf32>
    %1660 = vector.extract_strided_slice %1465 {offsets = [0, 0], sizes = [8, 2], strides = [1, 1]} : vector<8x128xf32> to vector<8x2xf32>
    %1661 = tpu.concatenate %1659, %1660 in 1 : vector<8x126xf32>, vector<8x2xf32> -> vector<8x128xf32>
    %1662 = vector.extract_strided_slice %1484 {offsets = [0, 2], sizes = [8, 126], strides = [1, 1]} : vector<8x128xf32> to vector<8x126xf32>
    %1663 = vector.extract_strided_slice %1484 {offsets = [0, 0], sizes = [8, 2], strides = [1, 1]} : vector<8x128xf32> to vector<8x2xf32>
    %1664 = tpu.concatenate %1662, %1663 in 1 : vector<8x126xf32>, vector<8x2xf32> -> vector<8x128xf32>
    %1665 = vector.extract_strided_slice %1503 {offsets = [0, 2], sizes = [8, 126], strides = [1, 1]} : vector<8x128xf32> to vector<8x126xf32>
    %1666 = vector.extract_strided_slice %1503 {offsets = [0, 0], sizes = [8, 2], strides = [1, 1]} : vector<8x128xf32> to vector<8x2xf32>
    %1667 = tpu.concatenate %1665, %1666 in 1 : vector<8x126xf32>, vector<8x2xf32> -> vector<8x128xf32>
    %c4_791 = arith.constant 4 : index
    %c0_792 = arith.constant 0 : index
    %1668 = memref.load %arg2[%c4_791, %c0_792] : memref<6x16xf32, #tpu.memory_space<smem>>
    %1669 = vector.broadcast %1668 : f32 to vector<8x128xf32>
    %1670 = arith.mulf %1446, %1669 : vector<8x128xf32>
    %c4_793 = arith.constant 4 : index
    %c0_794 = arith.constant 0 : index
    %1671 = memref.load %arg3[%c4_793, %c0_794] : memref<6x16xf32, #tpu.memory_space<smem>>
    %1672 = vector.broadcast %1671 : f32 to vector<8x128xf32>
    %1673 = arith.mulf %1658, %1672 : vector<8x128xf32>
    %1674 = arith.addf %1670, %1673 : vector<8x128xf32>
    %c4_795 = arith.constant 4 : index
    %c1_796 = arith.constant 1 : index
    %1675 = memref.load %arg2[%c4_795, %c1_796] : memref<6x16xf32, #tpu.memory_space<smem>>
    %1676 = vector.broadcast %1675 : f32 to vector<8x128xf32>
    %1677 = arith.mulf %1465, %1676 : vector<8x128xf32>
    %1678 = arith.addf %1674, %1677 : vector<8x128xf32>
    %c4_797 = arith.constant 4 : index
    %c1_798 = arith.constant 1 : index
    %1679 = memref.load %arg3[%c4_797, %c1_798] : memref<6x16xf32, #tpu.memory_space<smem>>
    %1680 = vector.broadcast %1679 : f32 to vector<8x128xf32>
    %1681 = arith.mulf %1661, %1680 : vector<8x128xf32>
    %1682 = arith.addf %1678, %1681 : vector<8x128xf32>
    %c4_799 = arith.constant 4 : index
    %c2_800 = arith.constant 2 : index
    %1683 = memref.load %arg2[%c4_799, %c2_800] : memref<6x16xf32, #tpu.memory_space<smem>>
    %1684 = vector.broadcast %1683 : f32 to vector<8x128xf32>
    %1685 = arith.mulf %1484, %1684 : vector<8x128xf32>
    %1686 = arith.addf %1682, %1685 : vector<8x128xf32>
    %c4_801 = arith.constant 4 : index
    %c2_802 = arith.constant 2 : index
    %1687 = memref.load %arg3[%c4_801, %c2_802] : memref<6x16xf32, #tpu.memory_space<smem>>
    %1688 = vector.broadcast %1687 : f32 to vector<8x128xf32>
    %1689 = arith.mulf %1664, %1688 : vector<8x128xf32>
    %1690 = arith.addf %1686, %1689 : vector<8x128xf32>
    %c4_803 = arith.constant 4 : index
    %c3_804 = arith.constant 3 : index
    %1691 = memref.load %arg2[%c4_803, %c3_804] : memref<6x16xf32, #tpu.memory_space<smem>>
    %1692 = vector.broadcast %1691 : f32 to vector<8x128xf32>
    %1693 = arith.mulf %1503, %1692 : vector<8x128xf32>
    %1694 = arith.addf %1690, %1693 : vector<8x128xf32>
    %c4_805 = arith.constant 4 : index
    %c3_806 = arith.constant 3 : index
    %1695 = memref.load %arg3[%c4_805, %c3_806] : memref<6x16xf32, #tpu.memory_space<smem>>
    %1696 = vector.broadcast %1695 : f32 to vector<8x128xf32>
    %1697 = arith.mulf %1667, %1696 : vector<8x128xf32>
    %1698 = arith.addf %1694, %1697 : vector<8x128xf32>
    %cst_807 = arith.constant -3.000000e+01 : f32
    %1699 = vector.broadcast %cst_807 : f32 to vector<8x128xf32>
    %1700 = arith.maximumf %1698, %1699 : vector<8x128xf32>
    %cst_808 = arith.constant 0.000000e+00 : f32
    %1701 = vector.broadcast %cst_808 : f32 to vector<8x128xf32>
    %1702 = arith.subf %1701, %1700 : vector<8x128xf32>
    %1703 = math.exp %1702 : vector<8x128xf32>
    %cst_809 = arith.constant 1.000000e+00 : f32
    %1704 = vector.broadcast %cst_809 : f32 to vector<8x128xf32>
    %1705 = arith.subf %1704, %1703 : vector<8x128xf32>
    %1706 = arith.mulf %1703, %1703 : vector<8x128xf32>
    %cst_810 = arith.constant 1.000000e+00 : f32
    %1707 = vector.broadcast %cst_810 : f32 to vector<8x128xf32>
    %1708 = arith.addf %1707, %1706 : vector<8x128xf32>
    %1709 = tpu.reciprocal %1708 : vector<8x128xf32> -> vector<8x128xf32>
    %1710 = arith.mulf %1705, %1709 : vector<8x128xf32>
    %c4_811 = arith.constant 4 : index
    %c4_812 = arith.constant 4 : index
    %1711 = memref.load %arg2[%c4_811, %c4_812] : memref<6x16xf32, #tpu.memory_space<smem>>
    %1712 = vector.broadcast %1711 : f32 to vector<8x128xf32>
    %1713 = arith.mulf %1446, %1712 : vector<8x128xf32>
    %c4_813 = arith.constant 4 : index
    %c4_814 = arith.constant 4 : index
    %1714 = memref.load %arg3[%c4_813, %c4_814] : memref<6x16xf32, #tpu.memory_space<smem>>
    %1715 = vector.broadcast %1714 : f32 to vector<8x128xf32>
    %1716 = arith.mulf %1658, %1715 : vector<8x128xf32>
    %1717 = arith.addf %1713, %1716 : vector<8x128xf32>
    %c4_815 = arith.constant 4 : index
    %c5_816 = arith.constant 5 : index
    %1718 = memref.load %arg2[%c4_815, %c5_816] : memref<6x16xf32, #tpu.memory_space<smem>>
    %1719 = vector.broadcast %1718 : f32 to vector<8x128xf32>
    %1720 = arith.mulf %1465, %1719 : vector<8x128xf32>
    %1721 = arith.addf %1717, %1720 : vector<8x128xf32>
    %c4_817 = arith.constant 4 : index
    %c5_818 = arith.constant 5 : index
    %1722 = memref.load %arg3[%c4_817, %c5_818] : memref<6x16xf32, #tpu.memory_space<smem>>
    %1723 = vector.broadcast %1722 : f32 to vector<8x128xf32>
    %1724 = arith.mulf %1661, %1723 : vector<8x128xf32>
    %1725 = arith.addf %1721, %1724 : vector<8x128xf32>
    %c4_819 = arith.constant 4 : index
    %c6_820 = arith.constant 6 : index
    %1726 = memref.load %arg2[%c4_819, %c6_820] : memref<6x16xf32, #tpu.memory_space<smem>>
    %1727 = vector.broadcast %1726 : f32 to vector<8x128xf32>
    %1728 = arith.mulf %1484, %1727 : vector<8x128xf32>
    %1729 = arith.addf %1725, %1728 : vector<8x128xf32>
    %c4_821 = arith.constant 4 : index
    %c6_822 = arith.constant 6 : index
    %1730 = memref.load %arg3[%c4_821, %c6_822] : memref<6x16xf32, #tpu.memory_space<smem>>
    %1731 = vector.broadcast %1730 : f32 to vector<8x128xf32>
    %1732 = arith.mulf %1664, %1731 : vector<8x128xf32>
    %1733 = arith.addf %1729, %1732 : vector<8x128xf32>
    %c4_823 = arith.constant 4 : index
    %c7_824 = arith.constant 7 : index
    %1734 = memref.load %arg2[%c4_823, %c7_824] : memref<6x16xf32, #tpu.memory_space<smem>>
    %1735 = vector.broadcast %1734 : f32 to vector<8x128xf32>
    %1736 = arith.mulf %1503, %1735 : vector<8x128xf32>
    %1737 = arith.addf %1733, %1736 : vector<8x128xf32>
    %c4_825 = arith.constant 4 : index
    %c7_826 = arith.constant 7 : index
    %1738 = memref.load %arg3[%c4_825, %c7_826] : memref<6x16xf32, #tpu.memory_space<smem>>
    %1739 = vector.broadcast %1738 : f32 to vector<8x128xf32>
    %1740 = arith.mulf %1667, %1739 : vector<8x128xf32>
    %1741 = arith.addf %1737, %1740 : vector<8x128xf32>
    %cst_827 = arith.constant -3.000000e+01 : f32
    %1742 = vector.broadcast %cst_827 : f32 to vector<8x128xf32>
    %1743 = arith.maximumf %1741, %1742 : vector<8x128xf32>
    %cst_828 = arith.constant 0.000000e+00 : f32
    %1744 = vector.broadcast %cst_828 : f32 to vector<8x128xf32>
    %1745 = arith.subf %1744, %1743 : vector<8x128xf32>
    %1746 = math.exp %1745 : vector<8x128xf32>
    %cst_829 = arith.constant 1.000000e+00 : f32
    %1747 = vector.broadcast %cst_829 : f32 to vector<8x128xf32>
    %1748 = arith.subf %1747, %1746 : vector<8x128xf32>
    %1749 = arith.mulf %1746, %1746 : vector<8x128xf32>
    %cst_830 = arith.constant 1.000000e+00 : f32
    %1750 = vector.broadcast %cst_830 : f32 to vector<8x128xf32>
    %1751 = arith.addf %1750, %1749 : vector<8x128xf32>
    %1752 = tpu.reciprocal %1751 : vector<8x128xf32> -> vector<8x128xf32>
    %1753 = arith.mulf %1748, %1752 : vector<8x128xf32>
    %c4_831 = arith.constant 4 : index
    %c8_832 = arith.constant 8 : index
    %1754 = memref.load %arg2[%c4_831, %c8_832] : memref<6x16xf32, #tpu.memory_space<smem>>
    %1755 = vector.broadcast %1754 : f32 to vector<8x128xf32>
    %1756 = arith.mulf %1446, %1755 : vector<8x128xf32>
    %c4_833 = arith.constant 4 : index
    %c8_834 = arith.constant 8 : index
    %1757 = memref.load %arg3[%c4_833, %c8_834] : memref<6x16xf32, #tpu.memory_space<smem>>
    %1758 = vector.broadcast %1757 : f32 to vector<8x128xf32>
    %1759 = arith.mulf %1658, %1758 : vector<8x128xf32>
    %1760 = arith.addf %1756, %1759 : vector<8x128xf32>
    %c4_835 = arith.constant 4 : index
    %c9_836 = arith.constant 9 : index
    %1761 = memref.load %arg2[%c4_835, %c9_836] : memref<6x16xf32, #tpu.memory_space<smem>>
    %1762 = vector.broadcast %1761 : f32 to vector<8x128xf32>
    %1763 = arith.mulf %1465, %1762 : vector<8x128xf32>
    %1764 = arith.addf %1760, %1763 : vector<8x128xf32>
    %c4_837 = arith.constant 4 : index
    %c9_838 = arith.constant 9 : index
    %1765 = memref.load %arg3[%c4_837, %c9_838] : memref<6x16xf32, #tpu.memory_space<smem>>
    %1766 = vector.broadcast %1765 : f32 to vector<8x128xf32>
    %1767 = arith.mulf %1661, %1766 : vector<8x128xf32>
    %1768 = arith.addf %1764, %1767 : vector<8x128xf32>
    %c4_839 = arith.constant 4 : index
    %c10_840 = arith.constant 10 : index
    %1769 = memref.load %arg2[%c4_839, %c10_840] : memref<6x16xf32, #tpu.memory_space<smem>>
    %1770 = vector.broadcast %1769 : f32 to vector<8x128xf32>
    %1771 = arith.mulf %1484, %1770 : vector<8x128xf32>
    %1772 = arith.addf %1768, %1771 : vector<8x128xf32>
    %c4_841 = arith.constant 4 : index
    %c10_842 = arith.constant 10 : index
    %1773 = memref.load %arg3[%c4_841, %c10_842] : memref<6x16xf32, #tpu.memory_space<smem>>
    %1774 = vector.broadcast %1773 : f32 to vector<8x128xf32>
    %1775 = arith.mulf %1664, %1774 : vector<8x128xf32>
    %1776 = arith.addf %1772, %1775 : vector<8x128xf32>
    %c4_843 = arith.constant 4 : index
    %c11_844 = arith.constant 11 : index
    %1777 = memref.load %arg2[%c4_843, %c11_844] : memref<6x16xf32, #tpu.memory_space<smem>>
    %1778 = vector.broadcast %1777 : f32 to vector<8x128xf32>
    %1779 = arith.mulf %1503, %1778 : vector<8x128xf32>
    %1780 = arith.addf %1776, %1779 : vector<8x128xf32>
    %c4_845 = arith.constant 4 : index
    %c11_846 = arith.constant 11 : index
    %1781 = memref.load %arg3[%c4_845, %c11_846] : memref<6x16xf32, #tpu.memory_space<smem>>
    %1782 = vector.broadcast %1781 : f32 to vector<8x128xf32>
    %1783 = arith.mulf %1667, %1782 : vector<8x128xf32>
    %1784 = arith.addf %1780, %1783 : vector<8x128xf32>
    %cst_847 = arith.constant -3.000000e+01 : f32
    %1785 = vector.broadcast %cst_847 : f32 to vector<8x128xf32>
    %1786 = arith.maximumf %1784, %1785 : vector<8x128xf32>
    %cst_848 = arith.constant 0.000000e+00 : f32
    %1787 = vector.broadcast %cst_848 : f32 to vector<8x128xf32>
    %1788 = arith.subf %1787, %1786 : vector<8x128xf32>
    %1789 = math.exp %1788 : vector<8x128xf32>
    %cst_849 = arith.constant 1.000000e+00 : f32
    %1790 = vector.broadcast %cst_849 : f32 to vector<8x128xf32>
    %1791 = arith.subf %1790, %1789 : vector<8x128xf32>
    %1792 = arith.mulf %1789, %1789 : vector<8x128xf32>
    %cst_850 = arith.constant 1.000000e+00 : f32
    %1793 = vector.broadcast %cst_850 : f32 to vector<8x128xf32>
    %1794 = arith.addf %1793, %1792 : vector<8x128xf32>
    %1795 = tpu.reciprocal %1794 : vector<8x128xf32> -> vector<8x128xf32>
    %1796 = arith.mulf %1791, %1795 : vector<8x128xf32>
    %c4_851 = arith.constant 4 : index
    %c12_852 = arith.constant 12 : index
    %1797 = memref.load %arg2[%c4_851, %c12_852] : memref<6x16xf32, #tpu.memory_space<smem>>
    %1798 = vector.broadcast %1797 : f32 to vector<8x128xf32>
    %1799 = arith.mulf %1446, %1798 : vector<8x128xf32>
    %c4_853 = arith.constant 4 : index
    %c12_854 = arith.constant 12 : index
    %1800 = memref.load %arg3[%c4_853, %c12_854] : memref<6x16xf32, #tpu.memory_space<smem>>
    %1801 = vector.broadcast %1800 : f32 to vector<8x128xf32>
    %1802 = arith.mulf %1658, %1801 : vector<8x128xf32>
    %1803 = arith.addf %1799, %1802 : vector<8x128xf32>
    %c4_855 = arith.constant 4 : index
    %c13_856 = arith.constant 13 : index
    %1804 = memref.load %arg2[%c4_855, %c13_856] : memref<6x16xf32, #tpu.memory_space<smem>>
    %1805 = vector.broadcast %1804 : f32 to vector<8x128xf32>
    %1806 = arith.mulf %1465, %1805 : vector<8x128xf32>
    %1807 = arith.addf %1803, %1806 : vector<8x128xf32>
    %c4_857 = arith.constant 4 : index
    %c13_858 = arith.constant 13 : index
    %1808 = memref.load %arg3[%c4_857, %c13_858] : memref<6x16xf32, #tpu.memory_space<smem>>
    %1809 = vector.broadcast %1808 : f32 to vector<8x128xf32>
    %1810 = arith.mulf %1661, %1809 : vector<8x128xf32>
    %1811 = arith.addf %1807, %1810 : vector<8x128xf32>
    %c4_859 = arith.constant 4 : index
    %c14_860 = arith.constant 14 : index
    %1812 = memref.load %arg2[%c4_859, %c14_860] : memref<6x16xf32, #tpu.memory_space<smem>>
    %1813 = vector.broadcast %1812 : f32 to vector<8x128xf32>
    %1814 = arith.mulf %1484, %1813 : vector<8x128xf32>
    %1815 = arith.addf %1811, %1814 : vector<8x128xf32>
    %c4_861 = arith.constant 4 : index
    %c14_862 = arith.constant 14 : index
    %1816 = memref.load %arg3[%c4_861, %c14_862] : memref<6x16xf32, #tpu.memory_space<smem>>
    %1817 = vector.broadcast %1816 : f32 to vector<8x128xf32>
    %1818 = arith.mulf %1664, %1817 : vector<8x128xf32>
    %1819 = arith.addf %1815, %1818 : vector<8x128xf32>
    %c4_863 = arith.constant 4 : index
    %c15_864 = arith.constant 15 : index
    %1820 = memref.load %arg2[%c4_863, %c15_864] : memref<6x16xf32, #tpu.memory_space<smem>>
    %1821 = vector.broadcast %1820 : f32 to vector<8x128xf32>
    %1822 = arith.mulf %1503, %1821 : vector<8x128xf32>
    %1823 = arith.addf %1819, %1822 : vector<8x128xf32>
    %c4_865 = arith.constant 4 : index
    %c15_866 = arith.constant 15 : index
    %1824 = memref.load %arg3[%c4_865, %c15_866] : memref<6x16xf32, #tpu.memory_space<smem>>
    %1825 = vector.broadcast %1824 : f32 to vector<8x128xf32>
    %1826 = arith.mulf %1667, %1825 : vector<8x128xf32>
    %1827 = arith.addf %1823, %1826 : vector<8x128xf32>
    %cst_867 = arith.constant -3.000000e+01 : f32
    %1828 = vector.broadcast %cst_867 : f32 to vector<8x128xf32>
    %1829 = arith.maximumf %1827, %1828 : vector<8x128xf32>
    %cst_868 = arith.constant 0.000000e+00 : f32
    %1830 = vector.broadcast %cst_868 : f32 to vector<8x128xf32>
    %1831 = arith.subf %1830, %1829 : vector<8x128xf32>
    %1832 = math.exp %1831 : vector<8x128xf32>
    %cst_869 = arith.constant 1.000000e+00 : f32
    %1833 = vector.broadcast %cst_869 : f32 to vector<8x128xf32>
    %1834 = arith.subf %1833, %1832 : vector<8x128xf32>
    %1835 = arith.mulf %1832, %1832 : vector<8x128xf32>
    %cst_870 = arith.constant 1.000000e+00 : f32
    %1836 = vector.broadcast %cst_870 : f32 to vector<8x128xf32>
    %1837 = arith.addf %1836, %1835 : vector<8x128xf32>
    %1838 = tpu.reciprocal %1837 : vector<8x128xf32> -> vector<8x128xf32>
    %1839 = arith.mulf %1834, %1838 : vector<8x128xf32>
    %c4_871 = arith.constant 4 : index
    %c0_872 = arith.constant 0 : index
    %1840 = memref.load %arg4[%c4_871, %c0_872] : memref<6x16xf32, #tpu.memory_space<smem>>
    %1841 = vector.broadcast %1840 : f32 to vector<8x128xf32>
    %1842 = arith.mulf %1710, %1841 : vector<8x128xf32>
    %c4_873 = arith.constant 4 : index
    %c1_874 = arith.constant 1 : index
    %1843 = memref.load %arg4[%c4_873, %c1_874] : memref<6x16xf32, #tpu.memory_space<smem>>
    %1844 = vector.broadcast %1843 : f32 to vector<8x128xf32>
    %1845 = arith.mulf %1753, %1844 : vector<8x128xf32>
    %1846 = arith.addf %1842, %1845 : vector<8x128xf32>
    %c4_875 = arith.constant 4 : index
    %c2_876 = arith.constant 2 : index
    %1847 = memref.load %arg4[%c4_875, %c2_876] : memref<6x16xf32, #tpu.memory_space<smem>>
    %1848 = vector.broadcast %1847 : f32 to vector<8x128xf32>
    %1849 = arith.mulf %1796, %1848 : vector<8x128xf32>
    %1850 = arith.addf %1846, %1849 : vector<8x128xf32>
    %c4_877 = arith.constant 4 : index
    %c3_878 = arith.constant 3 : index
    %1851 = memref.load %arg4[%c4_877, %c3_878] : memref<6x16xf32, #tpu.memory_space<smem>>
    %1852 = vector.broadcast %1851 : f32 to vector<8x128xf32>
    %1853 = arith.mulf %1839, %1852 : vector<8x128xf32>
    %1854 = arith.addf %1850, %1853 : vector<8x128xf32>
    %c4_879 = arith.constant 4 : index
    %c0_880 = arith.constant 0 : index
    %1855 = memref.load %arg5[%c4_879, %c0_880] : memref<6x4xf32, #tpu.memory_space<smem>>
    %1856 = vector.broadcast %1855 : f32 to vector<8x128xf32>
    %1857 = arith.addf %1854, %1856 : vector<8x128xf32>
    %1858 = arith.addf %1857, %1658 : vector<8x128xf32>
    %c4_881 = arith.constant 4 : index
    %c4_882 = arith.constant 4 : index
    %1859 = memref.load %arg4[%c4_881, %c4_882] : memref<6x16xf32, #tpu.memory_space<smem>>
    %1860 = vector.broadcast %1859 : f32 to vector<8x128xf32>
    %1861 = arith.mulf %1710, %1860 : vector<8x128xf32>
    %c4_883 = arith.constant 4 : index
    %c5_884 = arith.constant 5 : index
    %1862 = memref.load %arg4[%c4_883, %c5_884] : memref<6x16xf32, #tpu.memory_space<smem>>
    %1863 = vector.broadcast %1862 : f32 to vector<8x128xf32>
    %1864 = arith.mulf %1753, %1863 : vector<8x128xf32>
    %1865 = arith.addf %1861, %1864 : vector<8x128xf32>
    %c4_885 = arith.constant 4 : index
    %c6_886 = arith.constant 6 : index
    %1866 = memref.load %arg4[%c4_885, %c6_886] : memref<6x16xf32, #tpu.memory_space<smem>>
    %1867 = vector.broadcast %1866 : f32 to vector<8x128xf32>
    %1868 = arith.mulf %1796, %1867 : vector<8x128xf32>
    %1869 = arith.addf %1865, %1868 : vector<8x128xf32>
    %c4_887 = arith.constant 4 : index
    %c7_888 = arith.constant 7 : index
    %1870 = memref.load %arg4[%c4_887, %c7_888] : memref<6x16xf32, #tpu.memory_space<smem>>
    %1871 = vector.broadcast %1870 : f32 to vector<8x128xf32>
    %1872 = arith.mulf %1839, %1871 : vector<8x128xf32>
    %1873 = arith.addf %1869, %1872 : vector<8x128xf32>
    %c4_889 = arith.constant 4 : index
    %c1_890 = arith.constant 1 : index
    %1874 = memref.load %arg5[%c4_889, %c1_890] : memref<6x4xf32, #tpu.memory_space<smem>>
    %1875 = vector.broadcast %1874 : f32 to vector<8x128xf32>
    %1876 = arith.addf %1873, %1875 : vector<8x128xf32>
    %1877 = arith.addf %1876, %1661 : vector<8x128xf32>
    %c4_891 = arith.constant 4 : index
    %c8_892 = arith.constant 8 : index
    %1878 = memref.load %arg4[%c4_891, %c8_892] : memref<6x16xf32, #tpu.memory_space<smem>>
    %1879 = vector.broadcast %1878 : f32 to vector<8x128xf32>
    %1880 = arith.mulf %1710, %1879 : vector<8x128xf32>
    %c4_893 = arith.constant 4 : index
    %c9_894 = arith.constant 9 : index
    %1881 = memref.load %arg4[%c4_893, %c9_894] : memref<6x16xf32, #tpu.memory_space<smem>>
    %1882 = vector.broadcast %1881 : f32 to vector<8x128xf32>
    %1883 = arith.mulf %1753, %1882 : vector<8x128xf32>
    %1884 = arith.addf %1880, %1883 : vector<8x128xf32>
    %c4_895 = arith.constant 4 : index
    %c10_896 = arith.constant 10 : index
    %1885 = memref.load %arg4[%c4_895, %c10_896] : memref<6x16xf32, #tpu.memory_space<smem>>
    %1886 = vector.broadcast %1885 : f32 to vector<8x128xf32>
    %1887 = arith.mulf %1796, %1886 : vector<8x128xf32>
    %1888 = arith.addf %1884, %1887 : vector<8x128xf32>
    %c4_897 = arith.constant 4 : index
    %c11_898 = arith.constant 11 : index
    %1889 = memref.load %arg4[%c4_897, %c11_898] : memref<6x16xf32, #tpu.memory_space<smem>>
    %1890 = vector.broadcast %1889 : f32 to vector<8x128xf32>
    %1891 = arith.mulf %1839, %1890 : vector<8x128xf32>
    %1892 = arith.addf %1888, %1891 : vector<8x128xf32>
    %c4_899 = arith.constant 4 : index
    %c2_900 = arith.constant 2 : index
    %1893 = memref.load %arg5[%c4_899, %c2_900] : memref<6x4xf32, #tpu.memory_space<smem>>
    %1894 = vector.broadcast %1893 : f32 to vector<8x128xf32>
    %1895 = arith.addf %1892, %1894 : vector<8x128xf32>
    %1896 = arith.addf %1895, %1664 : vector<8x128xf32>
    %c4_901 = arith.constant 4 : index
    %c12_902 = arith.constant 12 : index
    %1897 = memref.load %arg4[%c4_901, %c12_902] : memref<6x16xf32, #tpu.memory_space<smem>>
    %1898 = vector.broadcast %1897 : f32 to vector<8x128xf32>
    %1899 = arith.mulf %1710, %1898 : vector<8x128xf32>
    %c4_903 = arith.constant 4 : index
    %c13_904 = arith.constant 13 : index
    %1900 = memref.load %arg4[%c4_903, %c13_904] : memref<6x16xf32, #tpu.memory_space<smem>>
    %1901 = vector.broadcast %1900 : f32 to vector<8x128xf32>
    %1902 = arith.mulf %1753, %1901 : vector<8x128xf32>
    %1903 = arith.addf %1899, %1902 : vector<8x128xf32>
    %c4_905 = arith.constant 4 : index
    %c14_906 = arith.constant 14 : index
    %1904 = memref.load %arg4[%c4_905, %c14_906] : memref<6x16xf32, #tpu.memory_space<smem>>
    %1905 = vector.broadcast %1904 : f32 to vector<8x128xf32>
    %1906 = arith.mulf %1796, %1905 : vector<8x128xf32>
    %1907 = arith.addf %1903, %1906 : vector<8x128xf32>
    %c4_907 = arith.constant 4 : index
    %c15_908 = arith.constant 15 : index
    %1908 = memref.load %arg4[%c4_907, %c15_908] : memref<6x16xf32, #tpu.memory_space<smem>>
    %1909 = vector.broadcast %1908 : f32 to vector<8x128xf32>
    %1910 = arith.mulf %1839, %1909 : vector<8x128xf32>
    %1911 = arith.addf %1907, %1910 : vector<8x128xf32>
    %c4_909 = arith.constant 4 : index
    %c3_910 = arith.constant 3 : index
    %1912 = memref.load %arg5[%c4_909, %c3_910] : memref<6x4xf32, #tpu.memory_space<smem>>
    %1913 = vector.broadcast %1912 : f32 to vector<8x128xf32>
    %1914 = arith.addf %1911, %1913 : vector<8x128xf32>
    %1915 = arith.addf %1914, %1667 : vector<8x128xf32>
    %1916 = vector.extract_strided_slice %1710 {offsets = [0, 22], sizes = [8, 16], strides = [1, 1]} : vector<8x128xf32> to vector<8x16xf32>
    %1917 = vector.extract_strided_slice %1753 {offsets = [0, 22], sizes = [8, 16], strides = [1, 1]} : vector<8x128xf32> to vector<8x16xf32>
    %1918 = vector.extract_strided_slice %1796 {offsets = [0, 22], sizes = [8, 16], strides = [1, 1]} : vector<8x128xf32> to vector<8x16xf32>
    %1919 = vector.extract_strided_slice %1839 {offsets = [0, 22], sizes = [8, 16], strides = [1, 1]} : vector<8x128xf32> to vector<8x16xf32>
    %c4_911 = arith.constant 4 : index
    %c0_912 = arith.constant 0 : index
    %1920 = memref.load %arg6[%c4_911, %c0_912] : memref<6x32xf32, #tpu.memory_space<smem>>
    %1921 = vector.broadcast %1920 : f32 to vector<8x16xf32>
    %1922 = arith.mulf %1916, %1921 : vector<8x16xf32>
    %c4_913 = arith.constant 4 : index
    %c1_914 = arith.constant 1 : index
    %1923 = memref.load %arg6[%c4_913, %c1_914] : memref<6x32xf32, #tpu.memory_space<smem>>
    %1924 = vector.broadcast %1923 : f32 to vector<8x16xf32>
    %1925 = arith.mulf %1917, %1924 : vector<8x16xf32>
    %1926 = arith.addf %1922, %1925 : vector<8x16xf32>
    %c4_915 = arith.constant 4 : index
    %c2_916 = arith.constant 2 : index
    %1927 = memref.load %arg6[%c4_915, %c2_916] : memref<6x32xf32, #tpu.memory_space<smem>>
    %1928 = vector.broadcast %1927 : f32 to vector<8x16xf32>
    %1929 = arith.mulf %1918, %1928 : vector<8x16xf32>
    %1930 = arith.addf %1926, %1929 : vector<8x16xf32>
    %c4_917 = arith.constant 4 : index
    %c3_918 = arith.constant 3 : index
    %1931 = memref.load %arg6[%c4_917, %c3_918] : memref<6x32xf32, #tpu.memory_space<smem>>
    %1932 = vector.broadcast %1931 : f32 to vector<8x16xf32>
    %1933 = arith.mulf %1919, %1932 : vector<8x16xf32>
    %1934 = arith.addf %1930, %1933 : vector<8x16xf32>
    %c4_919 = arith.constant 4 : index
    %c0_920 = arith.constant 0 : index
    %1935 = memref.load %arg7[%c4_919, %c0_920] : memref<6x8xf32, #tpu.memory_space<smem>>
    %1936 = vector.broadcast %1935 : f32 to vector<8x16xf32>
    %1937 = arith.addf %1934, %1936 : vector<8x16xf32>
    %c4_921 = arith.constant 4 : index
    %c4_922 = arith.constant 4 : index
    %1938 = memref.load %arg6[%c4_921, %c4_922] : memref<6x32xf32, #tpu.memory_space<smem>>
    %1939 = vector.broadcast %1938 : f32 to vector<8x16xf32>
    %1940 = arith.mulf %1916, %1939 : vector<8x16xf32>
    %c4_923 = arith.constant 4 : index
    %c5_924 = arith.constant 5 : index
    %1941 = memref.load %arg6[%c4_923, %c5_924] : memref<6x32xf32, #tpu.memory_space<smem>>
    %1942 = vector.broadcast %1941 : f32 to vector<8x16xf32>
    %1943 = arith.mulf %1917, %1942 : vector<8x16xf32>
    %1944 = arith.addf %1940, %1943 : vector<8x16xf32>
    %c4_925 = arith.constant 4 : index
    %c6_926 = arith.constant 6 : index
    %1945 = memref.load %arg6[%c4_925, %c6_926] : memref<6x32xf32, #tpu.memory_space<smem>>
    %1946 = vector.broadcast %1945 : f32 to vector<8x16xf32>
    %1947 = arith.mulf %1918, %1946 : vector<8x16xf32>
    %1948 = arith.addf %1944, %1947 : vector<8x16xf32>
    %c4_927 = arith.constant 4 : index
    %c7_928 = arith.constant 7 : index
    %1949 = memref.load %arg6[%c4_927, %c7_928] : memref<6x32xf32, #tpu.memory_space<smem>>
    %1950 = vector.broadcast %1949 : f32 to vector<8x16xf32>
    %1951 = arith.mulf %1919, %1950 : vector<8x16xf32>
    %1952 = arith.addf %1948, %1951 : vector<8x16xf32>
    %c4_929 = arith.constant 4 : index
    %c1_930 = arith.constant 1 : index
    %1953 = memref.load %arg7[%c4_929, %c1_930] : memref<6x8xf32, #tpu.memory_space<smem>>
    %1954 = vector.broadcast %1953 : f32 to vector<8x16xf32>
    %1955 = arith.addf %1952, %1954 : vector<8x16xf32>
    %c4_931 = arith.constant 4 : index
    %c8_932 = arith.constant 8 : index
    %1956 = memref.load %arg6[%c4_931, %c8_932] : memref<6x32xf32, #tpu.memory_space<smem>>
    %1957 = vector.broadcast %1956 : f32 to vector<8x16xf32>
    %1958 = arith.mulf %1916, %1957 : vector<8x16xf32>
    %c4_933 = arith.constant 4 : index
    %c9_934 = arith.constant 9 : index
    %1959 = memref.load %arg6[%c4_933, %c9_934] : memref<6x32xf32, #tpu.memory_space<smem>>
    %1960 = vector.broadcast %1959 : f32 to vector<8x16xf32>
    %1961 = arith.mulf %1917, %1960 : vector<8x16xf32>
    %1962 = arith.addf %1958, %1961 : vector<8x16xf32>
    %c4_935 = arith.constant 4 : index
    %c10_936 = arith.constant 10 : index
    %1963 = memref.load %arg6[%c4_935, %c10_936] : memref<6x32xf32, #tpu.memory_space<smem>>
    %1964 = vector.broadcast %1963 : f32 to vector<8x16xf32>
    %1965 = arith.mulf %1918, %1964 : vector<8x16xf32>
    %1966 = arith.addf %1962, %1965 : vector<8x16xf32>
    %c4_937 = arith.constant 4 : index
    %c11_938 = arith.constant 11 : index
    %1967 = memref.load %arg6[%c4_937, %c11_938] : memref<6x32xf32, #tpu.memory_space<smem>>
    %1968 = vector.broadcast %1967 : f32 to vector<8x16xf32>
    %1969 = arith.mulf %1919, %1968 : vector<8x16xf32>
    %1970 = arith.addf %1966, %1969 : vector<8x16xf32>
    %c4_939 = arith.constant 4 : index
    %c2_940 = arith.constant 2 : index
    %1971 = memref.load %arg7[%c4_939, %c2_940] : memref<6x8xf32, #tpu.memory_space<smem>>
    %1972 = vector.broadcast %1971 : f32 to vector<8x16xf32>
    %1973 = arith.addf %1970, %1972 : vector<8x16xf32>
    %c4_941 = arith.constant 4 : index
    %c12_942 = arith.constant 12 : index
    %1974 = memref.load %arg6[%c4_941, %c12_942] : memref<6x32xf32, #tpu.memory_space<smem>>
    %1975 = vector.broadcast %1974 : f32 to vector<8x16xf32>
    %1976 = arith.mulf %1916, %1975 : vector<8x16xf32>
    %c4_943 = arith.constant 4 : index
    %c13_944 = arith.constant 13 : index
    %1977 = memref.load %arg6[%c4_943, %c13_944] : memref<6x32xf32, #tpu.memory_space<smem>>
    %1978 = vector.broadcast %1977 : f32 to vector<8x16xf32>
    %1979 = arith.mulf %1917, %1978 : vector<8x16xf32>
    %1980 = arith.addf %1976, %1979 : vector<8x16xf32>
    %c4_945 = arith.constant 4 : index
    %c14_946 = arith.constant 14 : index
    %1981 = memref.load %arg6[%c4_945, %c14_946] : memref<6x32xf32, #tpu.memory_space<smem>>
    %1982 = vector.broadcast %1981 : f32 to vector<8x16xf32>
    %1983 = arith.mulf %1918, %1982 : vector<8x16xf32>
    %1984 = arith.addf %1980, %1983 : vector<8x16xf32>
    %c4_947 = arith.constant 4 : index
    %c15_948 = arith.constant 15 : index
    %1985 = memref.load %arg6[%c4_947, %c15_948] : memref<6x32xf32, #tpu.memory_space<smem>>
    %1986 = vector.broadcast %1985 : f32 to vector<8x16xf32>
    %1987 = arith.mulf %1919, %1986 : vector<8x16xf32>
    %1988 = arith.addf %1984, %1987 : vector<8x16xf32>
    %c4_949 = arith.constant 4 : index
    %c3_950 = arith.constant 3 : index
    %1989 = memref.load %arg7[%c4_949, %c3_950] : memref<6x8xf32, #tpu.memory_space<smem>>
    %1990 = vector.broadcast %1989 : f32 to vector<8x16xf32>
    %1991 = arith.addf %1988, %1990 : vector<8x16xf32>
    %c4_951 = arith.constant 4 : index
    %c16_952 = arith.constant 16 : index
    %1992 = memref.load %arg6[%c4_951, %c16_952] : memref<6x32xf32, #tpu.memory_space<smem>>
    %1993 = vector.broadcast %1992 : f32 to vector<8x16xf32>
    %1994 = arith.mulf %1916, %1993 : vector<8x16xf32>
    %c4_953 = arith.constant 4 : index
    %c17_954 = arith.constant 17 : index
    %1995 = memref.load %arg6[%c4_953, %c17_954] : memref<6x32xf32, #tpu.memory_space<smem>>
    %1996 = vector.broadcast %1995 : f32 to vector<8x16xf32>
    %1997 = arith.mulf %1917, %1996 : vector<8x16xf32>
    %1998 = arith.addf %1994, %1997 : vector<8x16xf32>
    %c4_955 = arith.constant 4 : index
    %c18_956 = arith.constant 18 : index
    %1999 = memref.load %arg6[%c4_955, %c18_956] : memref<6x32xf32, #tpu.memory_space<smem>>
    %2000 = vector.broadcast %1999 : f32 to vector<8x16xf32>
    %2001 = arith.mulf %1918, %2000 : vector<8x16xf32>
    %2002 = arith.addf %1998, %2001 : vector<8x16xf32>
    %c4_957 = arith.constant 4 : index
    %c19_958 = arith.constant 19 : index
    %2003 = memref.load %arg6[%c4_957, %c19_958] : memref<6x32xf32, #tpu.memory_space<smem>>
    %2004 = vector.broadcast %2003 : f32 to vector<8x16xf32>
    %2005 = arith.mulf %1919, %2004 : vector<8x16xf32>
    %2006 = arith.addf %2002, %2005 : vector<8x16xf32>
    %c4_959 = arith.constant 4 : index
    %c4_960 = arith.constant 4 : index
    %2007 = memref.load %arg7[%c4_959, %c4_960] : memref<6x8xf32, #tpu.memory_space<smem>>
    %2008 = vector.broadcast %2007 : f32 to vector<8x16xf32>
    %2009 = arith.addf %2006, %2008 : vector<8x16xf32>
    %c4_961 = arith.constant 4 : index
    %c20_962 = arith.constant 20 : index
    %2010 = memref.load %arg6[%c4_961, %c20_962] : memref<6x32xf32, #tpu.memory_space<smem>>
    %2011 = vector.broadcast %2010 : f32 to vector<8x16xf32>
    %2012 = arith.mulf %1916, %2011 : vector<8x16xf32>
    %c4_963 = arith.constant 4 : index
    %c21_964 = arith.constant 21 : index
    %2013 = memref.load %arg6[%c4_963, %c21_964] : memref<6x32xf32, #tpu.memory_space<smem>>
    %2014 = vector.broadcast %2013 : f32 to vector<8x16xf32>
    %2015 = arith.mulf %1917, %2014 : vector<8x16xf32>
    %2016 = arith.addf %2012, %2015 : vector<8x16xf32>
    %c4_965 = arith.constant 4 : index
    %c22_966 = arith.constant 22 : index
    %2017 = memref.load %arg6[%c4_965, %c22_966] : memref<6x32xf32, #tpu.memory_space<smem>>
    %2018 = vector.broadcast %2017 : f32 to vector<8x16xf32>
    %2019 = arith.mulf %1918, %2018 : vector<8x16xf32>
    %2020 = arith.addf %2016, %2019 : vector<8x16xf32>
    %c4_967 = arith.constant 4 : index
    %c23_968 = arith.constant 23 : index
    %2021 = memref.load %arg6[%c4_967, %c23_968] : memref<6x32xf32, #tpu.memory_space<smem>>
    %2022 = vector.broadcast %2021 : f32 to vector<8x16xf32>
    %2023 = arith.mulf %1919, %2022 : vector<8x16xf32>
    %2024 = arith.addf %2020, %2023 : vector<8x16xf32>
    %c4_969 = arith.constant 4 : index
    %c5_970 = arith.constant 5 : index
    %2025 = memref.load %arg7[%c4_969, %c5_970] : memref<6x8xf32, #tpu.memory_space<smem>>
    %2026 = vector.broadcast %2025 : f32 to vector<8x16xf32>
    %2027 = arith.addf %2024, %2026 : vector<8x16xf32>
    %c4_971 = arith.constant 4 : index
    %c24_972 = arith.constant 24 : index
    %2028 = memref.load %arg6[%c4_971, %c24_972] : memref<6x32xf32, #tpu.memory_space<smem>>
    %2029 = vector.broadcast %2028 : f32 to vector<8x16xf32>
    %2030 = arith.mulf %1916, %2029 : vector<8x16xf32>
    %c4_973 = arith.constant 4 : index
    %c25_974 = arith.constant 25 : index
    %2031 = memref.load %arg6[%c4_973, %c25_974] : memref<6x32xf32, #tpu.memory_space<smem>>
    %2032 = vector.broadcast %2031 : f32 to vector<8x16xf32>
    %2033 = arith.mulf %1917, %2032 : vector<8x16xf32>
    %2034 = arith.addf %2030, %2033 : vector<8x16xf32>
    %c4_975 = arith.constant 4 : index
    %c26_976 = arith.constant 26 : index
    %2035 = memref.load %arg6[%c4_975, %c26_976] : memref<6x32xf32, #tpu.memory_space<smem>>
    %2036 = vector.broadcast %2035 : f32 to vector<8x16xf32>
    %2037 = arith.mulf %1918, %2036 : vector<8x16xf32>
    %2038 = arith.addf %2034, %2037 : vector<8x16xf32>
    %c4_977 = arith.constant 4 : index
    %c27_978 = arith.constant 27 : index
    %2039 = memref.load %arg6[%c4_977, %c27_978] : memref<6x32xf32, #tpu.memory_space<smem>>
    %2040 = vector.broadcast %2039 : f32 to vector<8x16xf32>
    %2041 = arith.mulf %1919, %2040 : vector<8x16xf32>
    %2042 = arith.addf %2038, %2041 : vector<8x16xf32>
    %c4_979 = arith.constant 4 : index
    %c6_980 = arith.constant 6 : index
    %2043 = memref.load %arg7[%c4_979, %c6_980] : memref<6x8xf32, #tpu.memory_space<smem>>
    %2044 = vector.broadcast %2043 : f32 to vector<8x16xf32>
    %2045 = arith.addf %2042, %2044 : vector<8x16xf32>
    %c4_981 = arith.constant 4 : index
    %c28_982 = arith.constant 28 : index
    %2046 = memref.load %arg6[%c4_981, %c28_982] : memref<6x32xf32, #tpu.memory_space<smem>>
    %2047 = vector.broadcast %2046 : f32 to vector<8x16xf32>
    %2048 = arith.mulf %1916, %2047 : vector<8x16xf32>
    %c4_983 = arith.constant 4 : index
    %c29_984 = arith.constant 29 : index
    %2049 = memref.load %arg6[%c4_983, %c29_984] : memref<6x32xf32, #tpu.memory_space<smem>>
    %2050 = vector.broadcast %2049 : f32 to vector<8x16xf32>
    %2051 = arith.mulf %1917, %2050 : vector<8x16xf32>
    %2052 = arith.addf %2048, %2051 : vector<8x16xf32>
    %c4_985 = arith.constant 4 : index
    %c30_986 = arith.constant 30 : index
    %2053 = memref.load %arg6[%c4_985, %c30_986] : memref<6x32xf32, #tpu.memory_space<smem>>
    %2054 = vector.broadcast %2053 : f32 to vector<8x16xf32>
    %2055 = arith.mulf %1918, %2054 : vector<8x16xf32>
    %2056 = arith.addf %2052, %2055 : vector<8x16xf32>
    %c4_987 = arith.constant 4 : index
    %c31_988 = arith.constant 31 : index
    %2057 = memref.load %arg6[%c4_987, %c31_988] : memref<6x32xf32, #tpu.memory_space<smem>>
    %2058 = vector.broadcast %2057 : f32 to vector<8x16xf32>
    %2059 = arith.mulf %1919, %2058 : vector<8x16xf32>
    %2060 = arith.addf %2056, %2059 : vector<8x16xf32>
    %c4_989 = arith.constant 4 : index
    %c7_990 = arith.constant 7 : index
    %2061 = memref.load %arg7[%c4_989, %c7_990] : memref<6x8xf32, #tpu.memory_space<smem>>
    %2062 = vector.broadcast %2061 : f32 to vector<8x16xf32>
    %2063 = arith.addf %2060, %2062 : vector<8x16xf32>
    %2064 = tpu.concatenate %1937, %1955, %1973, %1991, %2009, %2027, %2045, %2063 in 1 : vector<8x16xf32>, vector<8x16xf32>, vector<8x16xf32>, vector<8x16xf32>, vector<8x16xf32>, vector<8x16xf32>, vector<8x16xf32>, vector<8x16xf32> -> vector<8x128xf32>
    %c4_991 = arith.constant 4 : index
    %c0_992 = arith.constant 0 : index
    %c0_993 = arith.constant 0 : index
    %2065 = vector.load %arg8[%c4_991, %c0_992, %c0_993] : memref<6x8x128xf32, #tpu.memory_space<vmem>>, vector<1x8x128xf32>
    %2066 = vector.shape_cast %2065 : vector<1x8x128xf32> to vector<8x128xf32>
    %2067 = vector.shape_cast %2064 : vector<8x128xf32> to vector<1x8x128xf32>
    tpu.vector_store %arg8[%c4_991, %c0_992, %c0_993], %2067 {strides = array<i32>} : memref<6x8x128xf32, #tpu.memory_space<vmem>>, vector<1x8x128xf32>,
    %2068 = vector.extract_strided_slice %1858 {offsets = [0, 4], sizes = [8, 124], strides = [1, 1]} : vector<8x128xf32> to vector<8x124xf32>
    %2069 = vector.extract_strided_slice %1858 {offsets = [0, 0], sizes = [8, 4], strides = [1, 1]} : vector<8x128xf32> to vector<8x4xf32>
    %2070 = tpu.concatenate %2068, %2069 in 1 : vector<8x124xf32>, vector<8x4xf32> -> vector<8x128xf32>
    %2071 = vector.extract_strided_slice %1877 {offsets = [0, 4], sizes = [8, 124], strides = [1, 1]} : vector<8x128xf32> to vector<8x124xf32>
    %2072 = vector.extract_strided_slice %1877 {offsets = [0, 0], sizes = [8, 4], strides = [1, 1]} : vector<8x128xf32> to vector<8x4xf32>
    %2073 = tpu.concatenate %2071, %2072 in 1 : vector<8x124xf32>, vector<8x4xf32> -> vector<8x128xf32>
    %2074 = vector.extract_strided_slice %1896 {offsets = [0, 4], sizes = [8, 124], strides = [1, 1]} : vector<8x128xf32> to vector<8x124xf32>
    %2075 = vector.extract_strided_slice %1896 {offsets = [0, 0], sizes = [8, 4], strides = [1, 1]} : vector<8x128xf32> to vector<8x4xf32>
    %2076 = tpu.concatenate %2074, %2075 in 1 : vector<8x124xf32>, vector<8x4xf32> -> vector<8x128xf32>
    %2077 = vector.extract_strided_slice %1915 {offsets = [0, 4], sizes = [8, 124], strides = [1, 1]} : vector<8x128xf32> to vector<8x124xf32>
    %2078 = vector.extract_strided_slice %1915 {offsets = [0, 0], sizes = [8, 4], strides = [1, 1]} : vector<8x128xf32> to vector<8x4xf32>
    %2079 = tpu.concatenate %2077, %2078 in 1 : vector<8x124xf32>, vector<8x4xf32> -> vector<8x128xf32>
    %c5_994 = arith.constant 5 : index
    %c0_995 = arith.constant 0 : index
    %2080 = memref.load %arg2[%c5_994, %c0_995] : memref<6x16xf32, #tpu.memory_space<smem>>
    %2081 = vector.broadcast %2080 : f32 to vector<8x128xf32>
    %2082 = arith.mulf %1858, %2081 : vector<8x128xf32>
    %c5_996 = arith.constant 5 : index
    %c0_997 = arith.constant 0 : index
    %2083 = memref.load %arg3[%c5_996, %c0_997] : memref<6x16xf32, #tpu.memory_space<smem>>
    %2084 = vector.broadcast %2083 : f32 to vector<8x128xf32>
    %2085 = arith.mulf %2070, %2084 : vector<8x128xf32>
    %2086 = arith.addf %2082, %2085 : vector<8x128xf32>
    %c5_998 = arith.constant 5 : index
    %c1_999 = arith.constant 1 : index
    %2087 = memref.load %arg2[%c5_998, %c1_999] : memref<6x16xf32, #tpu.memory_space<smem>>
    %2088 = vector.broadcast %2087 : f32 to vector<8x128xf32>
    %2089 = arith.mulf %1877, %2088 : vector<8x128xf32>
    %2090 = arith.addf %2086, %2089 : vector<8x128xf32>
    %c5_1000 = arith.constant 5 : index
    %c1_1001 = arith.constant 1 : index
    %2091 = memref.load %arg3[%c5_1000, %c1_1001] : memref<6x16xf32, #tpu.memory_space<smem>>
    %2092 = vector.broadcast %2091 : f32 to vector<8x128xf32>
    %2093 = arith.mulf %2073, %2092 : vector<8x128xf32>
    %2094 = arith.addf %2090, %2093 : vector<8x128xf32>
    %c5_1002 = arith.constant 5 : index
    %c2_1003 = arith.constant 2 : index
    %2095 = memref.load %arg2[%c5_1002, %c2_1003] : memref<6x16xf32, #tpu.memory_space<smem>>
    %2096 = vector.broadcast %2095 : f32 to vector<8x128xf32>
    %2097 = arith.mulf %1896, %2096 : vector<8x128xf32>
    %2098 = arith.addf %2094, %2097 : vector<8x128xf32>
    %c5_1004 = arith.constant 5 : index
    %c2_1005 = arith.constant 2 : index
    %2099 = memref.load %arg3[%c5_1004, %c2_1005] : memref<6x16xf32, #tpu.memory_space<smem>>
    %2100 = vector.broadcast %2099 : f32 to vector<8x128xf32>
    %2101 = arith.mulf %2076, %2100 : vector<8x128xf32>
    %2102 = arith.addf %2098, %2101 : vector<8x128xf32>
    %c5_1006 = arith.constant 5 : index
    %c3_1007 = arith.constant 3 : index
    %2103 = memref.load %arg2[%c5_1006, %c3_1007] : memref<6x16xf32, #tpu.memory_space<smem>>
    %2104 = vector.broadcast %2103 : f32 to vector<8x128xf32>
    %2105 = arith.mulf %1915, %2104 : vector<8x128xf32>
    %2106 = arith.addf %2102, %2105 : vector<8x128xf32>
    %c5_1008 = arith.constant 5 : index
    %c3_1009 = arith.constant 3 : index
    %2107 = memref.load %arg3[%c5_1008, %c3_1009] : memref<6x16xf32, #tpu.memory_space<smem>>
    %2108 = vector.broadcast %2107 : f32 to vector<8x128xf32>
    %2109 = arith.mulf %2079, %2108 : vector<8x128xf32>
    %2110 = arith.addf %2106, %2109 : vector<8x128xf32>
    %cst_1010 = arith.constant -3.000000e+01 : f32
    %2111 = vector.broadcast %cst_1010 : f32 to vector<8x128xf32>
    %2112 = arith.maximumf %2110, %2111 : vector<8x128xf32>
    %cst_1011 = arith.constant 0.000000e+00 : f32
    %2113 = vector.broadcast %cst_1011 : f32 to vector<8x128xf32>
    %2114 = arith.subf %2113, %2112 : vector<8x128xf32>
    %2115 = math.exp %2114 : vector<8x128xf32>
    %cst_1012 = arith.constant 1.000000e+00 : f32
    %2116 = vector.broadcast %cst_1012 : f32 to vector<8x128xf32>
    %2117 = arith.subf %2116, %2115 : vector<8x128xf32>
    %2118 = arith.mulf %2115, %2115 : vector<8x128xf32>
    %cst_1013 = arith.constant 1.000000e+00 : f32
    %2119 = vector.broadcast %cst_1013 : f32 to vector<8x128xf32>
    %2120 = arith.addf %2119, %2118 : vector<8x128xf32>
    %2121 = tpu.reciprocal %2120 : vector<8x128xf32> -> vector<8x128xf32>
    %2122 = arith.mulf %2117, %2121 : vector<8x128xf32>
    %c5_1014 = arith.constant 5 : index
    %c4_1015 = arith.constant 4 : index
    %2123 = memref.load %arg2[%c5_1014, %c4_1015] : memref<6x16xf32, #tpu.memory_space<smem>>
    %2124 = vector.broadcast %2123 : f32 to vector<8x128xf32>
    %2125 = arith.mulf %1858, %2124 : vector<8x128xf32>
    %c5_1016 = arith.constant 5 : index
    %c4_1017 = arith.constant 4 : index
    %2126 = memref.load %arg3[%c5_1016, %c4_1017] : memref<6x16xf32, #tpu.memory_space<smem>>
    %2127 = vector.broadcast %2126 : f32 to vector<8x128xf32>
    %2128 = arith.mulf %2070, %2127 : vector<8x128xf32>
    %2129 = arith.addf %2125, %2128 : vector<8x128xf32>
    %c5_1018 = arith.constant 5 : index
    %c5_1019 = arith.constant 5 : index
    %2130 = memref.load %arg2[%c5_1018, %c5_1019] : memref<6x16xf32, #tpu.memory_space<smem>>
    %2131 = vector.broadcast %2130 : f32 to vector<8x128xf32>
    %2132 = arith.mulf %1877, %2131 : vector<8x128xf32>
    %2133 = arith.addf %2129, %2132 : vector<8x128xf32>
    %c5_1020 = arith.constant 5 : index
    %c5_1021 = arith.constant 5 : index
    %2134 = memref.load %arg3[%c5_1020, %c5_1021] : memref<6x16xf32, #tpu.memory_space<smem>>
    %2135 = vector.broadcast %2134 : f32 to vector<8x128xf32>
    %2136 = arith.mulf %2073, %2135 : vector<8x128xf32>
    %2137 = arith.addf %2133, %2136 : vector<8x128xf32>
    %c5_1022 = arith.constant 5 : index
    %c6_1023 = arith.constant 6 : index
    %2138 = memref.load %arg2[%c5_1022, %c6_1023] : memref<6x16xf32, #tpu.memory_space<smem>>
    %2139 = vector.broadcast %2138 : f32 to vector<8x128xf32>
    %2140 = arith.mulf %1896, %2139 : vector<8x128xf32>
    %2141 = arith.addf %2137, %2140 : vector<8x128xf32>
    %c5_1024 = arith.constant 5 : index
    %c6_1025 = arith.constant 6 : index
    %2142 = memref.load %arg3[%c5_1024, %c6_1025] : memref<6x16xf32, #tpu.memory_space<smem>>
    %2143 = vector.broadcast %2142 : f32 to vector<8x128xf32>
    %2144 = arith.mulf %2076, %2143 : vector<8x128xf32>
    %2145 = arith.addf %2141, %2144 : vector<8x128xf32>
    %c5_1026 = arith.constant 5 : index
    %c7_1027 = arith.constant 7 : index
    %2146 = memref.load %arg2[%c5_1026, %c7_1027] : memref<6x16xf32, #tpu.memory_space<smem>>
    %2147 = vector.broadcast %2146 : f32 to vector<8x128xf32>
    %2148 = arith.mulf %1915, %2147 : vector<8x128xf32>
    %2149 = arith.addf %2145, %2148 : vector<8x128xf32>
    %c5_1028 = arith.constant 5 : index
    %c7_1029 = arith.constant 7 : index
    %2150 = memref.load %arg3[%c5_1028, %c7_1029] : memref<6x16xf32, #tpu.memory_space<smem>>
    %2151 = vector.broadcast %2150 : f32 to vector<8x128xf32>
    %2152 = arith.mulf %2079, %2151 : vector<8x128xf32>
    %2153 = arith.addf %2149, %2152 : vector<8x128xf32>
    %cst_1030 = arith.constant -3.000000e+01 : f32
    %2154 = vector.broadcast %cst_1030 : f32 to vector<8x128xf32>
    %2155 = arith.maximumf %2153, %2154 : vector<8x128xf32>
    %cst_1031 = arith.constant 0.000000e+00 : f32
    %2156 = vector.broadcast %cst_1031 : f32 to vector<8x128xf32>
    %2157 = arith.subf %2156, %2155 : vector<8x128xf32>
    %2158 = math.exp %2157 : vector<8x128xf32>
    %cst_1032 = arith.constant 1.000000e+00 : f32
    %2159 = vector.broadcast %cst_1032 : f32 to vector<8x128xf32>
    %2160 = arith.subf %2159, %2158 : vector<8x128xf32>
    %2161 = arith.mulf %2158, %2158 : vector<8x128xf32>
    %cst_1033 = arith.constant 1.000000e+00 : f32
    %2162 = vector.broadcast %cst_1033 : f32 to vector<8x128xf32>
    %2163 = arith.addf %2162, %2161 : vector<8x128xf32>
    %2164 = tpu.reciprocal %2163 : vector<8x128xf32> -> vector<8x128xf32>
    %2165 = arith.mulf %2160, %2164 : vector<8x128xf32>
    %c5_1034 = arith.constant 5 : index
    %c8_1035 = arith.constant 8 : index
    %2166 = memref.load %arg2[%c5_1034, %c8_1035] : memref<6x16xf32, #tpu.memory_space<smem>>
    %2167 = vector.broadcast %2166 : f32 to vector<8x128xf32>
    %2168 = arith.mulf %1858, %2167 : vector<8x128xf32>
    %c5_1036 = arith.constant 5 : index
    %c8_1037 = arith.constant 8 : index
    %2169 = memref.load %arg3[%c5_1036, %c8_1037] : memref<6x16xf32, #tpu.memory_space<smem>>
    %2170 = vector.broadcast %2169 : f32 to vector<8x128xf32>
    %2171 = arith.mulf %2070, %2170 : vector<8x128xf32>
    %2172 = arith.addf %2168, %2171 : vector<8x128xf32>
    %c5_1038 = arith.constant 5 : index
    %c9_1039 = arith.constant 9 : index
    %2173 = memref.load %arg2[%c5_1038, %c9_1039] : memref<6x16xf32, #tpu.memory_space<smem>>
    %2174 = vector.broadcast %2173 : f32 to vector<8x128xf32>
    %2175 = arith.mulf %1877, %2174 : vector<8x128xf32>
    %2176 = arith.addf %2172, %2175 : vector<8x128xf32>
    %c5_1040 = arith.constant 5 : index
    %c9_1041 = arith.constant 9 : index
    %2177 = memref.load %arg3[%c5_1040, %c9_1041] : memref<6x16xf32, #tpu.memory_space<smem>>
    %2178 = vector.broadcast %2177 : f32 to vector<8x128xf32>
    %2179 = arith.mulf %2073, %2178 : vector<8x128xf32>
    %2180 = arith.addf %2176, %2179 : vector<8x128xf32>
    %c5_1042 = arith.constant 5 : index
    %c10_1043 = arith.constant 10 : index
    %2181 = memref.load %arg2[%c5_1042, %c10_1043] : memref<6x16xf32, #tpu.memory_space<smem>>
    %2182 = vector.broadcast %2181 : f32 to vector<8x128xf32>
    %2183 = arith.mulf %1896, %2182 : vector<8x128xf32>
    %2184 = arith.addf %2180, %2183 : vector<8x128xf32>
    %c5_1044 = arith.constant 5 : index
    %c10_1045 = arith.constant 10 : index
    %2185 = memref.load %arg3[%c5_1044, %c10_1045] : memref<6x16xf32, #tpu.memory_space<smem>>
    %2186 = vector.broadcast %2185 : f32 to vector<8x128xf32>
    %2187 = arith.mulf %2076, %2186 : vector<8x128xf32>
    %2188 = arith.addf %2184, %2187 : vector<8x128xf32>
    %c5_1046 = arith.constant 5 : index
    %c11_1047 = arith.constant 11 : index
    %2189 = memref.load %arg2[%c5_1046, %c11_1047] : memref<6x16xf32, #tpu.memory_space<smem>>
    %2190 = vector.broadcast %2189 : f32 to vector<8x128xf32>
    %2191 = arith.mulf %1915, %2190 : vector<8x128xf32>
    %2192 = arith.addf %2188, %2191 : vector<8x128xf32>
    %c5_1048 = arith.constant 5 : index
    %c11_1049 = arith.constant 11 : index
    %2193 = memref.load %arg3[%c5_1048, %c11_1049] : memref<6x16xf32, #tpu.memory_space<smem>>
    %2194 = vector.broadcast %2193 : f32 to vector<8x128xf32>
    %2195 = arith.mulf %2079, %2194 : vector<8x128xf32>
    %2196 = arith.addf %2192, %2195 : vector<8x128xf32>
    %cst_1050 = arith.constant -3.000000e+01 : f32
    %2197 = vector.broadcast %cst_1050 : f32 to vector<8x128xf32>
    %2198 = arith.maximumf %2196, %2197 : vector<8x128xf32>
    %cst_1051 = arith.constant 0.000000e+00 : f32
    %2199 = vector.broadcast %cst_1051 : f32 to vector<8x128xf32>
    %2200 = arith.subf %2199, %2198 : vector<8x128xf32>
    %2201 = math.exp %2200 : vector<8x128xf32>
    %cst_1052 = arith.constant 1.000000e+00 : f32
    %2202 = vector.broadcast %cst_1052 : f32 to vector<8x128xf32>
    %2203 = arith.subf %2202, %2201 : vector<8x128xf32>
    %2204 = arith.mulf %2201, %2201 : vector<8x128xf32>
    %cst_1053 = arith.constant 1.000000e+00 : f32
    %2205 = vector.broadcast %cst_1053 : f32 to vector<8x128xf32>
    %2206 = arith.addf %2205, %2204 : vector<8x128xf32>
    %2207 = tpu.reciprocal %2206 : vector<8x128xf32> -> vector<8x128xf32>
    %2208 = arith.mulf %2203, %2207 : vector<8x128xf32>
    %c5_1054 = arith.constant 5 : index
    %c12_1055 = arith.constant 12 : index
    %2209 = memref.load %arg2[%c5_1054, %c12_1055] : memref<6x16xf32, #tpu.memory_space<smem>>
    %2210 = vector.broadcast %2209 : f32 to vector<8x128xf32>
    %2211 = arith.mulf %1858, %2210 : vector<8x128xf32>
    %c5_1056 = arith.constant 5 : index
    %c12_1057 = arith.constant 12 : index
    %2212 = memref.load %arg3[%c5_1056, %c12_1057] : memref<6x16xf32, #tpu.memory_space<smem>>
    %2213 = vector.broadcast %2212 : f32 to vector<8x128xf32>
    %2214 = arith.mulf %2070, %2213 : vector<8x128xf32>
    %2215 = arith.addf %2211, %2214 : vector<8x128xf32>
    %c5_1058 = arith.constant 5 : index
    %c13_1059 = arith.constant 13 : index
    %2216 = memref.load %arg2[%c5_1058, %c13_1059] : memref<6x16xf32, #tpu.memory_space<smem>>
    %2217 = vector.broadcast %2216 : f32 to vector<8x128xf32>
    %2218 = arith.mulf %1877, %2217 : vector<8x128xf32>
    %2219 = arith.addf %2215, %2218 : vector<8x128xf32>
    %c5_1060 = arith.constant 5 : index
    %c13_1061 = arith.constant 13 : index
    %2220 = memref.load %arg3[%c5_1060, %c13_1061] : memref<6x16xf32, #tpu.memory_space<smem>>
    %2221 = vector.broadcast %2220 : f32 to vector<8x128xf32>
    %2222 = arith.mulf %2073, %2221 : vector<8x128xf32>
    %2223 = arith.addf %2219, %2222 : vector<8x128xf32>
    %c5_1062 = arith.constant 5 : index
    %c14_1063 = arith.constant 14 : index
    %2224 = memref.load %arg2[%c5_1062, %c14_1063] : memref<6x16xf32, #tpu.memory_space<smem>>
    %2225 = vector.broadcast %2224 : f32 to vector<8x128xf32>
    %2226 = arith.mulf %1896, %2225 : vector<8x128xf32>
    %2227 = arith.addf %2223, %2226 : vector<8x128xf32>
    %c5_1064 = arith.constant 5 : index
    %c14_1065 = arith.constant 14 : index
    %2228 = memref.load %arg3[%c5_1064, %c14_1065] : memref<6x16xf32, #tpu.memory_space<smem>>
    %2229 = vector.broadcast %2228 : f32 to vector<8x128xf32>
    %2230 = arith.mulf %2076, %2229 : vector<8x128xf32>
    %2231 = arith.addf %2227, %2230 : vector<8x128xf32>
    %c5_1066 = arith.constant 5 : index
    %c15_1067 = arith.constant 15 : index
    %2232 = memref.load %arg2[%c5_1066, %c15_1067] : memref<6x16xf32, #tpu.memory_space<smem>>
    %2233 = vector.broadcast %2232 : f32 to vector<8x128xf32>
    %2234 = arith.mulf %1915, %2233 : vector<8x128xf32>
    %2235 = arith.addf %2231, %2234 : vector<8x128xf32>
    %c5_1068 = arith.constant 5 : index
    %c15_1069 = arith.constant 15 : index
    %2236 = memref.load %arg3[%c5_1068, %c15_1069] : memref<6x16xf32, #tpu.memory_space<smem>>
    %2237 = vector.broadcast %2236 : f32 to vector<8x128xf32>
    %2238 = arith.mulf %2079, %2237 : vector<8x128xf32>
    %2239 = arith.addf %2235, %2238 : vector<8x128xf32>
    %cst_1070 = arith.constant -3.000000e+01 : f32
    %2240 = vector.broadcast %cst_1070 : f32 to vector<8x128xf32>
    %2241 = arith.maximumf %2239, %2240 : vector<8x128xf32>
    %cst_1071 = arith.constant 0.000000e+00 : f32
    %2242 = vector.broadcast %cst_1071 : f32 to vector<8x128xf32>
    %2243 = arith.subf %2242, %2241 : vector<8x128xf32>
    %2244 = math.exp %2243 : vector<8x128xf32>
    %cst_1072 = arith.constant 1.000000e+00 : f32
    %2245 = vector.broadcast %cst_1072 : f32 to vector<8x128xf32>
    %2246 = arith.subf %2245, %2244 : vector<8x128xf32>
    %2247 = arith.mulf %2244, %2244 : vector<8x128xf32>
    %cst_1073 = arith.constant 1.000000e+00 : f32
    %2248 = vector.broadcast %cst_1073 : f32 to vector<8x128xf32>
    %2249 = arith.addf %2248, %2247 : vector<8x128xf32>
    %2250 = tpu.reciprocal %2249 : vector<8x128xf32> -> vector<8x128xf32>
    %2251 = arith.mulf %2246, %2250 : vector<8x128xf32>
    %2252 = vector.extract_strided_slice %2122 {offsets = [0, 18], sizes = [8, 16], strides = [1, 1]} : vector<8x128xf32> to vector<8x16xf32>
    %2253 = vector.extract_strided_slice %2165 {offsets = [0, 18], sizes = [8, 16], strides = [1, 1]} : vector<8x128xf32> to vector<8x16xf32>
    %2254 = vector.extract_strided_slice %2208 {offsets = [0, 18], sizes = [8, 16], strides = [1, 1]} : vector<8x128xf32> to vector<8x16xf32>
    %2255 = vector.extract_strided_slice %2251 {offsets = [0, 18], sizes = [8, 16], strides = [1, 1]} : vector<8x128xf32> to vector<8x16xf32>
    %c5_1074 = arith.constant 5 : index
    %c0_1075 = arith.constant 0 : index
    %2256 = memref.load %arg6[%c5_1074, %c0_1075] : memref<6x32xf32, #tpu.memory_space<smem>>
    %2257 = vector.broadcast %2256 : f32 to vector<8x16xf32>
    %2258 = arith.mulf %2252, %2257 : vector<8x16xf32>
    %c5_1076 = arith.constant 5 : index
    %c1_1077 = arith.constant 1 : index
    %2259 = memref.load %arg6[%c5_1076, %c1_1077] : memref<6x32xf32, #tpu.memory_space<smem>>
    %2260 = vector.broadcast %2259 : f32 to vector<8x16xf32>
    %2261 = arith.mulf %2253, %2260 : vector<8x16xf32>
    %2262 = arith.addf %2258, %2261 : vector<8x16xf32>
    %c5_1078 = arith.constant 5 : index
    %c2_1079 = arith.constant 2 : index
    %2263 = memref.load %arg6[%c5_1078, %c2_1079] : memref<6x32xf32, #tpu.memory_space<smem>>
    %2264 = vector.broadcast %2263 : f32 to vector<8x16xf32>
    %2265 = arith.mulf %2254, %2264 : vector<8x16xf32>
    %2266 = arith.addf %2262, %2265 : vector<8x16xf32>
    %c5_1080 = arith.constant 5 : index
    %c3_1081 = arith.constant 3 : index
    %2267 = memref.load %arg6[%c5_1080, %c3_1081] : memref<6x32xf32, #tpu.memory_space<smem>>
    %2268 = vector.broadcast %2267 : f32 to vector<8x16xf32>
    %2269 = arith.mulf %2255, %2268 : vector<8x16xf32>
    %2270 = arith.addf %2266, %2269 : vector<8x16xf32>
    %c5_1082 = arith.constant 5 : index
    %c0_1083 = arith.constant 0 : index
    %2271 = memref.load %arg7[%c5_1082, %c0_1083] : memref<6x8xf32, #tpu.memory_space<smem>>
    %2272 = vector.broadcast %2271 : f32 to vector<8x16xf32>
    %2273 = arith.addf %2270, %2272 : vector<8x16xf32>
    %c5_1084 = arith.constant 5 : index
    %c4_1085 = arith.constant 4 : index
    %2274 = memref.load %arg6[%c5_1084, %c4_1085] : memref<6x32xf32, #tpu.memory_space<smem>>
    %2275 = vector.broadcast %2274 : f32 to vector<8x16xf32>
    %2276 = arith.mulf %2252, %2275 : vector<8x16xf32>
    %c5_1086 = arith.constant 5 : index
    %c5_1087 = arith.constant 5 : index
    %2277 = memref.load %arg6[%c5_1086, %c5_1087] : memref<6x32xf32, #tpu.memory_space<smem>>
    %2278 = vector.broadcast %2277 : f32 to vector<8x16xf32>
    %2279 = arith.mulf %2253, %2278 : vector<8x16xf32>
    %2280 = arith.addf %2276, %2279 : vector<8x16xf32>
    %c5_1088 = arith.constant 5 : index
    %c6_1089 = arith.constant 6 : index
    %2281 = memref.load %arg6[%c5_1088, %c6_1089] : memref<6x32xf32, #tpu.memory_space<smem>>
    %2282 = vector.broadcast %2281 : f32 to vector<8x16xf32>
    %2283 = arith.mulf %2254, %2282 : vector<8x16xf32>
    %2284 = arith.addf %2280, %2283 : vector<8x16xf32>
    %c5_1090 = arith.constant 5 : index
    %c7_1091 = arith.constant 7 : index
    %2285 = memref.load %arg6[%c5_1090, %c7_1091] : memref<6x32xf32, #tpu.memory_space<smem>>
    %2286 = vector.broadcast %2285 : f32 to vector<8x16xf32>
    %2287 = arith.mulf %2255, %2286 : vector<8x16xf32>
    %2288 = arith.addf %2284, %2287 : vector<8x16xf32>
    %c5_1092 = arith.constant 5 : index
    %c1_1093 = arith.constant 1 : index
    %2289 = memref.load %arg7[%c5_1092, %c1_1093] : memref<6x8xf32, #tpu.memory_space<smem>>
    %2290 = vector.broadcast %2289 : f32 to vector<8x16xf32>
    %2291 = arith.addf %2288, %2290 : vector<8x16xf32>
    %c5_1094 = arith.constant 5 : index
    %c8_1095 = arith.constant 8 : index
    %2292 = memref.load %arg6[%c5_1094, %c8_1095] : memref<6x32xf32, #tpu.memory_space<smem>>
    %2293 = vector.broadcast %2292 : f32 to vector<8x16xf32>
    %2294 = arith.mulf %2252, %2293 : vector<8x16xf32>
    %c5_1096 = arith.constant 5 : index
    %c9_1097 = arith.constant 9 : index
    %2295 = memref.load %arg6[%c5_1096, %c9_1097] : memref<6x32xf32, #tpu.memory_space<smem>>
    %2296 = vector.broadcast %2295 : f32 to vector<8x16xf32>
    %2297 = arith.mulf %2253, %2296 : vector<8x16xf32>
    %2298 = arith.addf %2294, %2297 : vector<8x16xf32>
    %c5_1098 = arith.constant 5 : index
    %c10_1099 = arith.constant 10 : index
    %2299 = memref.load %arg6[%c5_1098, %c10_1099] : memref<6x32xf32, #tpu.memory_space<smem>>
    %2300 = vector.broadcast %2299 : f32 to vector<8x16xf32>
    %2301 = arith.mulf %2254, %2300 : vector<8x16xf32>
    %2302 = arith.addf %2298, %2301 : vector<8x16xf32>
    %c5_1100 = arith.constant 5 : index
    %c11_1101 = arith.constant 11 : index
    %2303 = memref.load %arg6[%c5_1100, %c11_1101] : memref<6x32xf32, #tpu.memory_space<smem>>
    %2304 = vector.broadcast %2303 : f32 to vector<8x16xf32>
    %2305 = arith.mulf %2255, %2304 : vector<8x16xf32>
    %2306 = arith.addf %2302, %2305 : vector<8x16xf32>
    %c5_1102 = arith.constant 5 : index
    %c2_1103 = arith.constant 2 : index
    %2307 = memref.load %arg7[%c5_1102, %c2_1103] : memref<6x8xf32, #tpu.memory_space<smem>>
    %2308 = vector.broadcast %2307 : f32 to vector<8x16xf32>
    %2309 = arith.addf %2306, %2308 : vector<8x16xf32>
    %c5_1104 = arith.constant 5 : index
    %c12_1105 = arith.constant 12 : index
    %2310 = memref.load %arg6[%c5_1104, %c12_1105] : memref<6x32xf32, #tpu.memory_space<smem>>
    %2311 = vector.broadcast %2310 : f32 to vector<8x16xf32>
    %2312 = arith.mulf %2252, %2311 : vector<8x16xf32>
    %c5_1106 = arith.constant 5 : index
    %c13_1107 = arith.constant 13 : index
    %2313 = memref.load %arg6[%c5_1106, %c13_1107] : memref<6x32xf32, #tpu.memory_space<smem>>
    %2314 = vector.broadcast %2313 : f32 to vector<8x16xf32>
    %2315 = arith.mulf %2253, %2314 : vector<8x16xf32>
    %2316 = arith.addf %2312, %2315 : vector<8x16xf32>
    %c5_1108 = arith.constant 5 : index
    %c14_1109 = arith.constant 14 : index
    %2317 = memref.load %arg6[%c5_1108, %c14_1109] : memref<6x32xf32, #tpu.memory_space<smem>>
    %2318 = vector.broadcast %2317 : f32 to vector<8x16xf32>
    %2319 = arith.mulf %2254, %2318 : vector<8x16xf32>
    %2320 = arith.addf %2316, %2319 : vector<8x16xf32>
    %c5_1110 = arith.constant 5 : index
    %c15_1111 = arith.constant 15 : index
    %2321 = memref.load %arg6[%c5_1110, %c15_1111] : memref<6x32xf32, #tpu.memory_space<smem>>
    %2322 = vector.broadcast %2321 : f32 to vector<8x16xf32>
    %2323 = arith.mulf %2255, %2322 : vector<8x16xf32>
    %2324 = arith.addf %2320, %2323 : vector<8x16xf32>
    %c5_1112 = arith.constant 5 : index
    %c3_1113 = arith.constant 3 : index
    %2325 = memref.load %arg7[%c5_1112, %c3_1113] : memref<6x8xf32, #tpu.memory_space<smem>>
    %2326 = vector.broadcast %2325 : f32 to vector<8x16xf32>
    %2327 = arith.addf %2324, %2326 : vector<8x16xf32>
    %c5_1114 = arith.constant 5 : index
    %c16_1115 = arith.constant 16 : index
    %2328 = memref.load %arg6[%c5_1114, %c16_1115] : memref<6x32xf32, #tpu.memory_space<smem>>
    %2329 = vector.broadcast %2328 : f32 to vector<8x16xf32>
    %2330 = arith.mulf %2252, %2329 : vector<8x16xf32>
    %c5_1116 = arith.constant 5 : index
    %c17_1117 = arith.constant 17 : index
    %2331 = memref.load %arg6[%c5_1116, %c17_1117] : memref<6x32xf32, #tpu.memory_space<smem>>
    %2332 = vector.broadcast %2331 : f32 to vector<8x16xf32>
    %2333 = arith.mulf %2253, %2332 : vector<8x16xf32>
    %2334 = arith.addf %2330, %2333 : vector<8x16xf32>
    %c5_1118 = arith.constant 5 : index
    %c18_1119 = arith.constant 18 : index
    %2335 = memref.load %arg6[%c5_1118, %c18_1119] : memref<6x32xf32, #tpu.memory_space<smem>>
    %2336 = vector.broadcast %2335 : f32 to vector<8x16xf32>
    %2337 = arith.mulf %2254, %2336 : vector<8x16xf32>
    %2338 = arith.addf %2334, %2337 : vector<8x16xf32>
    %c5_1120 = arith.constant 5 : index
    %c19_1121 = arith.constant 19 : index
    %2339 = memref.load %arg6[%c5_1120, %c19_1121] : memref<6x32xf32, #tpu.memory_space<smem>>
    %2340 = vector.broadcast %2339 : f32 to vector<8x16xf32>
    %2341 = arith.mulf %2255, %2340 : vector<8x16xf32>
    %2342 = arith.addf %2338, %2341 : vector<8x16xf32>
    %c5_1122 = arith.constant 5 : index
    %c4_1123 = arith.constant 4 : index
    %2343 = memref.load %arg7[%c5_1122, %c4_1123] : memref<6x8xf32, #tpu.memory_space<smem>>
    %2344 = vector.broadcast %2343 : f32 to vector<8x16xf32>
    %2345 = arith.addf %2342, %2344 : vector<8x16xf32>
    %c5_1124 = arith.constant 5 : index
    %c20_1125 = arith.constant 20 : index
    %2346 = memref.load %arg6[%c5_1124, %c20_1125] : memref<6x32xf32, #tpu.memory_space<smem>>
    %2347 = vector.broadcast %2346 : f32 to vector<8x16xf32>
    %2348 = arith.mulf %2252, %2347 : vector<8x16xf32>
    %c5_1126 = arith.constant 5 : index
    %c21_1127 = arith.constant 21 : index
    %2349 = memref.load %arg6[%c5_1126, %c21_1127] : memref<6x32xf32, #tpu.memory_space<smem>>
    %2350 = vector.broadcast %2349 : f32 to vector<8x16xf32>
    %2351 = arith.mulf %2253, %2350 : vector<8x16xf32>
    %2352 = arith.addf %2348, %2351 : vector<8x16xf32>
    %c5_1128 = arith.constant 5 : index
    %c22_1129 = arith.constant 22 : index
    %2353 = memref.load %arg6[%c5_1128, %c22_1129] : memref<6x32xf32, #tpu.memory_space<smem>>
    %2354 = vector.broadcast %2353 : f32 to vector<8x16xf32>
    %2355 = arith.mulf %2254, %2354 : vector<8x16xf32>
    %2356 = arith.addf %2352, %2355 : vector<8x16xf32>
    %c5_1130 = arith.constant 5 : index
    %c23_1131 = arith.constant 23 : index
    %2357 = memref.load %arg6[%c5_1130, %c23_1131] : memref<6x32xf32, #tpu.memory_space<smem>>
    %2358 = vector.broadcast %2357 : f32 to vector<8x16xf32>
    %2359 = arith.mulf %2255, %2358 : vector<8x16xf32>
    %2360 = arith.addf %2356, %2359 : vector<8x16xf32>
    %c5_1132 = arith.constant 5 : index
    %c5_1133 = arith.constant 5 : index
    %2361 = memref.load %arg7[%c5_1132, %c5_1133] : memref<6x8xf32, #tpu.memory_space<smem>>
    %2362 = vector.broadcast %2361 : f32 to vector<8x16xf32>
    %2363 = arith.addf %2360, %2362 : vector<8x16xf32>
    %c5_1134 = arith.constant 5 : index
    %c24_1135 = arith.constant 24 : index
    %2364 = memref.load %arg6[%c5_1134, %c24_1135] : memref<6x32xf32, #tpu.memory_space<smem>>
    %2365 = vector.broadcast %2364 : f32 to vector<8x16xf32>
    %2366 = arith.mulf %2252, %2365 : vector<8x16xf32>
    %c5_1136 = arith.constant 5 : index
    %c25_1137 = arith.constant 25 : index
    %2367 = memref.load %arg6[%c5_1136, %c25_1137] : memref<6x32xf32, #tpu.memory_space<smem>>
    %2368 = vector.broadcast %2367 : f32 to vector<8x16xf32>
    %2369 = arith.mulf %2253, %2368 : vector<8x16xf32>
    %2370 = arith.addf %2366, %2369 : vector<8x16xf32>
    %c5_1138 = arith.constant 5 : index
    %c26_1139 = arith.constant 26 : index
    %2371 = memref.load %arg6[%c5_1138, %c26_1139] : memref<6x32xf32, #tpu.memory_space<smem>>
    %2372 = vector.broadcast %2371 : f32 to vector<8x16xf32>
    %2373 = arith.mulf %2254, %2372 : vector<8x16xf32>
    %2374 = arith.addf %2370, %2373 : vector<8x16xf32>
    %c5_1140 = arith.constant 5 : index
    %c27_1141 = arith.constant 27 : index
    %2375 = memref.load %arg6[%c5_1140, %c27_1141] : memref<6x32xf32, #tpu.memory_space<smem>>
    %2376 = vector.broadcast %2375 : f32 to vector<8x16xf32>
    %2377 = arith.mulf %2255, %2376 : vector<8x16xf32>
    %2378 = arith.addf %2374, %2377 : vector<8x16xf32>
    %c5_1142 = arith.constant 5 : index
    %c6_1143 = arith.constant 6 : index
    %2379 = memref.load %arg7[%c5_1142, %c6_1143] : memref<6x8xf32, #tpu.memory_space<smem>>
    %2380 = vector.broadcast %2379 : f32 to vector<8x16xf32>
    %2381 = arith.addf %2378, %2380 : vector<8x16xf32>
    %c5_1144 = arith.constant 5 : index
    %c28_1145 = arith.constant 28 : index
    %2382 = memref.load %arg6[%c5_1144, %c28_1145] : memref<6x32xf32, #tpu.memory_space<smem>>
    %2383 = vector.broadcast %2382 : f32 to vector<8x16xf32>
    %2384 = arith.mulf %2252, %2383 : vector<8x16xf32>
    %c5_1146 = arith.constant 5 : index
    %c29_1147 = arith.constant 29 : index
    %2385 = memref.load %arg6[%c5_1146, %c29_1147] : memref<6x32xf32, #tpu.memory_space<smem>>
    %2386 = vector.broadcast %2385 : f32 to vector<8x16xf32>
    %2387 = arith.mulf %2253, %2386 : vector<8x16xf32>
    %2388 = arith.addf %2384, %2387 : vector<8x16xf32>
    %c5_1148 = arith.constant 5 : index
    %c30_1149 = arith.constant 30 : index
    %2389 = memref.load %arg6[%c5_1148, %c30_1149] : memref<6x32xf32, #tpu.memory_space<smem>>
    %2390 = vector.broadcast %2389 : f32 to vector<8x16xf32>
    %2391 = arith.mulf %2254, %2390 : vector<8x16xf32>
    %2392 = arith.addf %2388, %2391 : vector<8x16xf32>
    %c5_1150 = arith.constant 5 : index
    %c31_1151 = arith.constant 31 : index
    %2393 = memref.load %arg6[%c5_1150, %c31_1151] : memref<6x32xf32, #tpu.memory_space<smem>>
    %2394 = vector.broadcast %2393 : f32 to vector<8x16xf32>
    %2395 = arith.mulf %2255, %2394 : vector<8x16xf32>
    %2396 = arith.addf %2392, %2395 : vector<8x16xf32>
    %c5_1152 = arith.constant 5 : index
    %c7_1153 = arith.constant 7 : index
    %2397 = memref.load %arg7[%c5_1152, %c7_1153] : memref<6x8xf32, #tpu.memory_space<smem>>
    %2398 = vector.broadcast %2397 : f32 to vector<8x16xf32>
    %2399 = arith.addf %2396, %2398 : vector<8x16xf32>
    %2400 = tpu.concatenate %2273, %2291, %2309, %2327, %2345, %2363, %2381, %2399 in 1 : vector<8x16xf32>, vector<8x16xf32>, vector<8x16xf32>, vector<8x16xf32>, vector<8x16xf32>, vector<8x16xf32>, vector<8x16xf32>, vector<8x16xf32> -> vector<8x128xf32>
    %c5_1154 = arith.constant 5 : index
    %c0_1155 = arith.constant 0 : index
    %c0_1156 = arith.constant 0 : index
    %2401 = vector.load %arg8[%c5_1154, %c0_1155, %c0_1156] : memref<6x8x128xf32, #tpu.memory_space<vmem>>, vector<1x8x128xf32>
    %2402 = vector.shape_cast %2401 : vector<1x8x128xf32> to vector<8x128xf32>
    %2403 = vector.shape_cast %2400 : vector<8x128xf32> to vector<1x8x128xf32>
    tpu.vector_store %arg8[%c5_1154, %c0_1155, %c0_1156], %2403 {strides = array<i32>} : memref<6x8x128xf32, #tpu.memory_space<vmem>>, vector<1x8x128xf32>,
    return
  }
  func.func @transform_0(%arg0: i32) -> (i32, i32, i32) {
    %c0_i32 = arith.constant 0 : i32
    %c0_i32_0 = arith.constant 0 : i32
    %c0_i32_1 = arith.constant 0 : i32
    return %c0_i32, %arg0, %c0_i32_0 : i32, i32, i32
  }
  func.func @transform_1(%arg0: i32) -> (i32, i32) {
    %c0_i32 = arith.constant 0 : i32
    %c0_i32_0 = arith.constant 0 : i32
    %c0_i32_1 = arith.constant 0 : i32
    return %c0_i32, %c0_i32_0 : i32, i32
  }
  func.func @transform_2(%arg0: i32) -> (i32, i32) {
    %c0_i32 = arith.constant 0 : i32
    %c0_i32_0 = arith.constant 0 : i32
    %c0_i32_1 = arith.constant 0 : i32
    return %c0_i32, %c0_i32_0 : i32, i32
  }
  func.func @transform_3(%arg0: i32) -> (i32, i32) {
    %c0_i32 = arith.constant 0 : i32
    %c0_i32_0 = arith.constant 0 : i32
    %c0_i32_1 = arith.constant 0 : i32
    return %c0_i32, %c0_i32_0 : i32, i32
  }
  func.func @transform_4(%arg0: i32) -> (i32, i32) {
    %c0_i32 = arith.constant 0 : i32
    %c0_i32_0 = arith.constant 0 : i32
    %c0_i32_1 = arith.constant 0 : i32
    return %c0_i32, %c0_i32_0 : i32, i32
  }
  func.func @transform_5(%arg0: i32) -> (i32, i32) {
    %c0_i32 = arith.constant 0 : i32
    %c0_i32_0 = arith.constant 0 : i32
    %c0_i32_1 = arith.constant 0 : i32
    return %c0_i32, %c0_i32_0 : i32, i32
  }
  func.func @transform_6(%arg0: i32) -> (i32, i32) {
    %c0_i32 = arith.constant 0 : i32
    %c0_i32_0 = arith.constant 0 : i32
    %c0_i32_1 = arith.constant 0 : i32
    return %c0_i32, %c0_i32_0 : i32, i32
  }
  func.func @transform_7(%arg0: i32) -> (i32, i32, i32) {
    %c0_i32 = arith.constant 0 : i32
    %c0_i32_0 = arith.constant 0 : i32
    %c0_i32_1 = arith.constant 0 : i32
    return %c0_i32, %arg0, %c0_i32_0 : i32, i32, i32
  }
}

</mosaic_0001>

<llo_original>
// kernel: tpu_custom_call.1
$region0: #{tpu_custom_call.1}
  #allocation0 [shape = 'u32[]', space=smem, size = 0x4, offset = 0x4, fixed_abs, tag = 'smem constant byte address 0x4 - core index']
  #allocation1 [shape = 'u32[144,128]{1,0:T(1,128)}', space=vmem, size = 0x12000, scoped, tag = 'internal scratch']
  %s0 = inlined_call_operand.hbm [shape: f32[4,16,128], index: 0, kind: input, shape index: {}]
  %s1 = inlined_call_operand.vmem [shape: f32[6,16], index: 1, kind: input, shape index: {}]
  %s2 = inlined_call_operand.vmem [shape: f32[6,16], index: 2, kind: input, shape index: {}]
  %s3 = inlined_call_operand.hbm [shape: f32[6,16], index: 3, kind: input, shape index: {}]
  %s4 = inlined_call_operand.vmem [shape: f32[6,4], index: 4, kind: input, shape index: {}]
  %s5 = inlined_call_operand.vmem [shape: f32[6,32], index: 5, kind: input, shape index: {}]
  %s6 = inlined_call_operand.vmem [shape: f32[6,8], index: 6, kind: input, shape index: {}]
  %s7 = inlined_call_operand.hbm [shape: f32[6,16,128], index: 7, kind: output, shape index: {}]
  %s8 = sld [smem:[#allocation0]]
  $region89: #{tpu_custom_call.1} parent=0
    _
  %s10 = ssub.s32 1, %s8
  %s11 = scalar_select 0, %s10, %s8
  $region1: #{tpu_custom_call.1} parent=0
    #allocation2 [shape = 'u8[32768]{0}', space=vmem, size = 0x8000, scoped, tag = 'input window, operand 0']
    #allocation3 [shape = 's32[2]{0}', space=sflag, size = 0x8, scoped, tag = 'scoped memory for tpu_custom_call.1']
    #allocation4 [shape = 's32[2]{0}', space=sflag, size = 0x8, scoped, tag = 'scoped memory for tpu_custom_call.1']
    #allocation5 [shape = 's32[2]{0}', space=sflag, size = 0x8, scoped, tag = 'scoped memory for tpu_custom_call.1']
    #allocation6 [shape = 's32[2]{0}', space=sflag, size = 0x8, scoped, tag = 'scoped memory for tpu_custom_call.1']
    #allocation7 [shape = 'u8[4096]{0}', space=smem, size = 0x1000, scoped, tag = 'input window, operand 1, single buffered']
    #allocation8 [shape = 'u8[4096]{0}', space=smem, size = 0x1000, scoped, tag = 'input window, operand 2, single buffered']
    #allocation9 [shape = 's32[1]{0}', space=sflag, size = 0x4, scoped, tag = 'scoped memory for tpu_custom_call.1']
    #allocation10 [shape = 'u8[4096]{0}', space=smem, size = 0x1000, scoped, tag = 'input window, operand 3, single buffered']
    #allocation11 [shape = 'u8[4096]{0}', space=smem, size = 0x1000, scoped, tag = 'input window, operand 4, single buffered']
    #allocation12 [shape = 'u8[4096]{0}', space=smem, size = 0x1000, scoped, tag = 'input window, operand 5, single buffered']
    #allocation13 [shape = 's32[1]{0}', space=sflag, size = 0x4, scoped, tag = 'scoped memory for tpu_custom_call.1']
    #allocation14 [shape = 'u8[4096]{0}', space=smem, size = 0x1000, scoped, tag = 'input window, operand 6, single buffered']
    #allocation15 [shape = 'u8[49152]{0}', space=vmem, size = 0xc000, scoped, tag = 'output window, operand 0']
    %12 = vsyncpa [#allocation3], 0
    %s13 = scalar_lea.sflag [#allocation3], 1
    %14 = vsyncpa %s13, 0
    %15 = vsyncpa [#allocation6], 0
    %16 = vsyncpa [#allocation9], 0
    %17 = vsyncpa [#allocation5], 0
    %18 = vsyncpa [#allocation13], 0
    %19 = vsyncpa [#allocation4], 0
    %s20 = scalar_lea.sflag [#allocation4], 1
    %21 = vsyncpa %s20, 0
    loop: start=0, step=1, limit=4
    $region2: #{tpu_custom_call.1} parent=1 // loop_pre_header
      _
    $region3: #{tpu_custom_call.1} parent=1 // loop_header
      %s23 = sphi 0, %s27
      %p24 = scmp.ge.s32.totalorder %s23, 4
      %s33 = sphi 0, %s35
      %s36 = sphi 0, %s33
      %s37 = sphi 0, %s36
      %s53 = sphi 0, %s37
      %s57 = sphi 0, %s57
      %s59 = sphi 0, %s57
      %s60 = sphi 0, %s59
      %s74 = sphi 0, %s60
      %s78 = sphi 0, %s78
      %s80 = sphi 0, %s78
      %s81 = sphi 0, %s80
      %s95 = sphi 0, %s81
      %s99 = sphi 0, %s99
      %s101 = sphi 0, %s99
      %s102 = sphi 0, %s101
      %s116 = sphi 0, %s102
      %s120 = sphi 0, %s120
      %s122 = sphi 0, %s120
      %s123 = sphi 0, %s122
      %s137 = sphi 0, %s123
      %s141 = sphi 0, %s141
      %s143 = sphi 0, %s141
      %s144 = sphi 0, %s143
      %s158 = sphi 0, %s144
      %s162 = sphi 0, %s162
      %s164 = sphi 0, %s162
      %s165 = sphi 0, %s164
      %s179 = sphi 0, %s165
      %s185 = sphi 0, %s187
      %s188 = sphi 0, %s185
      %s189 = sphi 0, %s188
      %s205 = sphi 0, %s189
    $region4: #{tpu_custom_call.1} parent=1 // loop_header_branch
      %26 = sbr.rel (%p24) target = $region8
    $region5: #{tpu_custom_call.1} parent=1 // loop_body
      %s28 = ssub.s32 %s23, 1
      %s29 = ssub.s32 %s23, 2
      %s30 = sadd.s32 %s23, 1
      %s31 = ssub.s32 %s23, %s30
      %p32 = scmp.eq.s32.totalorder %s31, 0
      %s34 = sadd.s32 %s33, 1
      %s35 = scalar_select %p32, %s33, %s34
      %p38 = pneg %p32
      %p39 = scmp.eq.s32.totalorder %s23, 1
      %p40 = por %p38, %p39
      %p41 = scmp.ne.s32.totalorder %s33, %s36
      %p42 = scmp.eq.s32.totalorder %s23, 0
      %p43 = por %p41, %p42
      %p44 = scmp.ne.s32.totalorder %s33, %s36
      %p45 = scmp.eq.s32.totalorder %s28, 1
      %p46 = por %p44, %p45
      %p47 = scmp.ne.s32.totalorder %s36, %s37
      %p48 = scmp.eq.s32.totalorder %s28, 0
      %p49 = por %p47, %p48
      %p50 = scmp.ne.s32.totalorder %s36, %s37
      %p51 = scmp.eq.s32.totalorder %s29, 1
      %p52 = por %p50, %p51
      %p54 = scmp.ne.s32.totalorder %s37, %s53
      %p55 = scmp.eq.s32.totalorder %s29, 0
      %p56 = por %p54, %p55
      %s58 = sadd.s32 %s57, 1
      %p61 = scmp.eq.s32.totalorder %s23, 1
      %p62 = scmp.ne.s32.totalorder %s57, %s59
      %p63 = scmp.eq.s32.totalorder %s23, 0
      %p64 = por %p62, %p63
      %p65 = scmp.ne.s32.totalorder %s57, %s59
      %p66 = scmp.eq.s32.totalorder %s28, 1
      %p67 = por %p65, %p66
      %p68 = scmp.ne.s32.totalorder %s59, %s60
      %p69 = scmp.eq.s32.totalorder %s28, 0
      %p70 = por %p68, %p69
      %p71 = scmp.ne.s32.totalorder %s59, %s60
      %p72 = scmp.eq.s32.totalorder %s29, 1
      %p73 = por %p71, %p72
      %p75 = scmp.ne.s32.totalorder %s60, %s74
      %p76 = scmp.eq.s32.totalorder %s29, 0
      %p77 = por %p75, %p76
      %s79 = sadd.s32 %s78, 1
      %p82 = scmp.eq.s32.totalorder %s23, 1
      %p83 = scmp.ne.s32.totalorder %s78, %s80
      %p84 = scmp.eq.s32.totalorder %s23, 0
      %p85 = por %p83, %p84
      %p86 = scmp.ne.s32.totalorder %s78, %s80
      %p87 = scmp.eq.s32.totalorder %s28, 1
      %p88 = por %p86, %p87
      %p89 = scmp.ne.s32.totalorder %s80, %s81
      %p90 = scmp.eq.s32.totalorder %s28, 0
      %p91 = por %p89, %p90
      %p92 = scmp.ne.s32.totalorder %s80, %s81
      %p93 = scmp.eq.s32.totalorder %s29, 1
      %p94 = por %p92, %p93
      %p96 = scmp.ne.s32.totalorder %s81, %s95
      %p97 = scmp.eq.s32.totalorder %s29, 0
      %p98 = por %p96, %p97
      %s100 = sadd.s32 %s99, 1
      %p103 = scmp.eq.s32.totalorder %s23, 1
      %p104 = scmp.ne.s32.totalorder %s99, %s101
      %p105 = scmp.eq.s32.totalorder %s23, 0
      %p106 = por %p104, %p105
      %p107 = scmp.ne.s32.totalorder %s99, %s101
      %p108 = scmp.eq.s32.totalorder %s28, 1
      %p109 = por %p107, %p108
      %p110 = scmp.ne.s32.totalorder %s101, %s102
      %p111 = scmp.eq.s32.totalorder %s28, 0
      %p112 = por %p110, %p111
      %p113 = scmp.ne.s32.totalorder %s101, %s102
      %p114 = scmp.eq.s32.totalorder %s29, 1
      %p115 = por %p113, %p114
      %p117 = scmp.ne.s32.totalorder %s102, %s116
      %p118 = scmp.eq.s32.totalorder %s29, 0
      %p119 = por %p117, %p118
      %s121 = sadd.s32 %s120, 1
      %p124 = scmp.eq.s32.totalorder %s23, 1
      %p125 = scmp.ne.s32.totalorder %s120, %s122
      %p126 = scmp.eq.s32.totalorder %s23, 0
      %p127 = por %p125, %p126
      %p128 = scmp.ne.s32.totalorder %s120, %s122
      %p129 = scmp.eq.s32.totalorder %s28, 1
      %p130 = por %p128, %p129
      %p131 = scmp.ne.s32.totalorder %s122, %s123
      %p132 = scmp.eq.s32.totalorder %s28, 0
      %p133 = por %p131, %p132
      %p134 = scmp.ne.s32.totalorder %s122, %s123
      %p135 = scmp.eq.s32.totalorder %s29, 1
      %p136 = por %p134, %p135
      %p138 = scmp.ne.s32.totalorder %s123, %s137
      %p139 = scmp.eq.s32.totalorder %s29, 0
      %p140 = por %p138, %p139
      %s142 = sadd.s32 %s141, 1
      %p145 = scmp.eq.s32.totalorder %s23, 1
      %p146 = scmp.ne.s32.totalorder %s141, %s143
      %p147 = scmp.eq.s32.totalorder %s23, 0
      %p148 = por %p146, %p147
      %p149 = scmp.ne.s32.totalorder %s141, %s143
      %p150 = scmp.eq.s32.totalorder %s28, 1
      %p151 = por %p149, %p150
      %p152 = scmp.ne.s32.totalorder %s143, %s144
      %p153 = scmp.eq.s32.totalorder %s28, 0
      %p154 = por %p152, %p153
      %p155 = scmp.ne.s32.totalorder %s143, %s144
      %p156 = scmp.eq.s32.totalorder %s29, 1
      %p157 = por %p155, %p156
      %p159 = scmp.ne.s32.totalorder %s144, %s158
      %p160 = scmp.eq.s32.totalorder %s29, 0
      %p161 = por %p159, %p160
      %s163 = sadd.s32 %s162, 1
      %p166 = scmp.eq.s32.totalorder %s23, 1
      %p167 = scmp.ne.s32.totalorder %s162, %s164
      %p168 = scmp.eq.s32.totalorder %s23, 0
      %p169 = por %p167, %p168
      %p170 = scmp.ne.s32.totalorder %s162, %s164
      %p171 = scmp.eq.s32.totalorder %s28, 1
      %p172 = por %p170, %p171
      %p173 = scmp.ne.s32.totalorder %s164, %s165
      %p174 = scmp.eq.s32.totalorder %s28, 0
      %p175 = por %p173, %p174
      %p176 = scmp.ne.s32.totalorder %s164, %s165
      %p177 = scmp.eq.s32.totalorder %s29, 1
      %p178 = por %p176, %p177
      %p180 = scmp.ne.s32.totalorder %s165, %s179
      %p181 = scmp.eq.s32.totalorder %s29, 0
      %p182 = por %p180, %p181
      %s183 = ssub.s32 %s23, %s30
      %p184 = scmp.eq.s32.totalorder %s183, 0
      %s186 = sadd.s32 %s185, 1
      %s187 = scalar_select %p184, %s185, %s186
      %p190 = pneg %p184
      %p191 = scmp.eq.s32.totalorder %s23, 1
      %p192 = por %p190, %p191
      %p193 = scmp.ne.s32.totalorder %s185, %s188
      %p194 = scmp.eq.s32.totalorder %s23, 0
      %p195 = por %p193, %p194
      %p196 = scmp.ne.s32.totalorder %s185, %s188
      %p197 = scmp.eq.s32.totalorder %s28, 1
      %p198 = por %p196, %p197
      %p199 = scmp.ne.s32.totalorder %s188, %s189
      %p200 = scmp.eq.s32.totalorder %s28, 0
      %p201 = por %p199, %p200
      %p202 = scmp.ne.s32.totalorder %s188, %s189
      %p203 = scmp.eq.s32.totalorder %s29, 1
      %p204 = por %p202, %p203
      %p206 = scmp.ne.s32.totalorder %s189, %s205
      %p207 = scmp.eq.s32.totalorder %s29, 0
      %p208 = por %p206, %p207
      %p209 = scmp.le.s32.totalorder 1, %s23
      %p210 = scmp.lt.s32.totalorder %s23, 3
      %p211 = pnand %p209, %p210
      %p212 = pneg %p211
      // Predicated region
      $region9: #{tpu_custom_call.1} parent=5 // pred_check
        _
      $region10: #{tpu_custom_call.1} parent=5 // pred_check_branch
        %214 = sbr.rel (%p211) target = $region12
      $region11: #{tpu_custom_call.1} parent=5 // pred_region
        %s215 = ssub.s32 %s23, 1
        // Predicated region
        $region13: #{tpu_custom_call.1} parent=11 // pred_check
          %p216 = pneg %p70
        $region14: #{tpu_custom_call.1} parent=11 // pred_check_branch
          %218 = sbr.rel (%p216) target = $region16
        $region15: #{tpu_custom_call.1} parent=11 // pred_region
          %s220 = ssub.s32 128, 128
          %221 = vsyncadd [#allocation6], %s220
          %s223 = sshll.u32 %s1, 4
          %s224 = int_to_ptr.vmem [resolvable:$true] %s223
          %226 = dma.vmem_to_smem %s224, 128, [#allocation7], [#allocation6]
        $region16: #{tpu_custom_call.1} parent=11 // pred_fallthru
          _
        // Predicated region
        $region17: #{tpu_custom_call.1} parent=11 // pred_check
          %p227 = pneg %p91
        $region18: #{tpu_custom_call.1} parent=11 // pred_check_branch
          %229 = sbr.rel (%p227) target = $region20
        $region19: #{tpu_custom_call.1} parent=11 // pred_region
          %s231 = ssub.s32 128, 128
          %232 = vsyncadd [#allocation9], %s231
          %s234 = sshll.u32 %s2, 4
          %s235 = int_to_ptr.vmem [resolvable:$true] %s234
          %237 = dma.vmem_to_smem %s235, 128, [#allocation8], [#allocation9]
        $region20: #{tpu_custom_call.1} parent=11 // pred_fallthru
          _
        // Predicated region
        $region21: #{tpu_custom_call.1} parent=11 // pred_check
          %p238 = pneg %p112
        $region22: #{tpu_custom_call.1} parent=11 // pred_check_branch
          %240 = sbr.rel (%p238) target = $region24
        $region23: #{tpu_custom_call.1} parent=11 // pred_region
          %s242 = ssub.s32 128, 128
          %243 = vsyncadd [#allocation5], %s242
          %246 = dma.hbm_to_smem %s3, 128, [#allocation10], [#allocation5]
        $region24: #{tpu_custom_call.1} parent=11 // pred_fallthru
          _
        // Predicated region
        $region25: #{tpu_custom_call.1} parent=11 // pred_check
          %p247 = pneg %p133
        $region26: #{tpu_custom_call.1} parent=11 // pred_check_branch
          %249 = sbr.rel (%p247) target = $region28
        $region27: #{tpu_custom_call.1} parent=11 // pred_region
          %s251 = ssub.s32 128, 128
          %252 = vsyncadd [#allocation9], %s251
          %s254 = sshll.u32 %s4, 4
          %s255 = int_to_ptr.vmem [resolvable:$true] %s254
          %257 = dma.vmem_to_smem %s255, 128, [#allocation11], [#allocation9]
        $region28: #{tpu_custom_call.1} parent=11 // pred_fallthru
          _
        // Predicated region
        $region29: #{tpu_custom_call.1} parent=11 // pred_check
          %p258 = pneg %p154
        $region30: #{tpu_custom_call.1} parent=11 // pred_check_branch
          %260 = sbr.rel (%p258) target = $region32
        $region31: #{tpu_custom_call.1} parent=11 // pred_region
          %s262 = ssub.s32 128, 128
          %263 = vsyncadd [#allocation13], %s262
          %s265 = sshll.u32 %s5, 4
          %s266 = int_to_ptr.vmem [resolvable:$true] %s265
          %268 = dma.vmem_to_smem %s266, 128, [#allocation12], [#allocation13]
        $region32: #{tpu_custom_call.1} parent=11 // pred_fallthru
          _
        // Predicated region
        $region33: #{tpu_custom_call.1} parent=11 // pred_check
          %p269 = pneg %p175
        $region34: #{tpu_custom_call.1} parent=11 // pred_check_branch
          %271 = sbr.rel (%p269) target = $region36
        $region35: #{tpu_custom_call.1} parent=11 // pred_region
          %s273 = ssub.s32 128, 128
          %274 = vsyncadd [#allocation13], %s273
          %s276 = sshll.u32 %s6, 4
          %s277 = int_to_ptr.vmem [resolvable:$true] %s276
          %279 = dma.vmem_to_smem %s277, 128, [#allocation14], [#allocation13]
        $region36: #{tpu_custom_call.1} parent=11 // pred_fallthru
          _
      $region12: #{tpu_custom_call.1} parent=5 // pred_fallthru
        _
      %p280 = scmp.lt.s32.totalorder %s23, 2
      // Predicated region
      $region37: #{tpu_custom_call.1} parent=5 // pred_check
        %p281 = pneg %p280
      $region38: #{tpu_custom_call.1} parent=5 // pred_check_branch
        %283 = sbr.rel (%p281) target = $region40
      $region39: #{tpu_custom_call.1} parent=5 // pred_region
        // Predicated region
        $region41: #{tpu_custom_call.1} parent=39 // pred_check
          %p284 = pneg %p43
        $region42: #{tpu_custom_call.1} parent=39 // pred_check_branch
          %286 = sbr.rel (%p284) target = $region44
        $region43: #{tpu_custom_call.1} parent=39 // pred_region
          %s287 = sand.u32 %s33, 1
          %s288 = scalar_lea.sflag [#allocation3], %s287
          %s289 = sand.u32 %s33, 1
          %s290 = smul.addr %s289, 32
          %s291 = scalar_lea.vmem [#allocation2], %s290
          %s293 = ssub.s32 512, 512
          %294 = vsyncadd %s288, %s293
          %s295 = smul.addr %s23, 128
          %s296 = scalar_lea.hbm %s0, %s295
          %s297 = sshll.u32 %s291, 4
          %s298 = int_to_ptr.vmem [resolvable:$true] %s297
          %303 = dma.hbm_to_vmem [thread:$0]  %s296, 512, %s298, %s288, 256, 128, 8
        $region44: #{tpu_custom_call.1} parent=39 // pred_fallthru
          _
      $region40: #{tpu_custom_call.1} parent=5 // pred_fallthru
        _
      %p304 = scmp.le.s32.totalorder 1, %s23
      %p305 = scmp.lt.s32.totalorder %s23, 3
      %p306 = pnand %p304, %p305
      %p307 = pneg %p306
      // Predicated region
      $region45: #{tpu_custom_call.1} parent=5 // pred_check
        _
      $region46: #{tpu_custom_call.1} parent=5 // pred_check_branch
        %309 = sbr.rel (%p306) target = $region48
      $region47: #{tpu_custom_call.1} parent=5 // pred_region
        %s310 = ssub.s32 %s23, 1
        %s311 = sand.u32 %s36, 1
        %s312 = scalar_lea.sflag [#allocation3], %s311
        %s313 = sand.u32 %s36, 1
        %s314 = smul.addr %s313, 32
        %s315 = scalar_lea.vmem [#allocation2], %s314
        // Predicated region
        $region49: #{tpu_custom_call.1} parent=47 // pred_check
          %p316 = pneg %p49
        $region50: #{tpu_custom_call.1} parent=47 // pred_check_branch
          %318 = sbr.rel (%p316) target = $region52
        $region51: #{tpu_custom_call.1} parent=47 // pred_region
          %319 = dma.done %s312, 512
        $region52: #{tpu_custom_call.1} parent=47 // pred_fallthru
          _
        // Predicated region
        $region53: #{tpu_custom_call.1} parent=47 // pred_check
          %p320 = pneg %p70
        $region54: #{tpu_custom_call.1} parent=47 // pred_check_branch
          %322 = sbr.rel (%p320) target = $region56
        $region55: #{tpu_custom_call.1} parent=47 // pred_region
          %323 = dma.done [#allocation6], 128
        $region56: #{tpu_custom_call.1} parent=47 // pred_fallthru
          _
        // Predicated region
        $region57: #{tpu_custom_call.1} parent=47 // pred_check
          %p324 = pneg %p91
        $region58: #{tpu_custom_call.1} parent=47 // pred_check_branch
          %326 = sbr.rel (%p324) target = $region60
        $region59: #{tpu_custom_call.1} parent=47 // pred_region
          %327 = dma.done [#allocation9], 128
        $region60: #{tpu_custom_call.1} parent=47 // pred_fallthru
          _
        // Predicated region
        $region61: #{tpu_custom_call.1} parent=47 // pred_check
          %p328 = pneg %p112
        $region62: #{tpu_custom_call.1} parent=47 // pred_check_branch
          %330 = sbr.rel (%p328) target = $region64
        $region63: #{tpu_custom_call.1} parent=47 // pred_region
          %331 = dma.done [#allocation5], 128
        $region64: #{tpu_custom_call.1} parent=47 // pred_fallthru
          _
        // Predicated region
        $region65: #{tpu_custom_call.1} parent=47 // pred_check
          %p332 = pneg %p133
        $region66: #{tpu_custom_call.1} parent=47 // pred_check_branch
          %334 = sbr.rel (%p332) target = $region68
        $region67: #{tpu_custom_call.1} parent=47 // pred_region
          %335 = dma.done [#allocation9], 128
        $region68: #{tpu_custom_call.1} parent=47 // pred_fallthru
          _
        // Predicated region
        $region69: #{tpu_custom_call.1} parent=47 // pred_check
          %p336 = pneg %p154
        $region70: #{tpu_custom_call.1} parent=47 // pred_check_branch
          %338 = sbr.rel (%p336) target = $region72
        $region71: #{tpu_custom_call.1} parent=47 // pred_region
          %339 = dma.done [#allocation13], 128
        $region72: #{tpu_custom_call.1} parent=47 // pred_fallthru
          _
        // Predicated region
        $region73: #{tpu_custom_call.1} parent=47 // pred_check
          %p340 = pneg %p175
        $region74: #{tpu_custom_call.1} parent=47 // pred_check_branch
          %342 = sbr.rel (%p340) target = $region76
        $region75: #{tpu_custom_call.1} parent=47 // pred_region
          %343 = dma.done [#allocation13], 128
        $region76: #{tpu_custom_call.1} parent=47 // pred_fallthru
          _
        %344 = sfence
        %s345 = sand.u32 %s36, 1
        %s346 = scalar_lea.sflag [#allocation3], %s345
        %s347 = sand.u32 %s36, 1
        %s348 = smul.addr %s347, 32
        %s349 = scalar_lea.vmem [#allocation2], %s348
        %p350 = pneg %p49
        %p351 = pneg %p46
        %p352 = pneg %p70
        %p353 = pneg %p67
        %p354 = pneg %p91
        %p355 = pneg %p88
        %p356 = pneg %p112
        %p357 = pneg %p109
        %p358 = pneg %p133
        %p359 = pneg %p130
        %p360 = pneg %p154
        %p361 = pneg %p151
        %p362 = pneg %p175
        %p363 = pneg %p172
        %p364 = pneg %p201
        %p365 = pneg %p198
        %s366 = sand.u32 %s188, 1
        %s367 = scalar_lea.sflag [#allocation4], %s366
        %s368 = sand.u32 %s188, 1
        %s369 = smul.addr %s368, 48
        %s370 = scalar_lea.vmem [#allocation15], %s369
        %v371 = vld [vmem:[%s315] sm:$0xff]
        %s372 = scalar_lea.vmem %s315, 8 [#allocation2]
        %v373 = vld [vmem:[%s372] sm:$0xff]
        %s374 = scalar_lea.vmem %s315, 16 [#allocation2]
        %v375 = vld [vmem:[%s374] sm:$0xff]
        %s376 = scalar_lea.vmem %s315, 24 [#allocation2]
        %v377 = vld [vmem:[%s376] sm:$0xff]
        %379 = vrot.lane.b32.xlu0 %v371, 127
        %v380 = vpop.permute.xlu0 %379
        %383 = vrot.lane.b32.xlu0 %v373, 127
        %v384 = vpop.permute.xlu0 %383
        %387 = vrot.lane.b32.xlu0 %v375, 127
        %v388 = vpop.permute.xlu0 %387
        %391 = vrot.lane.b32.xlu0 %v377, 127
        %v392 = vpop.permute.xlu0 %391
        %s394 = sld [smem:[#allocation7]]
        %v395 = vstv %s394
        %v396 = vmul.f32 %v371, %v395
        %s397 = sld [smem:[#allocation8]]
        %v398 = vstv %s397
        %v399 = vmul.f32 %v380, %v398
        %v400 = vadd.f32 %v396, %v399
        %s401 = sld [smem:[#allocation7 + $0x1]]
        %v402 = vstv %s401
        %v403 = vmul.f32 %v373, %v402
        %v404 = vadd.f32 %v400, %v403
        %s405 = sld [smem:[#allocation8 + $0x1]]
        %v406 = vstv %s405
        %v407 = vmul.f32 %v384, %v406
        %v408 = vadd.f32 %v404, %v407
        %s409 = sld [smem:[#allocation7 + $0x2]]
        %v410 = vstv %s409
        %v411 = vmul.f32 %v375, %v410
        %v412 = vadd.f32 %v408, %v411
        %s413 = sld [smem:[#allocation8 + $0x2]]
        %v414 = vstv %s413
        %v415 = vmul.f32 %v388, %v414
        %v416 = vadd.f32 %v412, %v415
        %s417 = sld [smem:[#allocation7 + $0x3]]
        %v418 = vstv %s417
        %v419 = vmul.f32 %v377, %v418
        %v420 = vadd.f32 %v416, %v419
        %s421 = sld [smem:[#allocation8 + $0x3]]
        %v422 = vstv %s421
        %v423 = vmul.f32 %v392, %v422
        %v424 = vadd.f32 %v420, %v423
        %v425 = vmax.f32 %v424, -30.0
        %v426 = vsub.f32 0.0, %v425
        %v427 = vmul.f32 %v426, 1.442695
        %v428 = vpow.pop %v427
        %v429 = vsub.f32 1.0, %v428
        %v430 = vmul.f32 %v428, %v428
        %v431 = vadd.f32 %v430, 1.0
        %v432 = vrcp.pop %v431
        %v433 = vmul.f32 %v429, %v432
        %s434 = sld [smem:[#allocation7 + $0x4]]
        %v435 = vstv %s434
        %v436 = vmul.f32 %v371, %v435
        %s437 = sld [smem:[#allocation8 + $0x4]]
        %v438 = vstv %s437
        %v439 = vmul.f32 %v380, %v438
        %v440 = vadd.f32 %v436, %v439
        %s441 = sld [smem:[#allocation7 + $0x5]]
        %v442 = vstv %s441
        %v443 = vmul.f32 %v373, %v442
        %v444 = vadd.f32 %v440, %v443
        %s445 = sld [smem:[#allocation8 + $0x5]]
        %v446 = vstv %s445
        %v447 = vmul.f32 %v384, %v446
        %v448 = vadd.f32 %v444, %v447
        %s449 = sld [smem:[#allocation7 + $0x6]]
        %v450 = vstv %s449
        %v451 = vmul.f32 %v375, %v450
        %v452 = vadd.f32 %v448, %v451
        %s453 = sld [smem:[#allocation8 + $0x6]]
        %v454 = vstv %s453
        %v455 = vmul.f32 %v388, %v454
        %v456 = vadd.f32 %v452, %v455
        %s457 = sld [smem:[#allocation7 + $0x7]]
        %v458 = vstv %s457
        %v459 = vmul.f32 %v377, %v458
        %v460 = vadd.f32 %v456, %v459
        %s461 = sld [smem:[#allocation8 + $0x7]]
        %v462 = vstv %s461
        %v463 = vmul.f32 %v392, %v462
        %v464 = vadd.f32 %v460, %v463
        %v465 = vmax.f32 %v464, -30.0
        %v466 = vsub.f32 0.0, %v465
        %v467 = vmul.f32 %v466, 1.442695
        %v468 = vpow.pop %v467
        %v469 = vsub.f32 1.0, %v468
        %v470 = vmul.f32 %v468, %v468
        %v471 = vadd.f32 %v470, 1.0
        %v472 = vrcp.pop %v471
        %v473 = vmul.f32 %v469, %v472
        %s474 = sld [smem:[#allocation7 + $0x8]]
        %v475 = vstv %s474
        %v476 = vmul.f32 %v371, %v475
        %s477 = sld [smem:[#allocation8 + $0x8]]
        %v478 = vstv %s477
        %v479 = vmul.f32 %v380, %v478
        %v480 = vadd.f32 %v476, %v479
        %s481 = sld [smem:[#allocation7 + $0x9]]
        %v482 = vstv %s481
        %v483 = vmul.f32 %v373, %v482
        %v484 = vadd.f32 %v480, %v483
        %s485 = sld [smem:[#allocation8 + $0x9]]
        %v486 = vstv %s485
        %v487 = vmul.f32 %v384, %v486
        %v488 = vadd.f32 %v484, %v487
        %s489 = sld [smem:[#allocation7 + $0xa]]
        %v490 = vstv %s489
        %v491 = vmul.f32 %v375, %v490
        %v492 = vadd.f32 %v488, %v491
        %s493 = sld [smem:[#allocation8 + $0xa]]
        %v494 = vstv %s493
        %v495 = vmul.f32 %v388, %v494
        %v496 = vadd.f32 %v492, %v495
        %s497 = sld [smem:[#allocation7 + $0xb]]
        %v498 = vstv %s497
        %v499 = vmul.f32 %v377, %v498
        %v500 = vadd.f32 %v496, %v499
        %s501 = sld [smem:[#allocation8 + $0xb]]
        %v502 = vstv %s501
        %v503 = vmul.f32 %v392, %v502
        %v504 = vadd.f32 %v500, %v503
        %v505 = vmax.f32 %v504, -30.0
        %v506 = vsub.f32 0.0, %v505
        %v507 = vmul.f32 %v506, 1.442695
        %v508 = vpow.pop %v507
        %v509 = vsub.f32 1.0, %v508
        %v510 = vmul.f32 %v508, %v508
        %v511 = vadd.f32 %v510, 1.0
        %v512 = vrcp.pop %v511
        %v513 = vmul.f32 %v509, %v512
        %s514 = sld [smem:[#allocation7 + $0xc]]
        %v515 = vstv %s514
        %v516 = vmul.f32 %v371, %v515
        %s517 = sld [smem:[#allocation8 + $0xc]]
        %v518 = vstv %s517
        %v519 = vmul.f32 %v380, %v518
        %v520 = vadd.f32 %v516, %v519
        %s521 = sld [smem:[#allocation7 + $0xd]]
        %v522 = vstv %s521
        %v523 = vmul.f32 %v373, %v522
        %v524 = vadd.f32 %v520, %v523
        %s525 = sld [smem:[#allocation8 + $0xd]]
        %v526 = vstv %s525
        %v527 = vmul.f32 %v384, %v526
        %v528 = vadd.f32 %v524, %v527
        %s529 = sld [smem:[#allocation7 + $0xe]]
        %v530 = vstv %s529
        %v531 = vmul.f32 %v375, %v530
        %v532 = vadd.f32 %v528, %v531
        %s533 = sld [smem:[#allocation8 + $0xe]]
        %v534 = vstv %s533
        %v535 = vmul.f32 %v388, %v534
        %v536 = vadd.f32 %v532, %v535
        %s537 = sld [smem:[#allocation7 + $0xf]]
        %v538 = vstv %s537
        %v539 = vmul.f32 %v377, %v538
        %v540 = vadd.f32 %v536, %v539
        %s541 = sld [smem:[#allocation8 + $0xf]]
        %v542 = vstv %s541
        %v543 = vmul.f32 %v392, %v542
        %v544 = vadd.f32 %v540, %v543
        %v545 = vmax.f32 %v544, -30.0
        %v546 = vsub.f32 0.0, %v545
        %v547 = vmul.f32 %v546, 1.442695
        %v548 = vpow.pop %v547
        %v549 = vsub.f32 1.0, %v548
        %v550 = vmul.f32 %v548, %v548
        %v551 = vadd.f32 %v550, 1.0
        %v552 = vrcp.pop %v551
        %v553 = vmul.f32 %v549, %v552
        %s554 = sld [smem:[#allocation10]]
        %v555 = vstv %s554
        %v556 = vmul.f32 %v433, %v555
        %s557 = sld [smem:[#allocation10 + $0x1]]
        %v558 = vstv %s557
        %v559 = vmul.f32 %v473, %v558
        %v560 = vadd.f32 %v556, %v559
        %s561 = sld [smem:[#allocation10 + $0x2]]
        %v562 = vstv %s561
        %v563 = vmul.f32 %v513, %v562
        %v564 = vadd.f32 %v560, %v563
        %s565 = sld [smem:[#allocation10 + $0x3]]
        %v566 = vstv %s565
        %v567 = vmul.f32 %v553, %v566
        %v568 = vadd.f32 %v564, %v567
        %s569 = sld [smem:[#allocation11]]
        %v570 = vstv %s569
        %v571 = vadd.f32 %v568, %v570
        %v572 = vadd.f32 %v571, %v380
        %s573 = sld [smem:[#allocation10 + $0x4]]
        %v574 = vstv %s573
        %v575 = vmul.f32 %v433, %v574
        %s576 = sld [smem:[#allocation10 + $0x5]]
        %v577 = vstv %s576
        %v578 = vmul.f32 %v473, %v577
        %v579 = vadd.f32 %v575, %v578
        %s580 = sld [smem:[#allocation10 + $0x6]]
        %v581 = vstv %s580
        %v582 = vmul.f32 %v513, %v581
        %v583 = vadd.f32 %v579, %v582
        %s584 = sld [smem:[#allocation10 + $0x7]]
        %v585 = vstv %s584
        %v586 = vmul.f32 %v553, %v585
        %v587 = vadd.f32 %v583, %v586
        %s588 = sld [smem:[#allocation11 + $0x1]]
        %v589 = vstv %s588
        %v590 = vadd.f32 %v587, %v589
        %v591 = vadd.f32 %v590, %v384
        %s592 = sld [smem:[#allocation10 + $0x8]]
        %v593 = vstv %s592
        %v594 = vmul.f32 %v433, %v593
        %s595 = sld [smem:[#allocation10 + $0x9]]
        %v596 = vstv %s595
        %v597 = vmul.f32 %v473, %v596
        %v598 = vadd.f32 %v594, %v597
        %s599 = sld [smem:[#allocation10 + $0xa]]
        %v600 = vstv %s599
        %v601 = vmul.f32 %v513, %v600
        %v602 = vadd.f32 %v598, %v601
        %s603 = sld [smem:[#allocation10 + $0xb]]
        %v604 = vstv %s603
        %v605 = vmul.f32 %v553, %v604
        %v606 = vadd.f32 %v602, %v605
        %s607 = sld [smem:[#allocation11 + $0x2]]
        %v608 = vstv %s607
        %v609 = vadd.f32 %v606, %v608
        %v610 = vadd.f32 %v609, %v388
        %s611 = sld [smem:[#allocation10 + $0xc]]
        %v612 = vstv %s611
        %v613 = vmul.f32 %v433, %v612
        %s614 = sld [smem:[#allocation10 + $0xd]]
        %v615 = vstv %s614
        %v616 = vmul.f32 %v473, %v615
        %v617 = vadd.f32 %v613, %v616
        %s618 = sld [smem:[#allocation10 + $0xe]]
        %v619 = vstv %s618
        %v620 = vmul.f32 %v513, %v619
        %v621 = vadd.f32 %v617, %v620
        %s622 = sld [smem:[#allocation10 + $0xf]]
        %v623 = vstv %s622
        %v624 = vmul.f32 %v553, %v623
        %v625 = vadd.f32 %v621, %v624
        %s626 = sld [smem:[#allocation11 + $0x3]]
        %v627 = vstv %s626
        %v628 = vadd.f32 %v625, %v627
        %v629 = vadd.f32 %v628, %v392
        %s630 = sld [smem:[#allocation12]]
        %v631 = vstv %s630
        %v632 = vmul.f32 %v433, %v631
        %s633 = sld [smem:[#allocation12 + $0x1]]
        %v634 = vstv %s633
        %v635 = vmul.f32 %v473, %v634
        %v636 = vadd.f32 %v632, %v635
        %s637 = sld [smem:[#allocation12 + $0x2]]
        %v638 = vstv %s637
        %v639 = vmul.f32 %v513, %v638
        %v640 = vadd.f32 %v636, %v639
        %s641 = sld [smem:[#allocation12 + $0x3]]
        %v642 = vstv %s641
        %v643 = vmul.f32 %v553, %v642
        %v644 = vadd.f32 %v640, %v643
        %s645 = sld [smem:[#allocation14]]
        %v646 = vstv %s645
        %v647 = vadd.f32 %v644, %v646
        %s648 = sld [smem:[#allocation12 + $0x4]]
        %v649 = vstv %s648
        %v650 = vmul.f32 %v433, %v649
        %s651 = sld [smem:[#allocation12 + $0x5]]
        %v652 = vstv %s651
        %v653 = vmul.f32 %v473, %v652
        %v654 = vadd.f32 %v650, %v653
        %s655 = sld [smem:[#allocation12 + $0x6]]
        %v656 = vstv %s655
        %v657 = vmul.f32 %v513, %v656
        %v658 = vadd.f32 %v654, %v657
        %s659 = sld [smem:[#allocation12 + $0x7]]
        %v660 = vstv %s659
        %v661 = vmul.f32 %v553, %v660
        %v662 = vadd.f32 %v658, %v661
        %s663 = sld [smem:[#allocation14 + $0x1]]
        %v664 = vstv %s663
        %v665 = vadd.f32 %v662, %v664
        %s666 = sld [smem:[#allocation12 + $0x8]]
        %v667 = vstv %s666
        %v668 = vmul.f32 %v433, %v667
        %s669 = sld [smem:[#allocation12 + $0x9]]
        %v670 = vstv %s669
        %v671 = vmul.f32 %v473, %v670
        %v672 = vadd.f32 %v668, %v671
        %s673 = sld [smem:[#allocation12 + $0xa]]
        %v674 = vstv %s673
        %v675 = vmul.f32 %v513, %v674
        %v676 = vadd.f32 %v672, %v675
        %s677 = sld [smem:[#allocation12 + $0xb]]
        %v678 = vstv %s677
        %v679 = vmul.f32 %v553, %v678
        %v680 = vadd.f32 %v676, %v679
        %s681 = sld [smem:[#allocation14 + $0x2]]
        %v682 = vstv %s681
        %v683 = vadd.f32 %v680, %v682
        %s684 = sld [smem:[#allocation12 + $0xc]]
        %v685 = vstv %s684
        %v686 = vmul.f32 %v433, %v685
        %s687 = sld [smem:[#allocation12 + $0xd]]
        %v688 = vstv %s687
        %v689 = vmul.f32 %v473, %v688
        %v690 = vadd.f32 %v686, %v689
        %s691 = sld [smem:[#allocation12 + $0xe]]
        %v692 = vstv %s691
        %v693 = vmul.f32 %v513, %v692
        %v694 = vadd.f32 %v690, %v693
        %s695 = sld [smem:[#allocation12 + $0xf]]
        %v696 = vstv %s695
        %v697 = vmul.f32 %v553, %v696
        %v698 = vadd.f32 %v694, %v697
        %s699 = sld [smem:[#allocation14 + $0x3]]
        %v700 = vstv %s699
        %v701 = vadd.f32 %v698, %v700
        %s702 = sld [smem:[#allocation12 + $0x10]]
        %v703 = vstv %s702
        %v704 = vmul.f32 %v433, %v703
        %s705 = sld [smem:[#allocation12 + $0x11]]
        %v706 = vstv %s705
        %v707 = vmul.f32 %v473, %v706
        %v708 = vadd.f32 %v704, %v707
        %s709 = sld [smem:[#allocation12 + $0x12]]
        %v710 = vstv %s709
        %v711 = vmul.f32 %v513, %v710
        %v712 = vadd.f32 %v708, %v711
        %s713 = sld [smem:[#allocation12 + $0x13]]
        %v714 = vstv %s713
        %v715 = vmul.f32 %v553, %v714
        %v716 = vadd.f32 %v712, %v715
        %s717 = sld [smem:[#allocation14 + $0x4]]
        %v718 = vstv %s717
        %v719 = vadd.f32 %v716, %v718
        %s720 = sld [smem:[#allocation12 + $0x14]]
        %v721 = vstv %s720
        %v722 = vmul.f32 %v433, %v721
        %s723 = sld [smem:[#allocation12 + $0x15]]
        %v724 = vstv %s723
        %v725 = vmul.f32 %v473, %v724
        %v726 = vadd.f32 %v722, %v725
        %s727 = sld [smem:[#allocation12 + $0x16]]
        %v728 = vstv %s727
        %v729 = vmul.f32 %v513, %v728
        %v730 = vadd.f32 %v726, %v729
        %s731 = sld [smem:[#allocation12 + $0x17]]
        %v732 = vstv %s731
        %v733 = vmul.f32 %v553, %v732
        %v734 = vadd.f32 %v730, %v733
        %s735 = sld [smem:[#allocation14 + $0x5]]
        %v736 = vstv %s735
        %v737 = vadd.f32 %v734, %v736
        %s738 = sld [smem:[#allocation12 + $0x18]]
        %v739 = vstv %s738
        %v740 = vmul.f32 %v433, %v739
        %s741 = sld [smem:[#allocation12 + $0x19]]
        %v742 = vstv %s741
        %v743 = vmul.f32 %v473, %v742
        %v744 = vadd.f32 %v740, %v743
        %s745 = sld [smem:[#allocation12 + $0x1a]]
        %v746 = vstv %s745
        %v747 = vmul.f32 %v513, %v746
        %v748 = vadd.f32 %v744, %v747
        %s749 = sld [smem:[#allocation12 + $0x1b]]
        %v750 = vstv %s749
        %v751 = vmul.f32 %v553, %v750
        %v752 = vadd.f32 %v748, %v751
        %s753 = sld [smem:[#allocation14 + $0x6]]
        %v754 = vstv %s753
        %v755 = vadd.f32 %v752, %v754
        %s756 = sld [smem:[#allocation12 + $0x1c]]
        %v757 = vstv %s756
        %v758 = vmul.f32 %v433, %v757
        %s759 = sld [smem:[#allocation12 + $0x1d]]
        %v760 = vstv %s759
        %v761 = vmul.f32 %v473, %v760
        %v762 = vadd.f32 %v758, %v761
        %s763 = sld [smem:[#allocation12 + $0x1e]]
        %v764 = vstv %s763
        %v765 = vmul.f32 %v513, %v764
        %v766 = vadd.f32 %v762, %v765
        %s767 = sld [smem:[#allocation12 + $0x1f]]
        %v768 = vstv %s767
        %v769 = vmul.f32 %v553, %v768
        %v770 = vadd.f32 %v766, %v769
        %s771 = sld [smem:[#allocation14 + $0x7]]
        %v772 = vstv %s771
        %v773 = vadd.f32 %v770, %v772
        %775 = vrot.lane.b32.xlu0 %v647, 97
        %v776 = vpop.permute.xlu0 %775
        %779 = vrot.lane.b32.xlu0 %v665, 113
        %v780 = vpop.permute.xlu0 %779
        %783 = vrot.lane.b32.xlu0 %v683, 1
        %v784 = vpop.permute.xlu0 %783
        %787 = vrot.lane.b32.xlu0 %v701, 17
        %v788 = vpop.permute.xlu0 %787
        %791 = vrot.lane.b32.xlu0 %v719, 33
        %v792 = vpop.permute.xlu0 %791
        %795 = vrot.lane.b32.xlu0 %v737, 49
        %v796 = vpop.permute.xlu0 %795
        %799 = vrot.lane.b32.xlu0 %v755, 65
        %v800 = vpop.permute.xlu0 %799
        %803 = vrot.lane.b32.xlu0 %v773, 81
        %v804 = vpop.permute.xlu0 %803
        %vm806 = vcmask 130048
        %v807 = vsel %vm806, %v776, %v780
        %vm808 = vcmask 261120
        %v809 = vsel %vm808, %v807, %v784
        %vm810 = vcmask 392192
        %v811 = vsel %vm810, %v809, %v788
        %vm812 = vcmask 523264
        %v813 = vsel %vm812, %v811, %v792
        %vm814 = vcmask 654336
        %v815 = vsel %vm814, %v813, %v796
        %vm816 = vcmask 785408
        %v817 = vsel %vm816, %v815, %v800
        %vm818 = vcmask 916480
        %v819 = vsel %vm818, %v817, %v804
        %820 = vst [vmem:[%s370] sm:$0xff] %v819
        %822 = vrot.lane.b32.xlu0 %v572, 126
        %v823 = vpop.permute.xlu0 %822
        %826 = vrot.lane.b32.xlu0 %v591, 126
        %v827 = vpop.permute.xlu0 %826
        %830 = vrot.lane.b32.xlu0 %v610, 126
        %v831 = vpop.permute.xlu0 %830
        %834 = vrot.lane.b32.xlu0 %v629, 126
        %v835 = vpop.permute.xlu0 %834
        %s837 = sld [smem:[#allocation7 + $0x80]]
        %v838 = vstv %s837
        %v839 = vmul.f32 %v572, %v838
        %s840 = sld [smem:[#allocation8 + $0x80]]
        %v841 = vstv %s840
        %v842 = vmul.f32 %v823, %v841
        %v843 = vadd.f32 %v839, %v842
        %s844 = sld [smem:[#allocation7 + $0x81]]
        %v845 = vstv %s844
        %v846 = vmul.f32 %v591, %v845
        %v847 = vadd.f32 %v843, %v846
        %s848 = sld [smem:[#allocation8 + $0x81]]
        %v849 = vstv %s848
        %v850 = vmul.f32 %v827, %v849
        %v851 = vadd.f32 %v847, %v850
        %s852 = sld [smem:[#allocation7 + $0x82]]
        %v853 = vstv %s852
        %v854 = vmul.f32 %v610, %v853
        %v855 = vadd.f32 %v851, %v854
        %s856 = sld [smem:[#allocation8 + $0x82]]
        %v857 = vstv %s856
        %v858 = vmul.f32 %v831, %v857
        %v859 = vadd.f32 %v855, %v858
        %s860 = sld [smem:[#allocation7 + $0x83]]
        %v861 = vstv %s860
        %v862 = vmul.f32 %v629, %v861
        %v863 = vadd.f32 %v859, %v862
        %s864 = sld [smem:[#allocation8 + $0x83]]
        %v865 = vstv %s864
        %v866 = vmul.f32 %v835, %v865
        %v867 = vadd.f32 %v863, %v866
        %v868 = vmax.f32 %v867, -30.0
        %v869 = vsub.f32 0.0, %v868
        %v870 = vmul.f32 %v869, 1.442695
        %v871 = vpow.pop %v870
        %v872 = vsub.f32 1.0, %v871
        %v873 = vmul.f32 %v871, %v871
        %v874 = vadd.f32 %v873, 1.0
        %v875 = vrcp.pop %v874
        %v876 = vmul.f32 %v872, %v875
        %s877 = sld [smem:[#allocation7 + $0x84]]
        %v878 = vstv %s877
        %v879 = vmul.f32 %v572, %v878
        %s880 = sld [smem:[#allocation8 + $0x84]]
        %v881 = vstv %s880
        %v882 = vmul.f32 %v823, %v881
        %v883 = vadd.f32 %v879, %v882
        %s884 = sld [smem:[#allocation7 + $0x85]]
        %v885 = vstv %s884
        %v886 = vmul.f32 %v591, %v885
        %v887 = vadd.f32 %v883, %v886
        %s888 = sld [smem:[#allocation8 + $0x85]]
        %v889 = vstv %s888
        %v890 = vmul.f32 %v827, %v889
        %v891 = vadd.f32 %v887, %v890
        %s892 = sld [smem:[#allocation7 + $0x86]]
        %v893 = vstv %s892
        %v894 = vmul.f32 %v610, %v893
        %v895 = vadd.f32 %v891, %v894
        %s896 = sld [smem:[#allocation8 + $0x86]]
        %v897 = vstv %s896
        %v898 = vmul.f32 %v831, %v897
        %v899 = vadd.f32 %v895, %v898
        %s900 = sld [smem:[#allocation7 + $0x87]]
        %v901 = vstv %s900
        %v902 = vmul.f32 %v629, %v901
        %v903 = vadd.f32 %v899, %v902
        %s904 = sld [smem:[#allocation8 + $0x87]]
        %v905 = vstv %s904
        %v906 = vmul.f32 %v835, %v905
        %v907 = vadd.f32 %v903, %v906
        %v908 = vmax.f32 %v907, -30.0
        %v909 = vsub.f32 0.0, %v908
        %v910 = vmul.f32 %v909, 1.442695
        %v911 = vpow.pop %v910
        %v912 = vsub.f32 1.0, %v911
        %v913 = vmul.f32 %v911, %v911
        %v914 = vadd.f32 %v913, 1.0
        %v915 = vrcp.pop %v914
        %v916 = vmul.f32 %v912, %v915
        %s917 = sld [smem:[#allocation7 + $0x88]]
        %v918 = vstv %s917
        %v919 = vmul.f32 %v572, %v918
        %s920 = sld [smem:[#allocation8 + $0x88]]
        %v921 = vstv %s920
        %v922 = vmul.f32 %v823, %v921
        %v923 = vadd.f32 %v919, %v922
        %s924 = sld [smem:[#allocation7 + $0x89]]
        %v925 = vstv %s924
        %v926 = vmul.f32 %v591, %v925
        %v927 = vadd.f32 %v923, %v926
        %s928 = sld [smem:[#allocation8 + $0x89]]
        %v929 = vstv %s928
        %v930 = vmul.f32 %v827, %v929
        %v931 = vadd.f32 %v927, %v930
        %s932 = sld [smem:[#allocation7 + $0x8a]]
        %v933 = vstv %s932
        %v934 = vmul.f32 %v610, %v933
        %v935 = vadd.f32 %v931, %v934
        %s936 = sld [smem:[#allocation8 + $0x8a]]
        %v937 = vstv %s936
        %v938 = vmul.f32 %v831, %v937
        %v939 = vadd.f32 %v935, %v938
        %s940 = sld [smem:[#allocation7 + $0x8b]]
        %v941 = vstv %s940
        %v942 = vmul.f32 %v629, %v941
        %v943 = vadd.f32 %v939, %v942
        %s944 = sld [smem:[#allocation8 + $0x8b]]
        %v945 = vstv %s944
        %v946 = vmul.f32 %v835, %v945
        %v947 = vadd.f32 %v943, %v946
        %v948 = vmax.f32 %v947, -30.0
        %v949 = vsub.f32 0.0, %v948
        %v950 = vmul.f32 %v949, 1.442695
        %v951 = vpow.pop %v950
        %v952 = vsub.f32 1.0, %v951
        %v953 = vmul.f32 %v951, %v951
        %v954 = vadd.f32 %v953, 1.0
        %v955 = vrcp.pop %v954
        %v956 = vmul.f32 %v952, %v955
        %s957 = sld [smem:[#allocation7 + $0x8c]]
        %v958 = vstv %s957
        %v959 = vmul.f32 %v572, %v958
        %s960 = sld [smem:[#allocation8 + $0x8c]]
        %v961 = vstv %s960
        %v962 = vmul.f32 %v823, %v961
        %v963 = vadd.f32 %v959, %v962
        %s964 = sld [smem:[#allocation7 + $0x8d]]
        %v965 = vstv %s964
        %v966 = vmul.f32 %v591, %v965
        %v967 = vadd.f32 %v963, %v966
        %s968 = sld [smem:[#allocation8 + $0x8d]]
        %v969 = vstv %s968
        %v970 = vmul.f32 %v827, %v969
        %v971 = vadd.f32 %v967, %v970
        %s972 = sld [smem:[#allocation7 + $0x8e]]
        %v973 = vstv %s972
        %v974 = vmul.f32 %v610, %v973
        %v975 = vadd.f32 %v971, %v974
        %s976 = sld [smem:[#allocation8 + $0x8e]]
        %v977 = vstv %s976
        %v978 = vmul.f32 %v831, %v977
        %v979 = vadd.f32 %v975, %v978
        %s980 = sld [smem:[#allocation7 + $0x8f]]
        %v981 = vstv %s980
        %v982 = vmul.f32 %v629, %v981
        %v983 = vadd.f32 %v979, %v982
        %s984 = sld [smem:[#allocation8 + $0x8f]]
        %v985 = vstv %s984
        %v986 = vmul.f32 %v835, %v985
        %v987 = vadd.f32 %v983, %v986
        %v988 = vmax.f32 %v987, -30.0
        %v989 = vsub.f32 0.0, %v988
        %v990 = vmul.f32 %v989, 1.442695
        %v991 = vpow.pop %v990
        %v992 = vsub.f32 1.0, %v991
        %v993 = vmul.f32 %v991, %v991
        %v994 = vadd.f32 %v993, 1.0
        %v995 = vrcp.pop %v994
        %v996 = vmul.f32 %v992, %v995
        %s997 = sld [smem:[#allocation10 + $0x80]]
        %v998 = vstv %s997
        %v999 = vmul.f32 %v876, %v998
        %s1000 = sld [smem:[#allocation10 + $0x81]]
        %v1001 = vstv %s1000
        %v1002 = vmul.f32 %v916, %v1001
        %v1003 = vadd.f32 %v999, %v1002
        %s1004 = sld [smem:[#allocation10 + $0x82]]
        %v1005 = vstv %s1004
        %v1006 = vmul.f32 %v956, %v1005
        %v1007 = vadd.f32 %v1003, %v1006
        %s1008 = sld [smem:[#allocation10 + $0x83]]
        %v1009 = vstv %s1008
        %v1010 = vmul.f32 %v996, %v1009
        %v1011 = vadd.f32 %v1007, %v1010
        %s1012 = sld [smem:[#allocation11 + $0x80]]
        %v1013 = vstv %s1012
        %v1014 = vadd.f32 %v1011, %v1013
        %v1015 = vadd.f32 %v1014, %v823
        %s1016 = sld [smem:[#allocation10 + $0x84]]
        %v1017 = vstv %s1016
        %v1018 = vmul.f32 %v876, %v1017
        %s1019 = sld [smem:[#allocation10 + $0x85]]
        %v1020 = vstv %s1019
        %v1021 = vmul.f32 %v916, %v1020
        %v1022 = vadd.f32 %v1018, %v1021
        %s1023 = sld [smem:[#allocation10 + $0x86]]
        %v1024 = vstv %s1023
        %v1025 = vmul.f32 %v956, %v1024
        %v1026 = vadd.f32 %v1022, %v1025
        %s1027 = sld [smem:[#allocation10 + $0x87]]
        %v1028 = vstv %s1027
        %v1029 = vmul.f32 %v996, %v1028
        %v1030 = vadd.f32 %v1026, %v1029
        %s1031 = sld [smem:[#allocation11 + $0x81]]
        %v1032 = vstv %s1031
        %v1033 = vadd.f32 %v1030, %v1032
        %v1034 = vadd.f32 %v1033, %v827
        %s1035 = sld [smem:[#allocation10 + $0x88]]
        %v1036 = vstv %s1035
        %v1037 = vmul.f32 %v876, %v1036
        %s1038 = sld [smem:[#allocation10 + $0x89]]
        %v1039 = vstv %s1038
        %v1040 = vmul.f32 %v916, %v1039
        %v1041 = vadd.f32 %v1037, %v1040
        %s1042 = sld [smem:[#allocation10 + $0x8a]]
        %v1043 = vstv %s1042
        %v1044 = vmul.f32 %v956, %v1043
        %v1045 = vadd.f32 %v1041, %v1044
        %s1046 = sld [smem:[#allocation10 + $0x8b]]
        %v1047 = vstv %s1046
        %v1048 = vmul.f32 %v996, %v1047
        %v1049 = vadd.f32 %v1045, %v1048
        %s1050 = sld [smem:[#allocation11 + $0x82]]
        %v1051 = vstv %s1050
        %v1052 = vadd.f32 %v1049, %v1051
        %v1053 = vadd.f32 %v1052, %v831
        %s1054 = sld [smem:[#allocation10 + $0x8c]]
        %v1055 = vstv %s1054
        %v1056 = vmul.f32 %v876, %v1055
        %s1057 = sld [smem:[#allocation10 + $0x8d]]
        %v1058 = vstv %s1057
        %v1059 = vmul.f32 %v916, %v1058
        %v1060 = vadd.f32 %v1056, %v1059
        %s1061 = sld [smem:[#allocation10 + $0x8e]]
        %v1062 = vstv %s1061
        %v1063 = vmul.f32 %v956, %v1062
        %v1064 = vadd.f32 %v1060, %v1063
        %s1065 = sld [smem:[#allocation10 + $0x8f]]
        %v1066 = vstv %s1065
        %v1067 = vmul.f32 %v996, %v1066
        %v1068 = vadd.f32 %v1064, %v1067
        %s1069 = sld [smem:[#allocation11 + $0x83]]
        %v1070 = vstv %s1069
        %v1071 = vadd.f32 %v1068, %v1070
        %v1072 = vadd.f32 %v1071, %v835
        %s1073 = sld [smem:[#allocation12 + $0x80]]
        %v1074 = vstv %s1073
        %v1075 = vmul.f32 %v876, %v1074
        %s1076 = sld [smem:[#allocation12 + $0x81]]
        %v1077 = vstv %s1076
        %v1078 = vmul.f32 %v916, %v1077
        %v1079 = vadd.f32 %v1075, %v1078
        %s1080 = sld [smem:[#allocation12 + $0x82]]
        %v1081 = vstv %s1080
        %v1082 = vmul.f32 %v956, %v1081
        %v1083 = vadd.f32 %v1079, %v1082
        %s1084 = sld [smem:[#allocation12 + $0x83]]
        %v1085 = vstv %s1084
        %v1086 = vmul.f32 %v996, %v1085
        %v1087 = vadd.f32 %v1083, %v1086
        %s1088 = sld [smem:[#allocation14 + $0x80]]
        %v1089 = vstv %s1088
        %v1090 = vadd.f32 %v1087, %v1089
        %s1091 = sld [smem:[#allocation12 + $0x84]]
        %v1092 = vstv %s1091
        %v1093 = vmul.f32 %v876, %v1092
        %s1094 = sld [smem:[#allocation12 + $0x85]]
        %v1095 = vstv %s1094
        %v1096 = vmul.f32 %v916, %v1095
        %v1097 = vadd.f32 %v1093, %v1096
        %s1098 = sld [smem:[#allocation12 + $0x86]]
        %v1099 = vstv %s1098
        %v1100 = vmul.f32 %v956, %v1099
        %v1101 = vadd.f32 %v1097, %v1100
        %s1102 = sld [smem:[#allocation12 + $0x87]]
        %v1103 = vstv %s1102
        %v1104 = vmul.f32 %v996, %v1103
        %v1105 = vadd.f32 %v1101, %v1104
        %s1106 = sld [smem:[#allocation14 + $0x81]]
        %v1107 = vstv %s1106
        %v1108 = vadd.f32 %v1105, %v1107
        %s1109 = sld [smem:[#allocation12 + $0x88]]
        %v1110 = vstv %s1109
        %v1111 = vmul.f32 %v876, %v1110
        %s1112 = sld [smem:[#allocation12 + $0x89]]
        %v1113 = vstv %s1112
        %v1114 = vmul.f32 %v916, %v1113
        %v1115 = vadd.f32 %v1111, %v1114
        %s1116 = sld [smem:[#allocation12 + $0x8a]]
        %v1117 = vstv %s1116
        %v1118 = vmul.f32 %v956, %v1117
        %v1119 = vadd.f32 %v1115, %v1118
        %s1120 = sld [smem:[#allocation12 + $0x8b]]
        %v1121 = vstv %s1120
        %v1122 = vmul.f32 %v996, %v1121
        %v1123 = vadd.f32 %v1119, %v1122
        %s1124 = sld [smem:[#allocation14 + $0x82]]
        %v1125 = vstv %s1124
        %v1126 = vadd.f32 %v1123, %v1125
        %s1127 = sld [smem:[#allocation12 + $0x8c]]
        %v1128 = vstv %s1127
        %v1129 = vmul.f32 %v876, %v1128
        %s1130 = sld [smem:[#allocation12 + $0x8d]]
        %v1131 = vstv %s1130
        %v1132 = vmul.f32 %v916, %v1131
        %v1133 = vadd.f32 %v1129, %v1132
        %s1134 = sld [smem:[#allocation12 + $0x8e]]
        %v1135 = vstv %s1134
        %v1136 = vmul.f32 %v956, %v1135
        %v1137 = vadd.f32 %v1133, %v1136
        %s1138 = sld [smem:[#allocation12 + $0x8f]]
        %v1139 = vstv %s1138
        %v1140 = vmul.f32 %v996, %v1139
        %v1141 = vadd.f32 %v1137, %v1140
        %s1142 = sld [smem:[#allocation14 + $0x83]]
        %v1143 = vstv %s1142
        %v1144 = vadd.f32 %v1141, %v1143
        %s1145 = sld [smem:[#allocation12 + $0x90]]
        %v1146 = vstv %s1145
        %v1147 = vmul.f32 %v876, %v1146
        %s1148 = sld [smem:[#allocation12 + $0x91]]
        %v1149 = vstv %s1148
        %v1150 = vmul.f32 %v916, %v1149
        %v1151 = vadd.f32 %v1147, %v1150
        %s1152 = sld [smem:[#allocation12 + $0x92]]
        %v1153 = vstv %s1152
        %v1154 = vmul.f32 %v956, %v1153
        %v1155 = vadd.f32 %v1151, %v1154
        %s1156 = sld [smem:[#allocation12 + $0x93]]
        %v1157 = vstv %s1156
        %v1158 = vmul.f32 %v996, %v1157
        %v1159 = vadd.f32 %v1155, %v1158
        %s1160 = sld [smem:[#allocation14 + $0x84]]
        %v1161 = vstv %s1160
        %v1162 = vadd.f32 %v1159, %v1161
        %s1163 = sld [smem:[#allocation12 + $0x94]]
        %v1164 = vstv %s1163
        %v1165 = vmul.f32 %v876, %v1164
        %s1166 = sld [smem:[#allocation12 + $0x95]]
        %v1167 = vstv %s1166
        %v1168 = vmul.f32 %v916, %v1167
        %v1169 = vadd.f32 %v1165, %v1168
        %s1170 = sld [smem:[#allocation12 + $0x96]]
        %v1171 = vstv %s1170
        %v1172 = vmul.f32 %v956, %v1171
        %v1173 = vadd.f32 %v1169, %v1172
        %s1174 = sld [smem:[#allocation12 + $0x97]]
        %v1175 = vstv %s1174
        %v1176 = vmul.f32 %v996, %v1175
        %v1177 = vadd.f32 %v1173, %v1176
        %s1178 = sld [smem:[#allocation14 + $0x85]]
        %v1179 = vstv %s1178
        %v1180 = vadd.f32 %v1177, %v1179
        %s1181 = sld [smem:[#allocation12 + $0x98]]
        %v1182 = vstv %s1181
        %v1183 = vmul.f32 %v876, %v1182
        %s1184 = sld [smem:[#allocation12 + $0x99]]
        %v1185 = vstv %s1184
        %v1186 = vmul.f32 %v916, %v1185
        %v1187 = vadd.f32 %v1183, %v1186
        %s1188 = sld [smem:[#allocation12 + $0x9a]]
        %v1189 = vstv %s1188
        %v1190 = vmul.f32 %v956, %v1189
        %v1191 = vadd.f32 %v1187, %v1190
        %s1192 = sld [smem:[#allocation12 + $0x9b]]
        %v1193 = vstv %s1192
        %v1194 = vmul.f32 %v996, %v1193
        %v1195 = vadd.f32 %v1191, %v1194
        %s1196 = sld [smem:[#allocation14 + $0x86]]
        %v1197 = vstv %s1196
        %v1198 = vadd.f32 %v1195, %v1197
        %s1199 = sld [smem:[#allocation12 + $0x9c]]
        %v1200 = vstv %s1199
        %v1201 = vmul.f32 %v876, %v1200
        %s1202 = sld [smem:[#allocation12 + $0x9d]]
        %v1203 = vstv %s1202
        %v1204 = vmul.f32 %v916, %v1203
        %v1205 = vadd.f32 %v1201, %v1204
        %s1206 = sld [smem:[#allocation12 + $0x9e]]
        %v1207 = vstv %s1206
        %v1208 = vmul.f32 %v956, %v1207
        %v1209 = vadd.f32 %v1205, %v1208
        %s1210 = sld [smem:[#allocation12 + $0x9f]]
        %v1211 = vstv %s1210
        %v1212 = vmul.f32 %v996, %v1211
        %v1213 = vadd.f32 %v1209, %v1212
        %s1214 = sld [smem:[#allocation14 + $0x87]]
        %v1215 = vstv %s1214
        %v1216 = vadd.f32 %v1213, %v1215
        %1218 = vrot.lane.b32.xlu0 %v1090, 99
        %v1219 = vpop.permute.xlu0 %1218
        %1222 = vrot.lane.b32.xlu0 %v1108, 115
        %v1223 = vpop.permute.xlu0 %1222
        %1226 = vrot.lane.b32.xlu0 %v1126, 3
        %v1227 = vpop.permute.xlu0 %1226
        %1230 = vrot.lane.b32.xlu0 %v1144, 19
        %v1231 = vpop.permute.xlu0 %1230
        %1234 = vrot.lane.b32.xlu0 %v1162, 35
        %v1235 = vpop.permute.xlu0 %1234
        %1238 = vrot.lane.b32.xlu0 %v1180, 51
        %v1239 = vpop.permute.xlu0 %1238
        %1242 = vrot.lane.b32.xlu0 %v1198, 67
        %v1243 = vpop.permute.xlu0 %1242
        %1246 = vrot.lane.b32.xlu0 %v1216, 83
        %v1247 = vpop.permute.xlu0 %1246
        %v1249 = vsel %vm806, %v1219, %v1223
        %v1250 = vsel %vm808, %v1249, %v1227
        %v1251 = vsel %vm810, %v1250, %v1231
        %v1252 = vsel %vm812, %v1251, %v1235
        %v1253 = vsel %vm814, %v1252, %v1239
        %v1254 = vsel %vm816, %v1253, %v1243
        %v1255 = vsel %vm818, %v1254, %v1247
        %s1256 = scalar_lea.vmem %s370, 8 [#allocation15]
        %1257 = vst [vmem:[%s1256] sm:$0xff] %v1255
        %1259 = vrot.lane.b32.xlu0 %v1015, 124
        %v1260 = vpop.permute.xlu0 %1259
        %1263 = vrot.lane.b32.xlu0 %v1034, 124
        %v1264 = vpop.permute.xlu0 %1263
        %1267 = vrot.lane.b32.xlu0 %v1053, 124
        %v1268 = vpop.permute.xlu0 %1267
        %1271 = vrot.lane.b32.xlu0 %v1072, 124
        %v1272 = vpop.permute.xlu0 %1271
        %s1274 = sld [smem:[#allocation7 + $0x100]]
        %v1275 = vstv %s1274
        %v1276 = vmul.f32 %v1015, %v1275
        %s1277 = sld [smem:[#allocation8 + $0x100]]
        %v1278 = vstv %s1277
        %v1279 = vmul.f32 %v1260, %v1278
        %v1280 = vadd.f32 %v1276, %v1279
        %s1281 = sld [smem:[#allocation7 + $0x101]]
        %v1282 = vstv %s1281
        %v1283 = vmul.f32 %v1034, %v1282
        %v1284 = vadd.f32 %v1280, %v1283
        %s1285 = sld [smem:[#allocation8 + $0x101]]
        %v1286 = vstv %s1285
        %v1287 = vmul.f32 %v1264, %v1286
        %v1288 = vadd.f32 %v1284, %v1287
        %s1289 = sld [smem:[#allocation7 + $0x102]]
        %v1290 = vstv %s1289
        %v1291 = vmul.f32 %v1053, %v1290
        %v1292 = vadd.f32 %v1288, %v1291
        %s1293 = sld [smem:[#allocation8 + $0x102]]
        %v1294 = vstv %s1293
        %v1295 = vmul.f32 %v1268, %v1294
        %v1296 = vadd.f32 %v1292, %v1295
        %s1297 = sld [smem:[#allocation7 + $0x103]]
        %v1298 = vstv %s1297
        %v1299 = vmul.f32 %v1072, %v1298
        %v1300 = vadd.f32 %v1296, %v1299
        %s1301 = sld [smem:[#allocation8 + $0x103]]
        %v1302 = vstv %s1301
        %v1303 = vmul.f32 %v1272, %v1302
        %v1304 = vadd.f32 %v1300, %v1303
        %v1305 = vmax.f32 %v1304, -30.0
        %v1306 = vsub.f32 0.0, %v1305
        %v1307 = vmul.f32 %v1306, 1.442695
        %v1308 = vpow.pop %v1307
        %v1309 = vsub.f32 1.0, %v1308
        %v1310 = vmul.f32 %v1308, %v1308
        %v1311 = vadd.f32 %v1310, 1.0
        %v1312 = vrcp.pop %v1311
        %v1313 = vmul.f32 %v1309, %v1312
        %s1314 = sld [smem:[#allocation7 + $0x104]]
        %v1315 = vstv %s1314
        %v1316 = vmul.f32 %v1015, %v1315
        %s1317 = sld [smem:[#allocation8 + $0x104]]
        %v1318 = vstv %s1317
        %v1319 = vmul.f32 %v1260, %v1318
        %v1320 = vadd.f32 %v1316, %v1319
        %s1321 = sld [smem:[#allocation7 + $0x105]]
        %v1322 = vstv %s1321
        %v1323 = vmul.f32 %v1034, %v1322
        %v1324 = vadd.f32 %v1320, %v1323
        %s1325 = sld [smem:[#allocation8 + $0x105]]
        %v1326 = vstv %s1325
        %v1327 = vmul.f32 %v1264, %v1326
        %v1328 = vadd.f32 %v1324, %v1327
        %s1329 = sld [smem:[#allocation7 + $0x106]]
        %v1330 = vstv %s1329
        %v1331 = vmul.f32 %v1053, %v1330
        %v1332 = vadd.f32 %v1328, %v1331
        %s1333 = sld [smem:[#allocation8 + $0x106]]
        %v1334 = vstv %s1333
        %v1335 = vmul.f32 %v1268, %v1334
        %v1336 = vadd.f32 %v1332, %v1335
        %s1337 = sld [smem:[#allocation7 + $0x107]]
        %v1338 = vstv %s1337
        %v1339 = vmul.f32 %v1072, %v1338
        %v1340 = vadd.f32 %v1336, %v1339
        %s1341 = sld [smem:[#allocation8 + $0x107]]
        %v1342 = vstv %s1341
        %v1343 = vmul.f32 %v1272, %v1342
        %v1344 = vadd.f32 %v1340, %v1343
        %v1345 = vmax.f32 %v1344, -30.0
        %v1346 = vsub.f32 0.0, %v1345
        %v1347 = vmul.f32 %v1346, 1.442695
        %v1348 = vpow.pop %v1347
        %v1349 = vsub.f32 1.0, %v1348
        %v1350 = vmul.f32 %v1348, %v1348
        %v1351 = vadd.f32 %v1350, 1.0
        %v1352 = vrcp.pop %v1351
        %v1353 = vmul.f32 %v1349, %v1352
        %s1354 = sld [smem:[#allocation7 + $0x108]]
        %v1355 = vstv %s1354
        %v1356 = vmul.f32 %v1015, %v1355
        %s1357 = sld [smem:[#allocation8 + $0x108]]
        %v1358 = vstv %s1357
        %v1359 = vmul.f32 %v1260, %v1358
        %v1360 = vadd.f32 %v1356, %v1359
        %s1361 = sld [smem:[#allocation7 + $0x109]]
        %v1362 = vstv %s1361
        %v1363 = vmul.f32 %v1034, %v1362
        %v1364 = vadd.f32 %v1360, %v1363
        %s1365 = sld [smem:[#allocation8 + $0x109]]
        %v1366 = vstv %s1365
        %v1367 = vmul.f32 %v1264, %v1366
        %v1368 = vadd.f32 %v1364, %v1367
        %s1369 = sld [smem:[#allocation7 + $0x10a]]
        %v1370 = vstv %s1369
        %v1371 = vmul.f32 %v1053, %v1370
        %v1372 = vadd.f32 %v1368, %v1371
        %s1373 = sld [smem:[#allocation8 + $0x10a]]
        %v1374 = vstv %s1373
        %v1375 = vmul.f32 %v1268, %v1374
        %v1376 = vadd.f32 %v1372, %v1375
        %s1377 = sld [smem:[#allocation7 + $0x10b]]
        %v1378 = vstv %s1377
        %v1379 = vmul.f32 %v1072, %v1378
        %v1380 = vadd.f32 %v1376, %v1379
        %s1381 = sld [smem:[#allocation8 + $0x10b]]
        %v1382 = vstv %s1381
        %v1383 = vmul.f32 %v1272, %v1382
        %v1384 = vadd.f32 %v1380, %v1383
        %v1385 = vmax.f32 %v1384, -30.0
        %v1386 = vsub.f32 0.0, %v1385
        %v1387 = vmul.f32 %v1386, 1.442695
        %v1388 = vpow.pop %v1387
        %v1389 = vsub.f32 1.0, %v1388
        %v1390 = vmul.f32 %v1388, %v1388
        %v1391 = vadd.f32 %v1390, 1.0
        %v1392 = vrcp.pop %v1391
        %v1393 = vmul.f32 %v1389, %v1392
        %s1394 = sld [smem:[#allocation7 + $0x10c]]
        %v1395 = vstv %s1394
        %v1396 = vmul.f32 %v1015, %v1395
        %s1397 = sld [smem:[#allocation8 + $0x10c]]
        %v1398 = vstv %s1397
        %v1399 = vmul.f32 %v1260, %v1398
        %v1400 = vadd.f32 %v1396, %v1399
        %s1401 = sld [smem:[#allocation7 + $0x10d]]
        %v1402 = vstv %s1401
        %v1403 = vmul.f32 %v1034, %v1402
        %v1404 = vadd.f32 %v1400, %v1403
        %s1405 = sld [smem:[#allocation8 + $0x10d]]
        %v1406 = vstv %s1405
        %v1407 = vmul.f32 %v1264, %v1406
        %v1408 = vadd.f32 %v1404, %v1407
        %s1409 = sld [smem:[#allocation7 + $0x10e]]
        %v1410 = vstv %s1409
        %v1411 = vmul.f32 %v1053, %v1410
        %v1412 = vadd.f32 %v1408, %v1411
        %s1413 = sld [smem:[#allocation8 + $0x10e]]
        %v1414 = vstv %s1413
        %v1415 = vmul.f32 %v1268, %v1414
        %v1416 = vadd.f32 %v1412, %v1415
        %s1417 = sld [smem:[#allocation7 + $0x10f]]
        %v1418 = vstv %s1417
        %v1419 = vmul.f32 %v1072, %v1418
        %v1420 = vadd.f32 %v1416, %v1419
        %s1421 = sld [smem:[#allocation8 + $0x10f]]
        %v1422 = vstv %s1421
        %v1423 = vmul.f32 %v1272, %v1422
        %v1424 = vadd.f32 %v1420, %v1423
        %v1425 = vmax.f32 %v1424, -30.0
        %v1426 = vsub.f32 0.0, %v1425
        %v1427 = vmul.f32 %v1426, 1.442695
        %v1428 = vpow.pop %v1427
        %v1429 = vsub.f32 1.0, %v1428
        %v1430 = vmul.f32 %v1428, %v1428
        %v1431 = vadd.f32 %v1430, 1.0
        %v1432 = vrcp.pop %v1431
        %v1433 = vmul.f32 %v1429, %v1432
        %s1434 = sld [smem:[#allocation10 + $0x100]]
        %v1435 = vstv %s1434
        %v1436 = vmul.f32 %v1313, %v1435
        %s1437 = sld [smem:[#allocation10 + $0x101]]
        %v1438 = vstv %s1437
        %v1439 = vmul.f32 %v1353, %v1438
        %v1440 = vadd.f32 %v1436, %v1439
        %s1441 = sld [smem:[#allocation10 + $0x102]]
        %v1442 = vstv %s1441
        %v1443 = vmul.f32 %v1393, %v1442
        %v1444 = vadd.f32 %v1440, %v1443
        %s1445 = sld [smem:[#allocation10 + $0x103]]
        %v1446 = vstv %s1445
        %v1447 = vmul.f32 %v1433, %v1446
        %v1448 = vadd.f32 %v1444, %v1447
        %s1449 = sld [smem:[#allocation11 + $0x100]]
        %v1450 = vstv %s1449
        %v1451 = vadd.f32 %v1448, %v1450
        %v1452 = vadd.f32 %v1451, %v1260
        %s1453 = sld [smem:[#allocation10 + $0x104]]
        %v1454 = vstv %s1453
        %v1455 = vmul.f32 %v1313, %v1454
        %s1456 = sld [smem:[#allocation10 + $0x105]]
        %v1457 = vstv %s1456
        %v1458 = vmul.f32 %v1353, %v1457
        %v1459 = vadd.f32 %v1455, %v1458
        %s1460 = sld [smem:[#allocation10 + $0x106]]
        %v1461 = vstv %s1460
        %v1462 = vmul.f32 %v1393, %v1461
        %v1463 = vadd.f32 %v1459, %v1462
        %s1464 = sld [smem:[#allocation10 + $0x107]]
        %v1465 = vstv %s1464
        %v1466 = vmul.f32 %v1433, %v1465
        %v1467 = vadd.f32 %v1463, %v1466
        %s1468 = sld [smem:[#allocation11 + $0x101]]
        %v1469 = vstv %s1468
        %v1470 = vadd.f32 %v1467, %v1469
        %v1471 = vadd.f32 %v1470, %v1264
        %s1472 = sld [smem:[#allocation10 + $0x108]]
        %v1473 = vstv %s1472
        %v1474 = vmul.f32 %v1313, %v1473
        %s1475 = sld [smem:[#allocation10 + $0x109]]
        %v1476 = vstv %s1475
        %v1477 = vmul.f32 %v1353, %v1476
        %v1478 = vadd.f32 %v1474, %v1477
        %s1479 = sld [smem:[#allocation10 + $0x10a]]
        %v1480 = vstv %s1479
        %v1481 = vmul.f32 %v1393, %v1480
        %v1482 = vadd.f32 %v1478, %v1481
        %s1483 = sld [smem:[#allocation10 + $0x10b]]
        %v1484 = vstv %s1483
        %v1485 = vmul.f32 %v1433, %v1484
        %v1486 = vadd.f32 %v1482, %v1485
        %s1487 = sld [smem:[#allocation11 + $0x102]]
        %v1488 = vstv %s1487
        %v1489 = vadd.f32 %v1486, %v1488
        %v1490 = vadd.f32 %v1489, %v1268
        %s1491 = sld [smem:[#allocation10 + $0x10c]]
        %v1492 = vstv %s1491
        %v1493 = vmul.f32 %v1313, %v1492
        %s1494 = sld [smem:[#allocation10 + $0x10d]]
        %v1495 = vstv %s1494
        %v1496 = vmul.f32 %v1353, %v1495
        %v1497 = vadd.f32 %v1493, %v1496
        %s1498 = sld [smem:[#allocation10 + $0x10e]]
        %v1499 = vstv %s1498
        %v1500 = vmul.f32 %v1393, %v1499
        %v1501 = vadd.f32 %v1497, %v1500
        %s1502 = sld [smem:[#allocation10 + $0x10f]]
        %v1503 = vstv %s1502
        %v1504 = vmul.f32 %v1433, %v1503
        %v1505 = vadd.f32 %v1501, %v1504
        %s1506 = sld [smem:[#allocation11 + $0x103]]
        %v1507 = vstv %s1506
        %v1508 = vadd.f32 %v1505, %v1507
        %v1509 = vadd.f32 %v1508, %v1272
        %s1510 = sld [smem:[#allocation12 + $0x100]]
        %v1511 = vstv %s1510
        %v1512 = vmul.f32 %v1313, %v1511
        %s1513 = sld [smem:[#allocation12 + $0x101]]
        %v1514 = vstv %s1513
        %v1515 = vmul.f32 %v1353, %v1514
        %v1516 = vadd.f32 %v1512, %v1515
        %s1517 = sld [smem:[#allocation12 + $0x102]]
        %v1518 = vstv %s1517
        %v1519 = vmul.f32 %v1393, %v1518
        %v1520 = vadd.f32 %v1516, %v1519
        %s1521 = sld [smem:[#allocation12 + $0x103]]
        %v1522 = vstv %s1521
        %v1523 = vmul.f32 %v1433, %v1522
        %v1524 = vadd.f32 %v1520, %v1523
        %s1525 = sld [smem:[#allocation14 + $0x100]]
        %v1526 = vstv %s1525
        %v1527 = vadd.f32 %v1524, %v1526
        %s1528 = sld [smem:[#allocation12 + $0x104]]
        %v1529 = vstv %s1528
        %v1530 = vmul.f32 %v1313, %v1529
        %s1531 = sld [smem:[#allocation12 + $0x105]]
        %v1532 = vstv %s1531
        %v1533 = vmul.f32 %v1353, %v1532
        %v1534 = vadd.f32 %v1530, %v1533
        %s1535 = sld [smem:[#allocation12 + $0x106]]
        %v1536 = vstv %s1535
        %v1537 = vmul.f32 %v1393, %v1536
        %v1538 = vadd.f32 %v1534, %v1537
        %s1539 = sld [smem:[#allocation12 + $0x107]]
        %v1540 = vstv %s1539
        %v1541 = vmul.f32 %v1433, %v1540
        %v1542 = vadd.f32 %v1538, %v1541
        %s1543 = sld [smem:[#allocation14 + $0x101]]
        %v1544 = vstv %s1543
        %v1545 = vadd.f32 %v1542, %v1544
        %s1546 = sld [smem:[#allocation12 + $0x108]]
        %v1547 = vstv %s1546
        %v1548 = vmul.f32 %v1313, %v1547
        %s1549 = sld [smem:[#allocation12 + $0x109]]
        %v1550 = vstv %s1549
        %v1551 = vmul.f32 %v1353, %v1550
        %v1552 = vadd.f32 %v1548, %v1551
        %s1553 = sld [smem:[#allocation12 + $0x10a]]
        %v1554 = vstv %s1553
        %v1555 = vmul.f32 %v1393, %v1554
        %v1556 = vadd.f32 %v1552, %v1555
        %s1557 = sld [smem:[#allocation12 + $0x10b]]
        %v1558 = vstv %s1557
        %v1559 = vmul.f32 %v1433, %v1558
        %v1560 = vadd.f32 %v1556, %v1559
        %s1561 = sld [smem:[#allocation14 + $0x102]]
        %v1562 = vstv %s1561
        %v1563 = vadd.f32 %v1560, %v1562
        %s1564 = sld [smem:[#allocation12 + $0x10c]]
        %v1565 = vstv %s1564
        %v1566 = vmul.f32 %v1313, %v1565
        %s1567 = sld [smem:[#allocation12 + $0x10d]]
        %v1568 = vstv %s1567
        %v1569 = vmul.f32 %v1353, %v1568
        %v1570 = vadd.f32 %v1566, %v1569
        %s1571 = sld [smem:[#allocation12 + $0x10e]]
        %v1572 = vstv %s1571
        %v1573 = vmul.f32 %v1393, %v1572
        %v1574 = vadd.f32 %v1570, %v1573
        %s1575 = sld [smem:[#allocation12 + $0x10f]]
        %v1576 = vstv %s1575
        %v1577 = vmul.f32 %v1433, %v1576
        %v1578 = vadd.f32 %v1574, %v1577
        %s1579 = sld [smem:[#allocation14 + $0x103]]
        %v1580 = vstv %s1579
        %v1581 = vadd.f32 %v1578, %v1580
        %s1582 = sld [smem:[#allocation12 + $0x110]]
        %v1583 = vstv %s1582
        %v1584 = vmul.f32 %v1313, %v1583
        %s1585 = sld [smem:[#allocation12 + $0x111]]
        %v1586 = vstv %s1585
        %v1587 = vmul.f32 %v1353, %v1586
        %v1588 = vadd.f32 %v1584, %v1587
        %s1589 = sld [smem:[#allocation12 + $0x112]]
        %v1590 = vstv %s1589
        %v1591 = vmul.f32 %v1393, %v1590
        %v1592 = vadd.f32 %v1588, %v1591
        %s1593 = sld [smem:[#allocation12 + $0x113]]
        %v1594 = vstv %s1593
        %v1595 = vmul.f32 %v1433, %v1594
        %v1596 = vadd.f32 %v1592, %v1595
        %s1597 = sld [smem:[#allocation14 + $0x104]]
        %v1598 = vstv %s1597
        %v1599 = vadd.f32 %v1596, %v1598
        %s1600 = sld [smem:[#allocation12 + $0x114]]
        %v1601 = vstv %s1600
        %v1602 = vmul.f32 %v1313, %v1601
        %s1603 = sld [smem:[#allocation12 + $0x115]]
        %v1604 = vstv %s1603
        %v1605 = vmul.f32 %v1353, %v1604
        %v1606 = vadd.f32 %v1602, %v1605
        %s1607 = sld [smem:[#allocation12 + $0x116]]
        %v1608 = vstv %s1607
        %v1609 = vmul.f32 %v1393, %v1608
        %v1610 = vadd.f32 %v1606, %v1609
        %s1611 = sld [smem:[#allocation12 + $0x117]]
        %v1612 = vstv %s1611
        %v1613 = vmul.f32 %v1433, %v1612
        %v1614 = vadd.f32 %v1610, %v1613
        %s1615 = sld [smem:[#allocation14 + $0x105]]
        %v1616 = vstv %s1615
        %v1617 = vadd.f32 %v1614, %v1616
        %s1618 = sld [smem:[#allocation12 + $0x118]]
        %v1619 = vstv %s1618
        %v1620 = vmul.f32 %v1313, %v1619
        %s1621 = sld [smem:[#allocation12 + $0x119]]
        %v1622 = vstv %s1621
        %v1623 = vmul.f32 %v1353, %v1622
        %v1624 = vadd.f32 %v1620, %v1623
        %s1625 = sld [smem:[#allocation12 + $0x11a]]
        %v1626 = vstv %s1625
        %v1627 = vmul.f32 %v1393, %v1626
        %v1628 = vadd.f32 %v1624, %v1627
        %s1629 = sld [smem:[#allocation12 + $0x11b]]
        %v1630 = vstv %s1629
        %v1631 = vmul.f32 %v1433, %v1630
        %v1632 = vadd.f32 %v1628, %v1631
        %s1633 = sld [smem:[#allocation14 + $0x106]]
        %v1634 = vstv %s1633
        %v1635 = vadd.f32 %v1632, %v1634
        %s1636 = sld [smem:[#allocation12 + $0x11c]]
        %v1637 = vstv %s1636
        %v1638 = vmul.f32 %v1313, %v1637
        %s1639 = sld [smem:[#allocation12 + $0x11d]]
        %v1640 = vstv %s1639
        %v1641 = vmul.f32 %v1353, %v1640
        %v1642 = vadd.f32 %v1638, %v1641
        %s1643 = sld [smem:[#allocation12 + $0x11e]]
        %v1644 = vstv %s1643
        %v1645 = vmul.f32 %v1393, %v1644
        %v1646 = vadd.f32 %v1642, %v1645
        %s1647 = sld [smem:[#allocation12 + $0x11f]]
        %v1648 = vstv %s1647
        %v1649 = vmul.f32 %v1433, %v1648
        %v1650 = vadd.f32 %v1646, %v1649
        %s1651 = sld [smem:[#allocation14 + $0x107]]
        %v1652 = vstv %s1651
        %v1653 = vadd.f32 %v1650, %v1652
        %1655 = vrot.lane.b32.xlu0 %v1527, 103
        %v1656 = vpop.permute.xlu0 %1655
        %1659 = vrot.lane.b32.xlu0 %v1545, 119
        %v1660 = vpop.permute.xlu0 %1659
        %1663 = vrot.lane.b32.xlu0 %v1563, 7
        %v1664 = vpop.permute.xlu0 %1663
        %1667 = vrot.lane.b32.xlu0 %v1581, 23
        %v1668 = vpop.permute.xlu0 %1667
        %1671 = vrot.lane.b32.xlu0 %v1599, 39
        %v1672 = vpop.permute.xlu0 %1671
        %1675 = vrot.lane.b32.xlu0 %v1617, 55
        %v1676 = vpop.permute.xlu0 %1675
        %1679 = vrot.lane.b32.xlu0 %v1635, 71
        %v1680 = vpop.permute.xlu0 %1679
        %1683 = vrot.lane.b32.xlu0 %v1653, 87
        %v1684 = vpop.permute.xlu0 %1683
        %v1686 = vsel %vm806, %v1656, %v1660
        %v1687 = vsel %vm808, %v1686, %v1664
        %v1688 = vsel %vm810, %v1687, %v1668
        %v1689 = vsel %vm812, %v1688, %v1672
        %v1690 = vsel %vm814, %v1689, %v1676
        %v1691 = vsel %vm816, %v1690, %v1680
        %v1692 = vsel %vm818, %v1691, %v1684
        %s1693 = scalar_lea.vmem %s370, 16 [#allocation15]
        %1694 = vst [vmem:[%s1693] sm:$0xff] %v1692
        %1696 = vrot.lane.b32.xlu0 %v1452, 127
        %v1697 = vpop.permute.xlu0 %1696
        %1700 = vrot.lane.b32.xlu0 %v1471, 127
        %v1701 = vpop.permute.xlu0 %1700
        %1704 = vrot.lane.b32.xlu0 %v1490, 127
        %v1705 = vpop.permute.xlu0 %1704
        %1708 = vrot.lane.b32.xlu0 %v1509, 127
        %v1709 = vpop.permute.xlu0 %1708
        %s1711 = sld [smem:[#allocation7 + $0x180]]
        %v1712 = vstv %s1711
        %v1713 = vmul.f32 %v1452, %v1712
        %s1714 = sld [smem:[#allocation8 + $0x180]]
        %v1715 = vstv %s1714
        %v1716 = vmul.f32 %v1697, %v1715
        %v1717 = vadd.f32 %v1713, %v1716
        %s1718 = sld [smem:[#allocation7 + $0x181]]
        %v1719 = vstv %s1718
        %v1720 = vmul.f32 %v1471, %v1719
        %v1721 = vadd.f32 %v1717, %v1720
        %s1722 = sld [smem:[#allocation8 + $0x181]]
        %v1723 = vstv %s1722
        %v1724 = vmul.f32 %v1701, %v1723
        %v1725 = vadd.f32 %v1721, %v1724
        %s1726 = sld [smem:[#allocation7 + $0x182]]
        %v1727 = vstv %s1726
        %v1728 = vmul.f32 %v1490, %v1727
        %v1729 = vadd.f32 %v1725, %v1728
        %s1730 = sld [smem:[#allocation8 + $0x182]]
        %v1731 = vstv %s1730
        %v1732 = vmul.f32 %v1705, %v1731
        %v1733 = vadd.f32 %v1729, %v1732
        %s1734 = sld [smem:[#allocation7 + $0x183]]
        %v1735 = vstv %s1734
        %v1736 = vmul.f32 %v1509, %v1735
        %v1737 = vadd.f32 %v1733, %v1736
        %s1738 = sld [smem:[#allocation8 + $0x183]]
        %v1739 = vstv %s1738
        %v1740 = vmul.f32 %v1709, %v1739
        %v1741 = vadd.f32 %v1737, %v1740
        %v1742 = vmax.f32 %v1741, -30.0
        %v1743 = vsub.f32 0.0, %v1742
        %v1744 = vmul.f32 %v1743, 1.442695
        %v1745 = vpow.pop %v1744
        %v1746 = vsub.f32 1.0, %v1745
        %v1747 = vmul.f32 %v1745, %v1745
        %v1748 = vadd.f32 %v1747, 1.0
        %v1749 = vrcp.pop %v1748
        %v1750 = vmul.f32 %v1746, %v1749
        %s1751 = sld [smem:[#allocation7 + $0x184]]
        %v1752 = vstv %s1751
        %v1753 = vmul.f32 %v1452, %v1752
        %s1754 = sld [smem:[#allocation8 + $0x184]]
        %v1755 = vstv %s1754
        %v1756 = vmul.f32 %v1697, %v1755
        %v1757 = vadd.f32 %v1753, %v1756
        %s1758 = sld [smem:[#allocation7 + $0x185]]
        %v1759 = vstv %s1758
        %v1760 = vmul.f32 %v1471, %v1759
        %v1761 = vadd.f32 %v1757, %v1760
        %s1762 = sld [smem:[#allocation8 + $0x185]]
        %v1763 = vstv %s1762
        %v1764 = vmul.f32 %v1701, %v1763
        %v1765 = vadd.f32 %v1761, %v1764
        %s1766 = sld [smem:[#allocation7 + $0x186]]
        %v1767 = vstv %s1766
        %v1768 = vmul.f32 %v1490, %v1767
        %v1769 = vadd.f32 %v1765, %v1768
        %s1770 = sld [smem:[#allocation8 + $0x186]]
        %v1771 = vstv %s1770
        %v1772 = vmul.f32 %v1705, %v1771
        %v1773 = vadd.f32 %v1769, %v1772
        %s1774 = sld [smem:[#allocation7 + $0x187]]
        %v1775 = vstv %s1774
        %v1776 = vmul.f32 %v1509, %v1775
        %v1777 = vadd.f32 %v1773, %v1776
        %s1778 = sld [smem:[#allocation8 + $0x187]]
        %v1779 = vstv %s1778
        %v1780 = vmul.f32 %v1709, %v1779
        %v1781 = vadd.f32 %v1777, %v1780
        %v1782 = vmax.f32 %v1781, -30.0
        %v1783 = vsub.f32 0.0, %v1782
        %v1784 = vmul.f32 %v1783, 1.442695
        %v1785 = vpow.pop %v1784
        %v1786 = vsub.f32 1.0, %v1785
        %v1787 = vmul.f32 %v1785, %v1785
        %v1788 = vadd.f32 %v1787, 1.0
        %v1789 = vrcp.pop %v1788
        %v1790 = vmul.f32 %v1786, %v1789
        %s1791 = sld [smem:[#allocation7 + $0x188]]
        %v1792 = vstv %s1791
        %v1793 = vmul.f32 %v1452, %v1792
        %s1794 = sld [smem:[#allocation8 + $0x188]]
        %v1795 = vstv %s1794
        %v1796 = vmul.f32 %v1697, %v1795
        %v1797 = vadd.f32 %v1793, %v1796
        %s1798 = sld [smem:[#allocation7 + $0x189]]
        %v1799 = vstv %s1798
        %v1800 = vmul.f32 %v1471, %v1799
        %v1801 = vadd.f32 %v1797, %v1800
        %s1802 = sld [smem:[#allocation8 + $0x189]]
        %v1803 = vstv %s1802
        %v1804 = vmul.f32 %v1701, %v1803
        %v1805 = vadd.f32 %v1801, %v1804
        %s1806 = sld [smem:[#allocation7 + $0x18a]]
        %v1807 = vstv %s1806
        %v1808 = vmul.f32 %v1490, %v1807
        %v1809 = vadd.f32 %v1805, %v1808
        %s1810 = sld [smem:[#allocation8 + $0x18a]]
        %v1811 = vstv %s1810
        %v1812 = vmul.f32 %v1705, %v1811
        %v1813 = vadd.f32 %v1809, %v1812
        %s1814 = sld [smem:[#allocation7 + $0x18b]]
        %v1815 = vstv %s1814
        %v1816 = vmul.f32 %v1509, %v1815
        %v1817 = vadd.f32 %v1813, %v1816
        %s1818 = sld [smem:[#allocation8 + $0x18b]]
        %v1819 = vstv %s1818
        %v1820 = vmul.f32 %v1709, %v1819
        %v1821 = vadd.f32 %v1817, %v1820
        %v1822 = vmax.f32 %v1821, -30.0
        %v1823 = vsub.f32 0.0, %v1822
        %v1824 = vmul.f32 %v1823, 1.442695
        %v1825 = vpow.pop %v1824
        %v1826 = vsub.f32 1.0, %v1825
        %v1827 = vmul.f32 %v1825, %v1825
        %v1828 = vadd.f32 %v1827, 1.0
        %v1829 = vrcp.pop %v1828
        %v1830 = vmul.f32 %v1826, %v1829
        %s1831 = sld [smem:[#allocation7 + $0x18c]]
        %v1832 = vstv %s1831
        %v1833 = vmul.f32 %v1452, %v1832
        %s1834 = sld [smem:[#allocation8 + $0x18c]]
        %v1835 = vstv %s1834
        %v1836 = vmul.f32 %v1697, %v1835
        %v1837 = vadd.f32 %v1833, %v1836
        %s1838 = sld [smem:[#allocation7 + $0x18d]]
        %v1839 = vstv %s1838
        %v1840 = vmul.f32 %v1471, %v1839
        %v1841 = vadd.f32 %v1837, %v1840
        %s1842 = sld [smem:[#allocation8 + $0x18d]]
        %v1843 = vstv %s1842
        %v1844 = vmul.f32 %v1701, %v1843
        %v1845 = vadd.f32 %v1841, %v1844
        %s1846 = sld [smem:[#allocation7 + $0x18e]]
        %v1847 = vstv %s1846
        %v1848 = vmul.f32 %v1490, %v1847
        %v1849 = vadd.f32 %v1845, %v1848
        %s1850 = sld [smem:[#allocation8 + $0x18e]]
        %v1851 = vstv %s1850
        %v1852 = vmul.f32 %v1705, %v1851
        %v1853 = vadd.f32 %v1849, %v1852
        %s1854 = sld [smem:[#allocation7 + $0x18f]]
        %v1855 = vstv %s1854
        %v1856 = vmul.f32 %v1509, %v1855
        %v1857 = vadd.f32 %v1853, %v1856
        %s1858 = sld [smem:[#allocation8 + $0x18f]]
        %v1859 = vstv %s1858
        %v1860 = vmul.f32 %v1709, %v1859
        %v1861 = vadd.f32 %v1857, %v1860
        %v1862 = vmax.f32 %v1861, -30.0
        %v1863 = vsub.f32 0.0, %v1862
        %v1864 = vmul.f32 %v1863, 1.442695
        %v1865 = vpow.pop %v1864
        %v1866 = vsub.f32 1.0, %v1865
        %v1867 = vmul.f32 %v1865, %v1865
        %v1868 = vadd.f32 %v1867, 1.0
        %v1869 = vrcp.pop %v1868
        %v1870 = vmul.f32 %v1866, %v1869
        %s1871 = sld [smem:[#allocation10 + $0x180]]
        %v1872 = vstv %s1871
        %v1873 = vmul.f32 %v1750, %v1872
        %s1874 = sld [smem:[#allocation10 + $0x181]]
        %v1875 = vstv %s1874
        %v1876 = vmul.f32 %v1790, %v1875
        %v1877 = vadd.f32 %v1873, %v1876
        %s1878 = sld [smem:[#allocation10 + $0x182]]
        %v1879 = vstv %s1878
        %v1880 = vmul.f32 %v1830, %v1879
        %v1881 = vadd.f32 %v1877, %v1880
        %s1882 = sld [smem:[#allocation10 + $0x183]]
        %v1883 = vstv %s1882
        %v1884 = vmul.f32 %v1870, %v1883
        %v1885 = vadd.f32 %v1881, %v1884
        %s1886 = sld [smem:[#allocation11 + $0x180]]
        %v1887 = vstv %s1886
        %v1888 = vadd.f32 %v1885, %v1887
        %v1889 = vadd.f32 %v1888, %v1697
        %s1890 = sld [smem:[#allocation10 + $0x184]]
        %v1891 = vstv %s1890
        %v1892 = vmul.f32 %v1750, %v1891
        %s1893 = sld [smem:[#allocation10 + $0x185]]
        %v1894 = vstv %s1893
        %v1895 = vmul.f32 %v1790, %v1894
        %v1896 = vadd.f32 %v1892, %v1895
        %s1897 = sld [smem:[#allocation10 + $0x186]]
        %v1898 = vstv %s1897
        %v1899 = vmul.f32 %v1830, %v1898
        %v1900 = vadd.f32 %v1896, %v1899
        %s1901 = sld [smem:[#allocation10 + $0x187]]
        %v1902 = vstv %s1901
        %v1903 = vmul.f32 %v1870, %v1902
        %v1904 = vadd.f32 %v1900, %v1903
        %s1905 = sld [smem:[#allocation11 + $0x181]]
        %v1906 = vstv %s1905
        %v1907 = vadd.f32 %v1904, %v1906
        %v1908 = vadd.f32 %v1907, %v1701
        %s1909 = sld [smem:[#allocation10 + $0x188]]
        %v1910 = vstv %s1909
        %v1911 = vmul.f32 %v1750, %v1910
        %s1912 = sld [smem:[#allocation10 + $0x189]]
        %v1913 = vstv %s1912
        %v1914 = vmul.f32 %v1790, %v1913
        %v1915 = vadd.f32 %v1911, %v1914
        %s1916 = sld [smem:[#allocation10 + $0x18a]]
        %v1917 = vstv %s1916
        %v1918 = vmul.f32 %v1830, %v1917
        %v1919 = vadd.f32 %v1915, %v1918
        %s1920 = sld [smem:[#allocation10 + $0x18b]]
        %v1921 = vstv %s1920
        %v1922 = vmul.f32 %v1870, %v1921
        %v1923 = vadd.f32 %v1919, %v1922
        %s1924 = sld [smem:[#allocation11 + $0x182]]
        %v1925 = vstv %s1924
        %v1926 = vadd.f32 %v1923, %v1925
        %v1927 = vadd.f32 %v1926, %v1705
        %s1928 = sld [smem:[#allocation10 + $0x18c]]
        %v1929 = vstv %s1928
        %v1930 = vmul.f32 %v1750, %v1929
        %s1931 = sld [smem:[#allocation10 + $0x18d]]
        %v1932 = vstv %s1931
        %v1933 = vmul.f32 %v1790, %v1932
        %v1934 = vadd.f32 %v1930, %v1933
        %s1935 = sld [smem:[#allocation10 + $0x18e]]
        %v1936 = vstv %s1935
        %v1937 = vmul.f32 %v1830, %v1936
        %v1938 = vadd.f32 %v1934, %v1937
        %s1939 = sld [smem:[#allocation10 + $0x18f]]
        %v1940 = vstv %s1939
        %v1941 = vmul.f32 %v1870, %v1940
        %v1942 = vadd.f32 %v1938, %v1941
        %s1943 = sld [smem:[#allocation11 + $0x183]]
        %v1944 = vstv %s1943
        %v1945 = vadd.f32 %v1942, %v1944
        %v1946 = vadd.f32 %v1945, %v1709
        %s1947 = sld [smem:[#allocation12 + $0x180]]
        %v1948 = vstv %s1947
        %v1949 = vmul.f32 %v1750, %v1948
        %s1950 = sld [smem:[#allocation12 + $0x181]]
        %v1951 = vstv %s1950
        %v1952 = vmul.f32 %v1790, %v1951
        %v1953 = vadd.f32 %v1949, %v1952
        %s1954 = sld [smem:[#allocation12 + $0x182]]
        %v1955 = vstv %s1954
        %v1956 = vmul.f32 %v1830, %v1955
        %v1957 = vadd.f32 %v1953, %v1956
        %s1958 = sld [smem:[#allocation12 + $0x183]]
        %v1959 = vstv %s1958
        %v1960 = vmul.f32 %v1870, %v1959
        %v1961 = vadd.f32 %v1957, %v1960
        %s1962 = sld [smem:[#allocation14 + $0x180]]
        %v1963 = vstv %s1962
        %v1964 = vadd.f32 %v1961, %v1963
        %s1965 = sld [smem:[#allocation12 + $0x184]]
        %v1966 = vstv %s1965
        %v1967 = vmul.f32 %v1750, %v1966
        %s1968 = sld [smem:[#allocation12 + $0x185]]
        %v1969 = vstv %s1968
        %v1970 = vmul.f32 %v1790, %v1969
        %v1971 = vadd.f32 %v1967, %v1970
        %s1972 = sld [smem:[#allocation12 + $0x186]]
        %v1973 = vstv %s1972
        %v1974 = vmul.f32 %v1830, %v1973
        %v1975 = vadd.f32 %v1971, %v1974
        %s1976 = sld [smem:[#allocation12 + $0x187]]
        %v1977 = vstv %s1976
        %v1978 = vmul.f32 %v1870, %v1977
        %v1979 = vadd.f32 %v1975, %v1978
        %s1980 = sld [smem:[#allocation14 + $0x181]]
        %v1981 = vstv %s1980
        %v1982 = vadd.f32 %v1979, %v1981
        %s1983 = sld [smem:[#allocation12 + $0x188]]
        %v1984 = vstv %s1983
        %v1985 = vmul.f32 %v1750, %v1984
        %s1986 = sld [smem:[#allocation12 + $0x189]]
        %v1987 = vstv %s1986
        %v1988 = vmul.f32 %v1790, %v1987
        %v1989 = vadd.f32 %v1985, %v1988
        %s1990 = sld [smem:[#allocation12 + $0x18a]]
        %v1991 = vstv %s1990
        %v1992 = vmul.f32 %v1830, %v1991
        %v1993 = vadd.f32 %v1989, %v1992
        %s1994 = sld [smem:[#allocation12 + $0x18b]]
        %v1995 = vstv %s1994
        %v1996 = vmul.f32 %v1870, %v1995
        %v1997 = vadd.f32 %v1993, %v1996
        %s1998 = sld [smem:[#allocation14 + $0x182]]
        %v1999 = vstv %s1998
        %v2000 = vadd.f32 %v1997, %v1999
        %s2001 = sld [smem:[#allocation12 + $0x18c]]
        %v2002 = vstv %s2001
        %v2003 = vmul.f32 %v1750, %v2002
        %s2004 = sld [smem:[#allocation12 + $0x18d]]
        %v2005 = vstv %s2004
        %v2006 = vmul.f32 %v1790, %v2005
        %v2007 = vadd.f32 %v2003, %v2006
        %s2008 = sld [smem:[#allocation12 + $0x18e]]
        %v2009 = vstv %s2008
        %v2010 = vmul.f32 %v1830, %v2009
        %v2011 = vadd.f32 %v2007, %v2010
        %s2012 = sld [smem:[#allocation12 + $0x18f]]
        %v2013 = vstv %s2012
        %v2014 = vmul.f32 %v1870, %v2013
        %v2015 = vadd.f32 %v2011, %v2014
        %s2016 = sld [smem:[#allocation14 + $0x183]]
        %v2017 = vstv %s2016
        %v2018 = vadd.f32 %v2015, %v2017
        %s2019 = sld [smem:[#allocation12 + $0x190]]
        %v2020 = vstv %s2019
        %v2021 = vmul.f32 %v1750, %v2020
        %s2022 = sld [smem:[#allocation12 + $0x191]]
        %v2023 = vstv %s2022
        %v2024 = vmul.f32 %v1790, %v2023
        %v2025 = vadd.f32 %v2021, %v2024
        %s2026 = sld [smem:[#allocation12 + $0x192]]
        %v2027 = vstv %s2026
        %v2028 = vmul.f32 %v1830, %v2027
        %v2029 = vadd.f32 %v2025, %v2028
        %s2030 = sld [smem:[#allocation12 + $0x193]]
        %v2031 = vstv %s2030
        %v2032 = vmul.f32 %v1870, %v2031
        %v2033 = vadd.f32 %v2029, %v2032
        %s2034 = sld [smem:[#allocation14 + $0x184]]
        %v2035 = vstv %s2034
        %v2036 = vadd.f32 %v2033, %v2035
        %s2037 = sld [smem:[#allocation12 + $0x194]]
        %v2038 = vstv %s2037
        %v2039 = vmul.f32 %v1750, %v2038
        %s2040 = sld [smem:[#allocation12 + $0x195]]
        %v2041 = vstv %s2040
        %v2042 = vmul.f32 %v1790, %v2041
        %v2043 = vadd.f32 %v2039, %v2042
        %s2044 = sld [smem:[#allocation12 + $0x196]]
        %v2045 = vstv %s2044
        %v2046 = vmul.f32 %v1830, %v2045
        %v2047 = vadd.f32 %v2043, %v2046
        %s2048 = sld [smem:[#allocation12 + $0x197]]
        %v2049 = vstv %s2048
        %v2050 = vmul.f32 %v1870, %v2049
        %v2051 = vadd.f32 %v2047, %v2050
        %s2052 = sld [smem:[#allocation14 + $0x185]]
        %v2053 = vstv %s2052
        %v2054 = vadd.f32 %v2051, %v2053
        %s2055 = sld [smem:[#allocation12 + $0x198]]
        %v2056 = vstv %s2055
        %v2057 = vmul.f32 %v1750, %v2056
        %s2058 = sld [smem:[#allocation12 + $0x199]]
        %v2059 = vstv %s2058
        %v2060 = vmul.f32 %v1790, %v2059
        %v2061 = vadd.f32 %v2057, %v2060
        %s2062 = sld [smem:[#allocation12 + $0x19a]]
        %v2063 = vstv %s2062
        %v2064 = vmul.f32 %v1830, %v2063
        %v2065 = vadd.f32 %v2061, %v2064
        %s2066 = sld [smem:[#allocation12 + $0x19b]]
        %v2067 = vstv %s2066
        %v2068 = vmul.f32 %v1870, %v2067
        %v2069 = vadd.f32 %v2065, %v2068
        %s2070 = sld [smem:[#allocation14 + $0x186]]
        %v2071 = vstv %s2070
        %v2072 = vadd.f32 %v2069, %v2071
        %s2073 = sld [smem:[#allocation12 + $0x19c]]
        %v2074 = vstv %s2073
        %v2075 = vmul.f32 %v1750, %v2074
        %s2076 = sld [smem:[#allocation12 + $0x19d]]
        %v2077 = vstv %s2076
        %v2078 = vmul.f32 %v1790, %v2077
        %v2079 = vadd.f32 %v2075, %v2078
        %s2080 = sld [smem:[#allocation12 + $0x19e]]
        %v2081 = vstv %s2080
        %v2082 = vmul.f32 %v1830, %v2081
        %v2083 = vadd.f32 %v2079, %v2082
        %s2084 = sld [smem:[#allocation12 + $0x19f]]
        %v2085 = vstv %s2084
        %v2086 = vmul.f32 %v1870, %v2085
        %v2087 = vadd.f32 %v2083, %v2086
        %s2088 = sld [smem:[#allocation14 + $0x187]]
        %v2089 = vstv %s2088
        %v2090 = vadd.f32 %v2087, %v2089
        %2092 = vrot.lane.b32.xlu0 %v1964, 104
        %v2093 = vpop.permute.xlu0 %2092
        %2096 = vrot.lane.b32.xlu0 %v1982, 120
        %v2097 = vpop.permute.xlu0 %2096
        %2100 = vrot.lane.b32.xlu0 %v2000, 8
        %v2101 = vpop.permute.xlu0 %2100
        %2104 = vrot.lane.b32.xlu0 %v2018, 24
        %v2105 = vpop.permute.xlu0 %2104
        %2108 = vrot.lane.b32.xlu0 %v2036, 40
        %v2109 = vpop.permute.xlu0 %2108
        %2112 = vrot.lane.b32.xlu0 %v2054, 56
        %v2113 = vpop.permute.xlu0 %2112
        %2116 = vrot.lane.b32.xlu0 %v2072, 72
        %v2117 = vpop.permute.xlu0 %2116
        %2120 = vrot.lane.b32.xlu0 %v2090, 88
        %v2121 = vpop.permute.xlu0 %2120
        %v2123 = vsel %vm806, %v2093, %v2097
        %v2124 = vsel %vm808, %v2123, %v2101
        %v2125 = vsel %vm810, %v2124, %v2105
        %v2126 = vsel %vm812, %v2125, %v2109
        %v2127 = vsel %vm814, %v2126, %v2113
        %v2128 = vsel %vm816, %v2127, %v2117
        %v2129 = vsel %vm818, %v2128, %v2121
        %s2130 = scalar_lea.vmem %s370, 24 [#allocation15]
        %2131 = vst [vmem:[%s2130] sm:$0xff] %v2129
        %2133 = vrot.lane.b32.xlu0 %v1889, 126
        %v2134 = vpop.permute.xlu0 %2133
        %2137 = vrot.lane.b32.xlu0 %v1908, 126
        %v2138 = vpop.permute.xlu0 %2137
        %2141 = vrot.lane.b32.xlu0 %v1927, 126
        %v2142 = vpop.permute.xlu0 %2141
        %2145 = vrot.lane.b32.xlu0 %v1946, 126
        %v2146 = vpop.permute.xlu0 %2145
        %s2148 = sld [smem:[#allocation7 + $0x200]]
        %v2149 = vstv %s2148
        %v2150 = vmul.f32 %v1889, %v2149
        %s2151 = sld [smem:[#allocation8 + $0x200]]
        %v2152 = vstv %s2151
        %v2153 = vmul.f32 %v2134, %v2152
        %v2154 = vadd.f32 %v2150, %v2153
        %s2155 = sld [smem:[#allocation7 + $0x201]]
        %v2156 = vstv %s2155
        %v2157 = vmul.f32 %v1908, %v2156
        %v2158 = vadd.f32 %v2154, %v2157
        %s2159 = sld [smem:[#allocation8 + $0x201]]
        %v2160 = vstv %s2159
        %v2161 = vmul.f32 %v2138, %v2160
        %v2162 = vadd.f32 %v2158, %v2161
        %s2163 = sld [smem:[#allocation7 + $0x202]]
        %v2164 = vstv %s2163
        %v2165 = vmul.f32 %v1927, %v2164
        %v2166 = vadd.f32 %v2162, %v2165
        %s2167 = sld [smem:[#allocation8 + $0x202]]
        %v2168 = vstv %s2167
        %v2169 = vmul.f32 %v2142, %v2168
        %v2170 = vadd.f32 %v2166, %v2169
        %s2171 = sld [smem:[#allocation7 + $0x203]]
        %v2172 = vstv %s2171
        %v2173 = vmul.f32 %v1946, %v2172
        %v2174 = vadd.f32 %v2170, %v2173
        %s2175 = sld [smem:[#allocation8 + $0x203]]
        %v2176 = vstv %s2175
        %v2177 = vmul.f32 %v2146, %v2176
        %v2178 = vadd.f32 %v2174, %v2177
        %v2179 = vmax.f32 %v2178, -30.0
        %v2180 = vsub.f32 0.0, %v2179
        %v2181 = vmul.f32 %v2180, 1.442695
        %v2182 = vpow.pop %v2181
        %v2183 = vsub.f32 1.0, %v2182
        %v2184 = vmul.f32 %v2182, %v2182
        %v2185 = vadd.f32 %v2184, 1.0
        %v2186 = vrcp.pop %v2185
        %v2187 = vmul.f32 %v2183, %v2186
        %s2188 = sld [smem:[#allocation7 + $0x204]]
        %v2189 = vstv %s2188
        %v2190 = vmul.f32 %v1889, %v2189
        %s2191 = sld [smem:[#allocation8 + $0x204]]
        %v2192 = vstv %s2191
        %v2193 = vmul.f32 %v2134, %v2192
        %v2194 = vadd.f32 %v2190, %v2193
        %s2195 = sld [smem:[#allocation7 + $0x205]]
        %v2196 = vstv %s2195
        %v2197 = vmul.f32 %v1908, %v2196
        %v2198 = vadd.f32 %v2194, %v2197
        %s2199 = sld [smem:[#allocation8 + $0x205]]
        %v2200 = vstv %s2199
        %v2201 = vmul.f32 %v2138, %v2200
        %v2202 = vadd.f32 %v2198, %v2201
        %s2203 = sld [smem:[#allocation7 + $0x206]]
        %v2204 = vstv %s2203
        %v2205 = vmul.f32 %v1927, %v2204
        %v2206 = vadd.f32 %v2202, %v2205
        %s2207 = sld [smem:[#allocation8 + $0x206]]
        %v2208 = vstv %s2207
        %v2209 = vmul.f32 %v2142, %v2208
        %v2210 = vadd.f32 %v2206, %v2209
        %s2211 = sld [smem:[#allocation7 + $0x207]]
        %v2212 = vstv %s2211
        %v2213 = vmul.f32 %v1946, %v2212
        %v2214 = vadd.f32 %v2210, %v2213
        %s2215 = sld [smem:[#allocation8 + $0x207]]
        %v2216 = vstv %s2215
        %v2217 = vmul.f32 %v2146, %v2216
        %v2218 = vadd.f32 %v2214, %v2217
        %v2219 = vmax.f32 %v2218, -30.0
        %v2220 = vsub.f32 0.0, %v2219
        %v2221 = vmul.f32 %v2220, 1.442695
        %v2222 = vpow.pop %v2221
        %v2223 = vsub.f32 1.0, %v2222
        %v2224 = vmul.f32 %v2222, %v2222
        %v2225 = vadd.f32 %v2224, 1.0
        %v2226 = vrcp.pop %v2225
        %v2227 = vmul.f32 %v2223, %v2226
        %s2228 = sld [smem:[#allocation7 + $0x208]]
        %v2229 = vstv %s2228
        %v2230 = vmul.f32 %v1889, %v2229
        %s2231 = sld [smem:[#allocation8 + $0x208]]
        %v2232 = vstv %s2231
        %v2233 = vmul.f32 %v2134, %v2232
        %v2234 = vadd.f32 %v2230, %v2233
        %s2235 = sld [smem:[#allocation7 + $0x209]]
        %v2236 = vstv %s2235
        %v2237 = vmul.f32 %v1908, %v2236
        %v2238 = vadd.f32 %v2234, %v2237
        %s2239 = sld [smem:[#allocation8 + $0x209]]
        %v2240 = vstv %s2239
        %v2241 = vmul.f32 %v2138, %v2240
        %v2242 = vadd.f32 %v2238, %v2241
        %s2243 = sld [smem:[#allocation7 + $0x20a]]
        %v2244 = vstv %s2243
        %v2245 = vmul.f32 %v1927, %v2244
        %v2246 = vadd.f32 %v2242, %v2245
        %s2247 = sld [smem:[#allocation8 + $0x20a]]
        %v2248 = vstv %s2247
        %v2249 = vmul.f32 %v2142, %v2248
        %v2250 = vadd.f32 %v2246, %v2249
        %s2251 = sld [smem:[#allocation7 + $0x20b]]
        %v2252 = vstv %s2251
        %v2253 = vmul.f32 %v1946, %v2252
        %v2254 = vadd.f32 %v2250, %v2253
        %s2255 = sld [smem:[#allocation8 + $0x20b]]
        %v2256 = vstv %s2255
        %v2257 = vmul.f32 %v2146, %v2256
        %v2258 = vadd.f32 %v2254, %v2257
        %v2259 = vmax.f32 %v2258, -30.0
        %v2260 = vsub.f32 0.0, %v2259
        %v2261 = vmul.f32 %v2260, 1.442695
        %v2262 = vpow.pop %v2261
        %v2263 = vsub.f32 1.0, %v2262
        %v2264 = vmul.f32 %v2262, %v2262
        %v2265 = vadd.f32 %v2264, 1.0
        %v2266 = vrcp.pop %v2265
        %v2267 = vmul.f32 %v2263, %v2266
        %s2268 = sld [smem:[#allocation7 + $0x20c]]
        %v2269 = vstv %s2268
        %v2270 = vmul.f32 %v1889, %v2269
        %s2271 = sld [smem:[#allocation8 + $0x20c]]
        %v2272 = vstv %s2271
        %v2273 = vmul.f32 %v2134, %v2272
        %v2274 = vadd.f32 %v2270, %v2273
        %s2275 = sld [smem:[#allocation7 + $0x20d]]
        %v2276 = vstv %s2275
        %v2277 = vmul.f32 %v1908, %v2276
        %v2278 = vadd.f32 %v2274, %v2277
        %s2279 = sld [smem:[#allocation8 + $0x20d]]
        %v2280 = vstv %s2279
        %v2281 = vmul.f32 %v2138, %v2280
        %v2282 = vadd.f32 %v2278, %v2281
        %s2283 = sld [smem:[#allocation7 + $0x20e]]
        %v2284 = vstv %s2283
        %v2285 = vmul.f32 %v1927, %v2284
        %v2286 = vadd.f32 %v2282, %v2285
        %s2287 = sld [smem:[#allocation8 + $0x20e]]
        %v2288 = vstv %s2287
        %v2289 = vmul.f32 %v2142, %v2288
        %v2290 = vadd.f32 %v2286, %v2289
        %s2291 = sld [smem:[#allocation7 + $0x20f]]
        %v2292 = vstv %s2291
        %v2293 = vmul.f32 %v1946, %v2292
        %v2294 = vadd.f32 %v2290, %v2293
        %s2295 = sld [smem:[#allocation8 + $0x20f]]
        %v2296 = vstv %s2295
        %v2297 = vmul.f32 %v2146, %v2296
        %v2298 = vadd.f32 %v2294, %v2297
        %v2299 = vmax.f32 %v2298, -30.0
        %v2300 = vsub.f32 0.0, %v2299
        %v2301 = vmul.f32 %v2300, 1.442695
        %v2302 = vpow.pop %v2301
        %v2303 = vsub.f32 1.0, %v2302
        %v2304 = vmul.f32 %v2302, %v2302
        %v2305 = vadd.f32 %v2304, 1.0
        %v2306 = vrcp.pop %v2305
        %v2307 = vmul.f32 %v2303, %v2306
        %s2308 = sld [smem:[#allocation10 + $0x200]]
        %v2309 = vstv %s2308
        %v2310 = vmul.f32 %v2187, %v2309
        %s2311 = sld [smem:[#allocation10 + $0x201]]
        %v2312 = vstv %s2311
        %v2313 = vmul.f32 %v2227, %v2312
        %v2314 = vadd.f32 %v2310, %v2313
        %s2315 = sld [smem:[#allocation10 + $0x202]]
        %v2316 = vstv %s2315
        %v2317 = vmul.f32 %v2267, %v2316
        %v2318 = vadd.f32 %v2314, %v2317
        %s2319 = sld [smem:[#allocation10 + $0x203]]
        %v2320 = vstv %s2319
        %v2321 = vmul.f32 %v2307, %v2320
        %v2322 = vadd.f32 %v2318, %v2321
        %s2323 = sld [smem:[#allocation11 + $0x200]]
        %v2324 = vstv %s2323
        %v2325 = vadd.f32 %v2322, %v2324
        %v2326 = vadd.f32 %v2325, %v2134
        %s2327 = sld [smem:[#allocation10 + $0x204]]
        %v2328 = vstv %s2327
        %v2329 = vmul.f32 %v2187, %v2328
        %s2330 = sld [smem:[#allocation10 + $0x205]]
        %v2331 = vstv %s2330
        %v2332 = vmul.f32 %v2227, %v2331
        %v2333 = vadd.f32 %v2329, %v2332
        %s2334 = sld [smem:[#allocation10 + $0x206]]
        %v2335 = vstv %s2334
        %v2336 = vmul.f32 %v2267, %v2335
        %v2337 = vadd.f32 %v2333, %v2336
        %s2338 = sld [smem:[#allocation10 + $0x207]]
        %v2339 = vstv %s2338
        %v2340 = vmul.f32 %v2307, %v2339
        %v2341 = vadd.f32 %v2337, %v2340
        %s2342 = sld [smem:[#allocation11 + $0x201]]
        %v2343 = vstv %s2342
        %v2344 = vadd.f32 %v2341, %v2343
        %v2345 = vadd.f32 %v2344, %v2138
        %s2346 = sld [smem:[#allocation10 + $0x208]]
        %v2347 = vstv %s2346
        %v2348 = vmul.f32 %v2187, %v2347
        %s2349 = sld [smem:[#allocation10 + $0x209]]
        %v2350 = vstv %s2349
        %v2351 = vmul.f32 %v2227, %v2350
        %v2352 = vadd.f32 %v2348, %v2351
        %s2353 = sld [smem:[#allocation10 + $0x20a]]
        %v2354 = vstv %s2353
        %v2355 = vmul.f32 %v2267, %v2354
        %v2356 = vadd.f32 %v2352, %v2355
        %s2357 = sld [smem:[#allocation10 + $0x20b]]
        %v2358 = vstv %s2357
        %v2359 = vmul.f32 %v2307, %v2358
        %v2360 = vadd.f32 %v2356, %v2359
        %s2361 = sld [smem:[#allocation11 + $0x202]]
        %v2362 = vstv %s2361
        %v2363 = vadd.f32 %v2360, %v2362
        %v2364 = vadd.f32 %v2363, %v2142
        %s2365 = sld [smem:[#allocation10 + $0x20c]]
        %v2366 = vstv %s2365
        %v2367 = vmul.f32 %v2187, %v2366
        %s2368 = sld [smem:[#allocation10 + $0x20d]]
        %v2369 = vstv %s2368
        %v2370 = vmul.f32 %v2227, %v2369
        %v2371 = vadd.f32 %v2367, %v2370
        %s2372 = sld [smem:[#allocation10 + $0x20e]]
        %v2373 = vstv %s2372
        %v2374 = vmul.f32 %v2267, %v2373
        %v2375 = vadd.f32 %v2371, %v2374
        %s2376 = sld [smem:[#allocation10 + $0x20f]]
        %v2377 = vstv %s2376
        %v2378 = vmul.f32 %v2307, %v2377
        %v2379 = vadd.f32 %v2375, %v2378
        %s2380 = sld [smem:[#allocation11 + $0x203]]
        %v2381 = vstv %s2380
        %v2382 = vadd.f32 %v2379, %v2381
        %v2383 = vadd.f32 %v2382, %v2146
        %s2384 = sld [smem:[#allocation12 + $0x200]]
        %v2385 = vstv %s2384
        %v2386 = vmul.f32 %v2187, %v2385
        %s2387 = sld [smem:[#allocation12 + $0x201]]
        %v2388 = vstv %s2387
        %v2389 = vmul.f32 %v2227, %v2388
        %v2390 = vadd.f32 %v2386, %v2389
        %s2391 = sld [smem:[#allocation12 + $0x202]]
        %v2392 = vstv %s2391
        %v2393 = vmul.f32 %v2267, %v2392
        %v2394 = vadd.f32 %v2390, %v2393
        %s2395 = sld [smem:[#allocation12 + $0x203]]
        %v2396 = vstv %s2395
        %v2397 = vmul.f32 %v2307, %v2396
        %v2398 = vadd.f32 %v2394, %v2397
        %s2399 = sld [smem:[#allocation14 + $0x200]]
        %v2400 = vstv %s2399
        %v2401 = vadd.f32 %v2398, %v2400
        %s2402 = sld [smem:[#allocation12 + $0x204]]
        %v2403 = vstv %s2402
        %v2404 = vmul.f32 %v2187, %v2403
        %s2405 = sld [smem:[#allocation12 + $0x205]]
        %v2406 = vstv %s2405
        %v2407 = vmul.f32 %v2227, %v2406
        %v2408 = vadd.f32 %v2404, %v2407
        %s2409 = sld [smem:[#allocation12 + $0x206]]
        %v2410 = vstv %s2409
        %v2411 = vmul.f32 %v2267, %v2410
        %v2412 = vadd.f32 %v2408, %v2411
        %s2413 = sld [smem:[#allocation12 + $0x207]]
        %v2414 = vstv %s2413
        %v2415 = vmul.f32 %v2307, %v2414
        %v2416 = vadd.f32 %v2412, %v2415
        %s2417 = sld [smem:[#allocation14 + $0x201]]
        %v2418 = vstv %s2417
        %v2419 = vadd.f32 %v2416, %v2418
        %s2420 = sld [smem:[#allocation12 + $0x208]]
        %v2421 = vstv %s2420
        %v2422 = vmul.f32 %v2187, %v2421
        %s2423 = sld [smem:[#allocation12 + $0x209]]
        %v2424 = vstv %s2423
        %v2425 = vmul.f32 %v2227, %v2424
        %v2426 = vadd.f32 %v2422, %v2425
        %s2427 = sld [smem:[#allocation12 + $0x20a]]
        %v2428 = vstv %s2427
        %v2429 = vmul.f32 %v2267, %v2428
        %v2430 = vadd.f32 %v2426, %v2429
        %s2431 = sld [smem:[#allocation12 + $0x20b]]
        %v2432 = vstv %s2431
        %v2433 = vmul.f32 %v2307, %v2432
        %v2434 = vadd.f32 %v2430, %v2433
        %s2435 = sld [smem:[#allocation14 + $0x202]]
        %v2436 = vstv %s2435
        %v2437 = vadd.f32 %v2434, %v2436
        %s2438 = sld [smem:[#allocation12 + $0x20c]]
        %v2439 = vstv %s2438
        %v2440 = vmul.f32 %v2187, %v2439
        %s2441 = sld [smem:[#allocation12 + $0x20d]]
        %v2442 = vstv %s2441
        %v2443 = vmul.f32 %v2227, %v2442
        %v2444 = vadd.f32 %v2440, %v2443
        %s2445 = sld [smem:[#allocation12 + $0x20e]]
        %v2446 = vstv %s2445
        %v2447 = vmul.f32 %v2267, %v2446
        %v2448 = vadd.f32 %v2444, %v2447
        %s2449 = sld [smem:[#allocation12 + $0x20f]]
        %v2450 = vstv %s2449
        %v2451 = vmul.f32 %v2307, %v2450
        %v2452 = vadd.f32 %v2448, %v2451
        %s2453 = sld [smem:[#allocation14 + $0x203]]
        %v2454 = vstv %s2453
        %v2455 = vadd.f32 %v2452, %v2454
        %s2456 = sld [smem:[#allocation12 + $0x210]]
        %v2457 = vstv %s2456
        %v2458 = vmul.f32 %v2187, %v2457
        %s2459 = sld [smem:[#allocation12 + $0x211]]
        %v2460 = vstv %s2459
        %v2461 = vmul.f32 %v2227, %v2460
        %v2462 = vadd.f32 %v2458, %v2461
        %s2463 = sld [smem:[#allocation12 + $0x212]]
        %v2464 = vstv %s2463
        %v2465 = vmul.f32 %v2267, %v2464
        %v2466 = vadd.f32 %v2462, %v2465
        %s2467 = sld [smem:[#allocation12 + $0x213]]
        %v2468 = vstv %s2467
        %v2469 = vmul.f32 %v2307, %v2468
        %v2470 = vadd.f32 %v2466, %v2469
        %s2471 = sld [smem:[#allocation14 + $0x204]]
        %v2472 = vstv %s2471
        %v2473 = vadd.f32 %v2470, %v2472
        %s2474 = sld [smem:[#allocation12 + $0x214]]
        %v2475 = vstv %s2474
        %v2476 = vmul.f32 %v2187, %v2475
        %s2477 = sld [smem:[#allocation12 + $0x215]]
        %v2478 = vstv %s2477
        %v2479 = vmul.f32 %v2227, %v2478
        %v2480 = vadd.f32 %v2476, %v2479
        %s2481 = sld [smem:[#allocation12 + $0x216]]
        %v2482 = vstv %s2481
        %v2483 = vmul.f32 %v2267, %v2482
        %v2484 = vadd.f32 %v2480, %v2483
        %s2485 = sld [smem:[#allocation12 + $0x217]]
        %v2486 = vstv %s2485
        %v2487 = vmul.f32 %v2307, %v2486
        %v2488 = vadd.f32 %v2484, %v2487
        %s2489 = sld [smem:[#allocation14 + $0x205]]
        %v2490 = vstv %s2489
        %v2491 = vadd.f32 %v2488, %v2490
        %s2492 = sld [smem:[#allocation12 + $0x218]]
        %v2493 = vstv %s2492
        %v2494 = vmul.f32 %v2187, %v2493
        %s2495 = sld [smem:[#allocation12 + $0x219]]
        %v2496 = vstv %s2495
        %v2497 = vmul.f32 %v2227, %v2496
        %v2498 = vadd.f32 %v2494, %v2497
        %s2499 = sld [smem:[#allocation12 + $0x21a]]
        %v2500 = vstv %s2499
        %v2501 = vmul.f32 %v2267, %v2500
        %v2502 = vadd.f32 %v2498, %v2501
        %s2503 = sld [smem:[#allocation12 + $0x21b]]
        %v2504 = vstv %s2503
        %v2505 = vmul.f32 %v2307, %v2504
        %v2506 = vadd.f32 %v2502, %v2505
        %s2507 = sld [smem:[#allocation14 + $0x206]]
        %v2508 = vstv %s2507
        %v2509 = vadd.f32 %v2506, %v2508
        %s2510 = sld [smem:[#allocation12 + $0x21c]]
        %v2511 = vstv %s2510
        %v2512 = vmul.f32 %v2187, %v2511
        %s2513 = sld [smem:[#allocation12 + $0x21d]]
        %v2514 = vstv %s2513
        %v2515 = vmul.f32 %v2227, %v2514
        %v2516 = vadd.f32 %v2512, %v2515
        %s2517 = sld [smem:[#allocation12 + $0x21e]]
        %v2518 = vstv %s2517
        %v2519 = vmul.f32 %v2267, %v2518
        %v2520 = vadd.f32 %v2516, %v2519
        %s2521 = sld [smem:[#allocation12 + $0x21f]]
        %v2522 = vstv %s2521
        %v2523 = vmul.f32 %v2307, %v2522
        %v2524 = vadd.f32 %v2520, %v2523
        %s2525 = sld [smem:[#allocation14 + $0x207]]
        %v2526 = vstv %s2525
        %v2527 = vadd.f32 %v2524, %v2526
        %2529 = vrot.lane.b32.xlu0 %v2401, 106
        %v2530 = vpop.permute.xlu0 %2529
        %2533 = vrot.lane.b32.xlu0 %v2419, 122
        %v2534 = vpop.permute.xlu0 %2533
        %2537 = vrot.lane.b32.xlu0 %v2437, 10
        %v2538 = vpop.permute.xlu0 %2537
        %2541 = vrot.lane.b32.xlu0 %v2455, 26
        %v2542 = vpop.permute.xlu0 %2541
        %2545 = vrot.lane.b32.xlu0 %v2473, 42
        %v2546 = vpop.permute.xlu0 %2545
        %2549 = vrot.lane.b32.xlu0 %v2491, 58
        %v2550 = vpop.permute.xlu0 %2549
        %2553 = vrot.lane.b32.xlu0 %v2509, 74
        %v2554 = vpop.permute.xlu0 %2553
        %2557 = vrot.lane.b32.xlu0 %v2527, 90
        %v2558 = vpop.permute.xlu0 %2557
        %v2560 = vsel %vm806, %v2530, %v2534
        %v2561 = vsel %vm808, %v2560, %v2538
        %v2562 = vsel %vm810, %v2561, %v2542
        %v2563 = vsel %vm812, %v2562, %v2546
        %v2564 = vsel %vm814, %v2563, %v2550
        %v2565 = vsel %vm816, %v2564, %v2554
        %v2566 = vsel %vm818, %v2565, %v2558
        %s2567 = scalar_lea.vmem %s370, 32 [#allocation15]
        %2568 = vst [vmem:[%s2567] sm:$0xff] %v2566
        %2570 = vrot.lane.b32.xlu0 %v2326, 124
        %v2571 = vpop.permute.xlu0 %2570
        %2574 = vrot.lane.b32.xlu0 %v2345, 124
        %v2575 = vpop.permute.xlu0 %2574
        %2578 = vrot.lane.b32.xlu0 %v2364, 124
        %v2579 = vpop.permute.xlu0 %2578
        %2582 = vrot.lane.b32.xlu0 %v2383, 124
        %v2583 = vpop.permute.xlu0 %2582
        %s2585 = sld [smem:[#allocation7 + $0x280]]
        %v2586 = vstv %s2585
        %v2587 = vmul.f32 %v2326, %v2586
        %s2588 = sld [smem:[#allocation8 + $0x280]]
        %v2589 = vstv %s2588
        %v2590 = vmul.f32 %v2571, %v2589
        %v2591 = vadd.f32 %v2587, %v2590
        %s2592 = sld [smem:[#allocation7 + $0x281]]
        %v2593 = vstv %s2592
        %v2594 = vmul.f32 %v2345, %v2593
        %v2595 = vadd.f32 %v2591, %v2594
        %s2596 = sld [smem:[#allocation8 + $0x281]]
        %v2597 = vstv %s2596
        %v2598 = vmul.f32 %v2575, %v2597
        %v2599 = vadd.f32 %v2595, %v2598
        %s2600 = sld [smem:[#allocation7 + $0x282]]
        %v2601 = vstv %s2600
        %v2602 = vmul.f32 %v2364, %v2601
        %v2603 = vadd.f32 %v2599, %v2602
        %s2604 = sld [smem:[#allocation8 + $0x282]]
        %v2605 = vstv %s2604
        %v2606 = vmul.f32 %v2579, %v2605
        %v2607 = vadd.f32 %v2603, %v2606
        %s2608 = sld [smem:[#allocation7 + $0x283]]
        %v2609 = vstv %s2608
        %v2610 = vmul.f32 %v2383, %v2609
        %v2611 = vadd.f32 %v2607, %v2610
        %s2612 = sld [smem:[#allocation8 + $0x283]]
        %v2613 = vstv %s2612
        %v2614 = vmul.f32 %v2583, %v2613
        %v2615 = vadd.f32 %v2611, %v2614
        %v2616 = vmax.f32 %v2615, -30.0
        %v2617 = vsub.f32 0.0, %v2616
        %v2618 = vmul.f32 %v2617, 1.442695
        %v2619 = vpow.pop %v2618
        %v2620 = vsub.f32 1.0, %v2619
        %v2621 = vmul.f32 %v2619, %v2619
        %v2622 = vadd.f32 %v2621, 1.0
        %v2623 = vrcp.pop %v2622
        %v2624 = vmul.f32 %v2620, %v2623
        %s2625 = sld [smem:[#allocation7 + $0x284]]
        %v2626 = vstv %s2625
        %v2627 = vmul.f32 %v2326, %v2626
        %s2628 = sld [smem:[#allocation8 + $0x284]]
        %v2629 = vstv %s2628
        %v2630 = vmul.f32 %v2571, %v2629
        %v2631 = vadd.f32 %v2627, %v2630
        %s2632 = sld [smem:[#allocation7 + $0x285]]
        %v2633 = vstv %s2632
        %v2634 = vmul.f32 %v2345, %v2633
        %v2635 = vadd.f32 %v2631, %v2634
        %s2636 = sld [smem:[#allocation8 + $0x285]]
        %v2637 = vstv %s2636
        %v2638 = vmul.f32 %v2575, %v2637
        %v2639 = vadd.f32 %v2635, %v2638
        %s2640 = sld [smem:[#allocation7 + $0x286]]
        %v2641 = vstv %s2640
        %v2642 = vmul.f32 %v2364, %v2641
        %v2643 = vadd.f32 %v2639, %v2642
        %s2644 = sld [smem:[#allocation8 + $0x286]]
        %v2645 = vstv %s2644
        %v2646 = vmul.f32 %v2579, %v2645
        %v2647 = vadd.f32 %v2643, %v2646
        %s2648 = sld [smem:[#allocation7 + $0x287]]
        %v2649 = vstv %s2648
        %v2650 = vmul.f32 %v2383, %v2649
        %v2651 = vadd.f32 %v2647, %v2650
        %s2652 = sld [smem:[#allocation8 + $0x287]]
        %v2653 = vstv %s2652
        %v2654 = vmul.f32 %v2583, %v2653
        %v2655 = vadd.f32 %v2651, %v2654
        %v2656 = vmax.f32 %v2655, -30.0
        %v2657 = vsub.f32 0.0, %v2656
        %v2658 = vmul.f32 %v2657, 1.442695
        %v2659 = vpow.pop %v2658
        %v2660 = vsub.f32 1.0, %v2659
        %v2661 = vmul.f32 %v2659, %v2659
        %v2662 = vadd.f32 %v2661, 1.0
        %v2663 = vrcp.pop %v2662
        %v2664 = vmul.f32 %v2660, %v2663
        %s2665 = sld [smem:[#allocation7 + $0x288]]
        %v2666 = vstv %s2665
        %v2667 = vmul.f32 %v2326, %v2666
        %s2668 = sld [smem:[#allocation8 + $0x288]]
        %v2669 = vstv %s2668
        %v2670 = vmul.f32 %v2571, %v2669
        %v2671 = vadd.f32 %v2667, %v2670
        %s2672 = sld [smem:[#allocation7 + $0x289]]
        %v2673 = vstv %s2672
        %v2674 = vmul.f32 %v2345, %v2673
        %v2675 = vadd.f32 %v2671, %v2674
        %s2676 = sld [smem:[#allocation8 + $0x289]]
        %v2677 = vstv %s2676
        %v2678 = vmul.f32 %v2575, %v2677
        %v2679 = vadd.f32 %v2675, %v2678
        %s2680 = sld [smem:[#allocation7 + $0x28a]]
        %v2681 = vstv %s2680
        %v2682 = vmul.f32 %v2364, %v2681
        %v2683 = vadd.f32 %v2679, %v2682
        %s2684 = sld [smem:[#allocation8 + $0x28a]]
        %v2685 = vstv %s2684
        %v2686 = vmul.f32 %v2579, %v2685
        %v2687 = vadd.f32 %v2683, %v2686
        %s2688 = sld [smem:[#allocation7 + $0x28b]]
        %v2689 = vstv %s2688
        %v2690 = vmul.f32 %v2383, %v2689
        %v2691 = vadd.f32 %v2687, %v2690
        %s2692 = sld [smem:[#allocation8 + $0x28b]]
        %v2693 = vstv %s2692
        %v2694 = vmul.f32 %v2583, %v2693
        %v2695 = vadd.f32 %v2691, %v2694
        %v2696 = vmax.f32 %v2695, -30.0
        %v2697 = vsub.f32 0.0, %v2696
        %v2698 = vmul.f32 %v2697, 1.442695
        %v2699 = vpow.pop %v2698
        %v2700 = vsub.f32 1.0, %v2699
        %v2701 = vmul.f32 %v2699, %v2699
        %v2702 = vadd.f32 %v2701, 1.0
        %v2703 = vrcp.pop %v2702
        %v2704 = vmul.f32 %v2700, %v2703
        %s2705 = sld [smem:[#allocation7 + $0x28c]]
        %v2706 = vstv %s2705
        %v2707 = vmul.f32 %v2326, %v2706
        %s2708 = sld [smem:[#allocation8 + $0x28c]]
        %v2709 = vstv %s2708
        %v2710 = vmul.f32 %v2571, %v2709
        %v2711 = vadd.f32 %v2707, %v2710
        %s2712 = sld [smem:[#allocation7 + $0x28d]]
        %v2713 = vstv %s2712
        %v2714 = vmul.f32 %v2345, %v2713
        %v2715 = vadd.f32 %v2711, %v2714
        %s2716 = sld [smem:[#allocation8 + $0x28d]]
        %v2717 = vstv %s2716
        %v2718 = vmul.f32 %v2575, %v2717
        %v2719 = vadd.f32 %v2715, %v2718
        %s2720 = sld [smem:[#allocation7 + $0x28e]]
        %v2721 = vstv %s2720
        %v2722 = vmul.f32 %v2364, %v2721
        %v2723 = vadd.f32 %v2719, %v2722
        %s2724 = sld [smem:[#allocation8 + $0x28e]]
        %v2725 = vstv %s2724
        %v2726 = vmul.f32 %v2579, %v2725
        %v2727 = vadd.f32 %v2723, %v2726
        %s2728 = sld [smem:[#allocation7 + $0x28f]]
        %v2729 = vstv %s2728
        %v2730 = vmul.f32 %v2383, %v2729
        %v2731 = vadd.f32 %v2727, %v2730
        %s2732 = sld [smem:[#allocation8 + $0x28f]]
        %v2733 = vstv %s2732
        %v2734 = vmul.f32 %v2583, %v2733
        %v2735 = vadd.f32 %v2731, %v2734
        %v2736 = vmax.f32 %v2735, -30.0
        %v2737 = vsub.f32 0.0, %v2736
        %v2738 = vmul.f32 %v2737, 1.442695
        %v2739 = vpow.pop %v2738
        %v2740 = vsub.f32 1.0, %v2739
        %v2741 = vmul.f32 %v2739, %v2739
        %v2742 = vadd.f32 %v2741, 1.0
        %v2743 = vrcp.pop %v2742
        %v2744 = vmul.f32 %v2740, %v2743
        %s2745 = sld [smem:[#allocation12 + $0x280]]
        %v2746 = vstv %s2745
        %v2747 = vmul.f32 %v2624, %v2746
        %s2748 = sld [smem:[#allocation12 + $0x281]]
        %v2749 = vstv %s2748
        %v2750 = vmul.f32 %v2664, %v2749
        %v2751 = vadd.f32 %v2747, %v2750
        %s2752 = sld [smem:[#allocation12 + $0x282]]
        %v2753 = vstv %s2752
        %v2754 = vmul.f32 %v2704, %v2753
        %v2755 = vadd.f32 %v2751, %v2754
        %s2756 = sld [smem:[#allocation12 + $0x283]]
        %v2757 = vstv %s2756
        %v2758 = vmul.f32 %v2744, %v2757
        %v2759 = vadd.f32 %v2755, %v2758
        %s2760 = sld [smem:[#allocation14 + $0x280]]
        %v2761 = vstv %s2760
        %v2762 = vadd.f32 %v2759, %v2761
        %s2763 = sld [smem:[#allocation12 + $0x284]]
        %v2764 = vstv %s2763
        %v2765 = vmul.f32 %v2624, %v2764
        %s2766 = sld [smem:[#allocation12 + $0x285]]
        %v2767 = vstv %s2766
        %v2768 = vmul.f32 %v2664, %v2767
        %v2769 = vadd.f32 %v2765, %v2768
        %s2770 = sld [smem:[#allocation12 + $0x286]]
        %v2771 = vstv %s2770
        %v2772 = vmul.f32 %v2704, %v2771
        %v2773 = vadd.f32 %v2769, %v2772
        %s2774 = sld [smem:[#allocation12 + $0x287]]
        %v2775 = vstv %s2774
        %v2776 = vmul.f32 %v2744, %v2775
        %v2777 = vadd.f32 %v2773, %v2776
        %s2778 = sld [smem:[#allocation14 + $0x281]]
        %v2779 = vstv %s2778
        %v2780 = vadd.f32 %v2777, %v2779
        %s2781 = sld [smem:[#allocation12 + $0x288]]
        %v2782 = vstv %s2781
        %v2783 = vmul.f32 %v2624, %v2782
        %s2784 = sld [smem:[#allocation12 + $0x289]]
        %v2785 = vstv %s2784
        %v2786 = vmul.f32 %v2664, %v2785
        %v2787 = vadd.f32 %v2783, %v2786
        %s2788 = sld [smem:[#allocation12 + $0x28a]]
        %v2789 = vstv %s2788
        %v2790 = vmul.f32 %v2704, %v2789
        %v2791 = vadd.f32 %v2787, %v2790
        %s2792 = sld [smem:[#allocation12 + $0x28b]]
        %v2793 = vstv %s2792
        %v2794 = vmul.f32 %v2744, %v2793
        %v2795 = vadd.f32 %v2791, %v2794
        %s2796 = sld [smem:[#allocation14 + $0x282]]
        %v2797 = vstv %s2796
        %v2798 = vadd.f32 %v2795, %v2797
        %s2799 = sld [smem:[#allocation12 + $0x28c]]
        %v2800 = vstv %s2799
        %v2801 = vmul.f32 %v2624, %v2800
        %s2802 = sld [smem:[#allocation12 + $0x28d]]
        %v2803 = vstv %s2802
        %v2804 = vmul.f32 %v2664, %v2803
        %v2805 = vadd.f32 %v2801, %v2804
        %s2806 = sld [smem:[#allocation12 + $0x28e]]
        %v2807 = vstv %s2806
        %v2808 = vmul.f32 %v2704, %v2807
        %v2809 = vadd.f32 %v2805, %v2808
        %s2810 = sld [smem:[#allocation12 + $0x28f]]
        %v2811 = vstv %s2810
        %v2812 = vmul.f32 %v2744, %v2811
        %v2813 = vadd.f32 %v2809, %v2812
        %s2814 = sld [smem:[#allocation14 + $0x283]]
        %v2815 = vstv %s2814
        %v2816 = vadd.f32 %v2813, %v2815
        %s2817 = sld [smem:[#allocation12 + $0x290]]
        %v2818 = vstv %s2817
        %v2819 = vmul.f32 %v2624, %v2818
        %s2820 = sld [smem:[#allocation12 + $0x291]]
        %v2821 = vstv %s2820
        %v2822 = vmul.f32 %v2664, %v2821
        %v2823 = vadd.f32 %v2819, %v2822
        %s2824 = sld [smem:[#allocation12 + $0x292]]
        %v2825 = vstv %s2824
        %v2826 = vmul.f32 %v2704, %v2825
        %v2827 = vadd.f32 %v2823, %v2826
        %s2828 = sld [smem:[#allocation12 + $0x293]]
        %v2829 = vstv %s2828
        %v2830 = vmul.f32 %v2744, %v2829
        %v2831 = vadd.f32 %v2827, %v2830
        %s2832 = sld [smem:[#allocation14 + $0x284]]
        %v2833 = vstv %s2832
        %v2834 = vadd.f32 %v2831, %v2833
        %s2835 = sld [smem:[#allocation12 + $0x294]]
        %v2836 = vstv %s2835
        %v2837 = vmul.f32 %v2624, %v2836
        %s2838 = sld [smem:[#allocation12 + $0x295]]
        %v2839 = vstv %s2838
        %v2840 = vmul.f32 %v2664, %v2839
        %v2841 = vadd.f32 %v2837, %v2840
        %s2842 = sld [smem:[#allocation12 + $0x296]]
        %v2843 = vstv %s2842
        %v2844 = vmul.f32 %v2704, %v2843
        %v2845 = vadd.f32 %v2841, %v2844
        %s2846 = sld [smem:[#allocation12 + $0x297]]
        %v2847 = vstv %s2846
        %v2848 = vmul.f32 %v2744, %v2847
        %v2849 = vadd.f32 %v2845, %v2848
        %s2850 = sld [smem:[#allocation14 + $0x285]]
        %v2851 = vstv %s2850
        %v2852 = vadd.f32 %v2849, %v2851
        %s2853 = sld [smem:[#allocation12 + $0x298]]
        %v2854 = vstv %s2853
        %v2855 = vmul.f32 %v2624, %v2854
        %s2856 = sld [smem:[#allocation12 + $0x299]]
        %v2857 = vstv %s2856
        %v2858 = vmul.f32 %v2664, %v2857
        %v2859 = vadd.f32 %v2855, %v2858
        %s2860 = sld [smem:[#allocation12 + $0x29a]]
        %v2861 = vstv %s2860
        %v2862 = vmul.f32 %v2704, %v2861
        %v2863 = vadd.f32 %v2859, %v2862
        %s2864 = sld [smem:[#allocation12 + $0x29b]]
        %v2865 = vstv %s2864
        %v2866 = vmul.f32 %v2744, %v2865
        %v2867 = vadd.f32 %v2863, %v2866
        %s2868 = sld [smem:[#allocation14 + $0x286]]
        %v2869 = vstv %s2868
        %v2870 = vadd.f32 %v2867, %v2869
        %s2871 = sld [smem:[#allocation12 + $0x29c]]
        %v2872 = vstv %s2871
        %v2873 = vmul.f32 %v2624, %v2872
        %s2874 = sld [smem:[#allocation12 + $0x29d]]
        %v2875 = vstv %s2874
        %v2876 = vmul.f32 %v2664, %v2875
        %v2877 = vadd.f32 %v2873, %v2876
        %s2878 = sld [smem:[#allocation12 + $0x29e]]
        %v2879 = vstv %s2878
        %v2880 = vmul.f32 %v2704, %v2879
        %v2881 = vadd.f32 %v2877, %v2880
        %s2882 = sld [smem:[#allocation12 + $0x29f]]
        %v2883 = vstv %s2882
        %v2884 = vmul.f32 %v2744, %v2883
        %v2885 = vadd.f32 %v2881, %v2884
        %s2886 = sld [smem:[#allocation14 + $0x287]]
        %v2887 = vstv %s2886
        %v2888 = vadd.f32 %v2885, %v2887
        %2890 = vrot.lane.b32.xlu0 %v2762, 110
        %v2891 = vpop.permute.xlu0 %2890
        %2894 = vrot.lane.b32.xlu0 %v2780, 126
        %v2895 = vpop.permute.xlu0 %2894
        %2898 = vrot.lane.b32.xlu0 %v2798, 14
        %v2899 = vpop.permute.xlu0 %2898
        %2902 = vrot.lane.b32.xlu0 %v2816, 30
        %v2903 = vpop.permute.xlu0 %2902
        %2906 = vrot.lane.b32.xlu0 %v2834, 46
        %v2907 = vpop.permute.xlu0 %2906
        %2910 = vrot.lane.b32.xlu0 %v2852, 62
        %v2911 = vpop.permute.xlu0 %2910
        %2914 = vrot.lane.b32.xlu0 %v2870, 78
        %v2915 = vpop.permute.xlu0 %2914
        %2918 = vrot.lane.b32.xlu0 %v2888, 94
        %v2919 = vpop.permute.xlu0 %2918
        %v2921 = vsel %vm806, %v2891, %v2895
        %v2922 = vsel %vm808, %v2921, %v2899
        %v2923 = vsel %vm810, %v2922, %v2903
        %v2924 = vsel %vm812, %v2923, %v2907
        %v2925 = vsel %vm814, %v2924, %v2911
        %v2926 = vsel %vm816, %v2925, %v2915
        %v2927 = vsel %vm818, %v2926, %v2919
        %s2928 = scalar_lea.vmem %s370, 40 [#allocation15]
        %2929 = vst [vmem:[%s2928] sm:$0xff] %v2927
        %s2930 = sand.u32 %s188, 1
        %s2931 = scalar_lea.sflag [#allocation4], %s2930
        %s2932 = sand.u32 %s188, 1
        %s2933 = smul.addr %s2932, 48
        %s2934 = scalar_lea.vmem [#allocation15], %s2933
        // Predicated region
        $region77: #{tpu_custom_call.1} parent=47 // pred_check
          %p2935 = pneg %p198
        $region78: #{tpu_custom_call.1} parent=47 // pred_check_branch
          %2937 = sbr.rel (%p2935) target = $region80
        $region79: #{tpu_custom_call.1} parent=47 // pred_region
          %s2939 = ssub.s32 768, 768
          %2940 = vsyncadd %s2931, %s2939
          %s2941 = smul.addr %s28, 128
          %s2942 = scalar_lea.hbm %s7, %s2941
          %s2943 = sshll.u32 %s2934, 4
          %s2944 = int_to_ptr.vmem [resolvable:$true] %s2943
          %2949 = dma.vmem_to_hbm [thread:$0]  %s2944, 768, %s2942, %s2931, 128, 256, 8
        $region80: #{tpu_custom_call.1} parent=47 // pred_fallthru
          _
      $region48: #{tpu_custom_call.1} parent=5 // pred_fallthru
        _
      %p2950 = scmp.le.s32.totalorder 2, %s23
      // Predicated region
      $region81: #{tpu_custom_call.1} parent=5 // pred_check
        %p2951 = pneg %p2950
      $region82: #{tpu_custom_call.1} parent=5 // pred_check_branch
        %2953 = sbr.rel (%p2951) target = $region84
      $region83: #{tpu_custom_call.1} parent=5 // pred_region
        %s2954 = ssub.s32 %s23, 2
        // Predicated region
        $region85: #{tpu_custom_call.1} parent=83 // pred_check
          %p2955 = pneg %p204
        $region86: #{tpu_custom_call.1} parent=83 // pred_check_branch
          %2957 = sbr.rel (%p2955) target = $region88
        $region87: #{tpu_custom_call.1} parent=83 // pred_region
          %s2958 = sand.u32 %s189, 1
          %s2959 = scalar_lea.sflag [#allocation4], %s2958
          %s2960 = sand.u32 %s189, 1
          %s2961 = smul.addr %s2960, 48
          %s2962 = scalar_lea.vmem [#allocation15], %s2961
          %2963 = dma.done %s2959, 768
        $region88: #{tpu_custom_call.1} parent=83 // pred_fallthru
          _
      $region84: #{tpu_custom_call.1} parent=5 // pred_fallthru
        _
    $region6: #{tpu_custom_call.1} parent=1 // loop_footer
      %s27 = sadd.s32 1, %s23
    $region7: #{tpu_custom_call.1} parent=1 // loop_footer_branch
      %22 = sbr.rel target = $region3
    $region8: #{tpu_custom_call.1} parent=1 // loop_exit
      _
    %2964 = vsyncpa [#allocation3], 1
    %s2965 = scalar_lea.sflag [#allocation3], 1
    %2966 = vsyncpa %s2965, 1
    %2967 = vsyncpa [#allocation4], 1
    %s2968 = scalar_lea.sflag [#allocation4], 1
    %2969 = vsyncpa %s2968, 1
    %2970 = vsyncpa [#allocation5], 1
    %s2971 = scalar_lea.sflag [#allocation5], 1
    %2972 = vsyncpa %s2971, 1
    %2973 = vsyncpa [#allocation6], 1
    %s2974 = scalar_lea.sflag [#allocation6], 1
    %2975 = vsyncpa %s2974, 1
    %2976 = vsyncpa [#allocation9], 1
    %2977 = vsyncpa [#allocation13], 1

</llo_original>
